<compile_context>
chip_gen: v5e
topology: v5e:2x2
jax: 0.10.0
libtpu: 0.0.40
codegen_flags: <defaults>
</compile_context>

<pallas_src>
import functools

import jax
import jax.numpy as jnp
from jax import lax
from jax.experimental import pallas as pl
from jax.experimental.pallas import tpu as pltpu

# ---- surrogate architecture dims ----
J = 8            # skinning joints (rigid deformer)
L = 16           # non-rigid latent dim
F = 16           # per-gaussian texture feature dim
H = 32           # MLP hidden width
REFINE_SCALE = 0.01

# ---- channel-major input slabs ----
GEO_C = 4                      # f32 slab rows: [x, y, z, 1]
A_SKIN, A_LAT, A_FEAT = 0, J, J + L
CA = J + L + F                 # 40 bf16 attribute rows: [skin | latent | feat]

# ---- fused stage-A output rows (8-aligned segment starts) ----
MA_T, MA_HL, MA_HF = 0, 16, 48   # T(12,pad->16) | h_latent(32) | ht_feat(32)
MA = 80
# ---- fused prod-stage output rows ----
MP_XR, MP_HX = 0, 8              # xyz_rigid(3,pad->8) | h_xyz(32)
MP = 40

# ---- weight pack: each sub-weight at lane 0, 8-aligned row offset ----
R_WA   = 0               # (MA, CA) block-structured stage-A weight
R_WP   = R_WA + MA       # (MP, 16) [sel | w1x^T @ sel] applied to prod
R_W2   = R_WP + MP       # (3, H)   non-rigid output layer
R_WT1V = R_W2 + 8        # (H, 3)   texture view-dir weight
R_WT2  = R_WT1V + H      # (3, H)   texture output layer
R_WR1  = R_WT2 + 8       # (H, 3)   geometry-refine hidden
R_WR2  = R_WR1 + H       # (3, H)   geometry-refine output
R_REP  = R_WR2 + 8       # (16, 4)  0/1 replication matrix for [x,y,z,1] x4
WP_ROWS = R_REP + 16     # 224
WP_LANES = 48            # >= max K (40); equals full dim so any width is legal

# ---- bias / camera pack: (rows, 1) f32, 8-aligned row offsets ----
B_B1, B_B2, B_CAM = 0, 32, 40
B_BT1, B_BT2 = 48, 80
B_BR1, B_BR2 = 88, 120
NB_ROWS = 128


def _converter_kernel(refine, geo_ref, attr_ref, wpack_ref, bias_ref,
                      xyz_ref, color_ref, loss_ref):
    f32 = jnp.float32
    dot = functools.partial(jnp.dot, preferred_element_type=f32)

    geo = geo_ref[...]                      # (4,  tn) f32 : [x, y, z, 1]
    attr = attr_ref[...].astype(f32)        # (40, tn)     : [skin | latent | feat]

    # ---- stage A: one block-structured dot over the whole attribute slab ----
    #   rows  0:12  blended LBS transform T (row-major 3x4 per point)
    #   rows 16:48  latent contribution to the non-rigid hidden layer
    #   rows 48:80  feature contribution to the texture hidden layer
    o_a = dot(wpack_ref[R_WA:R_WA + MA, 0:CA], attr)             # (80, tn)
    T = o_a[MA_T:MA_T + 16, :]                                    # rows 12:16 == 0
    h_lat = o_a[MA_HL:MA_HL + H, :]
    ht_feat = o_a[MA_HF:MA_HF + H, :]

    # ---- rigid LBS: T * [xyz_h x4], then fused [sel | w1x^T @ sel] dot ----
    rep = dot(wpack_ref[R_REP:R_REP + 16, 0:GEO_C], geo)          # (16, tn)
    prod = T * rep
    o_p = dot(wpack_ref[R_WP:R_WP + MP, 0:16], prod)              # (40, tn)
    xyz_rigid = o_p[MP_XR:MP_XR + 3, :]
    h_xyz = o_p[MP_HX:MP_HX + H, :]

    # ---- non-rigid offset + regularization (per-tile partial loss) ----
    h = jnp.maximum(h_xyz + h_lat + bias_ref[B_B1:B_B1 + H, :], 0.0)
    offset = (dot(wpack_ref[R_W2:R_W2 + 3, 0:H], h)
              + bias_ref[B_B2:B_B2 + 3, :])                        # (3, tn)
    xyz_def = xyz_rigid + offset
    loss_ref[...] = jnp.full(loss_ref.shape, jnp.sum(offset * offset), f32)

    # ---- view direction (sublane reduce: cheap in channel-major) ----
    vd = bias_ref[B_CAM:B_CAM + 3, :] - xyz_def
    vd = vd * lax.rsqrt(jnp.sum(vd * vd, axis=0, keepdims=True) + 1e-8)

    # ---- texture MLP ----
    ht = jnp.maximum(ht_feat + dot(wpack_ref[R_WT1V:R_WT1V + H, 0:3], vd)
                     + bias_ref[B_BT1:B_BT1 + H, :], 0.0)
    color = jax.nn.sigmoid(dot(wpack_ref[R_WT2:R_WT2 + 3, 0:H], ht)
                           + bias_ref[B_BT2:B_BT2 + 3, :])

    # ---- geometry refine (static branch; skipped when iteration < delay) ----
    if refine:
        hr = jnp.maximum(dot(wpack_ref[R_WR1:R_WR1 + H, 0:3], xyz_def)
                         + bias_ref[B_BR1:B_BR1 + H, :], 0.0)
        delta = jnp.tanh(dot(wpack_ref[R_WR2:R_WR2 + 3, 0:H], hr)
                         + bias_ref[B_BR2:B_BR2 + 3, :]) * REFINE_SCALE
        xyz_out = xyz_def + delta
    else:
        xyz_out = xyz_def

    xyz_ref[...] = xyz_out            # (3, tn) lane-dense store
    color_ref[...] = color            # (3, tn) lane-dense store


def _build_packs(params, cam_pos):
    """Fuse all sub-module weights into one row-packed slab + one bias column."""
    f32 = jnp.float32
    # group-sum "selection": prod row p contributes to coord p // 4 (p < 12)
    sel = jnp.zeros((3, 16), f32).at[jnp.arange(12) // 4, jnp.arange(12)].set(1.0)
    w1xs = params["w1x"].T @ sel              # xyz_rigid -> hidden, folded through sel
    repmat = jnp.zeros((16, GEO_C), f32).at[
        jnp.arange(16), jnp.arange(16) % 4].set(1.0)

    # block-structured stage-A weight over the [skin | latent | feat] slab
    w_a = jnp.zeros((MA, CA), f32)
    w_a = w_a.at[MA_T:MA_T + 12, A_SKIN:A_SKIN + J].set(params["joint_T"].T)
    w_a = w_a.at[MA_HL:MA_HL + H, A_LAT:A_LAT + L].set(params["w1l"].T)
    w_a = w_a.at[MA_HF:MA_HF + H, A_FEAT:A_FEAT + F].set(params["wt1f"].T)

    # fused prod-stage weight: [xyz_rigid | h_xyz]
    w_p = jnp.zeros((MP, 16), f32)
    w_p = w_p.at[MP_XR:MP_XR + 3, :].set(sel)
    w_p = w_p.at[MP_HX:MP_HX + H, :].set(w1xs)

    wpack = jnp.zeros((WP_ROWS, WP_LANES), f32)
    wpack = wpack.at[R_WA:R_WA + MA, 0:CA].set(w_a)
    wpack = wpack.at[R_WP:R_WP + MP, 0:16].set(w_p)
    wpack = wpack.at[R_W2:R_W2 + 3, 0:H].set(params["w2"].T)
    wpack = wpack.at[R_WT1V:R_WT1V + H, 0:3].set(params["wt1v"].T)
    wpack = wpack.at[R_WT2:R_WT2 + 3, 0:H].set(params["wt2"].T)
    wpack = wpack.at[R_WR1:R_WR1 + H, 0:3].set(params["wr1"].T)
    wpack = wpack.at[R_WR2:R_WR2 + 3, 0:H].set(params["wr2"].T)
    wpack = wpack.at[R_REP:R_REP + 16, 0:GEO_C].set(repmat)

    bpack = jnp.zeros((NB_ROWS, 1), f32)
    bpack = bpack.at[B_B1:B_B1 + H, 0].set(params["b1"][0])
    bpack = bpack.at[B_B2:B_B2 + 3, 0].set(params["b2"][0])
    bpack = bpack.at[B_CAM:B_CAM + 3, 0].set(cam_pos)
    bpack = bpack.at[B_BT1:B_BT1 + H, 0].set(params["bt1"][0])
    bpack = bpack.at[B_BT2:B_BT2 + 3, 0].set(params["bt2"][0])
    bpack = bpack.at[B_BR1:B_BR1 + H, 0].set(params["br1"][0])
    bpack = bpack.at[B_BR2:B_BR2 + 3, 0].set(params["br2"][0])
    return wpack, bpack


def gaussian_converter_forward(params, gaussians, camera, iteration,
                               compute_loss=True, tile_n=None):
    # NOTE: the refine gate is a static Python bool -> crossing the delay
    # boundary triggers one retrace (intended; pre-delay variant skips 2
    # matmuls + tanh entirely).
    refine = bool(iteration >= params["delay"])
    f32 = jnp.float32

    xyz = gaussians["xyz"].astype(f32)
    skin = gaussians["skin_weights"].astype(f32)
    latent = gaussians["latent"].astype(f32)
    feat = gaussians["features"].astype(f32)
    cam_pos = camera["position"].reshape(3).astype(f32)
    n = xyz.shape[0]

    # channel-major input slabs (layout plumbing; upstream storage could keep
    # gaussians channel-major to avoid these transposes entirely)
    geo = jnp.concatenate([xyz, jnp.ones((n, 1), f32)], axis=1).T           # (4, N)  f32
    attr = jnp.concatenate([skin, latent, feat], axis=1
                           ).astype(jnp.bfloat16).T                         # (40, N) bf16

    if tile_n is None:
        tile_n = min(4096, n)
        if tile_n == n and n >= 256:
            tile_n = n // 2            # >=2 grid steps so v7x megacore has work
    # TODO(synk): ragged point counts need a padded/masked tail tile; unsupported.
    assert n % tile_n == 0 and tile_n % 128 == 0
    num_tiles = n // tile_n

    wpack, bpack = _build_packs(params, cam_pos)

    in_specs = [
        pl.BlockSpec((GEO_C, tile_n), lambda i: (0, i)),        # xyz_h slab (f32)
        pl.BlockSpec((CA, tile_n), lambda i: (0, i)),           # attribute slab (bf16)
        pl.BlockSpec((WP_ROWS, WP_LANES), lambda i: (0, 0)),    # row-packed weights
        pl.BlockSpec((NB_ROWS, 1), lambda i: (0, 0)),           # biases + camera
    ]
    out_specs = [
        pl.BlockSpec((3, tile_n), lambda i: (0, i)),            # deformed xyz
        pl.BlockSpec((3, tile_n), lambda i: (0, i)),            # color precompute
        pl.BlockSpec((1, 1, 128), lambda i: (i, 0, 0)),         # per-tile loss partial
    ]
    out_shape = [
        jax.ShapeDtypeStruct((3, n), f32),
        jax.ShapeDtypeStruct((3, n), f32),
        jax.ShapeDtypeStruct((num_tiles, 1, 128), f32),
    ]

    kernel = functools.partial(_converter_kernel, refine)
    xyz_cm, color_cm, loss_parts = pl.pallas_call(
        kernel,
        out_shape=out_shape,
        grid_spec=pltpu.PrefetchScalarGridSpec(
            num_scalar_prefetch=0,
            grid=(num_tiles,),
            in_specs=in_specs,
            out_specs=out_specs,
        ),
        compiler_params=pltpu.CompilerParams(
            dimension_semantics=("parallel",)),   # independent tiles -> megacore OK
    )(geo, attr, wpack, bpack)

    deformed_gaussians = dict(gaussians)
    deformed_gaussians["xyz"] = xyz_cm.T
    color_precompute = color_cm.T
    loss_reg = {}
    if compute_loss:
        loss_reg["nonrigid_offset"] = jnp.sum(loss_parts[:, 0, 0])
    return deformed_gaussians, loss_reg, color_precompute


def reference_forward(params, gaussians, camera, iteration):
    """Plain-JAX reference with identical semantics (unfused, row-major)."""
    xyz = gaussians["xyz"].astype(jnp.float32)
    skin = gaussians["skin_weights"].astype(jnp.float32)
    latent = gaussians["latent"].astype(jnp.float32)
    feat = gaussians["features"].astype(jnp.float32)
    cam = camera["position"].reshape(1, 3).astype(jnp.float32)
    n = xyz.shape[0]

    xyz_h = jnp.concatenate([xyz, jnp.ones((n, 1), jnp.float32)], axis=1)
    T = (skin @ params["joint_T"]).reshape(n, 3, 4)
    xyz_rigid = jnp.einsum("nkj,nj->nk", T, xyz_h)

    h = jnp.maximum(
        xyz_rigid @ params["w1x"] + latent @ params["w1l"] + params["b1"], 0.0)
    offset = h @ params["w2"] + params["b2"]
    xyz_def = xyz_rigid + offset
    loss = jnp.sum(offset * offset)

    vd = cam - xyz_def
    vd = vd * lax.rsqrt(jnp.sum(vd * vd, axis=-1, keepdims=True) + 1e-8)
    ht = jnp.maximum(
        feat @ params["wt1f"] + vd @ params["wt1v"] + params["bt1"], 0.0)
    color = jax.nn.sigmoid(ht @ params["wt2"] + params["bt2"])

    if iteration >= params["delay"]:
        hr = jnp.maximum(xyz_def @ params["wr1"] + params["br1"], 0.0)
        delta = jnp.tanh(hr @ params["wr2"] + params["br2"]) * REFINE_SCALE
        xyz_out = xyz_def + delta
    else:
        xyz_out = xyz_def
    return xyz_out, loss, color


def init_params(key):
    ks = jax.random.split(key, 16)
    eye34 = jnp.concatenate(
        [jnp.eye(3, dtype=jnp.float32), jnp.zeros((3, 1), jnp.float32)], axis=1)
    joint_T = (eye34.reshape(1, 12)
               + 0.05 * jax.random.normal(ks[0], (J, 12), jnp.float32))
    s = 0.1
    return {
        "delay": 0,
        "joint_T": joint_T,
        # non-rigid deformer MLP
        "w1x": s * jax.random.normal(ks[1], (3, H), jnp.float32),
        "w1l": s * jax.random.normal(ks[2], (L, H), jnp.float32),
        "b1": s * jax.random.normal(ks[3], (1, H), jnp.float32),
        "w2": s * jax.random.normal(ks[4], (H, 3), jnp.float32),
        "b2": s * jax.random.normal(ks[5], (1, 3), jnp.float32),
        # texture MLP
        "wt1f": s * jax.random.normal(ks[6], (F, H), jnp.float32),
        "wt1v": s * jax.random.normal(ks[7], (3, H), jnp.float32),
        "bt1": s * jax.random.normal(ks[8], (1, H), jnp.float32),
        "wt2": s * jax.random.normal(ks[9], (H, 3), jnp.float32),
        "bt2": s * jax.random.normal(ks[10], (1, 3), jnp.float32),
        # unet geometry-refine MLP
        "wr1": s * jax.random.normal(ks[11], (3, H), jnp.float32),
        "br1": s * jax.random.normal(ks[12], (1, H), jnp.float32),
        "wr2": s * jax.random.normal(ks[13], (H, 3), jnp.float32),
        "br2": s * jax.random.normal(ks[14], (1, 3), jnp.float32),
    }


if __name__ == "__main__":
    # use exact f32 matmuls on both sides so the check is tight
    jax.config.update("jax_default_matmul_precision", "highest")

    key = jax.random.PRNGKey(0)
    kp, kx, ks, kl, kf, kc = jax.random.split(key, 6)

    n_pts = 1024
    params = init_params(kp)
    gaussians = {
        "xyz": jax.random.normal(kx, (n_pts, 3), jnp.float32),
        "skin_weights": jax.nn.softmax(
            jax.random.normal(ks, (n_pts, J), jnp.float32), axis=-1),
        "latent": jax.random.normal(kl, (n_pts, L), jnp.float32),
        "features": jax.random.normal(kf, (n_pts, F), jnp.float32),
    }
    camera = {"position": 2.0 * jax.random.normal(kc, (3,), jnp.float32)}

    # the kernel streams skin/latent/feat in bf16 -> compare against a reference
    # that sees the same bf16-rounded attributes (f32 math on both sides).
    rb = lambda a: a.astype(jnp.bfloat16).astype(jnp.float32)
    gaussians_q = dict(gaussians,
                       skin_weights=rb(gaussians["skin_weights"]),
                       latent=rb(gaussians["latent"]),
                       features=rb(gaussians["features"]))

    # --- refine enabled (iteration >= delay); 2 parallel tiles ---
    deformed, loss_reg, color = gaussian_converter_forward(
        params, gaussians, camera, iteration=1, tile_n=512)
    jax.block_until_ready((deformed["xyz"], loss_reg["nonrigid_offset"], color))

    xyz_r, loss_r, color_r = reference_forward(params, gaussians_q, camera, 1)
    assert jnp.allclose(deformed["xyz"], xyz_r, atol=1e-3, rtol=1e-3)
    assert jnp.allclose(color, color_r, atol=1e-3, rtol=1e-3)
    assert jnp.allclose(loss_reg["nonrigid_offset"], loss_r, atol=1e-2, rtol=2e-3)

    # --- refine disabled (iteration < delay): pre-delay static branch,
    #     default tiling path (>=2 grid steps) ---
    params_d = dict(params, delay=10)
    deformed0, loss_reg0, color0 = gaussian_converter_forward(
        params_d, gaussians, camera, iteration=1)
    jax.block_until_ready(deformed0["xyz"])

    xyz_r0, loss_r0, color_r0 = reference_forward(params_d, gaussians_q, camera, 1)
    assert jnp.allclose(deformed0["xyz"], xyz_r0, atol=1e-3, rtol=1e-3)
    assert jnp.allclose(color0, color_r0, atol=1e-3, rtol=1e-3)
    assert jnp.allclose(loss_reg0["nonrigid_offset"], loss_r0, atol=1e-2, rtol=2e-3)

    print("KERNEL_OK")
</pallas_src>

<mosaic_0001>
module attributes {stable_mosaic.version = 11 : i64} {
  func.func @_converter_kernel(%arg0: i32, %arg1: memref<4x512xf32, #tpu.memory_space<vmem>>, %arg2: memref<40x512xbf16, #tpu.memory_space<vmem>>, %arg3: memref<224x48xf32, #tpu.memory_space<vmem>>, %arg4: memref<128x1xf32, #tpu.memory_space<vmem>>, %arg5: memref<3x512xf32, #tpu.memory_space<vmem>>, %arg6: memref<3x512xf32, #tpu.memory_space<vmem>>, %arg7: memref<1x1x128xf32, #tpu.memory_space<vmem>>) attributes {dimension_semantics = [#tpu.dimension_semantics<parallel>], iteration_bounds = array<i64: 2>, scalar_prefetch = 0 : i64, scratch_operands = 0 : i64, tpu.core_type = #tpu.core_type<tc>, window_params = [{transform_indices = @transform_0, window_bounds = array<i64: 4, 512>}, {transform_indices = @transform_1, window_bounds = array<i64: 40, 512>}, {pipeline_mode = #tpu.pipeline_mode<synchronous>, transform_indices = @transform_2, window_bounds = array<i64: 224, 48>}, {pipeline_mode = #tpu.pipeline_mode<synchronous>, transform_indices = @transform_3, window_bounds = array<i64: 128, 1>}, {transform_indices = @transform_4, window_bounds = array<i64: 3, 512>}, {transform_indices = @transform_5, window_bounds = array<i64: 3, 512>}, {transform_indices = @transform_6, window_bounds = array<i64: 1, 1, 128>}]} {
    %c0 = arith.constant 0 : index
    %c0_0 = arith.constant 0 : index
    %0 = vector.load %arg1[%c0, %c0_0] : memref<4x512xf32, #tpu.memory_space<vmem>>, vector<4x512xf32>
    %c0_1 = arith.constant 0 : index
    %c0_2 = arith.constant 0 : index
    %1 = vector.load %arg2[%c0_1, %c0_2] : memref<40x512xbf16, #tpu.memory_space<vmem>>, vector<40x512xbf16>
    %2 = arith.extf %1 : vector<40x512xbf16> to vector<40x512xf32>
    %c0_3 = arith.constant 0 : index
    %c0_4 = arith.constant 0 : index
    %3 = vector.load %arg3[%c0_3, %c0_4] : memref<224x48xf32, #tpu.memory_space<vmem>>, vector<80x40xf32>
    %cst = arith.constant dense<0.000000e+00> : vector<80x512xf32>
    %4 = tpu.matmul %3, %2, %cst {dimension_numbers = #tpu.dot_dimension_numbers<[1], [0], [0], [1], [0, 0, 1, 1], [], []>, precision = #tpu.contract_precision<fp32>} : vector<80x40xf32>, vector<40x512xf32>, vector<80x512xf32> -> vector<80x512xf32>
    %5 = vector.extract_strided_slice %4 {offsets = [0, 0], sizes = [16, 512], strides = [1, 1]} : vector<80x512xf32> to vector<16x512xf32>
    %6 = vector.extract_strided_slice %4 {offsets = [16, 0], sizes = [32, 512], strides = [1, 1]} : vector<80x512xf32> to vector<32x512xf32>
    %7 = vector.extract_strided_slice %4 {offsets = [48, 0], sizes = [32, 512], strides = [1, 1]} : vector<80x512xf32> to vector<32x512xf32>
    %c208 = arith.constant 208 : index
    %c0_5 = arith.constant 0 : index
    %8 = vector.load %arg3[%c208, %c0_5] : memref<224x48xf32, #tpu.memory_space<vmem>>, vector<16x4xf32>
    %cst_6 = arith.constant dense<0.000000e+00> : vector<16x512xf32>
    %9 = tpu.matmul %8, %0, %cst_6 {dimension_numbers = #tpu.dot_dimension_numbers<[1], [0], [0], [1], [0, 0, 1, 1], [], []>, precision = #tpu.contract_precision<fp32>} : vector<16x4xf32>, vector<4x512xf32>, vector<16x512xf32> -> vector<16x512xf32>
    %10 = arith.mulf %5, %9 : vector<16x512xf32>
    %c80 = arith.constant 80 : index
    %c0_7 = arith.constant 0 : index
    %11 = vector.load %arg3[%c80, %c0_7] : memref<224x48xf32, #tpu.memory_space<vmem>>, vector<40x16xf32>
    %cst_8 = arith.constant dense<0.000000e+00> : vector<40x512xf32>
    %12 = tpu.matmul %11, %10, %cst_8 {dimension_numbers = #tpu.dot_dimension_numbers<[1], [0], [0], [1], [0, 0, 1, 1], [], []>, precision = #tpu.contract_precision<fp32>} : vector<40x16xf32>, vector<16x512xf32>, vector<40x512xf32> -> vector<40x512xf32>
    %13 = vector.extract_strided_slice %12 {offsets = [0, 0], sizes = [3, 512], strides = [1, 1]} : vector<40x512xf32> to vector<3x512xf32>
    %14 = vector.extract_strided_slice %12 {offsets = [8, 0], sizes = [32, 512], strides = [1, 1]} : vector<40x512xf32> to vector<32x512xf32>
    %15 = arith.addf %14, %6 : vector<32x512xf32>
    %c0_9 = arith.constant 0 : index
    %c0_10 = arith.constant 0 : index
    %16 = vector.load %arg4[%c0_9, %c0_10] : memref<128x1xf32, #tpu.memory_space<vmem>>, vector<32x1xf32>
    %17 = vector.broadcast %16 : vector<32x1xf32> to vector<32x512xf32>
    %18 = arith.addf %15, %17 : vector<32x512xf32>
    %cst_11 = arith.constant 0.000000e+00 : f32
    %19 = vector.broadcast %cst_11 : f32 to vector<32x512xf32>
    %20 = arith.maximumf %18, %19 : vector<32x512xf32>
    %c120 = arith.constant 120 : index
    %c0_12 = arith.constant 0 : index
    %21 = vector.load %arg3[%c120, %c0_12] : memref<224x48xf32, #tpu.memory_space<vmem>>, vector<3x32xf32>
    %cst_13 = arith.constant dense<0.000000e+00> : vector<3x512xf32>
    %22 = tpu.matmul %21, %20, %cst_13 {dimension_numbers = #tpu.dot_dimension_numbers<[1], [0], [0], [1], [0, 0, 1, 1], [], []>, precision = #tpu.contract_precision<fp32>} : vector<3x32xf32>, vector<32x512xf32>, vector<3x512xf32> -> vector<3x512xf32>
    %c32 = arith.constant 32 : index
    %c0_14 = arith.constant 0 : index
    %23 = vector.load %arg4[%c32, %c0_14] : memref<128x1xf32, #tpu.memory_space<vmem>>, vector<3x1xf32>
    %24 = vector.broadcast %23 : vector<3x1xf32> to vector<3x512xf32>
    %25 = arith.addf %22, %24 : vector<3x512xf32>
    %26 = arith.addf %13, %25 : vector<3x512xf32>
    %27 = arith.mulf %25, %25 : vector<3x512xf32>
    %28 = vector.shape_cast %27 : vector<3x512xf32> to vector<1x3x512xf32>
    %cst_15 = arith.constant dense<0.000000e+00> : vector<1xf32>
    %29 = vector.multi_reduction <add>, %28, %cst_15 [1, 2] : vector<1x3x512xf32> to vector<1xf32>
    %30 = vector.shape_cast %29 : vector<1xf32> to vector<1x1x1xf32>
    %31 = vector.extract %30[0, 0, 0] : f32 from vector<1x1x1xf32>
    %32 = vector.broadcast %31 : f32 to vector<1x1x128xf32>
    %c0_16 = arith.constant 0 : index
    %c0_17 = arith.constant 0 : index
    %c0_18 = arith.constant 0 : index
    %33 = vector.load %arg7[%c0_16, %c0_17, %c0_18] : memref<1x1x128xf32, #tpu.memory_space<vmem>>, vector<1x1x128xf32>
    tpu.vector_store %arg7[%c0_16, %c0_17, %c0_18], %32 {strides = array<i32>} : memref<1x1x128xf32, #tpu.memory_space<vmem>>, vector<1x1x128xf32>,
    %c40 = arith.constant 40 : index
    %c0_19 = arith.constant 0 : index
    %34 = vector.load %arg4[%c40, %c0_19] : memref<128x1xf32, #tpu.memory_space<vmem>>, vector<3x1xf32>
    %35 = vector.broadcast %34 : vector<3x1xf32> to vector<3x512xf32>
    %36 = arith.subf %35, %26 : vector<3x512xf32>
    %37 = arith.mulf %36, %36 : vector<3x512xf32>
    %cst_20 = arith.constant dense<0.000000e+00> : vector<512xf32>
    %38 = vector.multi_reduction <add>, %37, %cst_20 [0] : vector<3x512xf32> to vector<512xf32>
    %39 = vector.shape_cast %38 : vector<512xf32> to vector<1x512xf32>
    %cst_21 = arith.constant 9.99999993E-9 : f32
    %40 = vector.broadcast %cst_21 : f32 to vector<1x512xf32>
    %41 = arith.addf %39, %40 : vector<1x512xf32>
    %42 = math.rsqrt %41 : vector<1x512xf32>
    %43 = vector.broadcast %42 : vector<1x512xf32> to vector<3x512xf32>
    %44 = arith.mulf %36, %43 : vector<3x512xf32>
    %c128 = arith.constant 128 : index
    %c0_22 = arith.constant 0 : index
    %45 = vector.load %arg3[%c128, %c0_22] : memref<224x48xf32, #tpu.memory_space<vmem>>, vector<32x3xf32>
    %cst_23 = arith.constant dense<0.000000e+00> : vector<32x512xf32>
    %46 = tpu.matmul %45, %44, %cst_23 {dimension_numbers = #tpu.dot_dimension_numbers<[1], [0], [0], [1], [0, 0, 1, 1], [], []>, precision = #tpu.contract_precision<fp32>} : vector<32x3xf32>, vector<3x512xf32>, vector<32x512xf32> -> vector<32x512xf32>
    %47 = arith.addf %7, %46 : vector<32x512xf32>
    %c48 = arith.constant 48 : index
    %c0_24 = arith.constant 0 : index
    %48 = vector.load %arg4[%c48, %c0_24] : memref<128x1xf32, #tpu.memory_space<vmem>>, vector<32x1xf32>
    %49 = vector.broadcast %48 : vector<32x1xf32> to vector<32x512xf32>
    %50 = arith.addf %47, %49 : vector<32x512xf32>
    %cst_25 = arith.constant 0.000000e+00 : f32
    %51 = vector.broadcast %cst_25 : f32 to vector<32x512xf32>
    %52 = arith.maximumf %50, %51 : vector<32x512xf32>
    %c160 = arith.constant 160 : index
    %c0_26 = arith.constant 0 : index
    %53 = vector.load %arg3[%c160, %c0_26] : memref<224x48xf32, #tpu.memory_space<vmem>>, vector<3x32xf32>
    %cst_27 = arith.constant dense<0.000000e+00> : vector<3x512xf32>
    %54 = tpu.matmul %53, %52, %cst_27 {dimension_numbers = #tpu.dot_dimension_numbers<[1], [0], [0], [1], [0, 0, 1, 1], [], []>, precision = #tpu.contract_precision<fp32>} : vector<3x32xf32>, vector<32x512xf32>, vector<3x512xf32> -> vector<3x512xf32>
    %c80_28 = arith.constant 80 : index
    %c0_29 = arith.constant 0 : index
    %55 = vector.load %arg4[%c80_28, %c0_29] : memref<128x1xf32, #tpu.memory_space<vmem>>, vector<3x1xf32>
    %56 = vector.broadcast %55 : vector<3x1xf32> to vector<3x512xf32>
    %57 = arith.addf %54, %56 : vector<3x512xf32>
    %58 = arith.negf %57 : vector<3x512xf32>
    %59 = math.exp %58 : vector<3x512xf32>
    %cst_30 = arith.constant 1.000000e+00 : f32
    %60 = vector.broadcast %cst_30 : f32 to vector<3x512xf32>
    %61 = arith.addf %60, %59 : vector<3x512xf32>
    %62 = arith.divf %60, %61 : vector<3x512xf32>
    %c168 = arith.constant 168 : index
    %c0_31 = arith.constant 0 : index
    %63 = vector.load %arg3[%c168, %c0_31] : memref<224x48xf32, #tpu.memory_space<vmem>>, vector<32x3xf32>
    %cst_32 = arith.constant dense<0.000000e+00> : vector<32x512xf32>
    %64 = tpu.matmul %63, %26, %cst_32 {dimension_numbers = #tpu.dot_dimension_numbers<[1], [0], [0], [1], [0, 0, 1, 1], [], []>, precision = #tpu.contract_precision<fp32>} : vector<32x3xf32>, vector<3x512xf32>, vector<32x512xf32> -> vector<32x512xf32>
    %c88 = arith.constant 88 : index
    %c0_33 = arith.constant 0 : index
    %65 = vector.load %arg4[%c88, %c0_33] : memref<128x1xf32, #tpu.memory_space<vmem>>, vector<32x1xf32>
    %66 = vector.broadcast %65 : vector<32x1xf32> to vector<32x512xf32>
    %67 = arith.addf %64, %66 : vector<32x512xf32>
    %cst_34 = arith.constant 0.000000e+00 : f32
    %68 = vector.broadcast %cst_34 : f32 to vector<32x512xf32>
    %69 = arith.maximumf %67, %68 : vector<32x512xf32>
    %c200 = arith.constant 200 : index
    %c0_35 = arith.constant 0 : index
    %70 = vector.load %arg3[%c200, %c0_35] : memref<224x48xf32, #tpu.memory_space<vmem>>, vector<3x32xf32>
    %cst_36 = arith.constant dense<0.000000e+00> : vector<3x512xf32>
    %71 = tpu.matmul %70, %69, %cst_36 {dimension_numbers = #tpu.dot_dimension_numbers<[1], [0], [0], [1], [0, 0, 1, 1], [], []>, precision = #tpu.contract_precision<fp32>} : vector<3x32xf32>, vector<32x512xf32>, vector<3x512xf32> -> vector<3x512xf32>
    %c120_37 = arith.constant 120 : index
    %c0_38 = arith.constant 0 : index
    %72 = vector.load %arg4[%c120_37, %c0_38] : memref<128x1xf32, #tpu.memory_space<vmem>>, vector<3x1xf32>
    %73 = vector.broadcast %72 : vector<3x1xf32> to vector<3x512xf32>
    %74 = arith.addf %71, %73 : vector<3x512xf32>
    %75 = math.tanh %74 : vector<3x512xf32>
    %cst_39 = arith.constant 0.00999999977 : f32
    %76 = vector.broadcast %cst_39 : f32 to vector<3x512xf32>
    %77 = arith.mulf %75, %76 : vector<3x512xf32>
    %78 = arith.addf %26, %77 : vector<3x512xf32>
    %c0_40 = arith.constant 0 : index
    %c0_41 = arith.constant 0 : index
    %79 = vector.load %arg5[%c0_40, %c0_41] : memref<3x512xf32, #tpu.memory_space<vmem>>, vector<3x512xf32>
    tpu.vector_store %arg5[%c0_40, %c0_41], %78 {strides = array<i32>} : memref<3x512xf32, #tpu.memory_space<vmem>>, vector<3x512xf32>,
    %c0_42 = arith.constant 0 : index
    %c0_43 = arith.constant 0 : index
    %80 = vector.load %arg6[%c0_42, %c0_43] : memref<3x512xf32, #tpu.memory_space<vmem>>, vector<3x512xf32>
    tpu.vector_store %arg6[%c0_42, %c0_43], %62 {strides = array<i32>} : memref<3x512xf32, #tpu.memory_space<vmem>>, vector<3x512xf32>,
    return
  }
  func.func @transform_0(%arg0: i32) -> (i32, i32) {
    %c0_i32 = arith.constant 0 : i32
    %c0_i32_0 = arith.constant 0 : i32
    return %c0_i32, %arg0 : i32, i32
  }
  func.func @transform_1(%arg0: i32) -> (i32, i32) {
    %c0_i32 = arith.constant 0 : i32
    %c0_i32_0 = arith.constant 0 : i32
    return %c0_i32, %arg0 : i32, i32
  }
  func.func @transform_2(%arg0: i32) -> (i32, i32) {
    %c0_i32 = arith.constant 0 : i32
    %c0_i32_0 = arith.constant 0 : i32
    %c0_i32_1 = arith.constant 0 : i32
    return %c0_i32, %c0_i32_0 : i32, i32
  }
  func.func @transform_3(%arg0: i32) -> (i32, i32) {
    %c0_i32 = arith.constant 0 : i32
    %c0_i32_0 = arith.constant 0 : i32
    %c0_i32_1 = arith.constant 0 : i32
    return %c0_i32, %c0_i32_0 : i32, i32
  }
  func.func @transform_4(%arg0: i32) -> (i32, i32) {
    %c0_i32 = arith.constant 0 : i32
    %c0_i32_0 = arith.constant 0 : i32
    return %c0_i32, %arg0 : i32, i32
  }
  func.func @transform_5(%arg0: i32) -> (i32, i32) {
    %c0_i32 = arith.constant 0 : i32
    %c0_i32_0 = arith.constant 0 : i32
    return %c0_i32, %arg0 : i32, i32
  }
  func.func @transform_6(%arg0: i32) -> (i32, i32, i32) {
    %c0_i32 = arith.constant 0 : i32
    %c0_i32_0 = arith.constant 0 : i32
    %c0_i32_1 = arith.constant 0 : i32
    return %arg0, %c0_i32, %c0_i32_0 : i32, i32, i32
  }
}

</mosaic_0001>

<llo_original>
// kernel: tpu_custom_call.1
$region0: #{tpu_custom_call.1}
  #allocation0 [shape = 'u32[]', space=smem, size = 0x4, offset = 0x4, fixed_abs, tag = 'smem constant byte address 0x4 - core index']
  #allocation1 [shape = 'u32[72,128]{1,0:T(1,128)}', space=vmem, size = 0x9000, scoped, tag = 'internal scratch']
  %s0 = inlined_call_operand.vmem [shape: f32[4,1024], index: 0, kind: input, shape index: {}]
  %s1 = inlined_call_operand.vmem [shape: bf16[40,1024], index: 1, kind: input, shape index: {}]
  %s2 = inlined_call_operand.vmem [shape: f32[224,48], index: 2, kind: input, shape index: {}]
  %s3 = inlined_call_operand.vmem [shape: f32[128,1], index: 3, kind: input, shape index: {}]
  %s4 = inlined_call_operand.hbm [shape: f32[3,1024], index: 4, kind: output, shape index: {0}]
  %s5 = inlined_call_operand.hbm [shape: f32[3,1024], index: 5, kind: output, shape index: {1}]
  %s6 = inlined_call_operand.hbm [shape: f32[2,1,128], index: 6, kind: output, shape index: {2}]
  %7 = xla_tuple %s4, %s5, %s6
  %s8 = sld [smem:[#allocation0]]
  $region88: #{tpu_custom_call.1} parent=0
    _
  %s10 = ssub.s32 1, %s8
  %s11 = scalar_select 0, %s10, %s8
  $region1: #{tpu_custom_call.1} parent=0
    #allocation2 [shape = 'u8[81920]{0}', space=vmem, size = 0x14000, scoped, tag = 'input window, operand 1']
    #allocation3 [shape = 'u8[16384]{0}', space=vmem, size = 0x4000, scoped, tag = 'output window, operand 0']
    #allocation4 [shape = 's32[2]{0}', space=sflag, size = 0x8, scoped, tag = 'scoped memory for tpu_custom_call.1']
    #allocation5 [shape = 'u8[16384]{0}', space=vmem, size = 0x4000, scoped, tag = 'output window, operand 1']
    #allocation6 [shape = 's32[2]{0}', space=sflag, size = 0x8, scoped, tag = 'scoped memory for tpu_custom_call.1']
    #allocation7 [shape = 'u8[1024]{0}', space=vmem, size = 0x400, scoped, tag = 'output window, operand 2']
    %12 = vsyncpa [#allocation4], 0
    %s13 = scalar_lea.sflag [#allocation4], 1
    %14 = vsyncpa %s13, 0
    %15 = vsyncpa [#allocation6], 0
    %s16 = scalar_lea.sflag [#allocation6], 1
    %17 = vsyncpa %s16, 0
    loop: start=0, step=1, limit=4
    $region2: #{tpu_custom_call.1} parent=1 // loop_pre_header
      _
    $region3: #{tpu_custom_call.1} parent=1 // loop_header
      %s19 = sphi 0, %s23
      %p20 = scmp.ge.s32.totalorder %s19, 4
      %s29 = sphi 0, %s31
      %s32 = sphi 0, %s29
      %s33 = sphi 0, %s32
      %s49 = sphi 0, %s33
      %s55 = sphi 0, %s57
      %s58 = sphi 0, %s55
      %s59 = sphi 0, %s58
      %s75 = sphi 0, %s59
      %s79 = sphi 0, %s79
      %s81 = sphi 0, %s79
      %s82 = sphi 0, %s81
      %s96 = sphi 0, %s82
      %s100 = sphi 0, %s100
      %s102 = sphi 0, %s100
      %s103 = sphi 0, %s102
      %s117 = sphi 0, %s103
      %s123 = sphi 0, %s125
      %s126 = sphi 0, %s123
      %s127 = sphi 0, %s126
      %s143 = sphi 0, %s127
      %s149 = sphi 0, %s151
      %s152 = sphi 0, %s149
      %s153 = sphi 0, %s152
      %s169 = sphi 0, %s153
      %s175 = sphi 0, %s177
      %s178 = sphi 0, %s175
      %s179 = sphi 0, %s178
      %s195 = sphi 0, %s179
    $region4: #{tpu_custom_call.1} parent=1 // loop_header_branch
      %22 = sbr.rel (%p20) target = $region8
    $region5: #{tpu_custom_call.1} parent=1 // loop_body
      %s24 = ssub.s32 %s19, 1
      %s25 = ssub.s32 %s19, 2
      %s26 = sadd.s32 %s19, 1
      %s27 = ssub.s32 %s19, %s26
      %p28 = scmp.eq.s32.totalorder %s27, 0
      %s30 = sadd.s32 %s29, 1
      %s31 = scalar_select %p28, %s29, %s30
      %p34 = pneg %p28
      %p35 = scmp.eq.s32.totalorder %s19, 1
      %p36 = por %p34, %p35
      %p37 = scmp.ne.s32.totalorder %s29, %s32
      %p38 = scmp.eq.s32.totalorder %s19, 0
      %p39 = por %p37, %p38
      %p40 = scmp.ne.s32.totalorder %s29, %s32
      %p41 = scmp.eq.s32.totalorder %s24, 1
      %p42 = por %p40, %p41
      %p43 = scmp.ne.s32.totalorder %s32, %s33
      %p44 = scmp.eq.s32.totalorder %s24, 0
      %p45 = por %p43, %p44
      %p46 = scmp.ne.s32.totalorder %s32, %s33
      %p47 = scmp.eq.s32.totalorder %s25, 1
      %p48 = por %p46, %p47
      %p50 = scmp.ne.s32.totalorder %s33, %s49
      %p51 = scmp.eq.s32.totalorder %s25, 0
      %p52 = por %p50, %p51
      %s53 = ssub.s32 %s19, %s26
      %p54 = scmp.eq.s32.totalorder %s53, 0
      %s56 = sadd.s32 %s55, 1
      %s57 = scalar_select %p54, %s55, %s56
      %p60 = pneg %p54
      %p61 = scmp.eq.s32.totalorder %s19, 1
      %p62 = por %p60, %p61
      %p63 = scmp.ne.s32.totalorder %s55, %s58
      %p64 = scmp.eq.s32.totalorder %s19, 0
      %p65 = por %p63, %p64
      %p66 = scmp.ne.s32.totalorder %s55, %s58
      %p67 = scmp.eq.s32.totalorder %s24, 1
      %p68 = por %p66, %p67
      %p69 = scmp.ne.s32.totalorder %s58, %s59
      %p70 = scmp.eq.s32.totalorder %s24, 0
      %p71 = por %p69, %p70
      %p72 = scmp.ne.s32.totalorder %s58, %s59
      %p73 = scmp.eq.s32.totalorder %s25, 1
      %p74 = por %p72, %p73
      %p76 = scmp.ne.s32.totalorder %s59, %s75
      %p77 = scmp.eq.s32.totalorder %s25, 0
      %p78 = por %p76, %p77
      %s80 = sadd.s32 %s79, 1
      %p83 = scmp.eq.s32.totalorder %s19, 1
      %p84 = scmp.ne.s32.totalorder %s79, %s81
      %p85 = scmp.eq.s32.totalorder %s19, 0
      %p86 = por %p84, %p85
      %p87 = scmp.ne.s32.totalorder %s79, %s81
      %p88 = scmp.eq.s32.totalorder %s24, 1
      %p89 = por %p87, %p88
      %p90 = scmp.ne.s32.totalorder %s81, %s82
      %p91 = scmp.eq.s32.totalorder %s24, 0
      %p92 = por %p90, %p91
      %p93 = scmp.ne.s32.totalorder %s81, %s82
      %p94 = scmp.eq.s32.totalorder %s25, 1
      %p95 = por %p93, %p94
      %p97 = scmp.ne.s32.totalorder %s82, %s96
      %p98 = scmp.eq.s32.totalorder %s25, 0
      %p99 = por %p97, %p98
      %s101 = sadd.s32 %s100, 1
      %p104 = scmp.eq.s32.totalorder %s19, 1
      %p105 = scmp.ne.s32.totalorder %s100, %s102
      %p106 = scmp.eq.s32.totalorder %s19, 0
      %p107 = por %p105, %p106
      %p108 = scmp.ne.s32.totalorder %s100, %s102
      %p109 = scmp.eq.s32.totalorder %s24, 1
      %p110 = por %p108, %p109
      %p111 = scmp.ne.s32.totalorder %s102, %s103
      %p112 = scmp.eq.s32.totalorder %s24, 0
      %p113 = por %p111, %p112
      %p114 = scmp.ne.s32.totalorder %s102, %s103
      %p115 = scmp.eq.s32.totalorder %s25, 1
      %p116 = por %p114, %p115
      %p118 = scmp.ne.s32.totalorder %s103, %s117
      %p119 = scmp.eq.s32.totalorder %s25, 0
      %p120 = por %p118, %p119
      %s121 = ssub.s32 %s19, %s26
      %p122 = scmp.eq.s32.totalorder %s121, 0
      %s124 = sadd.s32 %s123, 1
      %s125 = scalar_select %p122, %s123, %s124
      %p128 = pneg %p122
      %p129 = scmp.eq.s32.totalorder %s19, 1
      %p130 = por %p128, %p129
      %p131 = scmp.ne.s32.totalorder %s123, %s126
      %p132 = scmp.eq.s32.totalorder %s19, 0
      %p133 = por %p131, %p132
      %p134 = scmp.ne.s32.totalorder %s123, %s126
      %p135 = scmp.eq.s32.totalorder %s24, 1
      %p136 = por %p134, %p135
      %p137 = scmp.ne.s32.totalorder %s126, %s127
      %p138 = scmp.eq.s32.totalorder %s24, 0
      %p139 = por %p137, %p138
      %p140 = scmp.ne.s32.totalorder %s126, %s127
      %p141 = scmp.eq.s32.totalorder %s25, 1
      %p142 = por %p140, %p141
      %p144 = scmp.ne.s32.totalorder %s127, %s143
      %p145 = scmp.eq.s32.totalorder %s25, 0
      %p146 = por %p144, %p145
      %s147 = ssub.s32 %s19, %s26
      %p148 = scmp.eq.s32.totalorder %s147, 0
      %s150 = sadd.s32 %s149, 1
      %s151 = scalar_select %p148, %s149, %s150
      %p154 = pneg %p148
      %p155 = scmp.eq.s32.totalorder %s19, 1
      %p156 = por %p154, %p155
      %p157 = scmp.ne.s32.totalorder %s149, %s152
      %p158 = scmp.eq.s32.totalorder %s19, 0
      %p159 = por %p157, %p158
      %p160 = scmp.ne.s32.totalorder %s149, %s152
      %p161 = scmp.eq.s32.totalorder %s24, 1
      %p162 = por %p160, %p161
      %p163 = scmp.ne.s32.totalorder %s152, %s153
      %p164 = scmp.eq.s32.totalorder %s24, 0
      %p165 = por %p163, %p164
      %p166 = scmp.ne.s32.totalorder %s152, %s153
      %p167 = scmp.eq.s32.totalorder %s25, 1
      %p168 = por %p166, %p167
      %p170 = scmp.ne.s32.totalorder %s153, %s169
      %p171 = scmp.eq.s32.totalorder %s25, 0
      %p172 = por %p170, %p171
      %s173 = ssub.s32 %s19, %s26
      %p174 = scmp.eq.s32.totalorder %s173, 0
      %s176 = sadd.s32 %s175, 1
      %s177 = scalar_select %p174, %s175, %s176
      %p180 = pneg %p174
      %p181 = scmp.eq.s32.totalorder %s19, 1
      %p182 = por %p180, %p181
      %p183 = scmp.ne.s32.totalorder %s175, %s178
      %p184 = scmp.eq.s32.totalorder %s19, 0
      %p185 = por %p183, %p184
      %p186 = scmp.ne.s32.totalorder %s175, %s178
      %p187 = scmp.eq.s32.totalorder %s24, 1
      %p188 = por %p186, %p187
      %p189 = scmp.ne.s32.totalorder %s178, %s179
      %p190 = scmp.eq.s32.totalorder %s24, 0
      %p191 = por %p189, %p190
      %p192 = scmp.ne.s32.totalorder %s178, %s179
      %p193 = scmp.eq.s32.totalorder %s25, 1
      %p194 = por %p192, %p193
      %p196 = scmp.ne.s32.totalorder %s179, %s195
      %p197 = scmp.eq.s32.totalorder %s25, 0
      %p198 = por %p196, %p197
      %p199 = scmp.le.s32.totalorder 1, %s19
      %p200 = scmp.lt.s32.totalorder %s19, 3
      %p201 = pnand %p199, %p200
      %p202 = pneg %p201
      // Predicated region
      $region9: #{tpu_custom_call.1} parent=5 // pred_check
        _
      $region10: #{tpu_custom_call.1} parent=5 // pred_check_branch
        %204 = sbr.rel (%p201) target = $region12
      $region11: #{tpu_custom_call.1} parent=5 // pred_region
        %s205 = ssub.s32 %s19, 1
        // Predicated region
        $region13: #{tpu_custom_call.1} parent=11 // pred_check
          %p206 = pneg %p92
        $region14: #{tpu_custom_call.1} parent=11 // pred_check_branch
          %208 = sbr.rel (%p206) target = $region16
        $region15: #{tpu_custom_call.1} parent=11 // pred_region
          _
        $region16: #{tpu_custom_call.1} parent=11 // pred_fallthru
          _
        // Predicated region
        $region17: #{tpu_custom_call.1} parent=11 // pred_check
          %p209 = pneg %p113
        $region18: #{tpu_custom_call.1} parent=11 // pred_check_branch
          %211 = sbr.rel (%p209) target = $region20
        $region19: #{tpu_custom_call.1} parent=11 // pred_region
          _
        $region20: #{tpu_custom_call.1} parent=11 // pred_fallthru
          _
      $region12: #{tpu_custom_call.1} parent=5 // pred_fallthru
        _
      %p212 = scmp.lt.s32.totalorder %s19, 2
      // Predicated region
      $region21: #{tpu_custom_call.1} parent=5 // pred_check
        %p213 = pneg %p212
      $region22: #{tpu_custom_call.1} parent=5 // pred_check_branch
        %215 = sbr.rel (%p213) target = $region24
      $region23: #{tpu_custom_call.1} parent=5 // pred_region
        // Predicated region
        $region25: #{tpu_custom_call.1} parent=23 // pred_check
          %p216 = pneg %p39
        $region26: #{tpu_custom_call.1} parent=23 // pred_check_branch
          %218 = sbr.rel (%p216) target = $region28
        $region27: #{tpu_custom_call.1} parent=23 // pred_region
          %s219 = smul.u32 4, %s19
          %p220 = scmp.lt.s32.totalorder %s219, 7
          %s221 = scalar_select %p220, %s219, 7
          %s222 = smul.addr %s221, 4
          %s223 = scalar_lea.vmem %s0, %s222
          %s224 = smul.u32 4, %s19
        $region28: #{tpu_custom_call.1} parent=23 // pred_fallthru
          _
        // Predicated region
        $region29: #{tpu_custom_call.1} parent=23 // pred_check
          %p225 = pneg %p65
        $region30: #{tpu_custom_call.1} parent=23 // pred_check_branch
          %227 = sbr.rel (%p225) target = $region32
        $region31: #{tpu_custom_call.1} parent=23 // pred_region
          %s228 = sand.u32 %s55, 1
          %s229 = sand.u32 %s55, 1
          %s230 = smul.addr %s229, 80
          %s231 = scalar_lea.vmem [#allocation2], %s230
          %s232 = smul.u32 4, %s19
          %s233 = smul.addr %s232, 4
          %s234 = scalar_lea.vmem %s1, %s233
          // Predicated region
          $region33: #{tpu_custom_call.1} parent=31 // pred_check
            _
          $region34: #{tpu_custom_call.1} parent=31 // pred_check_branch
            %236 = sbr.rel (0) target = $region36
          $region35: #{tpu_custom_call.1} parent=31 // pred_region
            // Predicated region
            $region37: #{tpu_custom_call.1} parent=35 // pred_check
              _
            $region38: #{tpu_custom_call.1} parent=35 // pred_check_branch
              %238 = sbr.rel (0) target = $region40
            $region39: #{tpu_custom_call.1} parent=35 // pred_region
              loop: start=0, step=1, limit=1
              $region41: #{tpu_custom_call.1} parent=39 // loop_pre_header
                _
              $region42: #{tpu_custom_call.1} parent=39 // loop_header
                %s240 = sphi 0, %s244
                %p241 = scmp.ge.s32.totalorder %s240, 1
                %s245 = sphi %s234, %s234
                %s246 = sphi %s231, %s231
              $region43: #{tpu_custom_call.1} parent=39 // loop_header_branch
                %243 = sbr.rel (%p241) target = $region47
              $region44: #{tpu_custom_call.1} parent=39 // loop_body
                %v247 = vld [vmem:[%s245] sm:$0xff]
                %248 = vst [vmem:[%s246] sm:$0xff] %v247
                %v249 = vld [vmem:[%s245 + $0x8] sm:$0xff]
                %250 = vst [vmem:[%s246 + $0x8] sm:$0xff] %v249
                %v251 = vld [vmem:[%s245 + $0x20] sm:$0xff]
                %252 = vst [vmem:[%s246 + $0x10] sm:$0xff] %v251
                %v253 = vld [vmem:[%s245 + $0x28] sm:$0xff]
                %254 = vst [vmem:[%s246 + $0x18] sm:$0xff] %v253
                %v255 = vld [vmem:[%s245 + $0x40] sm:$0xff]
                %256 = vst [vmem:[%s246 + $0x20] sm:$0xff] %v255
                %v257 = vld [vmem:[%s245 + $0x48] sm:$0xff]
                %258 = vst [vmem:[%s246 + $0x28] sm:$0xff] %v257
                %v259 = vld [vmem:[%s245 + $0x60] sm:$0xff]
                %260 = vst [vmem:[%s246 + $0x30] sm:$0xff] %v259
                %v261 = vld [vmem:[%s245 + $0x68] sm:$0xff]
                %262 = vst [vmem:[%s246 + $0x38] sm:$0xff] %v261
                %v263 = vld [vmem:[%s245 + $0x80] sm:$0xff]
                %264 = vst [vmem:[%s246 + $0x40] sm:$0xff] %v263
                %v265 = vld [vmem:[%s245 + $0x88] sm:$0xff]
                %266 = vst [vmem:[%s246 + $0x48] sm:$0xff] %v265
              $region45: #{tpu_custom_call.1} parent=39 // loop_footer
                %s244 = sadd.s32 1, %s240
              $region46: #{tpu_custom_call.1} parent=39 // loop_footer_branch
                %239 = sbr.rel target = $region42
              $region47: #{tpu_custom_call.1} parent=39 // loop_exit
                _
            $region40: #{tpu_custom_call.1} parent=35 // pred_fallthru
              _
            // Predicated region
            $region48: #{tpu_custom_call.1} parent=35 // pred_check
              _
            $region49: #{tpu_custom_call.1} parent=35 // pred_check_branch
              %268 = sbr.rel target = $region51
            $region50: #{tpu_custom_call.1} parent=35 // pred_region
              _
            $region51: #{tpu_custom_call.1} parent=35 // pred_fallthru
              _
          $region36: #{tpu_custom_call.1} parent=31 // pred_fallthru
            _
          %269 = vnop
        $region32: #{tpu_custom_call.1} parent=23 // pred_fallthru
          _
      $region24: #{tpu_custom_call.1} parent=5 // pred_fallthru
        _
      %p270 = scmp.le.s32.totalorder 1, %s19
      %p271 = scmp.lt.s32.totalorder %s19, 3
      %p272 = pnand %p270, %p271
      %p273 = pneg %p272
      // Predicated region
      $region52: #{tpu_custom_call.1} parent=5 // pred_check
        _
      $region53: #{tpu_custom_call.1} parent=5 // pred_check_branch
        %275 = sbr.rel (%p272) target = $region55
      $region54: #{tpu_custom_call.1} parent=5 // pred_region
        %s276 = ssub.s32 %s19, 1
        %s277 = sand.u32 %s58, 1
        %s278 = sand.u32 %s58, 1
        %s279 = smul.addr %s278, 80
        %s280 = scalar_lea.vmem [#allocation2], %s279
        // Predicated region
        $region56: #{tpu_custom_call.1} parent=54 // pred_check
          %p281 = pneg %p71
        $region57: #{tpu_custom_call.1} parent=54 // pred_check_branch
          %283 = sbr.rel (%p281) target = $region59
        $region58: #{tpu_custom_call.1} parent=54 // pred_region
          _
        $region59: #{tpu_custom_call.1} parent=54 // pred_fallthru
          _
        %s284 = smul.u32 4, %s24
        %p285 = scmp.lt.s32.totalorder %s284, 7
        %s286 = scalar_select %p285, %s284, 7
        %s287 = smul.addr %s286, 4
        %s288 = scalar_lea.vmem %s0, %s287
        %p289 = pneg %p45
        %p290 = pneg %p42
        %s291 = sand.u32 %s58, 1
        %s292 = sand.u32 %s58, 1
        %s293 = smul.addr %s292, 80
        %s294 = scalar_lea.vmem [#allocation2], %s293
        %p295 = pneg %p71
        %p296 = pneg %p68
        %p297 = pneg %p92
        %p298 = pneg %p89
        %p299 = pneg %p113
        %p300 = pneg %p110
        %p301 = pneg %p139
        %p302 = pneg %p136
        %s303 = sand.u32 %s126, 1
        %s304 = scalar_lea.sflag [#allocation4], %s303
        %s305 = sand.u32 %s126, 1
        %s306 = smul.addr %s305, 16
        %s307 = scalar_lea.vmem [#allocation3], %s306
        %p308 = pneg %p165
        %p309 = pneg %p162
        %s310 = sand.u32 %s24, 1
        %s311 = scalar_lea.sflag [#allocation6], %s310
        %s312 = sand.u32 %s152, 1
        %s313 = smul.addr %s312, 16
        %s314 = scalar_lea.vmem [#allocation5], %s313
        %p315 = pneg %p191
        %p316 = pneg %p188
        %s317 = sand.u32 %s24, 1
        %s318 = scalar_lea.sflag [#allocation6], %s317
        %s319 = sand.u32 %s178, 1
        %s320 = scalar_lea.vmem [#allocation7], %s319
        %s321 = smul.u32 4, %s24
        %p322 = scmp.lt.s32.totalorder %s321, 7
        %s323 = scalar_select %p322, %s321, 7
        %s324 = smul.addr %s323, 4
        %s325 = scalar_lea.vmem %s0, %s324
        %s326 = smul.u32 4, %s24
        %s327 = smul.u32 4, %s24
        %s328 = smul.u32 4, %s24
        %s329 = smul.u32 4, %s24
        %v330 = vld [vmem:[%s325] sm:$0xff]
        %v331 = vld [vmem:[%s325 + $0x8] sm:$0xff]
        %v332 = vld [vmem:[%s280] sm:$0xff]
        %v333 = vld [vmem:[%s280 + $0x8] sm:$0xff]
        %v334 = vld [vmem:[%s280 + $0x10] sm:$0xff]
        %v335 = vld [vmem:[%s280 + $0x18] sm:$0xff]
        %v336 = vld [vmem:[%s280 + $0x20] sm:$0xff]
        %v337 = vld [vmem:[%s280 + $0x28] sm:$0xff]
        %v338 = vld [vmem:[%s280 + $0x30] sm:$0xff]
        %v339 = vld [vmem:[%s280 + $0x38] sm:$0xff]
        %v340 = vld [vmem:[%s280 + $0x40] sm:$0xff]
        %v341 = vld [vmem:[%s280 + $0x48] sm:$0xff]
        %v342 = vunpack.c.l.bf16 %v332
        %v343 = vunpack.c.h.bf16 %v332
        %v344 = vunpack.c.l.bf16 %v333
        %v345 = vunpack.c.h.bf16 %v333
        %v346 = vunpack.c.l.bf16 %v334
        %v347 = vunpack.c.h.bf16 %v334
        %v348 = vunpack.c.l.bf16 %v335
        %v349 = vunpack.c.h.bf16 %v335
        %v350 = vunpack.c.l.bf16 %v336
        %v351 = vunpack.c.h.bf16 %v336
        %v352 = vunpack.c.l.bf16 %v337
        %v353 = vunpack.c.h.bf16 %v337
        %v354 = vunpack.c.l.bf16 %v338
        %v355 = vunpack.c.h.bf16 %v338
        %v356 = vunpack.c.l.bf16 %v339
        %v357 = vunpack.c.h.bf16 %v339
        %v358 = vunpack.c.l.bf16 %v340
        %v359 = vunpack.c.h.bf16 %v340
        %v360 = vunpack.c.l.bf16 %v341
        %v361 = vunpack.c.h.bf16 %v341
        %v362 = vld [vmem:[%s2] sm:$0xff]
        %v363 = vld [vmem:[%s2 + $0x8] sm:$0xff]
        %v364 = vld [vmem:[%s2 + $0x10] sm:$0xff]
        %v365 = vld [vmem:[%s2 + $0x18] sm:$0xff]
        %v366 = vld [vmem:[%s2 + $0x20] sm:$0xff]
        %v367 = vld [vmem:[%s2 + $0x28] sm:$0xff]
        %v368 = vld [vmem:[%s2 + $0x30] sm:$0xff]
        %v369 = vld [vmem:[%s2 + $0x38] sm:$0xff]
        %v370 = vld [vmem:[%s2 + $0x40] sm:$0xff]
        %v371 = vld [vmem:[%s2 + $0x48] sm:$0xff]
        %vm372 = vcmask 326656
        %v374 = vsel %vm372, %v362, 0
        %v377 = vsel %vm372, %v363, 0
        %v380 = vsel %vm372, %v364, 0
        %v383 = vsel %vm372, %v365, 0
        %v386 = vsel %vm372, %v366, 0
        %v389 = vsel %vm372, %v367, 0
        %v392 = vsel %vm372, %v368, 0
        %v395 = vsel %vm372, %v369, 0
        %v398 = vsel %vm372, %v370, 0
        %v401 = vsel %vm372, %v371, 0
        %403 = vmatpush.msra.mxu0 0.0
        %404 = vmatpush.msra.mxu0 0.0
        %405 = vmatpush.msra.mxu0 0.0
        %406 = vmatpush.msra.mxu0 0.0
        %407 = vmatpush.msra.mxu0 0.0
        %408 = vmatpush.msra.mxu0 0.0
        %409 = vmatpush.msra.mxu0 0.0
        %410 = vmatpush.msra.mxu0 0.0
        %411 = vmatpush.msra.mxu0 0.0
        %412 = vmatpush.msra.mxu0 0.0
        %413 = vmatpush.msra.mxu0 0.0
        %414 = vmatpush.msra.mxu0 %v358
        %415 = vmatpush.msra.mxu0 %v354
        %416 = vmatpush.msra.mxu0 %v350
        %417 = vmatpush.msra.mxu0 %v346
        %418 = vmatpush.msra.mxu0 %v342
        %v419 = vand.u32 %v374, 4294901760
        %v420 = vsub.f32 %v374, %v419
        %v421 = vand.u32 %v420, 4294901760
        %v422 = vsub.f32 %v420, %v421
        %v423 = vand.u32 %v422, 4294901760
        %424 = vmatmul.f32.gmra.mxu0 %v423
        %v425 = vpop.f32.mrf.mxu0
        %v426 = vadd.f32 0.0, %v425
        %v427 = vand.u32 %v377, 4294901760
        %v428 = vsub.f32 %v377, %v427
        %v429 = vand.u32 %v428, 4294901760
        %v430 = vsub.f32 %v428, %v429
        %v431 = vand.u32 %v430, 4294901760
        %432 = vmatmul.f32.gmra.mxu0 %v431
        %v433 = vpop.f32.mrf.mxu0
        %v434 = vadd.f32 0.0, %v433
        %v435 = vand.u32 %v380, 4294901760
        %v436 = vsub.f32 %v380, %v435
        %v437 = vand.u32 %v436, 4294901760
        %v438 = vsub.f32 %v436, %v437
        %v439 = vand.u32 %v438, 4294901760
        %440 = vmatmul.f32.gmra.mxu0 %v439
        %v441 = vpop.f32.mrf.mxu0
        %v442 = vadd.f32 0.0, %v441
        %v443 = vand.u32 %v383, 4294901760
        %v444 = vsub.f32 %v383, %v443
        %v445 = vand.u32 %v444, 4294901760
        %v446 = vsub.f32 %v444, %v445
        %v447 = vand.u32 %v446, 4294901760
        %448 = vmatmul.f32.gmra.mxu0 %v447
        %v449 = vpop.f32.mrf.mxu0
        %v450 = vadd.f32 0.0, %v449
        %v451 = vand.u32 %v386, 4294901760
        %v452 = vsub.f32 %v386, %v451
        %v453 = vand.u32 %v452, 4294901760
        %v454 = vsub.f32 %v452, %v453
        %v455 = vand.u32 %v454, 4294901760
        %456 = vmatmul.f32.gmra.mxu0 %v455
        %v457 = vpop.f32.mrf.mxu0
        %v458 = vadd.f32 0.0, %v457
        %v459 = vand.u32 %v389, 4294901760
        %v460 = vsub.f32 %v389, %v459
        %v461 = vand.u32 %v460, 4294901760
        %v462 = vsub.f32 %v460, %v461
        %v463 = vand.u32 %v462, 4294901760
        %464 = vmatmul.f32.gmra.mxu0 %v463
        %v465 = vpop.f32.mrf.mxu0
        %v466 = vadd.f32 0.0, %v465
        %v467 = vand.u32 %v392, 4294901760
        %v468 = vsub.f32 %v392, %v467
        %v469 = vand.u32 %v468, 4294901760
        %v470 = vsub.f32 %v468, %v469
        %v471 = vand.u32 %v470, 4294901760
        %472 = vmatmul.f32.gmra.mxu0 %v471
        %v473 = vpop.f32.mrf.mxu0
        %v474 = vadd.f32 0.0, %v473
        %v475 = vand.u32 %v395, 4294901760
        %v476 = vsub.f32 %v395, %v475
        %v477 = vand.u32 %v476, 4294901760
        %v478 = vsub.f32 %v476, %v477
        %v479 = vand.u32 %v478, 4294901760
        %480 = vmatmul.f32.gmra.mxu0 %v479
        %v481 = vpop.f32.mrf.mxu0
        %v482 = vadd.f32 0.0, %v481
        %v483 = vand.u32 %v398, 4294901760
        %v484 = vsub.f32 %v398, %v483
        %v485 = vand.u32 %v484, 4294901760
        %v486 = vsub.f32 %v484, %v485
        %v487 = vand.u32 %v486, 4294901760
        %488 = vmatmul.f32.gmra.mxu0 %v487
        %v489 = vpop.f32.mrf.mxu0
        %v490 = vadd.f32 0.0, %v489
        %v491 = vand.u32 %v401, 4294901760
        %v492 = vsub.f32 %v401, %v491
        %v493 = vand.u32 %v492, 4294901760
        %v494 = vsub.f32 %v492, %v493
        %v495 = vand.u32 %v494, 4294901760
        %496 = vmatmul.f32.gmra.mxu0 %v495
        %v497 = vpop.f32.mrf.mxu0
        %v498 = vadd.f32 0.0, %v497
        %499 = vdwg.mxu0
        %500 = vmatpush.msra.mxu0 0.0
        %501 = vmatpush.msra.mxu0 0.0
        %502 = vmatpush.msra.mxu0 0.0
        %503 = vmatpush.msra.mxu0 0.0
        %504 = vmatpush.msra.mxu0 0.0
        %505 = vmatpush.msra.mxu0 0.0
        %506 = vmatpush.msra.mxu0 0.0
        %507 = vmatpush.msra.mxu0 0.0
        %508 = vmatpush.msra.mxu0 0.0
        %509 = vmatpush.msra.mxu0 0.0
        %510 = vmatpush.msra.mxu0 0.0
        %v511 = vsub.f32 %v358, %v358
        %v512 = vand.u32 %v511, 4294901760
        %v513 = vsub.f32 %v511, %v512
        %v514 = vand.u32 %v513, 4294901760
        %515 = vmatpush.msra.mxu0 %v514
        %v516 = vsub.f32 %v354, %v354
        %v517 = vand.u32 %v516, 4294901760
        %v518 = vsub.f32 %v516, %v517
        %v519 = vand.u32 %v518, 4294901760
        %520 = vmatpush.msra.mxu0 %v519
        %v521 = vsub.f32 %v350, %v350
        %v522 = vand.u32 %v521, 4294901760
        %v523 = vsub.f32 %v521, %v522
        %v524 = vand.u32 %v523, 4294901760
        %525 = vmatpush.msra.mxu0 %v524
        %v526 = vsub.f32 %v346, %v346
        %v527 = vand.u32 %v526, 4294901760
        %v528 = vsub.f32 %v526, %v527
        %v529 = vand.u32 %v528, 4294901760
        %530 = vmatpush.msra.mxu0 %v529
        %v531 = vsub.f32 %v342, %v342
        %v532 = vand.u32 %v531, 4294901760
        %v533 = vsub.f32 %v531, %v532
        %v534 = vand.u32 %v533, 4294901760
        %535 = vmatpush.msra.mxu0 %v534
        %v536 = vand.u32 %v374, 4294901760
        %537 = vmatmul.f32.gmra.mxu0 %v536
        %v538 = vpop.f32.mrf.mxu0
        %v539 = vadd.f32 %v426, %v538
        %v540 = vand.u32 %v377, 4294901760
        %541 = vmatmul.f32.gmra.mxu0 %v540
        %v542 = vpop.f32.mrf.mxu0
        %v543 = vadd.f32 %v434, %v542
        %v544 = vand.u32 %v380, 4294901760
        %545 = vmatmul.f32.gmra.mxu0 %v544
        %v546 = vpop.f32.mrf.mxu0
        %v547 = vadd.f32 %v442, %v546
        %v548 = vand.u32 %v383, 4294901760
        %549 = vmatmul.f32.gmra.mxu0 %v548
        %v550 = vpop.f32.mrf.mxu0
        %v551 = vadd.f32 %v450, %v550
        %v552 = vand.u32 %v386, 4294901760
        %553 = vmatmul.f32.gmra.mxu0 %v552
        %v554 = vpop.f32.mrf.mxu0
        %v555 = vadd.f32 %v458, %v554
        %v556 = vand.u32 %v389, 4294901760
        %557 = vmatmul.f32.gmra.mxu0 %v556
        %v558 = vpop.f32.mrf.mxu0
        %v559 = vadd.f32 %v466, %v558
        %v560 = vand.u32 %v392, 4294901760
        %561 = vmatmul.f32.gmra.mxu0 %v560
        %v562 = vpop.f32.mrf.mxu0
        %v563 = vadd.f32 %v474, %v562
        %v564 = vand.u32 %v395, 4294901760
        %565 = vmatmul.f32.gmra.mxu0 %v564
        %v566 = vpop.f32.mrf.mxu0
        %v567 = vadd.f32 %v482, %v566
        %v568 = vand.u32 %v398, 4294901760
        %569 = vmatmul.f32.gmra.mxu0 %v568
        %v570 = vpop.f32.mrf.mxu0
        %v571 = vadd.f32 %v490, %v570
        %v572 = vand.u32 %v401, 4294901760
        %573 = vmatmul.f32.gmra.mxu0 %v572
        %v574 = vpop.f32.mrf.mxu0
        %v575 = vadd.f32 %v498, %v574
        %576 = vdwg.mxu0
        %577 = vmatpush.msra.mxu0 0.0
        %578 = vmatpush.msra.mxu0 0.0
        %579 = vmatpush.msra.mxu0 0.0
        %580 = vmatpush.msra.mxu0 0.0
        %581 = vmatpush.msra.mxu0 0.0
        %582 = vmatpush.msra.mxu0 0.0
        %583 = vmatpush.msra.mxu0 0.0
        %584 = vmatpush.msra.mxu0 0.0
        %585 = vmatpush.msra.mxu0 0.0
        %586 = vmatpush.msra.mxu0 0.0
        %587 = vmatpush.msra.mxu0 0.0
        %v588 = vsub.f32 %v358, %v358
        %589 = vmatpush.msra.mxu0 %v588
        %v590 = vsub.f32 %v354, %v354
        %591 = vmatpush.msra.mxu0 %v590
        %v592 = vsub.f32 %v350, %v350
        %593 = vmatpush.msra.mxu0 %v592
        %v594 = vsub.f32 %v346, %v346
        %595 = vmatpush.msra.mxu0 %v594
        %v596 = vsub.f32 %v342, %v342
        %597 = vmatpush.msra.mxu0 %v596
        %v598 = vand.u32 %v374, 4294901760
        %v599 = vsub.f32 %v374, %v598
        %600 = vmatmul.f32.gmra.mxu0 %v599
        %v601 = vpop.f32.mrf.mxu0
        %v602 = vadd.f32 %v539, %v601
        %v603 = vand.u32 %v377, 4294901760
        %v604 = vsub.f32 %v377, %v603
        %605 = vmatmul.f32.gmra.mxu0 %v604
        %v606 = vpop.f32.mrf.mxu0
        %v607 = vadd.f32 %v543, %v606
        %v608 = vand.u32 %v380, 4294901760
        %v609 = vsub.f32 %v380, %v608
        %610 = vmatmul.f32.gmra.mxu0 %v609
        %v611 = vpop.f32.mrf.mxu0
        %v612 = vadd.f32 %v547, %v611
        %v613 = vand.u32 %v383, 4294901760
        %v614 = vsub.f32 %v383, %v613
        %615 = vmatmul.f32.gmra.mxu0 %v614
        %v616 = vpop.f32.mrf.mxu0
        %v617 = vadd.f32 %v551, %v616
        %v618 = vand.u32 %v386, 4294901760
        %v619 = vsub.f32 %v386, %v618
        %620 = vmatmul.f32.gmra.mxu0 %v619
        %v621 = vpop.f32.mrf.mxu0
        %v622 = vadd.f32 %v555, %v621
        %v623 = vand.u32 %v389, 4294901760
        %v624 = vsub.f32 %v389, %v623
        %625 = vmatmul.f32.gmra.mxu0 %v624
        %v626 = vpop.f32.mrf.mxu0
        %v627 = vadd.f32 %v559, %v626
        %v628 = vand.u32 %v392, 4294901760
        %v629 = vsub.f32 %v392, %v628
        %630 = vmatmul.f32.gmra.mxu0 %v629
        %v631 = vpop.f32.mrf.mxu0
        %v632 = vadd.f32 %v563, %v631
        %v633 = vand.u32 %v395, 4294901760
        %v634 = vsub.f32 %v395, %v633
        %635 = vmatmul.f32.gmra.mxu0 %v634
        %v636 = vpop.f32.mrf.mxu0
        %v637 = vadd.f32 %v567, %v636
        %v638 = vand.u32 %v398, 4294901760
        %v639 = vsub.f32 %v398, %v638
        %640 = vmatmul.f32.gmra.mxu0 %v639
        %v641 = vpop.f32.mrf.mxu0
        %v642 = vadd.f32 %v571, %v641
        %v643 = vand.u32 %v401, 4294901760
        %v644 = vsub.f32 %v401, %v643
        %645 = vmatmul.f32.gmra.mxu0 %v644
        %v646 = vpop.f32.mrf.mxu0
        %v647 = vadd.f32 %v575, %v646
        %648 = vdwg.mxu0
        %649 = vmatpush.msra.mxu0 0.0
        %650 = vmatpush.msra.mxu0 0.0
        %651 = vmatpush.msra.mxu0 0.0
        %652 = vmatpush.msra.mxu0 0.0
        %653 = vmatpush.msra.mxu0 0.0
        %654 = vmatpush.msra.mxu0 0.0
        %655 = vmatpush.msra.mxu0 0.0
        %656 = vmatpush.msra.mxu0 0.0
        %657 = vmatpush.msra.mxu0 0.0
        %658 = vmatpush.msra.mxu0 0.0
        %659 = vmatpush.msra.mxu0 0.0
        %660 = vmatpush.msra.mxu0 %v358
        %661 = vmatpush.msra.mxu0 %v354
        %662 = vmatpush.msra.mxu0 %v350
        %663 = vmatpush.msra.mxu0 %v346
        %664 = vmatpush.msra.mxu0 %v342
        %v665 = vand.u32 %v374, 4294901760
        %v666 = vsub.f32 %v374, %v665
        %v667 = vand.u32 %v666, 4294901760
        %668 = vmatmul.f32.gmra.mxu0 %v667
        %v669 = vpop.f32.mrf.mxu0
        %v670 = vadd.f32 %v602, %v669
        %v671 = vand.u32 %v377, 4294901760
        %v672 = vsub.f32 %v377, %v671
        %v673 = vand.u32 %v672, 4294901760
        %674 = vmatmul.f32.gmra.mxu0 %v673
        %v675 = vpop.f32.mrf.mxu0
        %v676 = vadd.f32 %v607, %v675
        %v677 = vand.u32 %v380, 4294901760
        %v678 = vsub.f32 %v380, %v677
        %v679 = vand.u32 %v678, 4294901760
        %680 = vmatmul.f32.gmra.mxu0 %v679
        %v681 = vpop.f32.mrf.mxu0
        %v682 = vadd.f32 %v612, %v681
        %v683 = vand.u32 %v383, 4294901760
        %v684 = vsub.f32 %v383, %v683
        %v685 = vand.u32 %v684, 4294901760
        %686 = vmatmul.f32.gmra.mxu0 %v685
        %v687 = vpop.f32.mrf.mxu0
        %v688 = vadd.f32 %v617, %v687
        %v689 = vand.u32 %v386, 4294901760
        %v690 = vsub.f32 %v386, %v689
        %v691 = vand.u32 %v690, 4294901760
        %692 = vmatmul.f32.gmra.mxu0 %v691
        %v693 = vpop.f32.mrf.mxu0
        %v694 = vadd.f32 %v622, %v693
        %v695 = vand.u32 %v389, 4294901760
        %v696 = vsub.f32 %v389, %v695
        %v697 = vand.u32 %v696, 4294901760
        %698 = vmatmul.f32.gmra.mxu0 %v697
        %v699 = vpop.f32.mrf.mxu0
        %v700 = vadd.f32 %v627, %v699
        %v701 = vand.u32 %v392, 4294901760
        %v702 = vsub.f32 %v392, %v701
        %v703 = vand.u32 %v702, 4294901760
        %704 = vmatmul.f32.gmra.mxu0 %v703
        %v705 = vpop.f32.mrf.mxu0
        %v706 = vadd.f32 %v632, %v705
        %v707 = vand.u32 %v395, 4294901760
        %v708 = vsub.f32 %v395, %v707
        %v709 = vand.u32 %v708, 4294901760
        %710 = vmatmul.f32.gmra.mxu0 %v709
        %v711 = vpop.f32.mrf.mxu0
        %v712 = vadd.f32 %v637, %v711
        %v713 = vand.u32 %v398, 4294901760
        %v714 = vsub.f32 %v398, %v713
        %v715 = vand.u32 %v714, 4294901760
        %716 = vmatmul.f32.gmra.mxu0 %v715
        %v717 = vpop.f32.mrf.mxu0
        %v718 = vadd.f32 %v642, %v717
        %v719 = vand.u32 %v401, 4294901760
        %v720 = vsub.f32 %v401, %v719
        %v721 = vand.u32 %v720, 4294901760
        %722 = vmatmul.f32.gmra.mxu0 %v721
        %v723 = vpop.f32.mrf.mxu0
        %v724 = vadd.f32 %v647, %v723
        %725 = vdwg.mxu0
        %726 = vmatpush.msra.mxu0 0.0
        %727 = vmatpush.msra.mxu0 0.0
        %728 = vmatpush.msra.mxu0 0.0
        %729 = vmatpush.msra.mxu0 0.0
        %730 = vmatpush.msra.mxu0 0.0
        %731 = vmatpush.msra.mxu0 0.0
        %732 = vmatpush.msra.mxu0 0.0
        %733 = vmatpush.msra.mxu0 0.0
        %734 = vmatpush.msra.mxu0 0.0
        %735 = vmatpush.msra.mxu0 0.0
        %736 = vmatpush.msra.mxu0 0.0
        %v737 = vsub.f32 %v358, %v358
        %v738 = vand.u32 %v737, 4294901760
        %739 = vmatpush.msra.mxu0 %v738
        %v740 = vsub.f32 %v354, %v354
        %v741 = vand.u32 %v740, 4294901760
        %742 = vmatpush.msra.mxu0 %v741
        %v743 = vsub.f32 %v350, %v350
        %v744 = vand.u32 %v743, 4294901760
        %745 = vmatpush.msra.mxu0 %v744
        %v746 = vsub.f32 %v346, %v346
        %v747 = vand.u32 %v746, 4294901760
        %748 = vmatpush.msra.mxu0 %v747
        %v749 = vsub.f32 %v342, %v342
        %v750 = vand.u32 %v749, 4294901760
        %751 = vmatpush.msra.mxu0 %v750
        %v752 = vand.u32 %v374, 4294901760
        %753 = vmatmul.f32.gmra.mxu0 %v752
        %v754 = vpop.f32.mrf.mxu0
        %v755 = vadd.f32 %v670, %v754
        %v756 = vand.u32 %v377, 4294901760
        %757 = vmatmul.f32.gmra.mxu0 %v756
        %v758 = vpop.f32.mrf.mxu0
        %v759 = vadd.f32 %v676, %v758
        %v760 = vand.u32 %v380, 4294901760
        %761 = vmatmul.f32.gmra.mxu0 %v760
        %v762 = vpop.f32.mrf.mxu0
        %v763 = vadd.f32 %v682, %v762
        %v764 = vand.u32 %v383, 4294901760
        %765 = vmatmul.f32.gmra.mxu0 %v764
        %v766 = vpop.f32.mrf.mxu0
        %v767 = vadd.f32 %v688, %v766
        %v768 = vand.u32 %v386, 4294901760
        %769 = vmatmul.f32.gmra.mxu0 %v768
        %v770 = vpop.f32.mrf.mxu0
        %v771 = vadd.f32 %v694, %v770
        %v772 = vand.u32 %v389, 4294901760
        %773 = vmatmul.f32.gmra.mxu0 %v772
        %v774 = vpop.f32.mrf.mxu0
        %v775 = vadd.f32 %v700, %v774
        %v776 = vand.u32 %v392, 4294901760
        %777 = vmatmul.f32.gmra.mxu0 %v776
        %v778 = vpop.f32.mrf.mxu0
        %v779 = vadd.f32 %v706, %v778
        %v780 = vand.u32 %v395, 4294901760
        %781 = vmatmul.f32.gmra.mxu0 %v780
        %v782 = vpop.f32.mrf.mxu0
        %v783 = vadd.f32 %v712, %v782
        %v784 = vand.u32 %v398, 4294901760
        %785 = vmatmul.f32.gmra.mxu0 %v784
        %v786 = vpop.f32.mrf.mxu0
        %v787 = vadd.f32 %v718, %v786
        %v788 = vand.u32 %v401, 4294901760
        %789 = vmatmul.f32.gmra.mxu0 %v788
        %v790 = vpop.f32.mrf.mxu0
        %v791 = vadd.f32 %v724, %v790
        %792 = vdwg.mxu0
        %793 = vmatpush.msra.mxu0 0.0
        %794 = vmatpush.msra.mxu0 0.0
        %795 = vmatpush.msra.mxu0 0.0
        %796 = vmatpush.msra.mxu0 0.0
        %797 = vmatpush.msra.mxu0 0.0
        %798 = vmatpush.msra.mxu0 0.0
        %799 = vmatpush.msra.mxu0 0.0
        %800 = vmatpush.msra.mxu0 0.0
        %801 = vmatpush.msra.mxu0 0.0
        %802 = vmatpush.msra.mxu0 0.0
        %803 = vmatpush.msra.mxu0 0.0
        %804 = vmatpush.msra.mxu0 %v358
        %805 = vmatpush.msra.mxu0 %v354
        %806 = vmatpush.msra.mxu0 %v350
        %807 = vmatpush.msra.mxu0 %v346
        %808 = vmatpush.msra.mxu0 %v342
        %v809 = vand.u32 %v374, 4294901760
        %810 = vmatmul.f32.gmra.mxu0 %v809
        %v811 = vpop.f32.mrf.mxu0
        %v812 = vadd.f32 %v755, %v811
        %v813 = vand.u32 %v377, 4294901760
        %814 = vmatmul.f32.gmra.mxu0 %v813
        %v815 = vpop.f32.mrf.mxu0
        %v816 = vadd.f32 %v759, %v815
        %v817 = vand.u32 %v380, 4294901760
        %818 = vmatmul.f32.gmra.mxu0 %v817
        %v819 = vpop.f32.mrf.mxu0
        %v820 = vadd.f32 %v763, %v819
        %v821 = vand.u32 %v383, 4294901760
        %822 = vmatmul.f32.gmra.mxu0 %v821
        %v823 = vpop.f32.mrf.mxu0
        %v824 = vadd.f32 %v767, %v823
        %v825 = vand.u32 %v386, 4294901760
        %826 = vmatmul.f32.gmra.mxu0 %v825
        %v827 = vpop.f32.mrf.mxu0
        %v828 = vadd.f32 %v771, %v827
        %v829 = vand.u32 %v389, 4294901760
        %830 = vmatmul.f32.gmra.mxu0 %v829
        %v831 = vpop.f32.mrf.mxu0
        %v832 = vadd.f32 %v775, %v831
        %v833 = vand.u32 %v392, 4294901760
        %834 = vmatmul.f32.gmra.mxu0 %v833
        %v835 = vpop.f32.mrf.mxu0
        %v836 = vadd.f32 %v779, %v835
        %v837 = vand.u32 %v395, 4294901760
        %838 = vmatmul.f32.gmra.mxu0 %v837
        %v839 = vpop.f32.mrf.mxu0
        %v840 = vadd.f32 %v783, %v839
        %v841 = vand.u32 %v398, 4294901760
        %842 = vmatmul.f32.gmra.mxu0 %v841
        %v843 = vpop.f32.mrf.mxu0
        %v844 = vadd.f32 %v787, %v843
        %v845 = vand.u32 %v401, 4294901760
        %846 = vmatmul.f32.gmra.mxu0 %v845
        %v847 = vpop.f32.mrf.mxu0
        %v848 = vadd.f32 %v791, %v847
        %849 = vdwg.mxu0
        %850 = vmatpush.msra.mxu0 0.0
        %851 = vmatpush.msra.mxu0 0.0
        %852 = vmatpush.msra.mxu0 0.0
        %853 = vmatpush.msra.mxu0 0.0
        %854 = vmatpush.msra.mxu0 0.0
        %855 = vmatpush.msra.mxu0 0.0
        %856 = vmatpush.msra.mxu0 0.0
        %857 = vmatpush.msra.mxu0 0.0
        %858 = vmatpush.msra.mxu0 0.0
        %859 = vmatpush.msra.mxu0 0.0
        %860 = vmatpush.msra.mxu0 0.0
        %861 = vmatpush.msra.mxu0 %v359
        %862 = vmatpush.msra.mxu0 %v355
        %863 = vmatpush.msra.mxu0 %v351
        %864 = vmatpush.msra.mxu0 %v347
        %865 = vmatpush.msra.mxu0 %v343
        %v866 = vand.u32 %v374, 4294901760
        %v867 = vsub.f32 %v374, %v866
        %v868 = vand.u32 %v867, 4294901760
        %v869 = vsub.f32 %v867, %v868
        %v870 = vand.u32 %v869, 4294901760
        %871 = vmatmul.f32.gmra.mxu0 %v870
        %v872 = vpop.f32.mrf.mxu0
        %v873 = vadd.f32 0.0, %v872
        %v874 = vand.u32 %v377, 4294901760
        %v875 = vsub.f32 %v377, %v874
        %v876 = vand.u32 %v875, 4294901760
        %v877 = vsub.f32 %v875, %v876
        %v878 = vand.u32 %v877, 4294901760
        %879 = vmatmul.f32.gmra.mxu0 %v878
        %v880 = vpop.f32.mrf.mxu0
        %v881 = vadd.f32 0.0, %v880
        %v882 = vand.u32 %v380, 4294901760
        %v883 = vsub.f32 %v380, %v882
        %v884 = vand.u32 %v883, 4294901760
        %v885 = vsub.f32 %v883, %v884
        %v886 = vand.u32 %v885, 4294901760
        %887 = vmatmul.f32.gmra.mxu0 %v886
        %v888 = vpop.f32.mrf.mxu0
        %v889 = vadd.f32 0.0, %v888
        %v890 = vand.u32 %v383, 4294901760
        %v891 = vsub.f32 %v383, %v890
        %v892 = vand.u32 %v891, 4294901760
        %v893 = vsub.f32 %v891, %v892
        %v894 = vand.u32 %v893, 4294901760
        %895 = vmatmul.f32.gmra.mxu0 %v894
        %v896 = vpop.f32.mrf.mxu0
        %v897 = vadd.f32 0.0, %v896
        %v898 = vand.u32 %v386, 4294901760
        %v899 = vsub.f32 %v386, %v898
        %v900 = vand.u32 %v899, 4294901760
        %v901 = vsub.f32 %v899, %v900
        %v902 = vand.u32 %v901, 4294901760
        %903 = vmatmul.f32.gmra.mxu0 %v902
        %v904 = vpop.f32.mrf.mxu0
        %v905 = vadd.f32 0.0, %v904
        %v906 = vand.u32 %v389, 4294901760
        %v907 = vsub.f32 %v389, %v906
        %v908 = vand.u32 %v907, 4294901760
        %v909 = vsub.f32 %v907, %v908
        %v910 = vand.u32 %v909, 4294901760
        %911 = vmatmul.f32.gmra.mxu0 %v910
        %v912 = vpop.f32.mrf.mxu0
        %v913 = vadd.f32 0.0, %v912
        %v914 = vand.u32 %v392, 4294901760
        %v915 = vsub.f32 %v392, %v914
        %v916 = vand.u32 %v915, 4294901760
        %v917 = vsub.f32 %v915, %v916
        %v918 = vand.u32 %v917, 4294901760
        %919 = vmatmul.f32.gmra.mxu0 %v918
        %v920 = vpop.f32.mrf.mxu0
        %v921 = vadd.f32 0.0, %v920
        %v922 = vand.u32 %v395, 4294901760
        %v923 = vsub.f32 %v395, %v922
        %v924 = vand.u32 %v923, 4294901760
        %v925 = vsub.f32 %v923, %v924
        %v926 = vand.u32 %v925, 4294901760
        %927 = vmatmul.f32.gmra.mxu0 %v926
        %v928 = vpop.f32.mrf.mxu0
        %v929 = vadd.f32 0.0, %v928
        %v930 = vand.u32 %v398, 4294901760
        %v931 = vsub.f32 %v398, %v930
        %v932 = vand.u32 %v931, 4294901760
        %v933 = vsub.f32 %v931, %v932
        %v934 = vand.u32 %v933, 4294901760
        %935 = vmatmul.f32.gmra.mxu0 %v934
        %v936 = vpop.f32.mrf.mxu0
        %v937 = vadd.f32 0.0, %v936
        %v938 = vand.u32 %v401, 4294901760
        %v939 = vsub.f32 %v401, %v938
        %v940 = vand.u32 %v939, 4294901760
        %v941 = vsub.f32 %v939, %v940
        %v942 = vand.u32 %v941, 4294901760
        %943 = vmatmul.f32.gmra.mxu0 %v942
        %v944 = vpop.f32.mrf.mxu0
        %v945 = vadd.f32 0.0, %v944
        %946 = vdwg.mxu0
        %947 = vmatpush.msra.mxu0 0.0
        %948 = vmatpush.msra.mxu0 0.0
        %949 = vmatpush.msra.mxu0 0.0
        %950 = vmatpush.msra.mxu0 0.0
        %951 = vmatpush.msra.mxu0 0.0
        %952 = vmatpush.msra.mxu0 0.0
        %953 = vmatpush.msra.mxu0 0.0
        %954 = vmatpush.msra.mxu0 0.0
        %955 = vmatpush.msra.mxu0 0.0
        %956 = vmatpush.msra.mxu0 0.0
        %957 = vmatpush.msra.mxu0 0.0
        %v958 = vsub.f32 %v359, %v359
        %v959 = vand.u32 %v958, 4294901760
        %v960 = vsub.f32 %v958, %v959
        %v961 = vand.u32 %v960, 4294901760
        %962 = vmatpush.msra.mxu0 %v961
        %v963 = vsub.f32 %v355, %v355
        %v964 = vand.u32 %v963, 4294901760
        %v965 = vsub.f32 %v963, %v964
        %v966 = vand.u32 %v965, 4294901760
        %967 = vmatpush.msra.mxu0 %v966
        %v968 = vsub.f32 %v351, %v351
        %v969 = vand.u32 %v968, 4294901760
        %v970 = vsub.f32 %v968, %v969
        %v971 = vand.u32 %v970, 4294901760
        %972 = vmatpush.msra.mxu0 %v971
        %v973 = vsub.f32 %v347, %v347
        %v974 = vand.u32 %v973, 4294901760
        %v975 = vsub.f32 %v973, %v974
        %v976 = vand.u32 %v975, 4294901760
        %977 = vmatpush.msra.mxu0 %v976
        %v978 = vsub.f32 %v343, %v343
        %v979 = vand.u32 %v978, 4294901760
        %v980 = vsub.f32 %v978, %v979
        %v981 = vand.u32 %v980, 4294901760
        %982 = vmatpush.msra.mxu0 %v981
        %v983 = vand.u32 %v374, 4294901760
        %984 = vmatmul.f32.gmra.mxu0 %v983
        %v985 = vpop.f32.mrf.mxu0
        %v986 = vadd.f32 %v873, %v985
        %v987 = vand.u32 %v377, 4294901760
        %988 = vmatmul.f32.gmra.mxu0 %v987
        %v989 = vpop.f32.mrf.mxu0
        %v990 = vadd.f32 %v881, %v989
        %v991 = vand.u32 %v380, 4294901760
        %992 = vmatmul.f32.gmra.mxu0 %v991
        %v993 = vpop.f32.mrf.mxu0
        %v994 = vadd.f32 %v889, %v993
        %v995 = vand.u32 %v383, 4294901760
        %996 = vmatmul.f32.gmra.mxu0 %v995
        %v997 = vpop.f32.mrf.mxu0
        %v998 = vadd.f32 %v897, %v997
        %v999 = vand.u32 %v386, 4294901760
        %1000 = vmatmul.f32.gmra.mxu0 %v999
        %v1001 = vpop.f32.mrf.mxu0
        %v1002 = vadd.f32 %v905, %v1001
        %v1003 = vand.u32 %v389, 4294901760
        %1004 = vmatmul.f32.gmra.mxu0 %v1003
        %v1005 = vpop.f32.mrf.mxu0
        %v1006 = vadd.f32 %v913, %v1005
        %v1007 = vand.u32 %v392, 4294901760
        %1008 = vmatmul.f32.gmra.mxu0 %v1007
        %v1009 = vpop.f32.mrf.mxu0
        %v1010 = vadd.f32 %v921, %v1009
        %v1011 = vand.u32 %v395, 4294901760
        %1012 = vmatmul.f32.gmra.mxu0 %v1011
        %v1013 = vpop.f32.mrf.mxu0
        %v1014 = vadd.f32 %v929, %v1013
        %v1015 = vand.u32 %v398, 4294901760
        %1016 = vmatmul.f32.gmra.mxu0 %v1015
        %v1017 = vpop.f32.mrf.mxu0
        %v1018 = vadd.f32 %v937, %v1017
        %v1019 = vand.u32 %v401, 4294901760
        %1020 = vmatmul.f32.gmra.mxu0 %v1019
        %v1021 = vpop.f32.mrf.mxu0
        %v1022 = vadd.f32 %v945, %v1021
        %1023 = vdwg.mxu0
        %1024 = vmatpush.msra.mxu0 0.0
        %1025 = vmatpush.msra.mxu0 0.0
        %1026 = vmatpush.msra.mxu0 0.0
        %1027 = vmatpush.msra.mxu0 0.0
        %1028 = vmatpush.msra.mxu0 0.0
        %1029 = vmatpush.msra.mxu0 0.0
        %1030 = vmatpush.msra.mxu0 0.0
        %1031 = vmatpush.msra.mxu0 0.0
        %1032 = vmatpush.msra.mxu0 0.0
        %1033 = vmatpush.msra.mxu0 0.0
        %1034 = vmatpush.msra.mxu0 0.0
        %v1035 = vsub.f32 %v359, %v359
        %1036 = vmatpush.msra.mxu0 %v1035
        %v1037 = vsub.f32 %v355, %v355
        %1038 = vmatpush.msra.mxu0 %v1037
        %v1039 = vsub.f32 %v351, %v351
        %1040 = vmatpush.msra.mxu0 %v1039
        %v1041 = vsub.f32 %v347, %v347
        %1042 = vmatpush.msra.mxu0 %v1041
        %v1043 = vsub.f32 %v343, %v343
        %1044 = vmatpush.msra.mxu0 %v1043
        %v1045 = vand.u32 %v374, 4294901760
        %v1046 = vsub.f32 %v374, %v1045
        %1047 = vmatmul.f32.gmra.mxu0 %v1046
        %v1048 = vpop.f32.mrf.mxu0
        %v1049 = vadd.f32 %v986, %v1048
        %v1050 = vand.u32 %v377, 4294901760
        %v1051 = vsub.f32 %v377, %v1050
        %1052 = vmatmul.f32.gmra.mxu0 %v1051
        %v1053 = vpop.f32.mrf.mxu0
        %v1054 = vadd.f32 %v990, %v1053
        %v1055 = vand.u32 %v380, 4294901760
        %v1056 = vsub.f32 %v380, %v1055
        %1057 = vmatmul.f32.gmra.mxu0 %v1056
        %v1058 = vpop.f32.mrf.mxu0
        %v1059 = vadd.f32 %v994, %v1058
        %v1060 = vand.u32 %v383, 4294901760
        %v1061 = vsub.f32 %v383, %v1060
        %1062 = vmatmul.f32.gmra.mxu0 %v1061
        %v1063 = vpop.f32.mrf.mxu0
        %v1064 = vadd.f32 %v998, %v1063
        %v1065 = vand.u32 %v386, 4294901760
        %v1066 = vsub.f32 %v386, %v1065
        %1067 = vmatmul.f32.gmra.mxu0 %v1066
        %v1068 = vpop.f32.mrf.mxu0
        %v1069 = vadd.f32 %v1002, %v1068
        %v1070 = vand.u32 %v389, 4294901760
        %v1071 = vsub.f32 %v389, %v1070
        %1072 = vmatmul.f32.gmra.mxu0 %v1071
        %v1073 = vpop.f32.mrf.mxu0
        %v1074 = vadd.f32 %v1006, %v1073
        %v1075 = vand.u32 %v392, 4294901760
        %v1076 = vsub.f32 %v392, %v1075
        %1077 = vmatmul.f32.gmra.mxu0 %v1076
        %v1078 = vpop.f32.mrf.mxu0
        %v1079 = vadd.f32 %v1010, %v1078
        %v1080 = vand.u32 %v395, 4294901760
        %v1081 = vsub.f32 %v395, %v1080
        %1082 = vmatmul.f32.gmra.mxu0 %v1081
        %v1083 = vpop.f32.mrf.mxu0
        %v1084 = vadd.f32 %v1014, %v1083
        %v1085 = vand.u32 %v398, 4294901760
        %v1086 = vsub.f32 %v398, %v1085
        %1087 = vmatmul.f32.gmra.mxu0 %v1086
        %v1088 = vpop.f32.mrf.mxu0
        %v1089 = vadd.f32 %v1018, %v1088
        %v1090 = vand.u32 %v401, 4294901760
        %v1091 = vsub.f32 %v401, %v1090
        %1092 = vmatmul.f32.gmra.mxu0 %v1091
        %v1093 = vpop.f32.mrf.mxu0
        %v1094 = vadd.f32 %v1022, %v1093
        %1095 = vdwg.mxu0
        %1096 = vmatpush.msra.mxu0 0.0
        %1097 = vmatpush.msra.mxu0 0.0
        %1098 = vmatpush.msra.mxu0 0.0
        %1099 = vmatpush.msra.mxu0 0.0
        %1100 = vmatpush.msra.mxu0 0.0
        %1101 = vmatpush.msra.mxu0 0.0
        %1102 = vmatpush.msra.mxu0 0.0
        %1103 = vmatpush.msra.mxu0 0.0
        %1104 = vmatpush.msra.mxu0 0.0
        %1105 = vmatpush.msra.mxu0 0.0
        %1106 = vmatpush.msra.mxu0 0.0
        %1107 = vmatpush.msra.mxu0 %v359
        %1108 = vmatpush.msra.mxu0 %v355
        %1109 = vmatpush.msra.mxu0 %v351
        %1110 = vmatpush.msra.mxu0 %v347
        %1111 = vmatpush.msra.mxu0 %v343
        %v1112 = vand.u32 %v374, 4294901760
        %v1113 = vsub.f32 %v374, %v1112
        %v1114 = vand.u32 %v1113, 4294901760
        %1115 = vmatmul.f32.gmra.mxu0 %v1114
        %v1116 = vpop.f32.mrf.mxu0
        %v1117 = vadd.f32 %v1049, %v1116
        %v1118 = vand.u32 %v377, 4294901760
        %v1119 = vsub.f32 %v377, %v1118
        %v1120 = vand.u32 %v1119, 4294901760
        %1121 = vmatmul.f32.gmra.mxu0 %v1120
        %v1122 = vpop.f32.mrf.mxu0
        %v1123 = vadd.f32 %v1054, %v1122
        %v1124 = vand.u32 %v380, 4294901760
        %v1125 = vsub.f32 %v380, %v1124
        %v1126 = vand.u32 %v1125, 4294901760
        %1127 = vmatmul.f32.gmra.mxu0 %v1126
        %v1128 = vpop.f32.mrf.mxu0
        %v1129 = vadd.f32 %v1059, %v1128
        %v1130 = vand.u32 %v383, 4294901760
        %v1131 = vsub.f32 %v383, %v1130
        %v1132 = vand.u32 %v1131, 4294901760
        %1133 = vmatmul.f32.gmra.mxu0 %v1132
        %v1134 = vpop.f32.mrf.mxu0
        %v1135 = vadd.f32 %v1064, %v1134
        %v1136 = vand.u32 %v386, 4294901760
        %v1137 = vsub.f32 %v386, %v1136
        %v1138 = vand.u32 %v1137, 4294901760
        %1139 = vmatmul.f32.gmra.mxu0 %v1138
        %v1140 = vpop.f32.mrf.mxu0
        %v1141 = vadd.f32 %v1069, %v1140
        %v1142 = vand.u32 %v389, 4294901760
        %v1143 = vsub.f32 %v389, %v1142
        %v1144 = vand.u32 %v1143, 4294901760
        %1145 = vmatmul.f32.gmra.mxu0 %v1144
        %v1146 = vpop.f32.mrf.mxu0
        %v1147 = vadd.f32 %v1074, %v1146
        %v1148 = vand.u32 %v392, 4294901760
        %v1149 = vsub.f32 %v392, %v1148
        %v1150 = vand.u32 %v1149, 4294901760
        %1151 = vmatmul.f32.gmra.mxu0 %v1150
        %v1152 = vpop.f32.mrf.mxu0
        %v1153 = vadd.f32 %v1079, %v1152
        %v1154 = vand.u32 %v395, 4294901760
        %v1155 = vsub.f32 %v395, %v1154
        %v1156 = vand.u32 %v1155, 4294901760
        %1157 = vmatmul.f32.gmra.mxu0 %v1156
        %v1158 = vpop.f32.mrf.mxu0
        %v1159 = vadd.f32 %v1084, %v1158
        %v1160 = vand.u32 %v398, 4294901760
        %v1161 = vsub.f32 %v398, %v1160
        %v1162 = vand.u32 %v1161, 4294901760
        %1163 = vmatmul.f32.gmra.mxu0 %v1162
        %v1164 = vpop.f32.mrf.mxu0
        %v1165 = vadd.f32 %v1089, %v1164
        %v1166 = vand.u32 %v401, 4294901760
        %v1167 = vsub.f32 %v401, %v1166
        %v1168 = vand.u32 %v1167, 4294901760
        %1169 = vmatmul.f32.gmra.mxu0 %v1168
        %v1170 = vpop.f32.mrf.mxu0
        %v1171 = vadd.f32 %v1094, %v1170
        %1172 = vdwg.mxu0
        %1173 = vmatpush.msra.mxu0 0.0
        %1174 = vmatpush.msra.mxu0 0.0
        %1175 = vmatpush.msra.mxu0 0.0
        %1176 = vmatpush.msra.mxu0 0.0
        %1177 = vmatpush.msra.mxu0 0.0
        %1178 = vmatpush.msra.mxu0 0.0
        %1179 = vmatpush.msra.mxu0 0.0
        %1180 = vmatpush.msra.mxu0 0.0
        %1181 = vmatpush.msra.mxu0 0.0
        %1182 = vmatpush.msra.mxu0 0.0
        %1183 = vmatpush.msra.mxu0 0.0
        %v1184 = vsub.f32 %v359, %v359
        %v1185 = vand.u32 %v1184, 4294901760
        %1186 = vmatpush.msra.mxu0 %v1185
        %v1187 = vsub.f32 %v355, %v355
        %v1188 = vand.u32 %v1187, 4294901760
        %1189 = vmatpush.msra.mxu0 %v1188
        %v1190 = vsub.f32 %v351, %v351
        %v1191 = vand.u32 %v1190, 4294901760
        %1192 = vmatpush.msra.mxu0 %v1191
        %v1193 = vsub.f32 %v347, %v347
        %v1194 = vand.u32 %v1193, 4294901760
        %1195 = vmatpush.msra.mxu0 %v1194
        %v1196 = vsub.f32 %v343, %v343
        %v1197 = vand.u32 %v1196, 4294901760
        %1198 = vmatpush.msra.mxu0 %v1197
        %v1199 = vand.u32 %v374, 4294901760
        %1200 = vmatmul.f32.gmra.mxu0 %v1199
        %v1201 = vpop.f32.mrf.mxu0
        %v1202 = vadd.f32 %v1117, %v1201
        %v1203 = vand.u32 %v377, 4294901760
        %1204 = vmatmul.f32.gmra.mxu0 %v1203
        %v1205 = vpop.f32.mrf.mxu0
        %v1206 = vadd.f32 %v1123, %v1205
        %v1207 = vand.u32 %v380, 4294901760
        %1208 = vmatmul.f32.gmra.mxu0 %v1207
        %v1209 = vpop.f32.mrf.mxu0
        %v1210 = vadd.f32 %v1129, %v1209
        %v1211 = vand.u32 %v383, 4294901760
        %1212 = vmatmul.f32.gmra.mxu0 %v1211
        %v1213 = vpop.f32.mrf.mxu0
        %v1214 = vadd.f32 %v1135, %v1213
        %v1215 = vand.u32 %v386, 4294901760
        %1216 = vmatmul.f32.gmra.mxu0 %v1215
        %v1217 = vpop.f32.mrf.mxu0
        %v1218 = vadd.f32 %v1141, %v1217
        %v1219 = vand.u32 %v389, 4294901760
        %1220 = vmatmul.f32.gmra.mxu0 %v1219
        %v1221 = vpop.f32.mrf.mxu0
        %v1222 = vadd.f32 %v1147, %v1221
        %v1223 = vand.u32 %v392, 4294901760
        %1224 = vmatmul.f32.gmra.mxu0 %v1223
        %v1225 = vpop.f32.mrf.mxu0
        %v1226 = vadd.f32 %v1153, %v1225
        %v1227 = vand.u32 %v395, 4294901760
        %1228 = vmatmul.f32.gmra.mxu0 %v1227
        %v1229 = vpop.f32.mrf.mxu0
        %v1230 = vadd.f32 %v1159, %v1229
        %v1231 = vand.u32 %v398, 4294901760
        %1232 = vmatmul.f32.gmra.mxu0 %v1231
        %v1233 = vpop.f32.mrf.mxu0
        %v1234 = vadd.f32 %v1165, %v1233
        %v1235 = vand.u32 %v401, 4294901760
        %1236 = vmatmul.f32.gmra.mxu0 %v1235
        %v1237 = vpop.f32.mrf.mxu0
        %v1238 = vadd.f32 %v1171, %v1237
        %1239 = vdwg.mxu0
        %1240 = vmatpush.msra.mxu0 0.0
        %1241 = vmatpush.msra.mxu0 0.0
        %1242 = vmatpush.msra.mxu0 0.0
        %1243 = vmatpush.msra.mxu0 0.0
        %1244 = vmatpush.msra.mxu0 0.0
        %1245 = vmatpush.msra.mxu0 0.0
        %1246 = vmatpush.msra.mxu0 0.0
        %1247 = vmatpush.msra.mxu0 0.0
        %1248 = vmatpush.msra.mxu0 0.0
        %1249 = vmatpush.msra.mxu0 0.0
        %1250 = vmatpush.msra.mxu0 0.0
        %1251 = vmatpush.msra.mxu0 %v359
        %1252 = vmatpush.msra.mxu0 %v355
        %1253 = vmatpush.msra.mxu0 %v351
        %1254 = vmatpush.msra.mxu0 %v347
        %1255 = vmatpush.msra.mxu0 %v343
        %v1256 = vand.u32 %v374, 4294901760
        %1257 = vmatmul.f32.gmra.mxu0 %v1256
        %v1258 = vpop.f32.mrf.mxu0
        %v1259 = vadd.f32 %v1202, %v1258
        %v1260 = vand.u32 %v377, 4294901760
        %1261 = vmatmul.f32.gmra.mxu0 %v1260
        %v1262 = vpop.f32.mrf.mxu0
        %v1263 = vadd.f32 %v1206, %v1262
        %v1264 = vand.u32 %v380, 4294901760
        %1265 = vmatmul.f32.gmra.mxu0 %v1264
        %v1266 = vpop.f32.mrf.mxu0
        %v1267 = vadd.f32 %v1210, %v1266
        %v1268 = vand.u32 %v383, 4294901760
        %1269 = vmatmul.f32.gmra.mxu0 %v1268
        %v1270 = vpop.f32.mrf.mxu0
        %v1271 = vadd.f32 %v1214, %v1270
        %v1272 = vand.u32 %v386, 4294901760
        %1273 = vmatmul.f32.gmra.mxu0 %v1272
        %v1274 = vpop.f32.mrf.mxu0
        %v1275 = vadd.f32 %v1218, %v1274
        %v1276 = vand.u32 %v389, 4294901760
        %1277 = vmatmul.f32.gmra.mxu0 %v1276
        %v1278 = vpop.f32.mrf.mxu0
        %v1279 = vadd.f32 %v1222, %v1278
        %v1280 = vand.u32 %v392, 4294901760
        %1281 = vmatmul.f32.gmra.mxu0 %v1280
        %v1282 = vpop.f32.mrf.mxu0
        %v1283 = vadd.f32 %v1226, %v1282
        %v1284 = vand.u32 %v395, 4294901760
        %1285 = vmatmul.f32.gmra.mxu0 %v1284
        %v1286 = vpop.f32.mrf.mxu0
        %v1287 = vadd.f32 %v1230, %v1286
        %v1288 = vand.u32 %v398, 4294901760
        %1289 = vmatmul.f32.gmra.mxu0 %v1288
        %v1290 = vpop.f32.mrf.mxu0
        %v1291 = vadd.f32 %v1234, %v1290
        %v1292 = vand.u32 %v401, 4294901760
        %1293 = vmatmul.f32.gmra.mxu0 %v1292
        %v1294 = vpop.f32.mrf.mxu0
        %v1295 = vadd.f32 %v1238, %v1294
        %1296 = vdwg.mxu0
        %1297 = vmatpush.msra.mxu0 0.0
        %1298 = vmatpush.msra.mxu0 0.0
        %1299 = vmatpush.msra.mxu0 0.0
        %1300 = vmatpush.msra.mxu0 0.0
        %1301 = vmatpush.msra.mxu0 0.0
        %1302 = vmatpush.msra.mxu0 0.0
        %1303 = vmatpush.msra.mxu0 0.0
        %1304 = vmatpush.msra.mxu0 0.0
        %1305 = vmatpush.msra.mxu0 0.0
        %1306 = vmatpush.msra.mxu0 0.0
        %1307 = vmatpush.msra.mxu0 0.0
        %1308 = vmatpush.msra.mxu0 %v360
        %1309 = vmatpush.msra.mxu0 %v356
        %1310 = vmatpush.msra.mxu0 %v352
        %1311 = vmatpush.msra.mxu0 %v348
        %1312 = vmatpush.msra.mxu0 %v344
        %v1313 = vand.u32 %v374, 4294901760
        %v1314 = vsub.f32 %v374, %v1313
        %v1315 = vand.u32 %v1314, 4294901760
        %v1316 = vsub.f32 %v1314, %v1315
        %v1317 = vand.u32 %v1316, 4294901760
        %1318 = vmatmul.f32.gmra.mxu0 %v1317
        %v1319 = vpop.f32.mrf.mxu0
        %v1320 = vadd.f32 0.0, %v1319
        %v1321 = vand.u32 %v377, 4294901760
        %v1322 = vsub.f32 %v377, %v1321
        %v1323 = vand.u32 %v1322, 4294901760
        %v1324 = vsub.f32 %v1322, %v1323
        %v1325 = vand.u32 %v1324, 4294901760
        %1326 = vmatmul.f32.gmra.mxu0 %v1325
        %v1327 = vpop.f32.mrf.mxu0
        %v1328 = vadd.f32 0.0, %v1327
        %v1329 = vand.u32 %v380, 4294901760
        %v1330 = vsub.f32 %v380, %v1329
        %v1331 = vand.u32 %v1330, 4294901760
        %v1332 = vsub.f32 %v1330, %v1331
        %v1333 = vand.u32 %v1332, 4294901760
        %1334 = vmatmul.f32.gmra.mxu0 %v1333
        %v1335 = vpop.f32.mrf.mxu0
        %v1336 = vadd.f32 0.0, %v1335
        %v1337 = vand.u32 %v383, 4294901760
        %v1338 = vsub.f32 %v383, %v1337
        %v1339 = vand.u32 %v1338, 4294901760
        %v1340 = vsub.f32 %v1338, %v1339
        %v1341 = vand.u32 %v1340, 4294901760
        %1342 = vmatmul.f32.gmra.mxu0 %v1341
        %v1343 = vpop.f32.mrf.mxu0
        %v1344 = vadd.f32 0.0, %v1343
        %v1345 = vand.u32 %v386, 4294901760
        %v1346 = vsub.f32 %v386, %v1345
        %v1347 = vand.u32 %v1346, 4294901760
        %v1348 = vsub.f32 %v1346, %v1347
        %v1349 = vand.u32 %v1348, 4294901760
        %1350 = vmatmul.f32.gmra.mxu0 %v1349
        %v1351 = vpop.f32.mrf.mxu0
        %v1352 = vadd.f32 0.0, %v1351
        %v1353 = vand.u32 %v389, 4294901760
        %v1354 = vsub.f32 %v389, %v1353
        %v1355 = vand.u32 %v1354, 4294901760
        %v1356 = vsub.f32 %v1354, %v1355
        %v1357 = vand.u32 %v1356, 4294901760
        %1358 = vmatmul.f32.gmra.mxu0 %v1357
        %v1359 = vpop.f32.mrf.mxu0
        %v1360 = vadd.f32 0.0, %v1359
        %v1361 = vand.u32 %v392, 4294901760
        %v1362 = vsub.f32 %v392, %v1361
        %v1363 = vand.u32 %v1362, 4294901760
        %v1364 = vsub.f32 %v1362, %v1363
        %v1365 = vand.u32 %v1364, 4294901760
        %1366 = vmatmul.f32.gmra.mxu0 %v1365
        %v1367 = vpop.f32.mrf.mxu0
        %v1368 = vadd.f32 0.0, %v1367
        %v1369 = vand.u32 %v395, 4294901760
        %v1370 = vsub.f32 %v395, %v1369
        %v1371 = vand.u32 %v1370, 4294901760
        %v1372 = vsub.f32 %v1370, %v1371
        %v1373 = vand.u32 %v1372, 4294901760
        %1374 = vmatmul.f32.gmra.mxu0 %v1373
        %v1375 = vpop.f32.mrf.mxu0
        %v1376 = vadd.f32 0.0, %v1375
        %v1377 = vand.u32 %v398, 4294901760
        %v1378 = vsub.f32 %v398, %v1377
        %v1379 = vand.u32 %v1378, 4294901760
        %v1380 = vsub.f32 %v1378, %v1379
        %v1381 = vand.u32 %v1380, 4294901760
        %1382 = vmatmul.f32.gmra.mxu0 %v1381
        %v1383 = vpop.f32.mrf.mxu0
        %v1384 = vadd.f32 0.0, %v1383
        %v1385 = vand.u32 %v401, 4294901760
        %v1386 = vsub.f32 %v401, %v1385
        %v1387 = vand.u32 %v1386, 4294901760
        %v1388 = vsub.f32 %v1386, %v1387
        %v1389 = vand.u32 %v1388, 4294901760
        %1390 = vmatmul.f32.gmra.mxu0 %v1389
        %v1391 = vpop.f32.mrf.mxu0
        %v1392 = vadd.f32 0.0, %v1391
        %1393 = vdwg.mxu0
        %1394 = vmatpush.msra.mxu0 0.0
        %1395 = vmatpush.msra.mxu0 0.0
        %1396 = vmatpush.msra.mxu0 0.0
        %1397 = vmatpush.msra.mxu0 0.0
        %1398 = vmatpush.msra.mxu0 0.0
        %1399 = vmatpush.msra.mxu0 0.0
        %1400 = vmatpush.msra.mxu0 0.0
        %1401 = vmatpush.msra.mxu0 0.0
        %1402 = vmatpush.msra.mxu0 0.0
        %1403 = vmatpush.msra.mxu0 0.0
        %1404 = vmatpush.msra.mxu0 0.0
        %v1405 = vsub.f32 %v360, %v360
        %v1406 = vand.u32 %v1405, 4294901760
        %v1407 = vsub.f32 %v1405, %v1406
        %v1408 = vand.u32 %v1407, 4294901760
        %1409 = vmatpush.msra.mxu0 %v1408
        %v1410 = vsub.f32 %v356, %v356
        %v1411 = vand.u32 %v1410, 4294901760
        %v1412 = vsub.f32 %v1410, %v1411
        %v1413 = vand.u32 %v1412, 4294901760
        %1414 = vmatpush.msra.mxu0 %v1413
        %v1415 = vsub.f32 %v352, %v352
        %v1416 = vand.u32 %v1415, 4294901760
        %v1417 = vsub.f32 %v1415, %v1416
        %v1418 = vand.u32 %v1417, 4294901760
        %1419 = vmatpush.msra.mxu0 %v1418
        %v1420 = vsub.f32 %v348, %v348
        %v1421 = vand.u32 %v1420, 4294901760
        %v1422 = vsub.f32 %v1420, %v1421
        %v1423 = vand.u32 %v1422, 4294901760
        %1424 = vmatpush.msra.mxu0 %v1423
        %v1425 = vsub.f32 %v344, %v344
        %v1426 = vand.u32 %v1425, 4294901760
        %v1427 = vsub.f32 %v1425, %v1426
        %v1428 = vand.u32 %v1427, 4294901760
        %1429 = vmatpush.msra.mxu0 %v1428
        %v1430 = vand.u32 %v374, 4294901760
        %1431 = vmatmul.f32.gmra.mxu0 %v1430
        %v1432 = vpop.f32.mrf.mxu0
        %v1433 = vadd.f32 %v1320, %v1432
        %v1434 = vand.u32 %v377, 4294901760
        %1435 = vmatmul.f32.gmra.mxu0 %v1434
        %v1436 = vpop.f32.mrf.mxu0
        %v1437 = vadd.f32 %v1328, %v1436
        %v1438 = vand.u32 %v380, 4294901760
        %1439 = vmatmul.f32.gmra.mxu0 %v1438
        %v1440 = vpop.f32.mrf.mxu0
        %v1441 = vadd.f32 %v1336, %v1440
        %v1442 = vand.u32 %v383, 4294901760
        %1443 = vmatmul.f32.gmra.mxu0 %v1442
        %v1444 = vpop.f32.mrf.mxu0
        %v1445 = vadd.f32 %v1344, %v1444
        %v1446 = vand.u32 %v386, 4294901760
        %1447 = vmatmul.f32.gmra.mxu0 %v1446
        %v1448 = vpop.f32.mrf.mxu0
        %v1449 = vadd.f32 %v1352, %v1448
        %v1450 = vand.u32 %v389, 4294901760
        %1451 = vmatmul.f32.gmra.mxu0 %v1450
        %v1452 = vpop.f32.mrf.mxu0
        %v1453 = vadd.f32 %v1360, %v1452
        %v1454 = vand.u32 %v392, 4294901760
        %1455 = vmatmul.f32.gmra.mxu0 %v1454
        %v1456 = vpop.f32.mrf.mxu0
        %v1457 = vadd.f32 %v1368, %v1456
        %v1458 = vand.u32 %v395, 4294901760
        %1459 = vmatmul.f32.gmra.mxu0 %v1458
        %v1460 = vpop.f32.mrf.mxu0
        %v1461 = vadd.f32 %v1376, %v1460
        %v1462 = vand.u32 %v398, 4294901760
        %1463 = vmatmul.f32.gmra.mxu0 %v1462
        %v1464 = vpop.f32.mrf.mxu0
        %v1465 = vadd.f32 %v1384, %v1464
        %v1466 = vand.u32 %v401, 4294901760
        %1467 = vmatmul.f32.gmra.mxu0 %v1466
        %v1468 = vpop.f32.mrf.mxu0
        %v1469 = vadd.f32 %v1392, %v1468
        %1470 = vdwg.mxu0
        %1471 = vmatpush.msra.mxu0 0.0
        %1472 = vmatpush.msra.mxu0 0.0
        %1473 = vmatpush.msra.mxu0 0.0
        %1474 = vmatpush.msra.mxu0 0.0
        %1475 = vmatpush.msra.mxu0 0.0
        %1476 = vmatpush.msra.mxu0 0.0
        %1477 = vmatpush.msra.mxu0 0.0
        %1478 = vmatpush.msra.mxu0 0.0
        %1479 = vmatpush.msra.mxu0 0.0
        %1480 = vmatpush.msra.mxu0 0.0
        %1481 = vmatpush.msra.mxu0 0.0
        %v1482 = vsub.f32 %v360, %v360
        %1483 = vmatpush.msra.mxu0 %v1482
        %v1484 = vsub.f32 %v356, %v356
        %1485 = vmatpush.msra.mxu0 %v1484
        %v1486 = vsub.f32 %v352, %v352
        %1487 = vmatpush.msra.mxu0 %v1486
        %v1488 = vsub.f32 %v348, %v348
        %1489 = vmatpush.msra.mxu0 %v1488
        %v1490 = vsub.f32 %v344, %v344
        %1491 = vmatpush.msra.mxu0 %v1490
        %v1492 = vand.u32 %v374, 4294901760
        %v1493 = vsub.f32 %v374, %v1492
        %1494 = vmatmul.f32.gmra.mxu0 %v1493
        %v1495 = vpop.f32.mrf.mxu0
        %v1496 = vadd.f32 %v1433, %v1495
        %v1497 = vand.u32 %v377, 4294901760
        %v1498 = vsub.f32 %v377, %v1497
        %1499 = vmatmul.f32.gmra.mxu0 %v1498
        %v1500 = vpop.f32.mrf.mxu0
        %v1501 = vadd.f32 %v1437, %v1500
        %v1502 = vand.u32 %v380, 4294901760
        %v1503 = vsub.f32 %v380, %v1502
        %1504 = vmatmul.f32.gmra.mxu0 %v1503
        %v1505 = vpop.f32.mrf.mxu0
        %v1506 = vadd.f32 %v1441, %v1505
        %v1507 = vand.u32 %v383, 4294901760
        %v1508 = vsub.f32 %v383, %v1507
        %1509 = vmatmul.f32.gmra.mxu0 %v1508
        %v1510 = vpop.f32.mrf.mxu0
        %v1511 = vadd.f32 %v1445, %v1510
        %v1512 = vand.u32 %v386, 4294901760
        %v1513 = vsub.f32 %v386, %v1512
        %1514 = vmatmul.f32.gmra.mxu0 %v1513
        %v1515 = vpop.f32.mrf.mxu0
        %v1516 = vadd.f32 %v1449, %v1515
        %v1517 = vand.u32 %v389, 4294901760
        %v1518 = vsub.f32 %v389, %v1517
        %1519 = vmatmul.f32.gmra.mxu0 %v1518
        %v1520 = vpop.f32.mrf.mxu0
        %v1521 = vadd.f32 %v1453, %v1520
        %v1522 = vand.u32 %v392, 4294901760
        %v1523 = vsub.f32 %v392, %v1522
        %1524 = vmatmul.f32.gmra.mxu0 %v1523
        %v1525 = vpop.f32.mrf.mxu0
        %v1526 = vadd.f32 %v1457, %v1525
        %v1527 = vand.u32 %v395, 4294901760
        %v1528 = vsub.f32 %v395, %v1527
        %1529 = vmatmul.f32.gmra.mxu0 %v1528
        %v1530 = vpop.f32.mrf.mxu0
        %v1531 = vadd.f32 %v1461, %v1530
        %v1532 = vand.u32 %v398, 4294901760
        %v1533 = vsub.f32 %v398, %v1532
        %1534 = vmatmul.f32.gmra.mxu0 %v1533
        %v1535 = vpop.f32.mrf.mxu0
        %v1536 = vadd.f32 %v1465, %v1535
        %v1537 = vand.u32 %v401, 4294901760
        %v1538 = vsub.f32 %v401, %v1537
        %1539 = vmatmul.f32.gmra.mxu0 %v1538
        %v1540 = vpop.f32.mrf.mxu0
        %v1541 = vadd.f32 %v1469, %v1540
        %1542 = vdwg.mxu0
        %1543 = vmatpush.msra.mxu0 0.0
        %1544 = vmatpush.msra.mxu0 0.0
        %1545 = vmatpush.msra.mxu0 0.0
        %1546 = vmatpush.msra.mxu0 0.0
        %1547 = vmatpush.msra.mxu0 0.0
        %1548 = vmatpush.msra.mxu0 0.0
        %1549 = vmatpush.msra.mxu0 0.0
        %1550 = vmatpush.msra.mxu0 0.0
        %1551 = vmatpush.msra.mxu0 0.0
        %1552 = vmatpush.msra.mxu0 0.0
        %1553 = vmatpush.msra.mxu0 0.0
        %1554 = vmatpush.msra.mxu0 %v360
        %1555 = vmatpush.msra.mxu0 %v356
        %1556 = vmatpush.msra.mxu0 %v352
        %1557 = vmatpush.msra.mxu0 %v348
        %1558 = vmatpush.msra.mxu0 %v344
        %v1559 = vand.u32 %v374, 4294901760
        %v1560 = vsub.f32 %v374, %v1559
        %v1561 = vand.u32 %v1560, 4294901760
        %1562 = vmatmul.f32.gmra.mxu0 %v1561
        %v1563 = vpop.f32.mrf.mxu0
        %v1564 = vadd.f32 %v1496, %v1563
        %v1565 = vand.u32 %v377, 4294901760
        %v1566 = vsub.f32 %v377, %v1565
        %v1567 = vand.u32 %v1566, 4294901760
        %1568 = vmatmul.f32.gmra.mxu0 %v1567
        %v1569 = vpop.f32.mrf.mxu0
        %v1570 = vadd.f32 %v1501, %v1569
        %v1571 = vand.u32 %v380, 4294901760
        %v1572 = vsub.f32 %v380, %v1571
        %v1573 = vand.u32 %v1572, 4294901760
        %1574 = vmatmul.f32.gmra.mxu0 %v1573
        %v1575 = vpop.f32.mrf.mxu0
        %v1576 = vadd.f32 %v1506, %v1575
        %v1577 = vand.u32 %v383, 4294901760
        %v1578 = vsub.f32 %v383, %v1577
        %v1579 = vand.u32 %v1578, 4294901760
        %1580 = vmatmul.f32.gmra.mxu0 %v1579
        %v1581 = vpop.f32.mrf.mxu0
        %v1582 = vadd.f32 %v1511, %v1581
        %v1583 = vand.u32 %v386, 4294901760
        %v1584 = vsub.f32 %v386, %v1583
        %v1585 = vand.u32 %v1584, 4294901760
        %1586 = vmatmul.f32.gmra.mxu0 %v1585
        %v1587 = vpop.f32.mrf.mxu0
        %v1588 = vadd.f32 %v1516, %v1587
        %v1589 = vand.u32 %v389, 4294901760
        %v1590 = vsub.f32 %v389, %v1589
        %v1591 = vand.u32 %v1590, 4294901760
        %1592 = vmatmul.f32.gmra.mxu0 %v1591
        %v1593 = vpop.f32.mrf.mxu0
        %v1594 = vadd.f32 %v1521, %v1593
        %v1595 = vand.u32 %v392, 4294901760
        %v1596 = vsub.f32 %v392, %v1595
        %v1597 = vand.u32 %v1596, 4294901760
        %1598 = vmatmul.f32.gmra.mxu0 %v1597
        %v1599 = vpop.f32.mrf.mxu0
        %v1600 = vadd.f32 %v1526, %v1599
        %v1601 = vand.u32 %v395, 4294901760
        %v1602 = vsub.f32 %v395, %v1601
        %v1603 = vand.u32 %v1602, 4294901760
        %1604 = vmatmul.f32.gmra.mxu0 %v1603
        %v1605 = vpop.f32.mrf.mxu0
        %v1606 = vadd.f32 %v1531, %v1605
        %v1607 = vand.u32 %v398, 4294901760
        %v1608 = vsub.f32 %v398, %v1607
        %v1609 = vand.u32 %v1608, 4294901760
        %1610 = vmatmul.f32.gmra.mxu0 %v1609
        %v1611 = vpop.f32.mrf.mxu0
        %v1612 = vadd.f32 %v1536, %v1611
        %v1613 = vand.u32 %v401, 4294901760
        %v1614 = vsub.f32 %v401, %v1613
        %v1615 = vand.u32 %v1614, 4294901760
        %1616 = vmatmul.f32.gmra.mxu0 %v1615
        %v1617 = vpop.f32.mrf.mxu0
        %v1618 = vadd.f32 %v1541, %v1617
        %1619 = vdwg.mxu0
        %1620 = vmatpush.msra.mxu0 0.0
        %1621 = vmatpush.msra.mxu0 0.0
        %1622 = vmatpush.msra.mxu0 0.0
        %1623 = vmatpush.msra.mxu0 0.0
        %1624 = vmatpush.msra.mxu0 0.0
        %1625 = vmatpush.msra.mxu0 0.0
        %1626 = vmatpush.msra.mxu0 0.0
        %1627 = vmatpush.msra.mxu0 0.0
        %1628 = vmatpush.msra.mxu0 0.0
        %1629 = vmatpush.msra.mxu0 0.0
        %1630 = vmatpush.msra.mxu0 0.0
        %v1631 = vsub.f32 %v360, %v360
        %v1632 = vand.u32 %v1631, 4294901760
        %1633 = vmatpush.msra.mxu0 %v1632
        %v1634 = vsub.f32 %v356, %v356
        %v1635 = vand.u32 %v1634, 4294901760
        %1636 = vmatpush.msra.mxu0 %v1635
        %v1637 = vsub.f32 %v352, %v352
        %v1638 = vand.u32 %v1637, 4294901760
        %1639 = vmatpush.msra.mxu0 %v1638
        %v1640 = vsub.f32 %v348, %v348
        %v1641 = vand.u32 %v1640, 4294901760
        %1642 = vmatpush.msra.mxu0 %v1641
        %v1643 = vsub.f32 %v344, %v344
        %v1644 = vand.u32 %v1643, 4294901760
        %1645 = vmatpush.msra.mxu0 %v1644
        %v1646 = vand.u32 %v374, 4294901760
        %1647 = vmatmul.f32.gmra.mxu0 %v1646
        %v1648 = vpop.f32.mrf.mxu0
        %v1649 = vadd.f32 %v1564, %v1648
        %v1650 = vand.u32 %v377, 4294901760
        %1651 = vmatmul.f32.gmra.mxu0 %v1650
        %v1652 = vpop.f32.mrf.mxu0
        %v1653 = vadd.f32 %v1570, %v1652
        %v1654 = vand.u32 %v380, 4294901760
        %1655 = vmatmul.f32.gmra.mxu0 %v1654
        %v1656 = vpop.f32.mrf.mxu0
        %v1657 = vadd.f32 %v1576, %v1656
        %v1658 = vand.u32 %v383, 4294901760
        %1659 = vmatmul.f32.gmra.mxu0 %v1658
        %v1660 = vpop.f32.mrf.mxu0
        %v1661 = vadd.f32 %v1582, %v1660
        %v1662 = vand.u32 %v386, 4294901760
        %1663 = vmatmul.f32.gmra.mxu0 %v1662
        %v1664 = vpop.f32.mrf.mxu0
        %v1665 = vadd.f32 %v1588, %v1664
        %v1666 = vand.u32 %v389, 4294901760
        %1667 = vmatmul.f32.gmra.mxu0 %v1666
        %v1668 = vpop.f32.mrf.mxu0
        %v1669 = vadd.f32 %v1594, %v1668
        %v1670 = vand.u32 %v392, 4294901760
        %1671 = vmatmul.f32.gmra.mxu0 %v1670
        %v1672 = vpop.f32.mrf.mxu0
        %v1673 = vadd.f32 %v1600, %v1672
        %v1674 = vand.u32 %v395, 4294901760
        %1675 = vmatmul.f32.gmra.mxu0 %v1674
        %v1676 = vpop.f32.mrf.mxu0
        %v1677 = vadd.f32 %v1606, %v1676
        %v1678 = vand.u32 %v398, 4294901760
        %1679 = vmatmul.f32.gmra.mxu0 %v1678
        %v1680 = vpop.f32.mrf.mxu0
        %v1681 = vadd.f32 %v1612, %v1680
        %v1682 = vand.u32 %v401, 4294901760
        %1683 = vmatmul.f32.gmra.mxu0 %v1682
        %v1684 = vpop.f32.mrf.mxu0
        %v1685 = vadd.f32 %v1618, %v1684
        %1686 = vdwg.mxu0
        %1687 = vmatpush.msra.mxu0 0.0
        %1688 = vmatpush.msra.mxu0 0.0
        %1689 = vmatpush.msra.mxu0 0.0
        %1690 = vmatpush.msra.mxu0 0.0
        %1691 = vmatpush.msra.mxu0 0.0
        %1692 = vmatpush.msra.mxu0 0.0
        %1693 = vmatpush.msra.mxu0 0.0
        %1694 = vmatpush.msra.mxu0 0.0
        %1695 = vmatpush.msra.mxu0 0.0
        %1696 = vmatpush.msra.mxu0 0.0
        %1697 = vmatpush.msra.mxu0 0.0
        %1698 = vmatpush.msra.mxu0 %v360
        %1699 = vmatpush.msra.mxu0 %v356
        %1700 = vmatpush.msra.mxu0 %v352
        %1701 = vmatpush.msra.mxu0 %v348
        %1702 = vmatpush.msra.mxu0 %v344
        %v1703 = vand.u32 %v374, 4294901760
        %1704 = vmatmul.f32.gmra.mxu0 %v1703
        %v1705 = vpop.f32.mrf.mxu0
        %v1706 = vadd.f32 %v1649, %v1705
        %v1707 = vand.u32 %v377, 4294901760
        %1708 = vmatmul.f32.gmra.mxu0 %v1707
        %v1709 = vpop.f32.mrf.mxu0
        %v1710 = vadd.f32 %v1653, %v1709
        %v1711 = vand.u32 %v380, 4294901760
        %1712 = vmatmul.f32.gmra.mxu0 %v1711
        %v1713 = vpop.f32.mrf.mxu0
        %v1714 = vadd.f32 %v1657, %v1713
        %v1715 = vand.u32 %v383, 4294901760
        %1716 = vmatmul.f32.gmra.mxu0 %v1715
        %v1717 = vpop.f32.mrf.mxu0
        %v1718 = vadd.f32 %v1661, %v1717
        %v1719 = vand.u32 %v386, 4294901760
        %1720 = vmatmul.f32.gmra.mxu0 %v1719
        %v1721 = vpop.f32.mrf.mxu0
        %v1722 = vadd.f32 %v1665, %v1721
        %v1723 = vand.u32 %v389, 4294901760
        %1724 = vmatmul.f32.gmra.mxu0 %v1723
        %v1725 = vpop.f32.mrf.mxu0
        %v1726 = vadd.f32 %v1669, %v1725
        %v1727 = vand.u32 %v392, 4294901760
        %1728 = vmatmul.f32.gmra.mxu0 %v1727
        %v1729 = vpop.f32.mrf.mxu0
        %v1730 = vadd.f32 %v1673, %v1729
        %v1731 = vand.u32 %v395, 4294901760
        %1732 = vmatmul.f32.gmra.mxu0 %v1731
        %v1733 = vpop.f32.mrf.mxu0
        %v1734 = vadd.f32 %v1677, %v1733
        %v1735 = vand.u32 %v398, 4294901760
        %1736 = vmatmul.f32.gmra.mxu0 %v1735
        %v1737 = vpop.f32.mrf.mxu0
        %v1738 = vadd.f32 %v1681, %v1737
        %v1739 = vand.u32 %v401, 4294901760
        %1740 = vmatmul.f32.gmra.mxu0 %v1739
        %v1741 = vpop.f32.mrf.mxu0
        %v1742 = vadd.f32 %v1685, %v1741
        %1743 = vdwg.mxu0
        %1744 = vmatpush.msra.mxu0 0.0
        %1745 = vmatpush.msra.mxu0 0.0
        %1746 = vmatpush.msra.mxu0 0.0
        %1747 = vmatpush.msra.mxu0 0.0
        %1748 = vmatpush.msra.mxu0 0.0
        %1749 = vmatpush.msra.mxu0 0.0
        %1750 = vmatpush.msra.mxu0 0.0
        %1751 = vmatpush.msra.mxu0 0.0
        %1752 = vmatpush.msra.mxu0 0.0
        %1753 = vmatpush.msra.mxu0 0.0
        %1754 = vmatpush.msra.mxu0 0.0
        %1755 = vmatpush.msra.mxu0 %v361
        %1756 = vmatpush.msra.mxu0 %v357
        %1757 = vmatpush.msra.mxu0 %v353
        %1758 = vmatpush.msra.mxu0 %v349
        %1759 = vmatpush.msra.mxu0 %v345
        %v1760 = vand.u32 %v374, 4294901760
        %v1761 = vsub.f32 %v374, %v1760
        %v1762 = vand.u32 %v1761, 4294901760
        %v1763 = vsub.f32 %v1761, %v1762
        %v1764 = vand.u32 %v1763, 4294901760
        %1765 = vmatmul.f32.gmra.mxu0 %v1764
        %v1766 = vpop.f32.mrf.mxu0
        %v1767 = vadd.f32 0.0, %v1766
        %v1768 = vand.u32 %v377, 4294901760
        %v1769 = vsub.f32 %v377, %v1768
        %v1770 = vand.u32 %v1769, 4294901760
        %v1771 = vsub.f32 %v1769, %v1770
        %v1772 = vand.u32 %v1771, 4294901760
        %1773 = vmatmul.f32.gmra.mxu0 %v1772
        %v1774 = vpop.f32.mrf.mxu0
        %v1775 = vadd.f32 0.0, %v1774
        %v1776 = vand.u32 %v380, 4294901760
        %v1777 = vsub.f32 %v380, %v1776
        %v1778 = vand.u32 %v1777, 4294901760
        %v1779 = vsub.f32 %v1777, %v1778
        %v1780 = vand.u32 %v1779, 4294901760
        %1781 = vmatmul.f32.gmra.mxu0 %v1780
        %v1782 = vpop.f32.mrf.mxu0
        %v1783 = vadd.f32 0.0, %v1782
        %v1784 = vand.u32 %v383, 4294901760
        %v1785 = vsub.f32 %v383, %v1784
        %v1786 = vand.u32 %v1785, 4294901760
        %v1787 = vsub.f32 %v1785, %v1786
        %v1788 = vand.u32 %v1787, 4294901760
        %1789 = vmatmul.f32.gmra.mxu0 %v1788
        %v1790 = vpop.f32.mrf.mxu0
        %v1791 = vadd.f32 0.0, %v1790
        %v1792 = vand.u32 %v386, 4294901760
        %v1793 = vsub.f32 %v386, %v1792
        %v1794 = vand.u32 %v1793, 4294901760
        %v1795 = vsub.f32 %v1793, %v1794
        %v1796 = vand.u32 %v1795, 4294901760
        %1797 = vmatmul.f32.gmra.mxu0 %v1796
        %v1798 = vpop.f32.mrf.mxu0
        %v1799 = vadd.f32 0.0, %v1798
        %v1800 = vand.u32 %v389, 4294901760
        %v1801 = vsub.f32 %v389, %v1800
        %v1802 = vand.u32 %v1801, 4294901760
        %v1803 = vsub.f32 %v1801, %v1802
        %v1804 = vand.u32 %v1803, 4294901760
        %1805 = vmatmul.f32.gmra.mxu0 %v1804
        %v1806 = vpop.f32.mrf.mxu0
        %v1807 = vadd.f32 0.0, %v1806
        %v1808 = vand.u32 %v392, 4294901760
        %v1809 = vsub.f32 %v392, %v1808
        %v1810 = vand.u32 %v1809, 4294901760
        %v1811 = vsub.f32 %v1809, %v1810
        %v1812 = vand.u32 %v1811, 4294901760
        %1813 = vmatmul.f32.gmra.mxu0 %v1812
        %v1814 = vpop.f32.mrf.mxu0
        %v1815 = vadd.f32 0.0, %v1814
        %v1816 = vand.u32 %v395, 4294901760
        %v1817 = vsub.f32 %v395, %v1816
        %v1818 = vand.u32 %v1817, 4294901760
        %v1819 = vsub.f32 %v1817, %v1818
        %v1820 = vand.u32 %v1819, 4294901760
        %1821 = vmatmul.f32.gmra.mxu0 %v1820
        %v1822 = vpop.f32.mrf.mxu0
        %v1823 = vadd.f32 0.0, %v1822
        %v1824 = vand.u32 %v398, 4294901760
        %v1825 = vsub.f32 %v398, %v1824
        %v1826 = vand.u32 %v1825, 4294901760
        %v1827 = vsub.f32 %v1825, %v1826
        %v1828 = vand.u32 %v1827, 4294901760
        %1829 = vmatmul.f32.gmra.mxu0 %v1828
        %v1830 = vpop.f32.mrf.mxu0
        %v1831 = vadd.f32 0.0, %v1830
        %v1832 = vand.u32 %v401, 4294901760
        %v1833 = vsub.f32 %v401, %v1832
        %v1834 = vand.u32 %v1833, 4294901760
        %v1835 = vsub.f32 %v1833, %v1834
        %v1836 = vand.u32 %v1835, 4294901760
        %1837 = vmatmul.f32.gmra.mxu0 %v1836
        %v1838 = vpop.f32.mrf.mxu0
        %v1839 = vadd.f32 0.0, %v1838
        %1840 = vdwg.mxu0
        %1841 = vmatpush.msra.mxu0 0.0
        %1842 = vmatpush.msra.mxu0 0.0
        %1843 = vmatpush.msra.mxu0 0.0
        %1844 = vmatpush.msra.mxu0 0.0
        %1845 = vmatpush.msra.mxu0 0.0
        %1846 = vmatpush.msra.mxu0 0.0
        %1847 = vmatpush.msra.mxu0 0.0
        %1848 = vmatpush.msra.mxu0 0.0
        %1849 = vmatpush.msra.mxu0 0.0
        %1850 = vmatpush.msra.mxu0 0.0
        %1851 = vmatpush.msra.mxu0 0.0
        %v1852 = vsub.f32 %v361, %v361
        %v1853 = vand.u32 %v1852, 4294901760
        %v1854 = vsub.f32 %v1852, %v1853
        %v1855 = vand.u32 %v1854, 4294901760
        %1856 = vmatpush.msra.mxu0 %v1855
        %v1857 = vsub.f32 %v357, %v357
        %v1858 = vand.u32 %v1857, 4294901760
        %v1859 = vsub.f32 %v1857, %v1858
        %v1860 = vand.u32 %v1859, 4294901760
        %1861 = vmatpush.msra.mxu0 %v1860
        %v1862 = vsub.f32 %v353, %v353
        %v1863 = vand.u32 %v1862, 4294901760
        %v1864 = vsub.f32 %v1862, %v1863
        %v1865 = vand.u32 %v1864, 4294901760
        %1866 = vmatpush.msra.mxu0 %v1865
        %v1867 = vsub.f32 %v349, %v349
        %v1868 = vand.u32 %v1867, 4294901760
        %v1869 = vsub.f32 %v1867, %v1868
        %v1870 = vand.u32 %v1869, 4294901760
        %1871 = vmatpush.msra.mxu0 %v1870
        %v1872 = vsub.f32 %v345, %v345
        %v1873 = vand.u32 %v1872, 4294901760
        %v1874 = vsub.f32 %v1872, %v1873
        %v1875 = vand.u32 %v1874, 4294901760
        %1876 = vmatpush.msra.mxu0 %v1875
        %v1877 = vand.u32 %v374, 4294901760
        %1878 = vmatmul.f32.gmra.mxu0 %v1877
        %v1879 = vpop.f32.mrf.mxu0
        %v1880 = vadd.f32 %v1767, %v1879
        %v1881 = vand.u32 %v377, 4294901760
        %1882 = vmatmul.f32.gmra.mxu0 %v1881
        %v1883 = vpop.f32.mrf.mxu0
        %v1884 = vadd.f32 %v1775, %v1883
        %v1885 = vand.u32 %v380, 4294901760
        %1886 = vmatmul.f32.gmra.mxu0 %v1885
        %v1887 = vpop.f32.mrf.mxu0
        %v1888 = vadd.f32 %v1783, %v1887
        %v1889 = vand.u32 %v383, 4294901760
        %1890 = vmatmul.f32.gmra.mxu0 %v1889
        %v1891 = vpop.f32.mrf.mxu0
        %v1892 = vadd.f32 %v1791, %v1891
        %v1893 = vand.u32 %v386, 4294901760
        %1894 = vmatmul.f32.gmra.mxu0 %v1893
        %v1895 = vpop.f32.mrf.mxu0
        %v1896 = vadd.f32 %v1799, %v1895
        %v1897 = vand.u32 %v389, 4294901760
        %1898 = vmatmul.f32.gmra.mxu0 %v1897
        %v1899 = vpop.f32.mrf.mxu0
        %v1900 = vadd.f32 %v1807, %v1899
        %v1901 = vand.u32 %v392, 4294901760
        %1902 = vmatmul.f32.gmra.mxu0 %v1901
        %v1903 = vpop.f32.mrf.mxu0
        %v1904 = vadd.f32 %v1815, %v1903
        %v1905 = vand.u32 %v395, 4294901760
        %1906 = vmatmul.f32.gmra.mxu0 %v1905
        %v1907 = vpop.f32.mrf.mxu0
        %v1908 = vadd.f32 %v1823, %v1907
        %v1909 = vand.u32 %v398, 4294901760
        %1910 = vmatmul.f32.gmra.mxu0 %v1909
        %v1911 = vpop.f32.mrf.mxu0
        %v1912 = vadd.f32 %v1831, %v1911
        %v1913 = vand.u32 %v401, 4294901760
        %1914 = vmatmul.f32.gmra.mxu0 %v1913
        %v1915 = vpop.f32.mrf.mxu0
        %v1916 = vadd.f32 %v1839, %v1915
        %1917 = vdwg.mxu0
        %1918 = vmatpush.msra.mxu0 0.0
        %1919 = vmatpush.msra.mxu0 0.0
        %1920 = vmatpush.msra.mxu0 0.0
        %1921 = vmatpush.msra.mxu0 0.0
        %1922 = vmatpush.msra.mxu0 0.0
        %1923 = vmatpush.msra.mxu0 0.0
        %1924 = vmatpush.msra.mxu0 0.0
        %1925 = vmatpush.msra.mxu0 0.0
        %1926 = vmatpush.msra.mxu0 0.0
        %1927 = vmatpush.msra.mxu0 0.0
        %1928 = vmatpush.msra.mxu0 0.0
        %v1929 = vsub.f32 %v361, %v361
        %1930 = vmatpush.msra.mxu0 %v1929
        %v1931 = vsub.f32 %v357, %v357
        %1932 = vmatpush.msra.mxu0 %v1931
        %v1933 = vsub.f32 %v353, %v353
        %1934 = vmatpush.msra.mxu0 %v1933
        %v1935 = vsub.f32 %v349, %v349
        %1936 = vmatpush.msra.mxu0 %v1935
        %v1937 = vsub.f32 %v345, %v345
        %1938 = vmatpush.msra.mxu0 %v1937
        %v1939 = vand.u32 %v374, 4294901760
        %v1940 = vsub.f32 %v374, %v1939
        %1941 = vmatmul.f32.gmra.mxu0 %v1940
        %v1942 = vpop.f32.mrf.mxu0
        %v1943 = vadd.f32 %v1880, %v1942
        %v1944 = vand.u32 %v377, 4294901760
        %v1945 = vsub.f32 %v377, %v1944
        %1946 = vmatmul.f32.gmra.mxu0 %v1945
        %v1947 = vpop.f32.mrf.mxu0
        %v1948 = vadd.f32 %v1884, %v1947
        %v1949 = vand.u32 %v380, 4294901760
        %v1950 = vsub.f32 %v380, %v1949
        %1951 = vmatmul.f32.gmra.mxu0 %v1950
        %v1952 = vpop.f32.mrf.mxu0
        %v1953 = vadd.f32 %v1888, %v1952
        %v1954 = vand.u32 %v383, 4294901760
        %v1955 = vsub.f32 %v383, %v1954
        %1956 = vmatmul.f32.gmra.mxu0 %v1955
        %v1957 = vpop.f32.mrf.mxu0
        %v1958 = vadd.f32 %v1892, %v1957
        %v1959 = vand.u32 %v386, 4294901760
        %v1960 = vsub.f32 %v386, %v1959
        %1961 = vmatmul.f32.gmra.mxu0 %v1960
        %v1962 = vpop.f32.mrf.mxu0
        %v1963 = vadd.f32 %v1896, %v1962
        %v1964 = vand.u32 %v389, 4294901760
        %v1965 = vsub.f32 %v389, %v1964
        %1966 = vmatmul.f32.gmra.mxu0 %v1965
        %v1967 = vpop.f32.mrf.mxu0
        %v1968 = vadd.f32 %v1900, %v1967
        %v1969 = vand.u32 %v392, 4294901760
        %v1970 = vsub.f32 %v392, %v1969
        %1971 = vmatmul.f32.gmra.mxu0 %v1970
        %v1972 = vpop.f32.mrf.mxu0
        %v1973 = vadd.f32 %v1904, %v1972
        %v1974 = vand.u32 %v395, 4294901760
        %v1975 = vsub.f32 %v395, %v1974
        %1976 = vmatmul.f32.gmra.mxu0 %v1975
        %v1977 = vpop.f32.mrf.mxu0
        %v1978 = vadd.f32 %v1908, %v1977
        %v1979 = vand.u32 %v398, 4294901760
        %v1980 = vsub.f32 %v398, %v1979
        %1981 = vmatmul.f32.gmra.mxu0 %v1980
        %v1982 = vpop.f32.mrf.mxu0
        %v1983 = vadd.f32 %v1912, %v1982
        %v1984 = vand.u32 %v401, 4294901760
        %v1985 = vsub.f32 %v401, %v1984
        %1986 = vmatmul.f32.gmra.mxu0 %v1985
        %v1987 = vpop.f32.mrf.mxu0
        %v1988 = vadd.f32 %v1916, %v1987
        %1989 = vdwg.mxu0
        %1990 = vmatpush.msra.mxu0 0.0
        %1991 = vmatpush.msra.mxu0 0.0
        %1992 = vmatpush.msra.mxu0 0.0
        %1993 = vmatpush.msra.mxu0 0.0
        %1994 = vmatpush.msra.mxu0 0.0
        %1995 = vmatpush.msra.mxu0 0.0
        %1996 = vmatpush.msra.mxu0 0.0
        %1997 = vmatpush.msra.mxu0 0.0
        %1998 = vmatpush.msra.mxu0 0.0
        %1999 = vmatpush.msra.mxu0 0.0
        %2000 = vmatpush.msra.mxu0 0.0
        %2001 = vmatpush.msra.mxu0 %v361
        %2002 = vmatpush.msra.mxu0 %v357
        %2003 = vmatpush.msra.mxu0 %v353
        %2004 = vmatpush.msra.mxu0 %v349
        %2005 = vmatpush.msra.mxu0 %v345
        %v2006 = vand.u32 %v374, 4294901760
        %v2007 = vsub.f32 %v374, %v2006
        %v2008 = vand.u32 %v2007, 4294901760
        %2009 = vmatmul.f32.gmra.mxu0 %v2008
        %v2010 = vpop.f32.mrf.mxu0
        %v2011 = vadd.f32 %v1943, %v2010
        %v2012 = vand.u32 %v377, 4294901760
        %v2013 = vsub.f32 %v377, %v2012
        %v2014 = vand.u32 %v2013, 4294901760
        %2015 = vmatmul.f32.gmra.mxu0 %v2014
        %v2016 = vpop.f32.mrf.mxu0
        %v2017 = vadd.f32 %v1948, %v2016
        %v2018 = vand.u32 %v380, 4294901760
        %v2019 = vsub.f32 %v380, %v2018
        %v2020 = vand.u32 %v2019, 4294901760
        %2021 = vmatmul.f32.gmra.mxu0 %v2020
        %v2022 = vpop.f32.mrf.mxu0
        %v2023 = vadd.f32 %v1953, %v2022
        %v2024 = vand.u32 %v383, 4294901760
        %v2025 = vsub.f32 %v383, %v2024
        %v2026 = vand.u32 %v2025, 4294901760
        %2027 = vmatmul.f32.gmra.mxu0 %v2026
        %v2028 = vpop.f32.mrf.mxu0
        %v2029 = vadd.f32 %v1958, %v2028
        %v2030 = vand.u32 %v386, 4294901760
        %v2031 = vsub.f32 %v386, %v2030
        %v2032 = vand.u32 %v2031, 4294901760
        %2033 = vmatmul.f32.gmra.mxu0 %v2032
        %v2034 = vpop.f32.mrf.mxu0
        %v2035 = vadd.f32 %v1963, %v2034
        %v2036 = vand.u32 %v389, 4294901760
        %v2037 = vsub.f32 %v389, %v2036
        %v2038 = vand.u32 %v2037, 4294901760
        %2039 = vmatmul.f32.gmra.mxu0 %v2038
        %v2040 = vpop.f32.mrf.mxu0
        %v2041 = vadd.f32 %v1968, %v2040
        %v2042 = vand.u32 %v392, 4294901760
        %v2043 = vsub.f32 %v392, %v2042
        %v2044 = vand.u32 %v2043, 4294901760
        %2045 = vmatmul.f32.gmra.mxu0 %v2044
        %v2046 = vpop.f32.mrf.mxu0
        %v2047 = vadd.f32 %v1973, %v2046
        %v2048 = vand.u32 %v395, 4294901760
        %v2049 = vsub.f32 %v395, %v2048
        %v2050 = vand.u32 %v2049, 4294901760
        %2051 = vmatmul.f32.gmra.mxu0 %v2050
        %v2052 = vpop.f32.mrf.mxu0
        %v2053 = vadd.f32 %v1978, %v2052
        %v2054 = vand.u32 %v398, 4294901760
        %v2055 = vsub.f32 %v398, %v2054
        %v2056 = vand.u32 %v2055, 4294901760
        %2057 = vmatmul.f32.gmra.mxu0 %v2056
        %v2058 = vpop.f32.mrf.mxu0
        %v2059 = vadd.f32 %v1983, %v2058
        %v2060 = vand.u32 %v401, 4294901760
        %v2061 = vsub.f32 %v401, %v2060
        %v2062 = vand.u32 %v2061, 4294901760
        %2063 = vmatmul.f32.gmra.mxu0 %v2062
        %v2064 = vpop.f32.mrf.mxu0
        %v2065 = vadd.f32 %v1988, %v2064
        %2066 = vdwg.mxu0
        %2067 = vmatpush.msra.mxu0 0.0
        %2068 = vmatpush.msra.mxu0 0.0
        %2069 = vmatpush.msra.mxu0 0.0
        %2070 = vmatpush.msra.mxu0 0.0
        %2071 = vmatpush.msra.mxu0 0.0
        %2072 = vmatpush.msra.mxu0 0.0
        %2073 = vmatpush.msra.mxu0 0.0
        %2074 = vmatpush.msra.mxu0 0.0
        %2075 = vmatpush.msra.mxu0 0.0
        %2076 = vmatpush.msra.mxu0 0.0
        %2077 = vmatpush.msra.mxu0 0.0
        %v2078 = vsub.f32 %v361, %v361
        %v2079 = vand.u32 %v2078, 4294901760
        %2080 = vmatpush.msra.mxu0 %v2079
        %v2081 = vsub.f32 %v357, %v357
        %v2082 = vand.u32 %v2081, 4294901760
        %2083 = vmatpush.msra.mxu0 %v2082
        %v2084 = vsub.f32 %v353, %v353
        %v2085 = vand.u32 %v2084, 4294901760
        %2086 = vmatpush.msra.mxu0 %v2085
        %v2087 = vsub.f32 %v349, %v349
        %v2088 = vand.u32 %v2087, 4294901760
        %2089 = vmatpush.msra.mxu0 %v2088
        %v2090 = vsub.f32 %v345, %v345
        %v2091 = vand.u32 %v2090, 4294901760
        %2092 = vmatpush.msra.mxu0 %v2091
        %v2093 = vand.u32 %v374, 4294901760
        %2094 = vmatmul.f32.gmra.mxu0 %v2093
        %v2095 = vpop.f32.mrf.mxu0
        %v2096 = vadd.f32 %v2011, %v2095
        %v2097 = vand.u32 %v377, 4294901760
        %2098 = vmatmul.f32.gmra.mxu0 %v2097
        %v2099 = vpop.f32.mrf.mxu0
        %v2100 = vadd.f32 %v2017, %v2099
        %v2101 = vand.u32 %v380, 4294901760
        %2102 = vmatmul.f32.gmra.mxu0 %v2101
        %v2103 = vpop.f32.mrf.mxu0
        %v2104 = vadd.f32 %v2023, %v2103
        %v2105 = vand.u32 %v383, 4294901760
        %2106 = vmatmul.f32.gmra.mxu0 %v2105
        %v2107 = vpop.f32.mrf.mxu0
        %v2108 = vadd.f32 %v2029, %v2107
        %v2109 = vand.u32 %v386, 4294901760
        %2110 = vmatmul.f32.gmra.mxu0 %v2109
        %v2111 = vpop.f32.mrf.mxu0
        %v2112 = vadd.f32 %v2035, %v2111
        %v2113 = vand.u32 %v389, 4294901760
        %2114 = vmatmul.f32.gmra.mxu0 %v2113
        %v2115 = vpop.f32.mrf.mxu0
        %v2116 = vadd.f32 %v2041, %v2115
        %v2117 = vand.u32 %v392, 4294901760
        %2118 = vmatmul.f32.gmra.mxu0 %v2117
        %v2119 = vpop.f32.mrf.mxu0
        %v2120 = vadd.f32 %v2047, %v2119
        %v2121 = vand.u32 %v395, 4294901760
        %2122 = vmatmul.f32.gmra.mxu0 %v2121
        %v2123 = vpop.f32.mrf.mxu0
        %v2124 = vadd.f32 %v2053, %v2123
        %v2125 = vand.u32 %v398, 4294901760
        %2126 = vmatmul.f32.gmra.mxu0 %v2125
        %v2127 = vpop.f32.mrf.mxu0
        %v2128 = vadd.f32 %v2059, %v2127
        %v2129 = vand.u32 %v401, 4294901760
        %2130 = vmatmul.f32.gmra.mxu0 %v2129
        %v2131 = vpop.f32.mrf.mxu0
        %v2132 = vadd.f32 %v2065, %v2131
        %2133 = vdwg.mxu0
        %2134 = vmatpush.msra.mxu0 0.0
        %2135 = vmatpush.msra.mxu0 0.0
        %2136 = vmatpush.msra.mxu0 0.0
        %2137 = vmatpush.msra.mxu0 0.0
        %2138 = vmatpush.msra.mxu0 0.0
        %2139 = vmatpush.msra.mxu0 0.0
        %2140 = vmatpush.msra.mxu0 0.0
        %2141 = vmatpush.msra.mxu0 0.0
        %2142 = vmatpush.msra.mxu0 0.0
        %2143 = vmatpush.msra.mxu0 0.0
        %2144 = vmatpush.msra.mxu0 0.0
        %2145 = vmatpush.msra.mxu0 %v361
        %2146 = vmatpush.msra.mxu0 %v357
        %2147 = vmatpush.msra.mxu0 %v353
        %2148 = vmatpush.msra.mxu0 %v349
        %2149 = vmatpush.msra.mxu0 %v345
        %v2150 = vand.u32 %v374, 4294901760
        %2151 = vmatmul.f32.gmra.mxu0 %v2150
        %v2152 = vpop.f32.mrf.mxu0
        %v2153 = vadd.f32 %v2096, %v2152
        %v2154 = vand.u32 %v377, 4294901760
        %2155 = vmatmul.f32.gmra.mxu0 %v2154
        %v2156 = vpop.f32.mrf.mxu0
        %v2157 = vadd.f32 %v2100, %v2156
        %v2158 = vand.u32 %v380, 4294901760
        %2159 = vmatmul.f32.gmra.mxu0 %v2158
        %v2160 = vpop.f32.mrf.mxu0
        %v2161 = vadd.f32 %v2104, %v2160
        %v2162 = vand.u32 %v383, 4294901760
        %2163 = vmatmul.f32.gmra.mxu0 %v2162
        %v2164 = vpop.f32.mrf.mxu0
        %v2165 = vadd.f32 %v2108, %v2164
        %v2166 = vand.u32 %v386, 4294901760
        %2167 = vmatmul.f32.gmra.mxu0 %v2166
        %v2168 = vpop.f32.mrf.mxu0
        %v2169 = vadd.f32 %v2112, %v2168
        %v2170 = vand.u32 %v389, 4294901760
        %2171 = vmatmul.f32.gmra.mxu0 %v2170
        %v2172 = vpop.f32.mrf.mxu0
        %v2173 = vadd.f32 %v2116, %v2172
        %v2174 = vand.u32 %v392, 4294901760
        %2175 = vmatmul.f32.gmra.mxu0 %v2174
        %v2176 = vpop.f32.mrf.mxu0
        %v2177 = vadd.f32 %v2120, %v2176
        %v2178 = vand.u32 %v395, 4294901760
        %2179 = vmatmul.f32.gmra.mxu0 %v2178
        %v2180 = vpop.f32.mrf.mxu0
        %v2181 = vadd.f32 %v2124, %v2180
        %v2182 = vand.u32 %v398, 4294901760
        %2183 = vmatmul.f32.gmra.mxu0 %v2182
        %v2184 = vpop.f32.mrf.mxu0
        %v2185 = vadd.f32 %v2128, %v2184
        %v2186 = vand.u32 %v401, 4294901760
        %2187 = vmatmul.f32.gmra.mxu0 %v2186
        %v2188 = vpop.f32.mrf.mxu0
        %v2189 = vadd.f32 %v2132, %v2188
        %2190 = vdwg.mxu0
        %v2191 = vld [vmem:[%s2 + $0xd0] sm:$0xff]
        %v2192 = vld [vmem:[%s2 + $0xd8] sm:$0xff]
        %2195 = vst [vmem:[#allocation1] ss:$2 sm:$0xff] %v330
        %s2196 = scalar_lea.vmem [#allocation1], 16
        %2197 = vst [vmem:[%s2196] ss:$2 sm:$0xff] %v331
        %v2198 = vld.sshfl [vmem:[#allocation1] sm:$0xff pattern:$0x75316420]
        %v2199 = vld.sshfl [vmem:[#allocation1 + $0x8] sm:$0xff pattern:$0x75316420]
        %v2200 = vld.sshfl [vmem:[#allocation1 + $0x10] sm:$0xff pattern:$0x75316420]
        %v2201 = vld.sshfl [vmem:[#allocation1 + $0x18] sm:$0xff pattern:$0x75316420]
        %vm2202 = vcmask 31744
        %v2204 = vsel %vm2202, %v2191, 0
        %v2207 = vsel %vm2202, %v2192, 0
        %vm2209 = vcmask 1043456
        %v2210 = vsel %vm2209, %v2198, 0
        %v2212 = vsel %vm2209, %v2199, 0
        %v2214 = vsel %vm2209, %v2200, 0
        %v2216 = vsel %vm2209, %v2201, 0
        %2218 = vmatpush.msra.mxu0 0.0
        %2219 = vmatpush.msra.mxu0 0.0
        %2220 = vmatpush.msra.mxu0 0.0
        %2221 = vmatpush.msra.mxu0 0.0
        %2222 = vmatpush.msra.mxu0 0.0
        %2223 = vmatpush.msra.mxu0 0.0
        %2224 = vmatpush.msra.mxu0 0.0
        %2225 = vmatpush.msra.mxu0 0.0
        %2226 = vmatpush.msra.mxu0 0.0
        %2227 = vmatpush.msra.mxu0 0.0
        %2228 = vmatpush.msra.mxu0 0.0
        %2229 = vmatpush.msra.mxu0 0.0
        %2230 = vmatpush.msra.mxu0 0.0
        %2231 = vmatpush.msra.mxu0 0.0
        %2232 = vmatpush.msra.mxu0 0.0
        %v2233 = vand.u32 %v2210, 4294901760
        %2234 = vmatpush.msra.mxu0 %v2233
        %v2235 = vand.u32 %v2204, 4294901760
        %v2236 = vsub.f32 %v2204, %v2235
        %v2237 = vand.u32 %v2236, 4294901760
        %v2238 = vsub.f32 %v2236, %v2237
        %v2239 = vand.u32 %v2238, 4294901760
        %2240 = vmatmul.f32.gmra.mxu0 %v2239
        %v2241 = vpop.f32.mrf.mxu0
        %v2242 = vadd.f32 0.0, %v2241
        %v2243 = vand.u32 %v2207, 4294901760
        %v2244 = vsub.f32 %v2207, %v2243
        %v2245 = vand.u32 %v2244, 4294901760
        %v2246 = vsub.f32 %v2244, %v2245
        %v2247 = vand.u32 %v2246, 4294901760
        %2248 = vmatmul.f32.gmra.mxu0 %v2247
        %v2249 = vpop.f32.mrf.mxu0
        %v2250 = vadd.f32 0.0, %v2249
        %2251 = vdwg.mxu0
        %2252 = vmatpush.msra.mxu0 0.0
        %2253 = vmatpush.msra.mxu0 0.0
        %2254 = vmatpush.msra.mxu0 0.0
        %2255 = vmatpush.msra.mxu0 0.0
        %2256 = vmatpush.msra.mxu0 0.0
        %2257 = vmatpush.msra.mxu0 0.0
        %2258 = vmatpush.msra.mxu0 0.0
        %2259 = vmatpush.msra.mxu0 0.0
        %2260 = vmatpush.msra.mxu0 0.0
        %2261 = vmatpush.msra.mxu0 0.0
        %2262 = vmatpush.msra.mxu0 0.0
        %2263 = vmatpush.msra.mxu0 0.0
        %2264 = vmatpush.msra.mxu0 0.0
        %2265 = vmatpush.msra.mxu0 0.0
        %2266 = vmatpush.msra.mxu0 0.0
        %v2267 = vand.u32 %v2210, 4294901760
        %v2268 = vsub.f32 %v2210, %v2267
        %v2269 = vand.u32 %v2268, 4294901760
        %v2270 = vsub.f32 %v2268, %v2269
        %v2271 = vand.u32 %v2270, 4294901760
        %2272 = vmatpush.msra.mxu0 %v2271
        %v2273 = vand.u32 %v2204, 4294901760
        %2274 = vmatmul.f32.gmra.mxu0 %v2273
        %v2275 = vpop.f32.mrf.mxu0
        %v2276 = vadd.f32 %v2242, %v2275
        %v2277 = vand.u32 %v2207, 4294901760
        %2278 = vmatmul.f32.gmra.mxu0 %v2277
        %v2279 = vpop.f32.mrf.mxu0
        %v2280 = vadd.f32 %v2250, %v2279
        %2281 = vdwg.mxu0
        %2282 = vmatpush.msra.mxu0 0.0
        %2283 = vmatpush.msra.mxu0 0.0
        %2284 = vmatpush.msra.mxu0 0.0
        %2285 = vmatpush.msra.mxu0 0.0
        %2286 = vmatpush.msra.mxu0 0.0
        %2287 = vmatpush.msra.mxu0 0.0
        %2288 = vmatpush.msra.mxu0 0.0
        %2289 = vmatpush.msra.mxu0 0.0
        %2290 = vmatpush.msra.mxu0 0.0
        %2291 = vmatpush.msra.mxu0 0.0
        %2292 = vmatpush.msra.mxu0 0.0
        %2293 = vmatpush.msra.mxu0 0.0
        %2294 = vmatpush.msra.mxu0 0.0
        %2295 = vmatpush.msra.mxu0 0.0
        %2296 = vmatpush.msra.mxu0 0.0
        %v2297 = vand.u32 %v2210, 4294901760
        %v2298 = vsub.f32 %v2210, %v2297
        %2299 = vmatpush.msra.mxu0 %v2298
        %v2300 = vand.u32 %v2204, 4294901760
        %v2301 = vsub.f32 %v2204, %v2300
        %2302 = vmatmul.f32.gmra.mxu0 %v2301
        %v2303 = vpop.f32.mrf.mxu0
        %v2304 = vadd.f32 %v2276, %v2303
        %v2305 = vand.u32 %v2207, 4294901760
        %v2306 = vsub.f32 %v2207, %v2305
        %2307 = vmatmul.f32.gmra.mxu0 %v2306
        %v2308 = vpop.f32.mrf.mxu0
        %v2309 = vadd.f32 %v2280, %v2308
        %2310 = vdwg.mxu0
        %2311 = vmatpush.msra.mxu0 0.0
        %2312 = vmatpush.msra.mxu0 0.0
        %2313 = vmatpush.msra.mxu0 0.0
        %2314 = vmatpush.msra.mxu0 0.0
        %2315 = vmatpush.msra.mxu0 0.0
        %2316 = vmatpush.msra.mxu0 0.0
        %2317 = vmatpush.msra.mxu0 0.0
        %2318 = vmatpush.msra.mxu0 0.0
        %2319 = vmatpush.msra.mxu0 0.0
        %2320 = vmatpush.msra.mxu0 0.0
        %2321 = vmatpush.msra.mxu0 0.0
        %2322 = vmatpush.msra.mxu0 0.0
        %2323 = vmatpush.msra.mxu0 0.0
        %2324 = vmatpush.msra.mxu0 0.0
        %2325 = vmatpush.msra.mxu0 0.0
        %v2326 = vand.u32 %v2210, 4294901760
        %2327 = vmatpush.msra.mxu0 %v2326
        %v2328 = vand.u32 %v2204, 4294901760
        %v2329 = vsub.f32 %v2204, %v2328
        %v2330 = vand.u32 %v2329, 4294901760
        %2331 = vmatmul.f32.gmra.mxu0 %v2330
        %v2332 = vpop.f32.mrf.mxu0
        %v2333 = vadd.f32 %v2304, %v2332
        %v2334 = vand.u32 %v2207, 4294901760
        %v2335 = vsub.f32 %v2207, %v2334
        %v2336 = vand.u32 %v2335, 4294901760
        %2337 = vmatmul.f32.gmra.mxu0 %v2336
        %v2338 = vpop.f32.mrf.mxu0
        %v2339 = vadd.f32 %v2309, %v2338
        %2340 = vdwg.mxu0
        %2341 = vmatpush.msra.mxu0 0.0
        %2342 = vmatpush.msra.mxu0 0.0
        %2343 = vmatpush.msra.mxu0 0.0
        %2344 = vmatpush.msra.mxu0 0.0
        %2345 = vmatpush.msra.mxu0 0.0
        %2346 = vmatpush.msra.mxu0 0.0
        %2347 = vmatpush.msra.mxu0 0.0
        %2348 = vmatpush.msra.mxu0 0.0
        %2349 = vmatpush.msra.mxu0 0.0
        %2350 = vmatpush.msra.mxu0 0.0
        %2351 = vmatpush.msra.mxu0 0.0
        %2352 = vmatpush.msra.mxu0 0.0
        %2353 = vmatpush.msra.mxu0 0.0
        %2354 = vmatpush.msra.mxu0 0.0
        %2355 = vmatpush.msra.mxu0 0.0
        %v2356 = vand.u32 %v2210, 4294901760
        %v2357 = vsub.f32 %v2210, %v2356
        %v2358 = vand.u32 %v2357, 4294901760
        %2359 = vmatpush.msra.mxu0 %v2358
        %v2360 = vand.u32 %v2204, 4294901760
        %2361 = vmatmul.f32.gmra.mxu0 %v2360
        %v2362 = vpop.f32.mrf.mxu0
        %v2363 = vadd.f32 %v2333, %v2362
        %v2364 = vand.u32 %v2207, 4294901760
        %2365 = vmatmul.f32.gmra.mxu0 %v2364
        %v2366 = vpop.f32.mrf.mxu0
        %v2367 = vadd.f32 %v2339, %v2366
        %2368 = vdwg.mxu0
        %2369 = vmatpush.msra.mxu0 0.0
        %2370 = vmatpush.msra.mxu0 0.0
        %2371 = vmatpush.msra.mxu0 0.0
        %2372 = vmatpush.msra.mxu0 0.0
        %2373 = vmatpush.msra.mxu0 0.0
        %2374 = vmatpush.msra.mxu0 0.0
        %2375 = vmatpush.msra.mxu0 0.0
        %2376 = vmatpush.msra.mxu0 0.0
        %2377 = vmatpush.msra.mxu0 0.0
        %2378 = vmatpush.msra.mxu0 0.0
        %2379 = vmatpush.msra.mxu0 0.0
        %2380 = vmatpush.msra.mxu0 0.0
        %2381 = vmatpush.msra.mxu0 0.0
        %2382 = vmatpush.msra.mxu0 0.0
        %2383 = vmatpush.msra.mxu0 0.0
        %v2384 = vand.u32 %v2210, 4294901760
        %2385 = vmatpush.msra.mxu0 %v2384
        %v2386 = vand.u32 %v2204, 4294901760
        %2387 = vmatmul.f32.gmra.mxu0 %v2386
        %v2388 = vpop.f32.mrf.mxu0
        %v2389 = vadd.f32 %v2363, %v2388
        %v2390 = vand.u32 %v2207, 4294901760
        %2391 = vmatmul.f32.gmra.mxu0 %v2390
        %v2392 = vpop.f32.mrf.mxu0
        %v2393 = vadd.f32 %v2367, %v2392
        %2394 = vdwg.mxu0
        %2395 = vmatpush.msra.mxu0 0.0
        %2396 = vmatpush.msra.mxu0 0.0
        %2397 = vmatpush.msra.mxu0 0.0
        %2398 = vmatpush.msra.mxu0 0.0
        %2399 = vmatpush.msra.mxu0 0.0
        %2400 = vmatpush.msra.mxu0 0.0
        %2401 = vmatpush.msra.mxu0 0.0
        %2402 = vmatpush.msra.mxu0 0.0
        %2403 = vmatpush.msra.mxu0 0.0
        %2404 = vmatpush.msra.mxu0 0.0
        %2405 = vmatpush.msra.mxu0 0.0
        %2406 = vmatpush.msra.mxu0 0.0
        %2407 = vmatpush.msra.mxu0 0.0
        %2408 = vmatpush.msra.mxu0 0.0
        %2409 = vmatpush.msra.mxu0 0.0
        %v2410 = vand.u32 %v2212, 4294901760
        %2411 = vmatpush.msra.mxu0 %v2410
        %v2412 = vand.u32 %v2204, 4294901760
        %v2413 = vsub.f32 %v2204, %v2412
        %v2414 = vand.u32 %v2413, 4294901760
        %v2415 = vsub.f32 %v2413, %v2414
        %v2416 = vand.u32 %v2415, 4294901760
        %2417 = vmatmul.f32.gmra.mxu0 %v2416
        %v2418 = vpop.f32.mrf.mxu0
        %v2419 = vadd.f32 0.0, %v2418
        %v2420 = vand.u32 %v2207, 4294901760
        %v2421 = vsub.f32 %v2207, %v2420
        %v2422 = vand.u32 %v2421, 4294901760
        %v2423 = vsub.f32 %v2421, %v2422
        %v2424 = vand.u32 %v2423, 4294901760
        %2425 = vmatmul.f32.gmra.mxu0 %v2424
        %v2426 = vpop.f32.mrf.mxu0
        %v2427 = vadd.f32 0.0, %v2426
        %2428 = vdwg.mxu0
        %2429 = vmatpush.msra.mxu0 0.0
        %2430 = vmatpush.msra.mxu0 0.0
        %2431 = vmatpush.msra.mxu0 0.0
        %2432 = vmatpush.msra.mxu0 0.0
        %2433 = vmatpush.msra.mxu0 0.0
        %2434 = vmatpush.msra.mxu0 0.0
        %2435 = vmatpush.msra.mxu0 0.0
        %2436 = vmatpush.msra.mxu0 0.0
        %2437 = vmatpush.msra.mxu0 0.0
        %2438 = vmatpush.msra.mxu0 0.0
        %2439 = vmatpush.msra.mxu0 0.0
        %2440 = vmatpush.msra.mxu0 0.0
        %2441 = vmatpush.msra.mxu0 0.0
        %2442 = vmatpush.msra.mxu0 0.0
        %2443 = vmatpush.msra.mxu0 0.0
        %v2444 = vand.u32 %v2212, 4294901760
        %v2445 = vsub.f32 %v2212, %v2444
        %v2446 = vand.u32 %v2445, 4294901760
        %v2447 = vsub.f32 %v2445, %v2446
        %v2448 = vand.u32 %v2447, 4294901760
        %2449 = vmatpush.msra.mxu0 %v2448
        %v2450 = vand.u32 %v2204, 4294901760
        %2451 = vmatmul.f32.gmra.mxu0 %v2450
        %v2452 = vpop.f32.mrf.mxu0
        %v2453 = vadd.f32 %v2419, %v2452
        %v2454 = vand.u32 %v2207, 4294901760
        %2455 = vmatmul.f32.gmra.mxu0 %v2454
        %v2456 = vpop.f32.mrf.mxu0
        %v2457 = vadd.f32 %v2427, %v2456
        %2458 = vdwg.mxu0
        %2459 = vmatpush.msra.mxu0 0.0
        %2460 = vmatpush.msra.mxu0 0.0
        %2461 = vmatpush.msra.mxu0 0.0
        %2462 = vmatpush.msra.mxu0 0.0
        %2463 = vmatpush.msra.mxu0 0.0
        %2464 = vmatpush.msra.mxu0 0.0
        %2465 = vmatpush.msra.mxu0 0.0
        %2466 = vmatpush.msra.mxu0 0.0
        %2467 = vmatpush.msra.mxu0 0.0
        %2468 = vmatpush.msra.mxu0 0.0
        %2469 = vmatpush.msra.mxu0 0.0
        %2470 = vmatpush.msra.mxu0 0.0
        %2471 = vmatpush.msra.mxu0 0.0
        %2472 = vmatpush.msra.mxu0 0.0
        %2473 = vmatpush.msra.mxu0 0.0
        %v2474 = vand.u32 %v2212, 4294901760
        %v2475 = vsub.f32 %v2212, %v2474
        %2476 = vmatpush.msra.mxu0 %v2475
        %v2477 = vand.u32 %v2204, 4294901760
        %v2478 = vsub.f32 %v2204, %v2477
        %2479 = vmatmul.f32.gmra.mxu0 %v2478
        %v2480 = vpop.f32.mrf.mxu0
        %v2481 = vadd.f32 %v2453, %v2480
        %v2482 = vand.u32 %v2207, 4294901760
        %v2483 = vsub.f32 %v2207, %v2482
        %2484 = vmatmul.f32.gmra.mxu0 %v2483
        %v2485 = vpop.f32.mrf.mxu0
        %v2486 = vadd.f32 %v2457, %v2485
        %2487 = vdwg.mxu0
        %2488 = vmatpush.msra.mxu0 0.0
        %2489 = vmatpush.msra.mxu0 0.0
        %2490 = vmatpush.msra.mxu0 0.0
        %2491 = vmatpush.msra.mxu0 0.0
        %2492 = vmatpush.msra.mxu0 0.0
        %2493 = vmatpush.msra.mxu0 0.0
        %2494 = vmatpush.msra.mxu0 0.0
        %2495 = vmatpush.msra.mxu0 0.0
        %2496 = vmatpush.msra.mxu0 0.0
        %2497 = vmatpush.msra.mxu0 0.0
        %2498 = vmatpush.msra.mxu0 0.0
        %2499 = vmatpush.msra.mxu0 0.0
        %2500 = vmatpush.msra.mxu0 0.0
        %2501 = vmatpush.msra.mxu0 0.0
        %2502 = vmatpush.msra.mxu0 0.0
        %v2503 = vand.u32 %v2212, 4294901760
        %2504 = vmatpush.msra.mxu0 %v2503
        %v2505 = vand.u32 %v2204, 4294901760
        %v2506 = vsub.f32 %v2204, %v2505
        %v2507 = vand.u32 %v2506, 4294901760
        %2508 = vmatmul.f32.gmra.mxu0 %v2507
        %v2509 = vpop.f32.mrf.mxu0
        %v2510 = vadd.f32 %v2481, %v2509
        %v2511 = vand.u32 %v2207, 4294901760
        %v2512 = vsub.f32 %v2207, %v2511
        %v2513 = vand.u32 %v2512, 4294901760
        %2514 = vmatmul.f32.gmra.mxu0 %v2513
        %v2515 = vpop.f32.mrf.mxu0
        %v2516 = vadd.f32 %v2486, %v2515
        %2517 = vdwg.mxu0
        %2518 = vmatpush.msra.mxu0 0.0
        %2519 = vmatpush.msra.mxu0 0.0
        %2520 = vmatpush.msra.mxu0 0.0
        %2521 = vmatpush.msra.mxu0 0.0
        %2522 = vmatpush.msra.mxu0 0.0
        %2523 = vmatpush.msra.mxu0 0.0
        %2524 = vmatpush.msra.mxu0 0.0
        %2525 = vmatpush.msra.mxu0 0.0
        %2526 = vmatpush.msra.mxu0 0.0
        %2527 = vmatpush.msra.mxu0 0.0
        %2528 = vmatpush.msra.mxu0 0.0
        %2529 = vmatpush.msra.mxu0 0.0
        %2530 = vmatpush.msra.mxu0 0.0
        %2531 = vmatpush.msra.mxu0 0.0
        %2532 = vmatpush.msra.mxu0 0.0
        %v2533 = vand.u32 %v2212, 4294901760
        %v2534 = vsub.f32 %v2212, %v2533
        %v2535 = vand.u32 %v2534, 4294901760
        %2536 = vmatpush.msra.mxu0 %v2535
        %v2537 = vand.u32 %v2204, 4294901760
        %2538 = vmatmul.f32.gmra.mxu0 %v2537
        %v2539 = vpop.f32.mrf.mxu0
        %v2540 = vadd.f32 %v2510, %v2539
        %v2541 = vand.u32 %v2207, 4294901760
        %2542 = vmatmul.f32.gmra.mxu0 %v2541
        %v2543 = vpop.f32.mrf.mxu0
        %v2544 = vadd.f32 %v2516, %v2543
        %2545 = vdwg.mxu0
        %2546 = vmatpush.msra.mxu0 0.0
        %2547 = vmatpush.msra.mxu0 0.0
        %2548 = vmatpush.msra.mxu0 0.0
        %2549 = vmatpush.msra.mxu0 0.0
        %2550 = vmatpush.msra.mxu0 0.0
        %2551 = vmatpush.msra.mxu0 0.0
        %2552 = vmatpush.msra.mxu0 0.0
        %2553 = vmatpush.msra.mxu0 0.0
        %2554 = vmatpush.msra.mxu0 0.0
        %2555 = vmatpush.msra.mxu0 0.0
        %2556 = vmatpush.msra.mxu0 0.0
        %2557 = vmatpush.msra.mxu0 0.0
        %2558 = vmatpush.msra.mxu0 0.0
        %2559 = vmatpush.msra.mxu0 0.0
        %2560 = vmatpush.msra.mxu0 0.0
        %v2561 = vand.u32 %v2212, 4294901760
        %2562 = vmatpush.msra.mxu0 %v2561
        %v2563 = vand.u32 %v2204, 4294901760
        %2564 = vmatmul.f32.gmra.mxu0 %v2563
        %v2565 = vpop.f32.mrf.mxu0
        %v2566 = vadd.f32 %v2540, %v2565
        %v2567 = vand.u32 %v2207, 4294901760
        %2568 = vmatmul.f32.gmra.mxu0 %v2567
        %v2569 = vpop.f32.mrf.mxu0
        %v2570 = vadd.f32 %v2544, %v2569
        %2571 = vdwg.mxu0
        %2572 = vmatpush.msra.mxu0 0.0
        %2573 = vmatpush.msra.mxu0 0.0
        %2574 = vmatpush.msra.mxu0 0.0
        %2575 = vmatpush.msra.mxu0 0.0
        %2576 = vmatpush.msra.mxu0 0.0
        %2577 = vmatpush.msra.mxu0 0.0
        %2578 = vmatpush.msra.mxu0 0.0
        %2579 = vmatpush.msra.mxu0 0.0
        %2580 = vmatpush.msra.mxu0 0.0
        %2581 = vmatpush.msra.mxu0 0.0
        %2582 = vmatpush.msra.mxu0 0.0
        %2583 = vmatpush.msra.mxu0 0.0
        %2584 = vmatpush.msra.mxu0 0.0
        %2585 = vmatpush.msra.mxu0 0.0
        %2586 = vmatpush.msra.mxu0 0.0
        %v2587 = vand.u32 %v2214, 4294901760
        %2588 = vmatpush.msra.mxu0 %v2587
        %v2589 = vand.u32 %v2204, 4294901760
        %v2590 = vsub.f32 %v2204, %v2589
        %v2591 = vand.u32 %v2590, 4294901760
        %v2592 = vsub.f32 %v2590, %v2591
        %v2593 = vand.u32 %v2592, 4294901760
        %2594 = vmatmul.f32.gmra.mxu0 %v2593
        %v2595 = vpop.f32.mrf.mxu0
        %v2596 = vadd.f32 0.0, %v2595
        %v2597 = vand.u32 %v2207, 4294901760
        %v2598 = vsub.f32 %v2207, %v2597
        %v2599 = vand.u32 %v2598, 4294901760
        %v2600 = vsub.f32 %v2598, %v2599
        %v2601 = vand.u32 %v2600, 4294901760
        %2602 = vmatmul.f32.gmra.mxu0 %v2601
        %v2603 = vpop.f32.mrf.mxu0
        %v2604 = vadd.f32 0.0, %v2603
        %2605 = vdwg.mxu0
        %2606 = vmatpush.msra.mxu0 0.0
        %2607 = vmatpush.msra.mxu0 0.0
        %2608 = vmatpush.msra.mxu0 0.0
        %2609 = vmatpush.msra.mxu0 0.0
        %2610 = vmatpush.msra.mxu0 0.0
        %2611 = vmatpush.msra.mxu0 0.0
        %2612 = vmatpush.msra.mxu0 0.0
        %2613 = vmatpush.msra.mxu0 0.0
        %2614 = vmatpush.msra.mxu0 0.0
        %2615 = vmatpush.msra.mxu0 0.0
        %2616 = vmatpush.msra.mxu0 0.0
        %2617 = vmatpush.msra.mxu0 0.0
        %2618 = vmatpush.msra.mxu0 0.0
        %2619 = vmatpush.msra.mxu0 0.0
        %2620 = vmatpush.msra.mxu0 0.0
        %v2621 = vand.u32 %v2214, 4294901760
        %v2622 = vsub.f32 %v2214, %v2621
        %v2623 = vand.u32 %v2622, 4294901760
        %v2624 = vsub.f32 %v2622, %v2623
        %v2625 = vand.u32 %v2624, 4294901760
        %2626 = vmatpush.msra.mxu0 %v2625
        %v2627 = vand.u32 %v2204, 4294901760
        %2628 = vmatmul.f32.gmra.mxu0 %v2627
        %v2629 = vpop.f32.mrf.mxu0
        %v2630 = vadd.f32 %v2596, %v2629
        %v2631 = vand.u32 %v2207, 4294901760
        %2632 = vmatmul.f32.gmra.mxu0 %v2631
        %v2633 = vpop.f32.mrf.mxu0
        %v2634 = vadd.f32 %v2604, %v2633
        %2635 = vdwg.mxu0
        %2636 = vmatpush.msra.mxu0 0.0
        %2637 = vmatpush.msra.mxu0 0.0
        %2638 = vmatpush.msra.mxu0 0.0
        %2639 = vmatpush.msra.mxu0 0.0
        %2640 = vmatpush.msra.mxu0 0.0
        %2641 = vmatpush.msra.mxu0 0.0
        %2642 = vmatpush.msra.mxu0 0.0
        %2643 = vmatpush.msra.mxu0 0.0
        %2644 = vmatpush.msra.mxu0 0.0
        %2645 = vmatpush.msra.mxu0 0.0
        %2646 = vmatpush.msra.mxu0 0.0
        %2647 = vmatpush.msra.mxu0 0.0
        %2648 = vmatpush.msra.mxu0 0.0
        %2649 = vmatpush.msra.mxu0 0.0
        %2650 = vmatpush.msra.mxu0 0.0
        %v2651 = vand.u32 %v2214, 4294901760
        %v2652 = vsub.f32 %v2214, %v2651
        %2653 = vmatpush.msra.mxu0 %v2652
        %v2654 = vand.u32 %v2204, 4294901760
        %v2655 = vsub.f32 %v2204, %v2654
        %2656 = vmatmul.f32.gmra.mxu0 %v2655
        %v2657 = vpop.f32.mrf.mxu0
        %v2658 = vadd.f32 %v2630, %v2657
        %v2659 = vand.u32 %v2207, 4294901760
        %v2660 = vsub.f32 %v2207, %v2659
        %2661 = vmatmul.f32.gmra.mxu0 %v2660
        %v2662 = vpop.f32.mrf.mxu0
        %v2663 = vadd.f32 %v2634, %v2662
        %2664 = vdwg.mxu0
        %2665 = vmatpush.msra.mxu0 0.0
        %2666 = vmatpush.msra.mxu0 0.0
        %2667 = vmatpush.msra.mxu0 0.0
        %2668 = vmatpush.msra.mxu0 0.0
        %2669 = vmatpush.msra.mxu0 0.0
        %2670 = vmatpush.msra.mxu0 0.0
        %2671 = vmatpush.msra.mxu0 0.0
        %2672 = vmatpush.msra.mxu0 0.0
        %2673 = vmatpush.msra.mxu0 0.0
        %2674 = vmatpush.msra.mxu0 0.0
        %2675 = vmatpush.msra.mxu0 0.0
        %2676 = vmatpush.msra.mxu0 0.0
        %2677 = vmatpush.msra.mxu0 0.0
        %2678 = vmatpush.msra.mxu0 0.0
        %2679 = vmatpush.msra.mxu0 0.0
        %v2680 = vand.u32 %v2214, 4294901760
        %2681 = vmatpush.msra.mxu0 %v2680
        %v2682 = vand.u32 %v2204, 4294901760
        %v2683 = vsub.f32 %v2204, %v2682
        %v2684 = vand.u32 %v2683, 4294901760
        %2685 = vmatmul.f32.gmra.mxu0 %v2684
        %v2686 = vpop.f32.mrf.mxu0
        %v2687 = vadd.f32 %v2658, %v2686
        %v2688 = vand.u32 %v2207, 4294901760
        %v2689 = vsub.f32 %v2207, %v2688
        %v2690 = vand.u32 %v2689, 4294901760
        %2691 = vmatmul.f32.gmra.mxu0 %v2690
        %v2692 = vpop.f32.mrf.mxu0
        %v2693 = vadd.f32 %v2663, %v2692
        %2694 = vdwg.mxu0
        %2695 = vmatpush.msra.mxu0 0.0
        %2696 = vmatpush.msra.mxu0 0.0
        %2697 = vmatpush.msra.mxu0 0.0
        %2698 = vmatpush.msra.mxu0 0.0
        %2699 = vmatpush.msra.mxu0 0.0
        %2700 = vmatpush.msra.mxu0 0.0
        %2701 = vmatpush.msra.mxu0 0.0
        %2702 = vmatpush.msra.mxu0 0.0
        %2703 = vmatpush.msra.mxu0 0.0
        %2704 = vmatpush.msra.mxu0 0.0
        %2705 = vmatpush.msra.mxu0 0.0
        %2706 = vmatpush.msra.mxu0 0.0
        %2707 = vmatpush.msra.mxu0 0.0
        %2708 = vmatpush.msra.mxu0 0.0
        %2709 = vmatpush.msra.mxu0 0.0
        %v2710 = vand.u32 %v2214, 4294901760
        %v2711 = vsub.f32 %v2214, %v2710
        %v2712 = vand.u32 %v2711, 4294901760
        %2713 = vmatpush.msra.mxu0 %v2712
        %v2714 = vand.u32 %v2204, 4294901760
        %2715 = vmatmul.f32.gmra.mxu0 %v2714
        %v2716 = vpop.f32.mrf.mxu0
        %v2717 = vadd.f32 %v2687, %v2716
        %v2718 = vand.u32 %v2207, 4294901760
        %2719 = vmatmul.f32.gmra.mxu0 %v2718
        %v2720 = vpop.f32.mrf.mxu0
        %v2721 = vadd.f32 %v2693, %v2720
        %2722 = vdwg.mxu0
        %2723 = vmatpush.msra.mxu0 0.0
        %2724 = vmatpush.msra.mxu0 0.0
        %2725 = vmatpush.msra.mxu0 0.0
        %2726 = vmatpush.msra.mxu0 0.0
        %2727 = vmatpush.msra.mxu0 0.0
        %2728 = vmatpush.msra.mxu0 0.0
        %2729 = vmatpush.msra.mxu0 0.0
        %2730 = vmatpush.msra.mxu0 0.0
        %2731 = vmatpush.msra.mxu0 0.0
        %2732 = vmatpush.msra.mxu0 0.0
        %2733 = vmatpush.msra.mxu0 0.0
        %2734 = vmatpush.msra.mxu0 0.0
        %2735 = vmatpush.msra.mxu0 0.0
        %2736 = vmatpush.msra.mxu0 0.0
        %2737 = vmatpush.msra.mxu0 0.0
        %v2738 = vand.u32 %v2214, 4294901760
        %2739 = vmatpush.msra.mxu0 %v2738
        %v2740 = vand.u32 %v2204, 4294901760
        %2741 = vmatmul.f32.gmra.mxu0 %v2740
        %v2742 = vpop.f32.mrf.mxu0
        %v2743 = vadd.f32 %v2717, %v2742
        %v2744 = vand.u32 %v2207, 4294901760
        %2745 = vmatmul.f32.gmra.mxu0 %v2744
        %v2746 = vpop.f32.mrf.mxu0
        %v2747 = vadd.f32 %v2721, %v2746
        %2748 = vdwg.mxu0
        %2749 = vmatpush.msra.mxu0 0.0
        %2750 = vmatpush.msra.mxu0 0.0
        %2751 = vmatpush.msra.mxu0 0.0
        %2752 = vmatpush.msra.mxu0 0.0
        %2753 = vmatpush.msra.mxu0 0.0
        %2754 = vmatpush.msra.mxu0 0.0
        %2755 = vmatpush.msra.mxu0 0.0
        %2756 = vmatpush.msra.mxu0 0.0
        %2757 = vmatpush.msra.mxu0 0.0
        %2758 = vmatpush.msra.mxu0 0.0
        %2759 = vmatpush.msra.mxu0 0.0
        %2760 = vmatpush.msra.mxu0 0.0
        %2761 = vmatpush.msra.mxu0 0.0
        %2762 = vmatpush.msra.mxu0 0.0
        %2763 = vmatpush.msra.mxu0 0.0
        %v2764 = vand.u32 %v2216, 4294901760
        %2765 = vmatpush.msra.mxu0 %v2764
        %v2766 = vand.u32 %v2204, 4294901760
        %v2767 = vsub.f32 %v2204, %v2766
        %v2768 = vand.u32 %v2767, 4294901760
        %v2769 = vsub.f32 %v2767, %v2768
        %v2770 = vand.u32 %v2769, 4294901760
        %2771 = vmatmul.f32.gmra.mxu0 %v2770
        %v2772 = vpop.f32.mrf.mxu0
        %v2773 = vadd.f32 0.0, %v2772
        %v2774 = vand.u32 %v2207, 4294901760
        %v2775 = vsub.f32 %v2207, %v2774
        %v2776 = vand.u32 %v2775, 4294901760
        %v2777 = vsub.f32 %v2775, %v2776
        %v2778 = vand.u32 %v2777, 4294901760
        %2779 = vmatmul.f32.gmra.mxu0 %v2778
        %v2780 = vpop.f32.mrf.mxu0
        %v2781 = vadd.f32 0.0, %v2780
        %2782 = vdwg.mxu0
        %2783 = vmatpush.msra.mxu0 0.0
        %2784 = vmatpush.msra.mxu0 0.0
        %2785 = vmatpush.msra.mxu0 0.0
        %2786 = vmatpush.msra.mxu0 0.0
        %2787 = vmatpush.msra.mxu0 0.0
        %2788 = vmatpush.msra.mxu0 0.0
        %2789 = vmatpush.msra.mxu0 0.0
        %2790 = vmatpush.msra.mxu0 0.0
        %2791 = vmatpush.msra.mxu0 0.0
        %2792 = vmatpush.msra.mxu0 0.0
        %2793 = vmatpush.msra.mxu0 0.0
        %2794 = vmatpush.msra.mxu0 0.0
        %2795 = vmatpush.msra.mxu0 0.0
        %2796 = vmatpush.msra.mxu0 0.0
        %2797 = vmatpush.msra.mxu0 0.0
        %v2798 = vand.u32 %v2216, 4294901760
        %v2799 = vsub.f32 %v2216, %v2798
        %v2800 = vand.u32 %v2799, 4294901760
        %v2801 = vsub.f32 %v2799, %v2800
        %v2802 = vand.u32 %v2801, 4294901760
        %2803 = vmatpush.msra.mxu0 %v2802
        %v2804 = vand.u32 %v2204, 4294901760
        %2805 = vmatmul.f32.gmra.mxu0 %v2804
        %v2806 = vpop.f32.mrf.mxu0
        %v2807 = vadd.f32 %v2773, %v2806
        %v2808 = vand.u32 %v2207, 4294901760
        %2809 = vmatmul.f32.gmra.mxu0 %v2808
        %v2810 = vpop.f32.mrf.mxu0
        %v2811 = vadd.f32 %v2781, %v2810
        %2812 = vdwg.mxu0
        %2813 = vmatpush.msra.mxu0 0.0
        %2814 = vmatpush.msra.mxu0 0.0
        %2815 = vmatpush.msra.mxu0 0.0
        %2816 = vmatpush.msra.mxu0 0.0
        %2817 = vmatpush.msra.mxu0 0.0
        %2818 = vmatpush.msra.mxu0 0.0
        %2819 = vmatpush.msra.mxu0 0.0
        %2820 = vmatpush.msra.mxu0 0.0
        %2821 = vmatpush.msra.mxu0 0.0
        %2822 = vmatpush.msra.mxu0 0.0
        %2823 = vmatpush.msra.mxu0 0.0
        %2824 = vmatpush.msra.mxu0 0.0
        %2825 = vmatpush.msra.mxu0 0.0
        %2826 = vmatpush.msra.mxu0 0.0
        %2827 = vmatpush.msra.mxu0 0.0
        %v2828 = vand.u32 %v2216, 4294901760
        %v2829 = vsub.f32 %v2216, %v2828
        %2830 = vmatpush.msra.mxu0 %v2829
        %v2831 = vand.u32 %v2204, 4294901760
        %v2832 = vsub.f32 %v2204, %v2831
        %2833 = vmatmul.f32.gmra.mxu0 %v2832
        %v2834 = vpop.f32.mrf.mxu0
        %v2835 = vadd.f32 %v2807, %v2834
        %v2836 = vand.u32 %v2207, 4294901760
        %v2837 = vsub.f32 %v2207, %v2836
        %2838 = vmatmul.f32.gmra.mxu0 %v2837
        %v2839 = vpop.f32.mrf.mxu0
        %v2840 = vadd.f32 %v2811, %v2839
        %2841 = vdwg.mxu0
        %2842 = vmatpush.msra.mxu0 0.0
        %2843 = vmatpush.msra.mxu0 0.0
        %2844 = vmatpush.msra.mxu0 0.0
        %2845 = vmatpush.msra.mxu0 0.0
        %2846 = vmatpush.msra.mxu0 0.0
        %2847 = vmatpush.msra.mxu0 0.0
        %2848 = vmatpush.msra.mxu0 0.0
        %2849 = vmatpush.msra.mxu0 0.0
        %2850 = vmatpush.msra.mxu0 0.0
        %2851 = vmatpush.msra.mxu0 0.0
        %2852 = vmatpush.msra.mxu0 0.0
        %2853 = vmatpush.msra.mxu0 0.0
        %2854 = vmatpush.msra.mxu0 0.0
        %2855 = vmatpush.msra.mxu0 0.0
        %2856 = vmatpush.msra.mxu0 0.0
        %v2857 = vand.u32 %v2216, 4294901760
        %2858 = vmatpush.msra.mxu0 %v2857
        %v2859 = vand.u32 %v2204, 4294901760
        %v2860 = vsub.f32 %v2204, %v2859
        %v2861 = vand.u32 %v2860, 4294901760
        %2862 = vmatmul.f32.gmra.mxu0 %v2861
        %v2863 = vpop.f32.mrf.mxu0
        %v2864 = vadd.f32 %v2835, %v2863
        %v2865 = vand.u32 %v2207, 4294901760
        %v2866 = vsub.f32 %v2207, %v2865
        %v2867 = vand.u32 %v2866, 4294901760
        %2868 = vmatmul.f32.gmra.mxu0 %v2867
        %v2869 = vpop.f32.mrf.mxu0
        %v2870 = vadd.f32 %v2840, %v2869
        %2871 = vdwg.mxu0
        %2872 = vmatpush.msra.mxu0 0.0
        %2873 = vmatpush.msra.mxu0 0.0
        %2874 = vmatpush.msra.mxu0 0.0
        %2875 = vmatpush.msra.mxu0 0.0
        %2876 = vmatpush.msra.mxu0 0.0
        %2877 = vmatpush.msra.mxu0 0.0
        %2878 = vmatpush.msra.mxu0 0.0
        %2879 = vmatpush.msra.mxu0 0.0
        %2880 = vmatpush.msra.mxu0 0.0
        %2881 = vmatpush.msra.mxu0 0.0
        %2882 = vmatpush.msra.mxu0 0.0
        %2883 = vmatpush.msra.mxu0 0.0
        %2884 = vmatpush.msra.mxu0 0.0
        %2885 = vmatpush.msra.mxu0 0.0
        %2886 = vmatpush.msra.mxu0 0.0
        %v2887 = vand.u32 %v2216, 4294901760
        %v2888 = vsub.f32 %v2216, %v2887
        %v2889 = vand.u32 %v2888, 4294901760
        %2890 = vmatpush.msra.mxu0 %v2889
        %v2891 = vand.u32 %v2204, 4294901760
        %2892 = vmatmul.f32.gmra.mxu0 %v2891
        %v2893 = vpop.f32.mrf.mxu0
        %v2894 = vadd.f32 %v2864, %v2893
        %v2895 = vand.u32 %v2207, 4294901760
        %2896 = vmatmul.f32.gmra.mxu0 %v2895
        %v2897 = vpop.f32.mrf.mxu0
        %v2898 = vadd.f32 %v2870, %v2897
        %2899 = vdwg.mxu0
        %2900 = vmatpush.msra.mxu0 0.0
        %2901 = vmatpush.msra.mxu0 0.0
        %2902 = vmatpush.msra.mxu0 0.0
        %2903 = vmatpush.msra.mxu0 0.0
        %2904 = vmatpush.msra.mxu0 0.0
        %2905 = vmatpush.msra.mxu0 0.0
        %2906 = vmatpush.msra.mxu0 0.0
        %2907 = vmatpush.msra.mxu0 0.0
        %2908 = vmatpush.msra.mxu0 0.0
        %2909 = vmatpush.msra.mxu0 0.0
        %2910 = vmatpush.msra.mxu0 0.0
        %2911 = vmatpush.msra.mxu0 0.0
        %2912 = vmatpush.msra.mxu0 0.0
        %2913 = vmatpush.msra.mxu0 0.0
        %2914 = vmatpush.msra.mxu0 0.0
        %v2915 = vand.u32 %v2216, 4294901760
        %2916 = vmatpush.msra.mxu0 %v2915
        %v2917 = vand.u32 %v2204, 4294901760
        %2918 = vmatmul.f32.gmra.mxu0 %v2917
        %v2919 = vpop.f32.mrf.mxu0
        %v2920 = vadd.f32 %v2894, %v2919
        %v2921 = vand.u32 %v2207, 4294901760
        %2922 = vmatmul.f32.gmra.mxu0 %v2921
        %v2923 = vpop.f32.mrf.mxu0
        %v2924 = vadd.f32 %v2898, %v2923
        %2925 = vdwg.mxu0
        %v2926 = vmul.f32 %v812, %v2389
        %v2927 = vmul.f32 %v1259, %v2566
        %v2928 = vmul.f32 %v1706, %v2743
        %v2929 = vmul.f32 %v2153, %v2920
        %v2930 = vmul.f32 %v816, %v2393
        %v2931 = vmul.f32 %v1263, %v2570
        %v2932 = vmul.f32 %v1710, %v2747
        %v2933 = vmul.f32 %v2157, %v2924
        %v2934 = vld [vmem:[%s2 + $0x50] sm:$0xff]
        %v2935 = vld [vmem:[%s2 + $0x58] sm:$0xff]
        %v2936 = vld [vmem:[%s2 + $0x60] sm:$0xff]
        %v2937 = vld [vmem:[%s2 + $0x68] sm:$0xff]
        %v2938 = vld [vmem:[%s2 + $0x70] sm:$0xff]
        %vm2939 = vcmask 130048
        %v2941 = vsel %vm2939, %v2934, 0
        %v2944 = vsel %vm2939, %v2935, 0
        %v2947 = vsel %vm2939, %v2936, 0
        %v2950 = vsel %vm2939, %v2937, 0
        %v2953 = vsel %vm2939, %v2938, 0
        %2955 = vmatpush.msra.mxu0 0.0
        %2956 = vmatpush.msra.mxu0 0.0
        %2957 = vmatpush.msra.mxu0 0.0
        %2958 = vmatpush.msra.mxu0 0.0
        %2959 = vmatpush.msra.mxu0 0.0
        %2960 = vmatpush.msra.mxu0 0.0
        %2961 = vmatpush.msra.mxu0 0.0
        %2962 = vmatpush.msra.mxu0 0.0
        %2963 = vmatpush.msra.mxu0 0.0
        %2964 = vmatpush.msra.mxu0 0.0
        %2965 = vmatpush.msra.mxu0 0.0
        %2966 = vmatpush.msra.mxu0 0.0
        %2967 = vmatpush.msra.mxu0 0.0
        %2968 = vmatpush.msra.mxu0 0.0
        %v2969 = vand.u32 %v2930, 4294901760
        %2970 = vmatpush.msra.mxu0 %v2969
        %v2971 = vand.u32 %v2926, 4294901760
        %2972 = vmatpush.msra.mxu0 %v2971
        %v2973 = vand.u32 %v2941, 4294901760
        %v2974 = vsub.f32 %v2941, %v2973
        %v2975 = vand.u32 %v2974, 4294901760
        %v2976 = vsub.f32 %v2974, %v2975
        %v2977 = vand.u32 %v2976, 4294901760
        %2978 = vmatmul.f32.gmra.mxu0 %v2977
        %v2979 = vpop.f32.mrf.mxu0
        %v2980 = vadd.f32 0.0, %v2979
        %v2981 = vand.u32 %v2944, 4294901760
        %v2982 = vsub.f32 %v2944, %v2981
        %v2983 = vand.u32 %v2982, 4294901760
        %v2984 = vsub.f32 %v2982, %v2983
        %v2985 = vand.u32 %v2984, 4294901760
        %2986 = vmatmul.f32.gmra.mxu0 %v2985
        %v2987 = vpop.f32.mrf.mxu0
        %v2988 = vadd.f32 0.0, %v2987
        %v2989 = vand.u32 %v2947, 4294901760
        %v2990 = vsub.f32 %v2947, %v2989
        %v2991 = vand.u32 %v2990, 4294901760
        %v2992 = vsub.f32 %v2990, %v2991
        %v2993 = vand.u32 %v2992, 4294901760
        %2994 = vmatmul.f32.gmra.mxu0 %v2993
        %v2995 = vpop.f32.mrf.mxu0
        %v2996 = vadd.f32 0.0, %v2995
        %v2997 = vand.u32 %v2950, 4294901760
        %v2998 = vsub.f32 %v2950, %v2997
        %v2999 = vand.u32 %v2998, 4294901760
        %v3000 = vsub.f32 %v2998, %v2999
        %v3001 = vand.u32 %v3000, 4294901760
        %3002 = vmatmul.f32.gmra.mxu0 %v3001
        %v3003 = vpop.f32.mrf.mxu0
        %v3004 = vadd.f32 0.0, %v3003
        %v3005 = vand.u32 %v2953, 4294901760
        %v3006 = vsub.f32 %v2953, %v3005
        %v3007 = vand.u32 %v3006, 4294901760
        %v3008 = vsub.f32 %v3006, %v3007
        %v3009 = vand.u32 %v3008, 4294901760
        %3010 = vmatmul.f32.gmra.mxu0 %v3009
        %v3011 = vpop.f32.mrf.mxu0
        %v3012 = vadd.f32 0.0, %v3011
        %3013 = vdwg.mxu0
        %3014 = vmatpush.msra.mxu0 0.0
        %3015 = vmatpush.msra.mxu0 0.0
        %3016 = vmatpush.msra.mxu0 0.0
        %3017 = vmatpush.msra.mxu0 0.0
        %3018 = vmatpush.msra.mxu0 0.0
        %3019 = vmatpush.msra.mxu0 0.0
        %3020 = vmatpush.msra.mxu0 0.0
        %3021 = vmatpush.msra.mxu0 0.0
        %3022 = vmatpush.msra.mxu0 0.0
        %3023 = vmatpush.msra.mxu0 0.0
        %3024 = vmatpush.msra.mxu0 0.0
        %3025 = vmatpush.msra.mxu0 0.0
        %3026 = vmatpush.msra.mxu0 0.0
        %3027 = vmatpush.msra.mxu0 0.0
        %v3028 = vand.u32 %v2930, 4294901760
        %v3029 = vsub.f32 %v2930, %v3028
        %v3030 = vand.u32 %v3029, 4294901760
        %v3031 = vsub.f32 %v3029, %v3030
        %v3032 = vand.u32 %v3031, 4294901760
        %3033 = vmatpush.msra.mxu0 %v3032
        %v3034 = vand.u32 %v2926, 4294901760
        %v3035 = vsub.f32 %v2926, %v3034
        %v3036 = vand.u32 %v3035, 4294901760
        %v3037 = vsub.f32 %v3035, %v3036
        %v3038 = vand.u32 %v3037, 4294901760
        %3039 = vmatpush.msra.mxu0 %v3038
        %v3040 = vand.u32 %v2941, 4294901760
        %3041 = vmatmul.f32.gmra.mxu0 %v3040
        %v3042 = vpop.f32.mrf.mxu0
        %v3043 = vadd.f32 %v2980, %v3042
        %v3044 = vand.u32 %v2944, 4294901760
        %3045 = vmatmul.f32.gmra.mxu0 %v3044
        %v3046 = vpop.f32.mrf.mxu0
        %v3047 = vadd.f32 %v2988, %v3046
        %v3048 = vand.u32 %v2947, 4294901760
        %3049 = vmatmul.f32.gmra.mxu0 %v3048
        %v3050 = vpop.f32.mrf.mxu0
        %v3051 = vadd.f32 %v2996, %v3050
        %v3052 = vand.u32 %v2950, 4294901760
        %3053 = vmatmul.f32.gmra.mxu0 %v3052
        %v3054 = vpop.f32.mrf.mxu0
        %v3055 = vadd.f32 %v3004, %v3054
        %v3056 = vand.u32 %v2953, 4294901760
        %3057 = vmatmul.f32.gmra.mxu0 %v3056
        %v3058 = vpop.f32.mrf.mxu0
        %v3059 = vadd.f32 %v3012, %v3058
        %3060 = vdwg.mxu0
        %3061 = vmatpush.msra.mxu0 0.0
        %3062 = vmatpush.msra.mxu0 0.0
        %3063 = vmatpush.msra.mxu0 0.0
        %3064 = vmatpush.msra.mxu0 0.0
        %3065 = vmatpush.msra.mxu0 0.0
        %3066 = vmatpush.msra.mxu0 0.0
        %3067 = vmatpush.msra.mxu0 0.0
        %3068 = vmatpush.msra.mxu0 0.0
        %3069 = vmatpush.msra.mxu0 0.0
        %3070 = vmatpush.msra.mxu0 0.0
        %3071 = vmatpush.msra.mxu0 0.0
        %3072 = vmatpush.msra.mxu0 0.0
        %3073 = vmatpush.msra.mxu0 0.0
        %3074 = vmatpush.msra.mxu0 0.0
        %v3075 = vand.u32 %v2930, 4294901760
        %v3076 = vsub.f32 %v2930, %v3075
        %3077 = vmatpush.msra.mxu0 %v3076
        %v3078 = vand.u32 %v2926, 4294901760
        %v3079 = vsub.f32 %v2926, %v3078
        %3080 = vmatpush.msra.mxu0 %v3079
        %v3081 = vand.u32 %v2941, 4294901760
        %v3082 = vsub.f32 %v2941, %v3081
        %3083 = vmatmul.f32.gmra.mxu0 %v3082
        %v3084 = vpop.f32.mrf.mxu0
        %v3085 = vadd.f32 %v3043, %v3084
        %v3086 = vand.u32 %v2944, 4294901760
        %v3087 = vsub.f32 %v2944, %v3086
        %3088 = vmatmul.f32.gmra.mxu0 %v3087
        %v3089 = vpop.f32.mrf.mxu0
        %v3090 = vadd.f32 %v3047, %v3089
        %v3091 = vand.u32 %v2947, 4294901760
        %v3092 = vsub.f32 %v2947, %v3091
        %3093 = vmatmul.f32.gmra.mxu0 %v3092
        %v3094 = vpop.f32.mrf.mxu0
        %v3095 = vadd.f32 %v3051, %v3094
        %v3096 = vand.u32 %v2950, 4294901760
        %v3097 = vsub.f32 %v2950, %v3096
        %3098 = vmatmul.f32.gmra.mxu0 %v3097
        %v3099 = vpop.f32.mrf.mxu0
        %v3100 = vadd.f32 %v3055, %v3099
        %v3101 = vand.u32 %v2953, 4294901760
        %v3102 = vsub.f32 %v2953, %v3101
        %3103 = vmatmul.f32.gmra.mxu0 %v3102
        %v3104 = vpop.f32.mrf.mxu0
        %v3105 = vadd.f32 %v3059, %v3104
        %3106 = vdwg.mxu0
        %3107 = vmatpush.msra.mxu0 0.0
        %3108 = vmatpush.msra.mxu0 0.0
        %3109 = vmatpush.msra.mxu0 0.0
        %3110 = vmatpush.msra.mxu0 0.0
        %3111 = vmatpush.msra.mxu0 0.0
        %3112 = vmatpush.msra.mxu0 0.0
        %3113 = vmatpush.msra.mxu0 0.0
        %3114 = vmatpush.msra.mxu0 0.0
        %3115 = vmatpush.msra.mxu0 0.0
        %3116 = vmatpush.msra.mxu0 0.0
        %3117 = vmatpush.msra.mxu0 0.0
        %3118 = vmatpush.msra.mxu0 0.0
        %3119 = vmatpush.msra.mxu0 0.0
        %3120 = vmatpush.msra.mxu0 0.0
        %v3121 = vand.u32 %v2930, 4294901760
        %3122 = vmatpush.msra.mxu0 %v3121
        %v3123 = vand.u32 %v2926, 4294901760
        %3124 = vmatpush.msra.mxu0 %v3123
        %v3125 = vand.u32 %v2941, 4294901760
        %v3126 = vsub.f32 %v2941, %v3125
        %v3127 = vand.u32 %v3126, 4294901760
        %3128 = vmatmul.f32.gmra.mxu0 %v3127
        %v3129 = vpop.f32.mrf.mxu0
        %v3130 = vadd.f32 %v3085, %v3129
        %v3131 = vand.u32 %v2944, 4294901760
        %v3132 = vsub.f32 %v2944, %v3131
        %v3133 = vand.u32 %v3132, 4294901760
        %3134 = vmatmul.f32.gmra.mxu0 %v3133
        %v3135 = vpop.f32.mrf.mxu0
        %v3136 = vadd.f32 %v3090, %v3135
        %v3137 = vand.u32 %v2947, 4294901760
        %v3138 = vsub.f32 %v2947, %v3137
        %v3139 = vand.u32 %v3138, 4294901760
        %3140 = vmatmul.f32.gmra.mxu0 %v3139
        %v3141 = vpop.f32.mrf.mxu0
        %v3142 = vadd.f32 %v3095, %v3141
        %v3143 = vand.u32 %v2950, 4294901760
        %v3144 = vsub.f32 %v2950, %v3143
        %v3145 = vand.u32 %v3144, 4294901760
        %3146 = vmatmul.f32.gmra.mxu0 %v3145
        %v3147 = vpop.f32.mrf.mxu0
        %v3148 = vadd.f32 %v3100, %v3147
        %v3149 = vand.u32 %v2953, 4294901760
        %v3150 = vsub.f32 %v2953, %v3149
        %v3151 = vand.u32 %v3150, 4294901760
        %3152 = vmatmul.f32.gmra.mxu0 %v3151
        %v3153 = vpop.f32.mrf.mxu0
        %v3154 = vadd.f32 %v3105, %v3153
        %3155 = vdwg.mxu0
        %3156 = vmatpush.msra.mxu0 0.0
        %3157 = vmatpush.msra.mxu0 0.0
        %3158 = vmatpush.msra.mxu0 0.0
        %3159 = vmatpush.msra.mxu0 0.0
        %3160 = vmatpush.msra.mxu0 0.0
        %3161 = vmatpush.msra.mxu0 0.0
        %3162 = vmatpush.msra.mxu0 0.0
        %3163 = vmatpush.msra.mxu0 0.0
        %3164 = vmatpush.msra.mxu0 0.0
        %3165 = vmatpush.msra.mxu0 0.0
        %3166 = vmatpush.msra.mxu0 0.0
        %3167 = vmatpush.msra.mxu0 0.0
        %3168 = vmatpush.msra.mxu0 0.0
        %3169 = vmatpush.msra.mxu0 0.0
        %v3170 = vand.u32 %v2930, 4294901760
        %v3171 = vsub.f32 %v2930, %v3170
        %v3172 = vand.u32 %v3171, 4294901760
        %3173 = vmatpush.msra.mxu0 %v3172
        %v3174 = vand.u32 %v2926, 4294901760
        %v3175 = vsub.f32 %v2926, %v3174
        %v3176 = vand.u32 %v3175, 4294901760
        %3177 = vmatpush.msra.mxu0 %v3176
        %v3178 = vand.u32 %v2941, 4294901760
        %3179 = vmatmul.f32.gmra.mxu0 %v3178
        %v3180 = vpop.f32.mrf.mxu0
        %v3181 = vadd.f32 %v3130, %v3180
        %v3182 = vand.u32 %v2944, 4294901760
        %3183 = vmatmul.f32.gmra.mxu0 %v3182
        %v3184 = vpop.f32.mrf.mxu0
        %v3185 = vadd.f32 %v3136, %v3184
        %v3186 = vand.u32 %v2947, 4294901760
        %3187 = vmatmul.f32.gmra.mxu0 %v3186
        %v3188 = vpop.f32.mrf.mxu0
        %v3189 = vadd.f32 %v3142, %v3188
        %v3190 = vand.u32 %v2950, 4294901760
        %3191 = vmatmul.f32.gmra.mxu0 %v3190
        %v3192 = vpop.f32.mrf.mxu0
        %v3193 = vadd.f32 %v3148, %v3192
        %v3194 = vand.u32 %v2953, 4294901760
        %3195 = vmatmul.f32.gmra.mxu0 %v3194
        %v3196 = vpop.f32.mrf.mxu0
        %v3197 = vadd.f32 %v3154, %v3196
        %3198 = vdwg.mxu0
        %3199 = vmatpush.msra.mxu0 0.0
        %3200 = vmatpush.msra.mxu0 0.0
        %3201 = vmatpush.msra.mxu0 0.0
        %3202 = vmatpush.msra.mxu0 0.0
        %3203 = vmatpush.msra.mxu0 0.0
        %3204 = vmatpush.msra.mxu0 0.0
        %3205 = vmatpush.msra.mxu0 0.0
        %3206 = vmatpush.msra.mxu0 0.0
        %3207 = vmatpush.msra.mxu0 0.0
        %3208 = vmatpush.msra.mxu0 0.0
        %3209 = vmatpush.msra.mxu0 0.0
        %3210 = vmatpush.msra.mxu0 0.0
        %3211 = vmatpush.msra.mxu0 0.0
        %3212 = vmatpush.msra.mxu0 0.0
        %v3213 = vand.u32 %v2930, 4294901760
        %3214 = vmatpush.msra.mxu0 %v3213
        %v3215 = vand.u32 %v2926, 4294901760
        %3216 = vmatpush.msra.mxu0 %v3215
        %v3217 = vand.u32 %v2941, 4294901760
        %3218 = vmatmul.f32.gmra.mxu0 %v3217
        %v3219 = vpop.f32.mrf.mxu0
        %v3220 = vadd.f32 %v3181, %v3219
        %v3221 = vand.u32 %v2944, 4294901760
        %3222 = vmatmul.f32.gmra.mxu0 %v3221
        %v3223 = vpop.f32.mrf.mxu0
        %v3224 = vadd.f32 %v3185, %v3223
        %v3225 = vand.u32 %v2947, 4294901760
        %3226 = vmatmul.f32.gmra.mxu0 %v3225
        %v3227 = vpop.f32.mrf.mxu0
        %v3228 = vadd.f32 %v3189, %v3227
        %v3229 = vand.u32 %v2950, 4294901760
        %3230 = vmatmul.f32.gmra.mxu0 %v3229
        %v3231 = vpop.f32.mrf.mxu0
        %v3232 = vadd.f32 %v3193, %v3231
        %v3233 = vand.u32 %v2953, 4294901760
        %3234 = vmatmul.f32.gmra.mxu0 %v3233
        %v3235 = vpop.f32.mrf.mxu0
        %v3236 = vadd.f32 %v3197, %v3235
        %3237 = vdwg.mxu0
        %3238 = vmatpush.msra.mxu0 0.0
        %3239 = vmatpush.msra.mxu0 0.0
        %3240 = vmatpush.msra.mxu0 0.0
        %3241 = vmatpush.msra.mxu0 0.0
        %3242 = vmatpush.msra.mxu0 0.0
        %3243 = vmatpush.msra.mxu0 0.0
        %3244 = vmatpush.msra.mxu0 0.0
        %3245 = vmatpush.msra.mxu0 0.0
        %3246 = vmatpush.msra.mxu0 0.0
        %3247 = vmatpush.msra.mxu0 0.0
        %3248 = vmatpush.msra.mxu0 0.0
        %3249 = vmatpush.msra.mxu0 0.0
        %3250 = vmatpush.msra.mxu0 0.0
        %3251 = vmatpush.msra.mxu0 0.0
        %v3252 = vand.u32 %v2931, 4294901760
        %3253 = vmatpush.msra.mxu0 %v3252
        %v3254 = vand.u32 %v2927, 4294901760
        %3255 = vmatpush.msra.mxu0 %v3254
        %v3256 = vand.u32 %v2941, 4294901760
        %v3257 = vsub.f32 %v2941, %v3256
        %v3258 = vand.u32 %v3257, 4294901760
        %v3259 = vsub.f32 %v3257, %v3258
        %v3260 = vand.u32 %v3259, 4294901760
        %3261 = vmatmul.f32.gmra.mxu0 %v3260
        %v3262 = vpop.f32.mrf.mxu0
        %v3263 = vadd.f32 0.0, %v3262
        %v3264 = vand.u32 %v2944, 4294901760
        %v3265 = vsub.f32 %v2944, %v3264
        %v3266 = vand.u32 %v3265, 4294901760
        %v3267 = vsub.f32 %v3265, %v3266
        %v3268 = vand.u32 %v3267, 4294901760
        %3269 = vmatmul.f32.gmra.mxu0 %v3268
        %v3270 = vpop.f32.mrf.mxu0
        %v3271 = vadd.f32 0.0, %v3270
        %v3272 = vand.u32 %v2947, 4294901760
        %v3273 = vsub.f32 %v2947, %v3272
        %v3274 = vand.u32 %v3273, 4294901760
        %v3275 = vsub.f32 %v3273, %v3274
        %v3276 = vand.u32 %v3275, 4294901760
        %3277 = vmatmul.f32.gmra.mxu0 %v3276
        %v3278 = vpop.f32.mrf.mxu0
        %v3279 = vadd.f32 0.0, %v3278
        %v3280 = vand.u32 %v2950, 4294901760
        %v3281 = vsub.f32 %v2950, %v3280
        %v3282 = vand.u32 %v3281, 4294901760
        %v3283 = vsub.f32 %v3281, %v3282
        %v3284 = vand.u32 %v3283, 4294901760
        %3285 = vmatmul.f32.gmra.mxu0 %v3284
        %v3286 = vpop.f32.mrf.mxu0
        %v3287 = vadd.f32 0.0, %v3286
        %v3288 = vand.u32 %v2953, 4294901760
        %v3289 = vsub.f32 %v2953, %v3288
        %v3290 = vand.u32 %v3289, 4294901760
        %v3291 = vsub.f32 %v3289, %v3290
        %v3292 = vand.u32 %v3291, 4294901760
        %3293 = vmatmul.f32.gmra.mxu0 %v3292
        %v3294 = vpop.f32.mrf.mxu0
        %v3295 = vadd.f32 0.0, %v3294
        %3296 = vdwg.mxu0
        %3297 = vmatpush.msra.mxu0 0.0
        %3298 = vmatpush.msra.mxu0 0.0
        %3299 = vmatpush.msra.mxu0 0.0
        %3300 = vmatpush.msra.mxu0 0.0
        %3301 = vmatpush.msra.mxu0 0.0
        %3302 = vmatpush.msra.mxu0 0.0
        %3303 = vmatpush.msra.mxu0 0.0
        %3304 = vmatpush.msra.mxu0 0.0
        %3305 = vmatpush.msra.mxu0 0.0
        %3306 = vmatpush.msra.mxu0 0.0
        %3307 = vmatpush.msra.mxu0 0.0
        %3308 = vmatpush.msra.mxu0 0.0
        %3309 = vmatpush.msra.mxu0 0.0
        %3310 = vmatpush.msra.mxu0 0.0
        %v3311 = vand.u32 %v2931, 4294901760
        %v3312 = vsub.f32 %v2931, %v3311
        %v3313 = vand.u32 %v3312, 4294901760
        %v3314 = vsub.f32 %v3312, %v3313
        %v3315 = vand.u32 %v3314, 4294901760
        %3316 = vmatpush.msra.mxu0 %v3315
        %v3317 = vand.u32 %v2927, 4294901760
        %v3318 = vsub.f32 %v2927, %v3317
        %v3319 = vand.u32 %v3318, 4294901760
        %v3320 = vsub.f32 %v3318, %v3319
        %v3321 = vand.u32 %v3320, 4294901760
        %3322 = vmatpush.msra.mxu0 %v3321
        %v3323 = vand.u32 %v2941, 4294901760
        %3324 = vmatmul.f32.gmra.mxu0 %v3323
        %v3325 = vpop.f32.mrf.mxu0
        %v3326 = vadd.f32 %v3263, %v3325
        %v3327 = vand.u32 %v2944, 4294901760
        %3328 = vmatmul.f32.gmra.mxu0 %v3327
        %v3329 = vpop.f32.mrf.mxu0
        %v3330 = vadd.f32 %v3271, %v3329
        %v3331 = vand.u32 %v2947, 4294901760
        %3332 = vmatmul.f32.gmra.mxu0 %v3331
        %v3333 = vpop.f32.mrf.mxu0
        %v3334 = vadd.f32 %v3279, %v3333
        %v3335 = vand.u32 %v2950, 4294901760
        %3336 = vmatmul.f32.gmra.mxu0 %v3335
        %v3337 = vpop.f32.mrf.mxu0
        %v3338 = vadd.f32 %v3287, %v3337
        %v3339 = vand.u32 %v2953, 4294901760
        %3340 = vmatmul.f32.gmra.mxu0 %v3339
        %v3341 = vpop.f32.mrf.mxu0
        %v3342 = vadd.f32 %v3295, %v3341
        %3343 = vdwg.mxu0
        %3344 = vmatpush.msra.mxu0 0.0
        %3345 = vmatpush.msra.mxu0 0.0
        %3346 = vmatpush.msra.mxu0 0.0
        %3347 = vmatpush.msra.mxu0 0.0
        %3348 = vmatpush.msra.mxu0 0.0
        %3349 = vmatpush.msra.mxu0 0.0
        %3350 = vmatpush.msra.mxu0 0.0
        %3351 = vmatpush.msra.mxu0 0.0
        %3352 = vmatpush.msra.mxu0 0.0
        %3353 = vmatpush.msra.mxu0 0.0
        %3354 = vmatpush.msra.mxu0 0.0
        %3355 = vmatpush.msra.mxu0 0.0
        %3356 = vmatpush.msra.mxu0 0.0
        %3357 = vmatpush.msra.mxu0 0.0
        %v3358 = vand.u32 %v2931, 4294901760
        %v3359 = vsub.f32 %v2931, %v3358
        %3360 = vmatpush.msra.mxu0 %v3359
        %v3361 = vand.u32 %v2927, 4294901760
        %v3362 = vsub.f32 %v2927, %v3361
        %3363 = vmatpush.msra.mxu0 %v3362
        %v3364 = vand.u32 %v2941, 4294901760
        %v3365 = vsub.f32 %v2941, %v3364
        %3366 = vmatmul.f32.gmra.mxu0 %v3365
        %v3367 = vpop.f32.mrf.mxu0
        %v3368 = vadd.f32 %v3326, %v3367
        %v3369 = vand.u32 %v2944, 4294901760
        %v3370 = vsub.f32 %v2944, %v3369
        %3371 = vmatmul.f32.gmra.mxu0 %v3370
        %v3372 = vpop.f32.mrf.mxu0
        %v3373 = vadd.f32 %v3330, %v3372
        %v3374 = vand.u32 %v2947, 4294901760
        %v3375 = vsub.f32 %v2947, %v3374
        %3376 = vmatmul.f32.gmra.mxu0 %v3375
        %v3377 = vpop.f32.mrf.mxu0
        %v3378 = vadd.f32 %v3334, %v3377
        %v3379 = vand.u32 %v2950, 4294901760
        %v3380 = vsub.f32 %v2950, %v3379
        %3381 = vmatmul.f32.gmra.mxu0 %v3380
        %v3382 = vpop.f32.mrf.mxu0
        %v3383 = vadd.f32 %v3338, %v3382
        %v3384 = vand.u32 %v2953, 4294901760
        %v3385 = vsub.f32 %v2953, %v3384
        %3386 = vmatmul.f32.gmra.mxu0 %v3385
        %v3387 = vpop.f32.mrf.mxu0
        %v3388 = vadd.f32 %v3342, %v3387
        %3389 = vdwg.mxu0
        %3390 = vmatpush.msra.mxu0 0.0
        %3391 = vmatpush.msra.mxu0 0.0
        %3392 = vmatpush.msra.mxu0 0.0
        %3393 = vmatpush.msra.mxu0 0.0
        %3394 = vmatpush.msra.mxu0 0.0
        %3395 = vmatpush.msra.mxu0 0.0
        %3396 = vmatpush.msra.mxu0 0.0
        %3397 = vmatpush.msra.mxu0 0.0
        %3398 = vmatpush.msra.mxu0 0.0
        %3399 = vmatpush.msra.mxu0 0.0
        %3400 = vmatpush.msra.mxu0 0.0
        %3401 = vmatpush.msra.mxu0 0.0
        %3402 = vmatpush.msra.mxu0 0.0
        %3403 = vmatpush.msra.mxu0 0.0
        %v3404 = vand.u32 %v2931, 4294901760
        %3405 = vmatpush.msra.mxu0 %v3404
        %v3406 = vand.u32 %v2927, 4294901760
        %3407 = vmatpush.msra.mxu0 %v3406
        %v3408 = vand.u32 %v2941, 4294901760
        %v3409 = vsub.f32 %v2941, %v3408
        %v3410 = vand.u32 %v3409, 4294901760
        %3411 = vmatmul.f32.gmra.mxu0 %v3410
        %v3412 = vpop.f32.mrf.mxu0
        %v3413 = vadd.f32 %v3368, %v3412
        %v3414 = vand.u32 %v2944, 4294901760
        %v3415 = vsub.f32 %v2944, %v3414
        %v3416 = vand.u32 %v3415, 4294901760
        %3417 = vmatmul.f32.gmra.mxu0 %v3416
        %v3418 = vpop.f32.mrf.mxu0
        %v3419 = vadd.f32 %v3373, %v3418
        %v3420 = vand.u32 %v2947, 4294901760
        %v3421 = vsub.f32 %v2947, %v3420
        %v3422 = vand.u32 %v3421, 4294901760
        %3423 = vmatmul.f32.gmra.mxu0 %v3422
        %v3424 = vpop.f32.mrf.mxu0
        %v3425 = vadd.f32 %v3378, %v3424
        %v3426 = vand.u32 %v2950, 4294901760
        %v3427 = vsub.f32 %v2950, %v3426
        %v3428 = vand.u32 %v3427, 4294901760
        %3429 = vmatmul.f32.gmra.mxu0 %v3428
        %v3430 = vpop.f32.mrf.mxu0
        %v3431 = vadd.f32 %v3383, %v3430
        %v3432 = vand.u32 %v2953, 4294901760
        %v3433 = vsub.f32 %v2953, %v3432
        %v3434 = vand.u32 %v3433, 4294901760
        %3435 = vmatmul.f32.gmra.mxu0 %v3434
        %v3436 = vpop.f32.mrf.mxu0
        %v3437 = vadd.f32 %v3388, %v3436
        %3438 = vdwg.mxu0
        %3439 = vmatpush.msra.mxu0 0.0
        %3440 = vmatpush.msra.mxu0 0.0
        %3441 = vmatpush.msra.mxu0 0.0
        %3442 = vmatpush.msra.mxu0 0.0
        %3443 = vmatpush.msra.mxu0 0.0
        %3444 = vmatpush.msra.mxu0 0.0
        %3445 = vmatpush.msra.mxu0 0.0
        %3446 = vmatpush.msra.mxu0 0.0
        %3447 = vmatpush.msra.mxu0 0.0
        %3448 = vmatpush.msra.mxu0 0.0
        %3449 = vmatpush.msra.mxu0 0.0
        %3450 = vmatpush.msra.mxu0 0.0
        %3451 = vmatpush.msra.mxu0 0.0
        %3452 = vmatpush.msra.mxu0 0.0
        %v3453 = vand.u32 %v2931, 4294901760
        %v3454 = vsub.f32 %v2931, %v3453
        %v3455 = vand.u32 %v3454, 4294901760
        %3456 = vmatpush.msra.mxu0 %v3455
        %v3457 = vand.u32 %v2927, 4294901760
        %v3458 = vsub.f32 %v2927, %v3457
        %v3459 = vand.u32 %v3458, 4294901760
        %3460 = vmatpush.msra.mxu0 %v3459
        %v3461 = vand.u32 %v2941, 4294901760
        %3462 = vmatmul.f32.gmra.mxu0 %v3461
        %v3463 = vpop.f32.mrf.mxu0
        %v3464 = vadd.f32 %v3413, %v3463
        %v3465 = vand.u32 %v2944, 4294901760
        %3466 = vmatmul.f32.gmra.mxu0 %v3465
        %v3467 = vpop.f32.mrf.mxu0
        %v3468 = vadd.f32 %v3419, %v3467
        %v3469 = vand.u32 %v2947, 4294901760
        %3470 = vmatmul.f32.gmra.mxu0 %v3469
        %v3471 = vpop.f32.mrf.mxu0
        %v3472 = vadd.f32 %v3425, %v3471
        %v3473 = vand.u32 %v2950, 4294901760
        %3474 = vmatmul.f32.gmra.mxu0 %v3473
        %v3475 = vpop.f32.mrf.mxu0
        %v3476 = vadd.f32 %v3431, %v3475
        %v3477 = vand.u32 %v2953, 4294901760
        %3478 = vmatmul.f32.gmra.mxu0 %v3477
        %v3479 = vpop.f32.mrf.mxu0
        %v3480 = vadd.f32 %v3437, %v3479
        %3481 = vdwg.mxu0
        %3482 = vmatpush.msra.mxu0 0.0
        %3483 = vmatpush.msra.mxu0 0.0
        %3484 = vmatpush.msra.mxu0 0.0
        %3485 = vmatpush.msra.mxu0 0.0
        %3486 = vmatpush.msra.mxu0 0.0
        %3487 = vmatpush.msra.mxu0 0.0
        %3488 = vmatpush.msra.mxu0 0.0
        %3489 = vmatpush.msra.mxu0 0.0
        %3490 = vmatpush.msra.mxu0 0.0
        %3491 = vmatpush.msra.mxu0 0.0
        %3492 = vmatpush.msra.mxu0 0.0
        %3493 = vmatpush.msra.mxu0 0.0
        %3494 = vmatpush.msra.mxu0 0.0
        %3495 = vmatpush.msra.mxu0 0.0
        %v3496 = vand.u32 %v2931, 4294901760
        %3497 = vmatpush.msra.mxu0 %v3496
        %v3498 = vand.u32 %v2927, 4294901760
        %3499 = vmatpush.msra.mxu0 %v3498
        %v3500 = vand.u32 %v2941, 4294901760
        %3501 = vmatmul.f32.gmra.mxu0 %v3500
        %v3502 = vpop.f32.mrf.mxu0
        %v3503 = vadd.f32 %v3464, %v3502
        %v3504 = vand.u32 %v2944, 4294901760
        %3505 = vmatmul.f32.gmra.mxu0 %v3504
        %v3506 = vpop.f32.mrf.mxu0
        %v3507 = vadd.f32 %v3468, %v3506
        %v3508 = vand.u32 %v2947, 4294901760
        %3509 = vmatmul.f32.gmra.mxu0 %v3508
        %v3510 = vpop.f32.mrf.mxu0
        %v3511 = vadd.f32 %v3472, %v3510
        %v3512 = vand.u32 %v2950, 4294901760
        %3513 = vmatmul.f32.gmra.mxu0 %v3512
        %v3514 = vpop.f32.mrf.mxu0
        %v3515 = vadd.f32 %v3476, %v3514
        %v3516 = vand.u32 %v2953, 4294901760
        %3517 = vmatmul.f32.gmra.mxu0 %v3516
        %v3518 = vpop.f32.mrf.mxu0
        %v3519 = vadd.f32 %v3480, %v3518
        %3520 = vdwg.mxu0
        %3521 = vmatpush.msra.mxu0 0.0
        %3522 = vmatpush.msra.mxu0 0.0
        %3523 = vmatpush.msra.mxu0 0.0
        %3524 = vmatpush.msra.mxu0 0.0
        %3525 = vmatpush.msra.mxu0 0.0
        %3526 = vmatpush.msra.mxu0 0.0
        %3527 = vmatpush.msra.mxu0 0.0
        %3528 = vmatpush.msra.mxu0 0.0
        %3529 = vmatpush.msra.mxu0 0.0
        %3530 = vmatpush.msra.mxu0 0.0
        %3531 = vmatpush.msra.mxu0 0.0
        %3532 = vmatpush.msra.mxu0 0.0
        %3533 = vmatpush.msra.mxu0 0.0
        %3534 = vmatpush.msra.mxu0 0.0
        %v3535 = vand.u32 %v2932, 4294901760
        %3536 = vmatpush.msra.mxu0 %v3535
        %v3537 = vand.u32 %v2928, 4294901760
        %3538 = vmatpush.msra.mxu0 %v3537
        %v3539 = vand.u32 %v2941, 4294901760
        %v3540 = vsub.f32 %v2941, %v3539
        %v3541 = vand.u32 %v3540, 4294901760
        %v3542 = vsub.f32 %v3540, %v3541
        %v3543 = vand.u32 %v3542, 4294901760
        %3544 = vmatmul.f32.gmra.mxu0 %v3543
        %v3545 = vpop.f32.mrf.mxu0
        %v3546 = vadd.f32 0.0, %v3545
        %v3547 = vand.u32 %v2944, 4294901760
        %v3548 = vsub.f32 %v2944, %v3547
        %v3549 = vand.u32 %v3548, 4294901760
        %v3550 = vsub.f32 %v3548, %v3549
        %v3551 = vand.u32 %v3550, 4294901760
        %3552 = vmatmul.f32.gmra.mxu0 %v3551
        %v3553 = vpop.f32.mrf.mxu0
        %v3554 = vadd.f32 0.0, %v3553
        %v3555 = vand.u32 %v2947, 4294901760
        %v3556 = vsub.f32 %v2947, %v3555
        %v3557 = vand.u32 %v3556, 4294901760
        %v3558 = vsub.f32 %v3556, %v3557
        %v3559 = vand.u32 %v3558, 4294901760
        %3560 = vmatmul.f32.gmra.mxu0 %v3559
        %v3561 = vpop.f32.mrf.mxu0
        %v3562 = vadd.f32 0.0, %v3561
        %v3563 = vand.u32 %v2950, 4294901760
        %v3564 = vsub.f32 %v2950, %v3563
        %v3565 = vand.u32 %v3564, 4294901760
        %v3566 = vsub.f32 %v3564, %v3565
        %v3567 = vand.u32 %v3566, 4294901760
        %3568 = vmatmul.f32.gmra.mxu0 %v3567
        %v3569 = vpop.f32.mrf.mxu0
        %v3570 = vadd.f32 0.0, %v3569
        %v3571 = vand.u32 %v2953, 4294901760
        %v3572 = vsub.f32 %v2953, %v3571
        %v3573 = vand.u32 %v3572, 4294901760
        %v3574 = vsub.f32 %v3572, %v3573
        %v3575 = vand.u32 %v3574, 4294901760
        %3576 = vmatmul.f32.gmra.mxu0 %v3575
        %v3577 = vpop.f32.mrf.mxu0
        %v3578 = vadd.f32 0.0, %v3577
        %3579 = vdwg.mxu0
        %3580 = vmatpush.msra.mxu0 0.0
        %3581 = vmatpush.msra.mxu0 0.0
        %3582 = vmatpush.msra.mxu0 0.0
        %3583 = vmatpush.msra.mxu0 0.0
        %3584 = vmatpush.msra.mxu0 0.0
        %3585 = vmatpush.msra.mxu0 0.0
        %3586 = vmatpush.msra.mxu0 0.0
        %3587 = vmatpush.msra.mxu0 0.0
        %3588 = vmatpush.msra.mxu0 0.0
        %3589 = vmatpush.msra.mxu0 0.0
        %3590 = vmatpush.msra.mxu0 0.0
        %3591 = vmatpush.msra.mxu0 0.0
        %3592 = vmatpush.msra.mxu0 0.0
        %3593 = vmatpush.msra.mxu0 0.0
        %v3594 = vand.u32 %v2932, 4294901760
        %v3595 = vsub.f32 %v2932, %v3594
        %v3596 = vand.u32 %v3595, 4294901760
        %v3597 = vsub.f32 %v3595, %v3596
        %v3598 = vand.u32 %v3597, 4294901760
        %3599 = vmatpush.msra.mxu0 %v3598
        %v3600 = vand.u32 %v2928, 4294901760
        %v3601 = vsub.f32 %v2928, %v3600
        %v3602 = vand.u32 %v3601, 4294901760
        %v3603 = vsub.f32 %v3601, %v3602
        %v3604 = vand.u32 %v3603, 4294901760
        %3605 = vmatpush.msra.mxu0 %v3604
        %v3606 = vand.u32 %v2941, 4294901760
        %3607 = vmatmul.f32.gmra.mxu0 %v3606
        %v3608 = vpop.f32.mrf.mxu0
        %v3609 = vadd.f32 %v3546, %v3608
        %v3610 = vand.u32 %v2944, 4294901760
        %3611 = vmatmul.f32.gmra.mxu0 %v3610
        %v3612 = vpop.f32.mrf.mxu0
        %v3613 = vadd.f32 %v3554, %v3612
        %v3614 = vand.u32 %v2947, 4294901760
        %3615 = vmatmul.f32.gmra.mxu0 %v3614
        %v3616 = vpop.f32.mrf.mxu0
        %v3617 = vadd.f32 %v3562, %v3616
        %v3618 = vand.u32 %v2950, 4294901760
        %3619 = vmatmul.f32.gmra.mxu0 %v3618
        %v3620 = vpop.f32.mrf.mxu0
        %v3621 = vadd.f32 %v3570, %v3620
        %v3622 = vand.u32 %v2953, 4294901760
        %3623 = vmatmul.f32.gmra.mxu0 %v3622
        %v3624 = vpop.f32.mrf.mxu0
        %v3625 = vadd.f32 %v3578, %v3624
        %3626 = vdwg.mxu0
        %3627 = vmatpush.msra.mxu0 0.0
        %3628 = vmatpush.msra.mxu0 0.0
        %3629 = vmatpush.msra.mxu0 0.0
        %3630 = vmatpush.msra.mxu0 0.0
        %3631 = vmatpush.msra.mxu0 0.0
        %3632 = vmatpush.msra.mxu0 0.0
        %3633 = vmatpush.msra.mxu0 0.0
        %3634 = vmatpush.msra.mxu0 0.0
        %3635 = vmatpush.msra.mxu0 0.0
        %3636 = vmatpush.msra.mxu0 0.0
        %3637 = vmatpush.msra.mxu0 0.0
        %3638 = vmatpush.msra.mxu0 0.0
        %3639 = vmatpush.msra.mxu0 0.0
        %3640 = vmatpush.msra.mxu0 0.0
        %v3641 = vand.u32 %v2932, 4294901760
        %v3642 = vsub.f32 %v2932, %v3641
        %3643 = vmatpush.msra.mxu0 %v3642
        %v3644 = vand.u32 %v2928, 4294901760
        %v3645 = vsub.f32 %v2928, %v3644
        %3646 = vmatpush.msra.mxu0 %v3645
        %v3647 = vand.u32 %v2941, 4294901760
        %v3648 = vsub.f32 %v2941, %v3647
        %3649 = vmatmul.f32.gmra.mxu0 %v3648
        %v3650 = vpop.f32.mrf.mxu0
        %v3651 = vadd.f32 %v3609, %v3650
        %v3652 = vand.u32 %v2944, 4294901760
        %v3653 = vsub.f32 %v2944, %v3652
        %3654 = vmatmul.f32.gmra.mxu0 %v3653
        %v3655 = vpop.f32.mrf.mxu0
        %v3656 = vadd.f32 %v3613, %v3655
        %v3657 = vand.u32 %v2947, 4294901760
        %v3658 = vsub.f32 %v2947, %v3657
        %3659 = vmatmul.f32.gmra.mxu0 %v3658
        %v3660 = vpop.f32.mrf.mxu0
        %v3661 = vadd.f32 %v3617, %v3660
        %v3662 = vand.u32 %v2950, 4294901760
        %v3663 = vsub.f32 %v2950, %v3662
        %3664 = vmatmul.f32.gmra.mxu0 %v3663
        %v3665 = vpop.f32.mrf.mxu0
        %v3666 = vadd.f32 %v3621, %v3665
        %v3667 = vand.u32 %v2953, 4294901760
        %v3668 = vsub.f32 %v2953, %v3667
        %3669 = vmatmul.f32.gmra.mxu0 %v3668
        %v3670 = vpop.f32.mrf.mxu0
        %v3671 = vadd.f32 %v3625, %v3670
        %3672 = vdwg.mxu0
        %3673 = vmatpush.msra.mxu0 0.0
        %3674 = vmatpush.msra.mxu0 0.0
        %3675 = vmatpush.msra.mxu0 0.0
        %3676 = vmatpush.msra.mxu0 0.0
        %3677 = vmatpush.msra.mxu0 0.0
        %3678 = vmatpush.msra.mxu0 0.0
        %3679 = vmatpush.msra.mxu0 0.0
        %3680 = vmatpush.msra.mxu0 0.0
        %3681 = vmatpush.msra.mxu0 0.0
        %3682 = vmatpush.msra.mxu0 0.0
        %3683 = vmatpush.msra.mxu0 0.0
        %3684 = vmatpush.msra.mxu0 0.0
        %3685 = vmatpush.msra.mxu0 0.0
        %3686 = vmatpush.msra.mxu0 0.0
        %v3687 = vand.u32 %v2932, 4294901760
        %3688 = vmatpush.msra.mxu0 %v3687
        %v3689 = vand.u32 %v2928, 4294901760
        %3690 = vmatpush.msra.mxu0 %v3689
        %v3691 = vand.u32 %v2941, 4294901760
        %v3692 = vsub.f32 %v2941, %v3691
        %v3693 = vand.u32 %v3692, 4294901760
        %3694 = vmatmul.f32.gmra.mxu0 %v3693
        %v3695 = vpop.f32.mrf.mxu0
        %v3696 = vadd.f32 %v3651, %v3695
        %v3697 = vand.u32 %v2944, 4294901760
        %v3698 = vsub.f32 %v2944, %v3697
        %v3699 = vand.u32 %v3698, 4294901760
        %3700 = vmatmul.f32.gmra.mxu0 %v3699
        %v3701 = vpop.f32.mrf.mxu0
        %v3702 = vadd.f32 %v3656, %v3701
        %v3703 = vand.u32 %v2947, 4294901760
        %v3704 = vsub.f32 %v2947, %v3703
        %v3705 = vand.u32 %v3704, 4294901760
        %3706 = vmatmul.f32.gmra.mxu0 %v3705
        %v3707 = vpop.f32.mrf.mxu0
        %v3708 = vadd.f32 %v3661, %v3707
        %v3709 = vand.u32 %v2950, 4294901760
        %v3710 = vsub.f32 %v2950, %v3709
        %v3711 = vand.u32 %v3710, 4294901760
        %3712 = vmatmul.f32.gmra.mxu0 %v3711
        %v3713 = vpop.f32.mrf.mxu0
        %v3714 = vadd.f32 %v3666, %v3713
        %v3715 = vand.u32 %v2953, 4294901760
        %v3716 = vsub.f32 %v2953, %v3715
        %v3717 = vand.u32 %v3716, 4294901760
        %3718 = vmatmul.f32.gmra.mxu0 %v3717
        %v3719 = vpop.f32.mrf.mxu0
        %v3720 = vadd.f32 %v3671, %v3719
        %3721 = vdwg.mxu0
        %3722 = vmatpush.msra.mxu0 0.0
        %3723 = vmatpush.msra.mxu0 0.0
        %3724 = vmatpush.msra.mxu0 0.0
        %3725 = vmatpush.msra.mxu0 0.0
        %3726 = vmatpush.msra.mxu0 0.0
        %3727 = vmatpush.msra.mxu0 0.0
        %3728 = vmatpush.msra.mxu0 0.0
        %3729 = vmatpush.msra.mxu0 0.0
        %3730 = vmatpush.msra.mxu0 0.0
        %3731 = vmatpush.msra.mxu0 0.0
        %3732 = vmatpush.msra.mxu0 0.0
        %3733 = vmatpush.msra.mxu0 0.0
        %3734 = vmatpush.msra.mxu0 0.0
        %3735 = vmatpush.msra.mxu0 0.0
        %v3736 = vand.u32 %v2932, 4294901760
        %v3737 = vsub.f32 %v2932, %v3736
        %v3738 = vand.u32 %v3737, 4294901760
        %3739 = vmatpush.msra.mxu0 %v3738
        %v3740 = vand.u32 %v2928, 4294901760
        %v3741 = vsub.f32 %v2928, %v3740
        %v3742 = vand.u32 %v3741, 4294901760
        %3743 = vmatpush.msra.mxu0 %v3742
        %v3744 = vand.u32 %v2941, 4294901760
        %3745 = vmatmul.f32.gmra.mxu0 %v3744
        %v3746 = vpop.f32.mrf.mxu0
        %v3747 = vadd.f32 %v3696, %v3746
        %v3748 = vand.u32 %v2944, 4294901760
        %3749 = vmatmul.f32.gmra.mxu0 %v3748
        %v3750 = vpop.f32.mrf.mxu0
        %v3751 = vadd.f32 %v3702, %v3750
        %v3752 = vand.u32 %v2947, 4294901760
        %3753 = vmatmul.f32.gmra.mxu0 %v3752
        %v3754 = vpop.f32.mrf.mxu0
        %v3755 = vadd.f32 %v3708, %v3754
        %v3756 = vand.u32 %v2950, 4294901760
        %3757 = vmatmul.f32.gmra.mxu0 %v3756
        %v3758 = vpop.f32.mrf.mxu0
        %v3759 = vadd.f32 %v3714, %v3758
        %v3760 = vand.u32 %v2953, 4294901760
        %3761 = vmatmul.f32.gmra.mxu0 %v3760
        %v3762 = vpop.f32.mrf.mxu0
        %v3763 = vadd.f32 %v3720, %v3762
        %3764 = vdwg.mxu0
        %3765 = vmatpush.msra.mxu0 0.0
        %3766 = vmatpush.msra.mxu0 0.0
        %3767 = vmatpush.msra.mxu0 0.0
        %3768 = vmatpush.msra.mxu0 0.0
        %3769 = vmatpush.msra.mxu0 0.0
        %3770 = vmatpush.msra.mxu0 0.0
        %3771 = vmatpush.msra.mxu0 0.0
        %3772 = vmatpush.msra.mxu0 0.0
        %3773 = vmatpush.msra.mxu0 0.0
        %3774 = vmatpush.msra.mxu0 0.0
        %3775 = vmatpush.msra.mxu0 0.0
        %3776 = vmatpush.msra.mxu0 0.0
        %3777 = vmatpush.msra.mxu0 0.0
        %3778 = vmatpush.msra.mxu0 0.0
        %v3779 = vand.u32 %v2932, 4294901760
        %3780 = vmatpush.msra.mxu0 %v3779
        %v3781 = vand.u32 %v2928, 4294901760
        %3782 = vmatpush.msra.mxu0 %v3781
        %v3783 = vand.u32 %v2941, 4294901760
        %3784 = vmatmul.f32.gmra.mxu0 %v3783
        %v3785 = vpop.f32.mrf.mxu0
        %v3786 = vadd.f32 %v3747, %v3785
        %v3787 = vand.u32 %v2944, 4294901760
        %3788 = vmatmul.f32.gmra.mxu0 %v3787
        %v3789 = vpop.f32.mrf.mxu0
        %v3790 = vadd.f32 %v3751, %v3789
        %v3791 = vand.u32 %v2947, 4294901760
        %3792 = vmatmul.f32.gmra.mxu0 %v3791
        %v3793 = vpop.f32.mrf.mxu0
        %v3794 = vadd.f32 %v3755, %v3793
        %v3795 = vand.u32 %v2950, 4294901760
        %3796 = vmatmul.f32.gmra.mxu0 %v3795
        %v3797 = vpop.f32.mrf.mxu0
        %v3798 = vadd.f32 %v3759, %v3797
        %v3799 = vand.u32 %v2953, 4294901760
        %3800 = vmatmul.f32.gmra.mxu0 %v3799
        %v3801 = vpop.f32.mrf.mxu0
        %v3802 = vadd.f32 %v3763, %v3801
        %3803 = vdwg.mxu0
        %3804 = vmatpush.msra.mxu0 0.0
        %3805 = vmatpush.msra.mxu0 0.0
        %3806 = vmatpush.msra.mxu0 0.0
        %3807 = vmatpush.msra.mxu0 0.0
        %3808 = vmatpush.msra.mxu0 0.0
        %3809 = vmatpush.msra.mxu0 0.0
        %3810 = vmatpush.msra.mxu0 0.0
        %3811 = vmatpush.msra.mxu0 0.0
        %3812 = vmatpush.msra.mxu0 0.0
        %3813 = vmatpush.msra.mxu0 0.0
        %3814 = vmatpush.msra.mxu0 0.0
        %3815 = vmatpush.msra.mxu0 0.0
        %3816 = vmatpush.msra.mxu0 0.0
        %3817 = vmatpush.msra.mxu0 0.0
        %v3818 = vand.u32 %v2933, 4294901760
        %3819 = vmatpush.msra.mxu0 %v3818
        %v3820 = vand.u32 %v2929, 4294901760
        %3821 = vmatpush.msra.mxu0 %v3820
        %v3822 = vand.u32 %v2941, 4294901760
        %v3823 = vsub.f32 %v2941, %v3822
        %v3824 = vand.u32 %v3823, 4294901760
        %v3825 = vsub.f32 %v3823, %v3824
        %v3826 = vand.u32 %v3825, 4294901760
        %3827 = vmatmul.f32.gmra.mxu0 %v3826
        %v3828 = vpop.f32.mrf.mxu0
        %v3829 = vadd.f32 0.0, %v3828
        %v3830 = vand.u32 %v2944, 4294901760
        %v3831 = vsub.f32 %v2944, %v3830
        %v3832 = vand.u32 %v3831, 4294901760
        %v3833 = vsub.f32 %v3831, %v3832
        %v3834 = vand.u32 %v3833, 4294901760
        %3835 = vmatmul.f32.gmra.mxu0 %v3834
        %v3836 = vpop.f32.mrf.mxu0
        %v3837 = vadd.f32 0.0, %v3836
        %v3838 = vand.u32 %v2947, 4294901760
        %v3839 = vsub.f32 %v2947, %v3838
        %v3840 = vand.u32 %v3839, 4294901760
        %v3841 = vsub.f32 %v3839, %v3840
        %v3842 = vand.u32 %v3841, 4294901760
        %3843 = vmatmul.f32.gmra.mxu0 %v3842
        %v3844 = vpop.f32.mrf.mxu0
        %v3845 = vadd.f32 0.0, %v3844
        %v3846 = vand.u32 %v2950, 4294901760
        %v3847 = vsub.f32 %v2950, %v3846
        %v3848 = vand.u32 %v3847, 4294901760
        %v3849 = vsub.f32 %v3847, %v3848
        %v3850 = vand.u32 %v3849, 4294901760
        %3851 = vmatmul.f32.gmra.mxu0 %v3850
        %v3852 = vpop.f32.mrf.mxu0
        %v3853 = vadd.f32 0.0, %v3852
        %v3854 = vand.u32 %v2953, 4294901760
        %v3855 = vsub.f32 %v2953, %v3854
        %v3856 = vand.u32 %v3855, 4294901760
        %v3857 = vsub.f32 %v3855, %v3856
        %v3858 = vand.u32 %v3857, 4294901760
        %3859 = vmatmul.f32.gmra.mxu0 %v3858
        %v3860 = vpop.f32.mrf.mxu0
        %v3861 = vadd.f32 0.0, %v3860
        %3862 = vdwg.mxu0
        %3863 = vmatpush.msra.mxu0 0.0
        %3864 = vmatpush.msra.mxu0 0.0
        %3865 = vmatpush.msra.mxu0 0.0
        %3866 = vmatpush.msra.mxu0 0.0
        %3867 = vmatpush.msra.mxu0 0.0
        %3868 = vmatpush.msra.mxu0 0.0
        %3869 = vmatpush.msra.mxu0 0.0
        %3870 = vmatpush.msra.mxu0 0.0
        %3871 = vmatpush.msra.mxu0 0.0
        %3872 = vmatpush.msra.mxu0 0.0
        %3873 = vmatpush.msra.mxu0 0.0
        %3874 = vmatpush.msra.mxu0 0.0
        %3875 = vmatpush.msra.mxu0 0.0
        %3876 = vmatpush.msra.mxu0 0.0
        %v3877 = vand.u32 %v2933, 4294901760
        %v3878 = vsub.f32 %v2933, %v3877
        %v3879 = vand.u32 %v3878, 4294901760
        %v3880 = vsub.f32 %v3878, %v3879
        %v3881 = vand.u32 %v3880, 4294901760
        %3882 = vmatpush.msra.mxu0 %v3881
        %v3883 = vand.u32 %v2929, 4294901760
        %v3884 = vsub.f32 %v2929, %v3883
        %v3885 = vand.u32 %v3884, 4294901760
        %v3886 = vsub.f32 %v3884, %v3885
        %v3887 = vand.u32 %v3886, 4294901760
        %3888 = vmatpush.msra.mxu0 %v3887
        %v3889 = vand.u32 %v2941, 4294901760
        %3890 = vmatmul.f32.gmra.mxu0 %v3889
        %v3891 = vpop.f32.mrf.mxu0
        %v3892 = vadd.f32 %v3829, %v3891
        %v3893 = vand.u32 %v2944, 4294901760
        %3894 = vmatmul.f32.gmra.mxu0 %v3893
        %v3895 = vpop.f32.mrf.mxu0
        %v3896 = vadd.f32 %v3837, %v3895
        %v3897 = vand.u32 %v2947, 4294901760
        %3898 = vmatmul.f32.gmra.mxu0 %v3897
        %v3899 = vpop.f32.mrf.mxu0
        %v3900 = vadd.f32 %v3845, %v3899
        %v3901 = vand.u32 %v2950, 4294901760
        %3902 = vmatmul.f32.gmra.mxu0 %v3901
        %v3903 = vpop.f32.mrf.mxu0
        %v3904 = vadd.f32 %v3853, %v3903
        %v3905 = vand.u32 %v2953, 4294901760
        %3906 = vmatmul.f32.gmra.mxu0 %v3905
        %v3907 = vpop.f32.mrf.mxu0
        %v3908 = vadd.f32 %v3861, %v3907
        %3909 = vdwg.mxu0
        %3910 = vmatpush.msra.mxu0 0.0
        %3911 = vmatpush.msra.mxu0 0.0
        %3912 = vmatpush.msra.mxu0 0.0
        %3913 = vmatpush.msra.mxu0 0.0
        %3914 = vmatpush.msra.mxu0 0.0
        %3915 = vmatpush.msra.mxu0 0.0
        %3916 = vmatpush.msra.mxu0 0.0
        %3917 = vmatpush.msra.mxu0 0.0
        %3918 = vmatpush.msra.mxu0 0.0
        %3919 = vmatpush.msra.mxu0 0.0
        %3920 = vmatpush.msra.mxu0 0.0
        %3921 = vmatpush.msra.mxu0 0.0
        %3922 = vmatpush.msra.mxu0 0.0
        %3923 = vmatpush.msra.mxu0 0.0
        %v3924 = vand.u32 %v2933, 4294901760
        %v3925 = vsub.f32 %v2933, %v3924
        %3926 = vmatpush.msra.mxu0 %v3925
        %v3927 = vand.u32 %v2929, 4294901760
        %v3928 = vsub.f32 %v2929, %v3927
        %3929 = vmatpush.msra.mxu0 %v3928
        %v3930 = vand.u32 %v2941, 4294901760
        %v3931 = vsub.f32 %v2941, %v3930
        %3932 = vmatmul.f32.gmra.mxu0 %v3931
        %v3933 = vpop.f32.mrf.mxu0
        %v3934 = vadd.f32 %v3892, %v3933
        %v3935 = vand.u32 %v2944, 4294901760
        %v3936 = vsub.f32 %v2944, %v3935
        %3937 = vmatmul.f32.gmra.mxu0 %v3936
        %v3938 = vpop.f32.mrf.mxu0
        %v3939 = vadd.f32 %v3896, %v3938
        %v3940 = vand.u32 %v2947, 4294901760
        %v3941 = vsub.f32 %v2947, %v3940
        %3942 = vmatmul.f32.gmra.mxu0 %v3941
        %v3943 = vpop.f32.mrf.mxu0
        %v3944 = vadd.f32 %v3900, %v3943
        %v3945 = vand.u32 %v2950, 4294901760
        %v3946 = vsub.f32 %v2950, %v3945
        %3947 = vmatmul.f32.gmra.mxu0 %v3946
        %v3948 = vpop.f32.mrf.mxu0
        %v3949 = vadd.f32 %v3904, %v3948
        %v3950 = vand.u32 %v2953, 4294901760
        %v3951 = vsub.f32 %v2953, %v3950
        %3952 = vmatmul.f32.gmra.mxu0 %v3951
        %v3953 = vpop.f32.mrf.mxu0
        %v3954 = vadd.f32 %v3908, %v3953
        %3955 = vdwg.mxu0
        %3956 = vmatpush.msra.mxu0 0.0
        %3957 = vmatpush.msra.mxu0 0.0
        %3958 = vmatpush.msra.mxu0 0.0
        %3959 = vmatpush.msra.mxu0 0.0
        %3960 = vmatpush.msra.mxu0 0.0
        %3961 = vmatpush.msra.mxu0 0.0
        %3962 = vmatpush.msra.mxu0 0.0
        %3963 = vmatpush.msra.mxu0 0.0
        %3964 = vmatpush.msra.mxu0 0.0
        %3965 = vmatpush.msra.mxu0 0.0
        %3966 = vmatpush.msra.mxu0 0.0
        %3967 = vmatpush.msra.mxu0 0.0
        %3968 = vmatpush.msra.mxu0 0.0
        %3969 = vmatpush.msra.mxu0 0.0
        %v3970 = vand.u32 %v2933, 4294901760
        %3971 = vmatpush.msra.mxu0 %v3970
        %v3972 = vand.u32 %v2929, 4294901760
        %3973 = vmatpush.msra.mxu0 %v3972
        %v3974 = vand.u32 %v2941, 4294901760
        %v3975 = vsub.f32 %v2941, %v3974
        %v3976 = vand.u32 %v3975, 4294901760
        %3977 = vmatmul.f32.gmra.mxu0 %v3976
        %v3978 = vpop.f32.mrf.mxu0
        %v3979 = vadd.f32 %v3934, %v3978
        %v3980 = vand.u32 %v2944, 4294901760
        %v3981 = vsub.f32 %v2944, %v3980
        %v3982 = vand.u32 %v3981, 4294901760
        %3983 = vmatmul.f32.gmra.mxu0 %v3982
        %v3984 = vpop.f32.mrf.mxu0
        %v3985 = vadd.f32 %v3939, %v3984
        %v3986 = vand.u32 %v2947, 4294901760
        %v3987 = vsub.f32 %v2947, %v3986
        %v3988 = vand.u32 %v3987, 4294901760
        %3989 = vmatmul.f32.gmra.mxu0 %v3988
        %v3990 = vpop.f32.mrf.mxu0
        %v3991 = vadd.f32 %v3944, %v3990
        %v3992 = vand.u32 %v2950, 4294901760
        %v3993 = vsub.f32 %v2950, %v3992
        %v3994 = vand.u32 %v3993, 4294901760
        %3995 = vmatmul.f32.gmra.mxu0 %v3994
        %v3996 = vpop.f32.mrf.mxu0
        %v3997 = vadd.f32 %v3949, %v3996
        %v3998 = vand.u32 %v2953, 4294901760
        %v3999 = vsub.f32 %v2953, %v3998
        %v4000 = vand.u32 %v3999, 4294901760
        %4001 = vmatmul.f32.gmra.mxu0 %v4000
        %v4002 = vpop.f32.mrf.mxu0
        %v4003 = vadd.f32 %v3954, %v4002
        %4004 = vdwg.mxu0
        %4005 = vmatpush.msra.mxu0 0.0
        %4006 = vmatpush.msra.mxu0 0.0
        %4007 = vmatpush.msra.mxu0 0.0
        %4008 = vmatpush.msra.mxu0 0.0
        %4009 = vmatpush.msra.mxu0 0.0
        %4010 = vmatpush.msra.mxu0 0.0
        %4011 = vmatpush.msra.mxu0 0.0
        %4012 = vmatpush.msra.mxu0 0.0
        %4013 = vmatpush.msra.mxu0 0.0
        %4014 = vmatpush.msra.mxu0 0.0
        %4015 = vmatpush.msra.mxu0 0.0
        %4016 = vmatpush.msra.mxu0 0.0
        %4017 = vmatpush.msra.mxu0 0.0
        %4018 = vmatpush.msra.mxu0 0.0
        %v4019 = vand.u32 %v2933, 4294901760
        %v4020 = vsub.f32 %v2933, %v4019
        %v4021 = vand.u32 %v4020, 4294901760
        %4022 = vmatpush.msra.mxu0 %v4021
        %v4023 = vand.u32 %v2929, 4294901760
        %v4024 = vsub.f32 %v2929, %v4023
        %v4025 = vand.u32 %v4024, 4294901760
        %4026 = vmatpush.msra.mxu0 %v4025
        %v4027 = vand.u32 %v2941, 4294901760
        %4028 = vmatmul.f32.gmra.mxu0 %v4027
        %v4029 = vpop.f32.mrf.mxu0
        %v4030 = vadd.f32 %v3979, %v4029
        %v4031 = vand.u32 %v2944, 4294901760
        %4032 = vmatmul.f32.gmra.mxu0 %v4031
        %v4033 = vpop.f32.mrf.mxu0
        %v4034 = vadd.f32 %v3985, %v4033
        %v4035 = vand.u32 %v2947, 4294901760
        %4036 = vmatmul.f32.gmra.mxu0 %v4035
        %v4037 = vpop.f32.mrf.mxu0
        %v4038 = vadd.f32 %v3991, %v4037
        %v4039 = vand.u32 %v2950, 4294901760
        %4040 = vmatmul.f32.gmra.mxu0 %v4039
        %v4041 = vpop.f32.mrf.mxu0
        %v4042 = vadd.f32 %v3997, %v4041
        %v4043 = vand.u32 %v2953, 4294901760
        %4044 = vmatmul.f32.gmra.mxu0 %v4043
        %v4045 = vpop.f32.mrf.mxu0
        %v4046 = vadd.f32 %v4003, %v4045
        %4047 = vdwg.mxu0
        %4048 = vmatpush.msra.mxu0 0.0
        %4049 = vmatpush.msra.mxu0 0.0
        %4050 = vmatpush.msra.mxu0 0.0
        %4051 = vmatpush.msra.mxu0 0.0
        %4052 = vmatpush.msra.mxu0 0.0
        %4053 = vmatpush.msra.mxu0 0.0
        %4054 = vmatpush.msra.mxu0 0.0
        %4055 = vmatpush.msra.mxu0 0.0
        %4056 = vmatpush.msra.mxu0 0.0
        %4057 = vmatpush.msra.mxu0 0.0
        %4058 = vmatpush.msra.mxu0 0.0
        %4059 = vmatpush.msra.mxu0 0.0
        %4060 = vmatpush.msra.mxu0 0.0
        %4061 = vmatpush.msra.mxu0 0.0
        %v4062 = vand.u32 %v2933, 4294901760
        %4063 = vmatpush.msra.mxu0 %v4062
        %v4064 = vand.u32 %v2929, 4294901760
        %4065 = vmatpush.msra.mxu0 %v4064
        %v4066 = vand.u32 %v2941, 4294901760
        %4067 = vmatmul.f32.gmra.mxu0 %v4066
        %v4068 = vpop.f32.mrf.mxu0
        %v4069 = vadd.f32 %v4030, %v4068
        %v4070 = vand.u32 %v2944, 4294901760
        %4071 = vmatmul.f32.gmra.mxu0 %v4070
        %v4072 = vpop.f32.mrf.mxu0
        %v4073 = vadd.f32 %v4034, %v4072
        %v4074 = vand.u32 %v2947, 4294901760
        %4075 = vmatmul.f32.gmra.mxu0 %v4074
        %v4076 = vpop.f32.mrf.mxu0
        %v4077 = vadd.f32 %v4038, %v4076
        %v4078 = vand.u32 %v2950, 4294901760
        %4079 = vmatmul.f32.gmra.mxu0 %v4078
        %v4080 = vpop.f32.mrf.mxu0
        %v4081 = vadd.f32 %v4042, %v4080
        %v4082 = vand.u32 %v2953, 4294901760
        %4083 = vmatmul.f32.gmra.mxu0 %v4082
        %v4084 = vpop.f32.mrf.mxu0
        %v4085 = vadd.f32 %v4046, %v4084
        %4086 = vdwg.mxu0
        %v4087 = vadd.f32 %v3224, %v820
        %v4088 = vadd.f32 %v3507, %v1267
        %v4089 = vadd.f32 %v3790, %v1714
        %v4090 = vadd.f32 %v4073, %v2161
        %v4091 = vadd.f32 %v3228, %v824
        %v4092 = vadd.f32 %v3511, %v1271
        %v4093 = vadd.f32 %v3794, %v1718
        %v4094 = vadd.f32 %v4077, %v2165
        %v4095 = vadd.f32 %v3232, %v828
        %v4096 = vadd.f32 %v3515, %v1275
        %v4097 = vadd.f32 %v3798, %v1722
        %v4098 = vadd.f32 %v4081, %v2169
        %v4099 = vadd.f32 %v3236, %v832
        %v4100 = vadd.f32 %v3519, %v1279
        %v4101 = vadd.f32 %v3802, %v1726
        %v4102 = vadd.f32 %v4085, %v2173
        %v4103 = vld [vmem:[%s3] sm:$0xff]
        %v4104 = vld [vmem:[%s3 + $0x8] sm:$0xff]
        %v4105 = vld [vmem:[%s3 + $0x10] sm:$0xff]
        %v4106 = vld [vmem:[%s3 + $0x18] sm:$0xff]
        %4108 = vset.pattern.permute.xlu0 0
        %4109 = vperm.xlu0 %4108, %v4103
        %v4110 = vpop.permute.xlu0 %4109
        %4113 = vset.pattern.permute.xlu0 0
        %4114 = vperm.xlu0 %4113, %v4104
        %v4115 = vpop.permute.xlu0 %4114
        %4118 = vset.pattern.permute.xlu0 0
        %4119 = vperm.xlu0 %4118, %v4105
        %v4120 = vpop.permute.xlu0 %4119
        %4123 = vset.pattern.permute.xlu0 0
        %4124 = vperm.xlu0 %4123, %v4106
        %v4125 = vpop.permute.xlu0 %4124
        %v4127 = vadd.f32 %v4087, %v4110
        %v4128 = vadd.f32 %v4088, %v4110
        %v4129 = vadd.f32 %v4089, %v4110
        %v4130 = vadd.f32 %v4090, %v4110
        %v4131 = vadd.f32 %v4091, %v4115
        %v4132 = vadd.f32 %v4092, %v4115
        %v4133 = vadd.f32 %v4093, %v4115
        %v4134 = vadd.f32 %v4094, %v4115
        %v4135 = vadd.f32 %v4095, %v4120
        %v4136 = vadd.f32 %v4096, %v4120
        %v4137 = vadd.f32 %v4097, %v4120
        %v4138 = vadd.f32 %v4098, %v4120
        %v4139 = vadd.f32 %v4099, %v4125
        %v4140 = vadd.f32 %v4100, %v4125
        %v4141 = vadd.f32 %v4101, %v4125
        %v4142 = vadd.f32 %v4102, %v4125
        %v4143 = vmax.f32 %v4127, 0.0
        %v4144 = vmax.f32 %v4128, 0.0
        %v4145 = vmax.f32 %v4129, 0.0
        %v4146 = vmax.f32 %v4130, 0.0
        %v4147 = vmax.f32 %v4131, 0.0
        %v4148 = vmax.f32 %v4132, 0.0
        %v4149 = vmax.f32 %v4133, 0.0
        %v4150 = vmax.f32 %v4134, 0.0
        %v4151 = vmax.f32 %v4135, 0.0
        %v4152 = vmax.f32 %v4136, 0.0
        %v4153 = vmax.f32 %v4137, 0.0
        %v4154 = vmax.f32 %v4138, 0.0
        %v4155 = vmax.f32 %v4139, 0.0
        %v4156 = vmax.f32 %v4140, 0.0
        %v4157 = vmax.f32 %v4141, 0.0
        %v4158 = vmax.f32 %v4142, 0.0
        %v4159 = vld [vmem:[%s2 + $0x78] sm:$0x7]
        %v4160 = vld [vmem:[%s3 + $0x20] sm:$0x7]
        %4162 = vset.pattern.permute.xlu0 0
        %4163 = vperm.xlu0 %4162, %v4160
        %v4164 = vpop.permute.xlu0 %4163
        %vm4166 = vcmask 261120
        %v4168 = vsel %vm4166, %v4159, 0
        %4170 = vmatpush.msra.mxu0 0.0
        %4171 = vmatpush.msra.mxu0 0.0
        %4172 = vmatpush.msra.mxu0 0.0
        %4173 = vmatpush.msra.mxu0 0.0
        %4174 = vmatpush.msra.mxu0 0.0
        %4175 = vmatpush.msra.mxu0 0.0
        %4176 = vmatpush.msra.mxu0 0.0
        %4177 = vmatpush.msra.mxu0 0.0
        %4178 = vmatpush.msra.mxu0 0.0
        %4179 = vmatpush.msra.mxu0 0.0
        %4180 = vmatpush.msra.mxu0 0.0
        %4181 = vmatpush.msra.mxu0 0.0
        %v4182 = vand.u32 %v4155, 4294901760
        %4183 = vmatpush.msra.mxu0 %v4182
        %v4184 = vand.u32 %v4151, 4294901760
        %4185 = vmatpush.msra.mxu0 %v4184
        %v4186 = vand.u32 %v4147, 4294901760
        %4187 = vmatpush.msra.mxu0 %v4186
        %v4188 = vand.u32 %v4143, 4294901760
        %4189 = vmatpush.msra.mxu0 %v4188
        %v4190 = vand.u32 %v4168, 4294901760
        %v4191 = vsub.f32 %v4168, %v4190
        %v4192 = vand.u32 %v4191, 4294901760
        %v4193 = vsub.f32 %v4191, %v4192
        %v4194 = vand.u32 %v4193, 4294901760
        %4195 = vmatmul.f32.gmra.mxu0 %v4194
        %v4196 = vpop.f32.mrf.mxu0
        %v4197 = vadd.f32 %v4164, %v4196
        %4198 = vdwg.mxu0
        %4199 = vmatpush.msra.mxu0 0.0
        %4200 = vmatpush.msra.mxu0 0.0
        %4201 = vmatpush.msra.mxu0 0.0
        %4202 = vmatpush.msra.mxu0 0.0
        %4203 = vmatpush.msra.mxu0 0.0
        %4204 = vmatpush.msra.mxu0 0.0
        %4205 = vmatpush.msra.mxu0 0.0
        %4206 = vmatpush.msra.mxu0 0.0
        %4207 = vmatpush.msra.mxu0 0.0
        %4208 = vmatpush.msra.mxu0 0.0
        %4209 = vmatpush.msra.mxu0 0.0
        %4210 = vmatpush.msra.mxu0 0.0
        %v4211 = vand.u32 %v4155, 4294901760
        %v4212 = vsub.f32 %v4155, %v4211
        %v4213 = vand.u32 %v4212, 4294901760
        %v4214 = vsub.f32 %v4212, %v4213
        %v4215 = vand.u32 %v4214, 4294901760
        %4216 = vmatpush.msra.mxu0 %v4215
        %v4217 = vand.u32 %v4151, 4294901760
        %v4218 = vsub.f32 %v4151, %v4217
        %v4219 = vand.u32 %v4218, 4294901760
        %v4220 = vsub.f32 %v4218, %v4219
        %v4221 = vand.u32 %v4220, 4294901760
        %4222 = vmatpush.msra.mxu0 %v4221
        %v4223 = vand.u32 %v4147, 4294901760
        %v4224 = vsub.f32 %v4147, %v4223
        %v4225 = vand.u32 %v4224, 4294901760
        %v4226 = vsub.f32 %v4224, %v4225
        %v4227 = vand.u32 %v4226, 4294901760
        %4228 = vmatpush.msra.mxu0 %v4227
        %v4229 = vand.u32 %v4143, 4294901760
        %v4230 = vsub.f32 %v4143, %v4229
        %v4231 = vand.u32 %v4230, 4294901760
        %v4232 = vsub.f32 %v4230, %v4231
        %v4233 = vand.u32 %v4232, 4294901760
        %4234 = vmatpush.msra.mxu0 %v4233
        %v4235 = vand.u32 %v4168, 4294901760
        %4236 = vmatmul.f32.gmra.mxu0 %v4235
        %v4237 = vpop.f32.mrf.mxu0
        %v4238 = vadd.f32 %v4197, %v4237
        %4239 = vdwg.mxu0
        %4240 = vmatpush.msra.mxu0 0.0
        %4241 = vmatpush.msra.mxu0 0.0
        %4242 = vmatpush.msra.mxu0 0.0
        %4243 = vmatpush.msra.mxu0 0.0
        %4244 = vmatpush.msra.mxu0 0.0
        %4245 = vmatpush.msra.mxu0 0.0
        %4246 = vmatpush.msra.mxu0 0.0
        %4247 = vmatpush.msra.mxu0 0.0
        %4248 = vmatpush.msra.mxu0 0.0
        %4249 = vmatpush.msra.mxu0 0.0
        %4250 = vmatpush.msra.mxu0 0.0
        %4251 = vmatpush.msra.mxu0 0.0
        %v4252 = vand.u32 %v4155, 4294901760
        %v4253 = vsub.f32 %v4155, %v4252
        %4254 = vmatpush.msra.mxu0 %v4253
        %v4255 = vand.u32 %v4151, 4294901760
        %v4256 = vsub.f32 %v4151, %v4255
        %4257 = vmatpush.msra.mxu0 %v4256
        %v4258 = vand.u32 %v4147, 4294901760
        %v4259 = vsub.f32 %v4147, %v4258
        %4260 = vmatpush.msra.mxu0 %v4259
        %v4261 = vand.u32 %v4143, 4294901760
        %v4262 = vsub.f32 %v4143, %v4261
        %4263 = vmatpush.msra.mxu0 %v4262
        %v4264 = vand.u32 %v4168, 4294901760
        %v4265 = vsub.f32 %v4168, %v4264
        %4266 = vmatmul.f32.gmra.mxu0 %v4265
        %v4267 = vpop.f32.mrf.mxu0
        %v4268 = vadd.f32 %v4238, %v4267
        %4269 = vdwg.mxu0
        %4270 = vmatpush.msra.mxu0 0.0
        %4271 = vmatpush.msra.mxu0 0.0
        %4272 = vmatpush.msra.mxu0 0.0
        %4273 = vmatpush.msra.mxu0 0.0
        %4274 = vmatpush.msra.mxu0 0.0
        %4275 = vmatpush.msra.mxu0 0.0
        %4276 = vmatpush.msra.mxu0 0.0
        %4277 = vmatpush.msra.mxu0 0.0
        %4278 = vmatpush.msra.mxu0 0.0
        %4279 = vmatpush.msra.mxu0 0.0
        %4280 = vmatpush.msra.mxu0 0.0
        %4281 = vmatpush.msra.mxu0 0.0
        %v4282 = vand.u32 %v4155, 4294901760
        %4283 = vmatpush.msra.mxu0 %v4282
        %v4284 = vand.u32 %v4151, 4294901760
        %4285 = vmatpush.msra.mxu0 %v4284
        %v4286 = vand.u32 %v4147, 4294901760
        %4287 = vmatpush.msra.mxu0 %v4286
        %v4288 = vand.u32 %v4143, 4294901760
        %4289 = vmatpush.msra.mxu0 %v4288
        %v4290 = vand.u32 %v4168, 4294901760
        %v4291 = vsub.f32 %v4168, %v4290
        %v4292 = vand.u32 %v4291, 4294901760
        %4293 = vmatmul.f32.gmra.mxu0 %v4292
        %v4294 = vpop.f32.mrf.mxu0
        %v4295 = vadd.f32 %v4268, %v4294
        %4296 = vdwg.mxu0
        %4297 = vmatpush.msra.mxu0 0.0
        %4298 = vmatpush.msra.mxu0 0.0
        %4299 = vmatpush.msra.mxu0 0.0
        %4300 = vmatpush.msra.mxu0 0.0
        %4301 = vmatpush.msra.mxu0 0.0
        %4302 = vmatpush.msra.mxu0 0.0
        %4303 = vmatpush.msra.mxu0 0.0
        %4304 = vmatpush.msra.mxu0 0.0
        %4305 = vmatpush.msra.mxu0 0.0
        %4306 = vmatpush.msra.mxu0 0.0
        %4307 = vmatpush.msra.mxu0 0.0
        %4308 = vmatpush.msra.mxu0 0.0
        %v4309 = vand.u32 %v4155, 4294901760
        %v4310 = vsub.f32 %v4155, %v4309
        %v4311 = vand.u32 %v4310, 4294901760
        %4312 = vmatpush.msra.mxu0 %v4311
        %v4313 = vand.u32 %v4151, 4294901760
        %v4314 = vsub.f32 %v4151, %v4313
        %v4315 = vand.u32 %v4314, 4294901760
        %4316 = vmatpush.msra.mxu0 %v4315
        %v4317 = vand.u32 %v4147, 4294901760
        %v4318 = vsub.f32 %v4147, %v4317
        %v4319 = vand.u32 %v4318, 4294901760
        %4320 = vmatpush.msra.mxu0 %v4319
        %v4321 = vand.u32 %v4143, 4294901760
        %v4322 = vsub.f32 %v4143, %v4321
        %v4323 = vand.u32 %v4322, 4294901760
        %4324 = vmatpush.msra.mxu0 %v4323
        %v4325 = vand.u32 %v4168, 4294901760
        %4326 = vmatmul.f32.gmra.mxu0 %v4325
        %v4327 = vpop.f32.mrf.mxu0
        %v4328 = vadd.f32 %v4295, %v4327
        %4329 = vdwg.mxu0
        %4330 = vmatpush.msra.mxu0 0.0
        %4331 = vmatpush.msra.mxu0 0.0
        %4332 = vmatpush.msra.mxu0 0.0
        %4333 = vmatpush.msra.mxu0 0.0
        %4334 = vmatpush.msra.mxu0 0.0
        %4335 = vmatpush.msra.mxu0 0.0
        %4336 = vmatpush.msra.mxu0 0.0
        %4337 = vmatpush.msra.mxu0 0.0
        %4338 = vmatpush.msra.mxu0 0.0
        %4339 = vmatpush.msra.mxu0 0.0
        %4340 = vmatpush.msra.mxu0 0.0
        %4341 = vmatpush.msra.mxu0 0.0
        %v4342 = vand.u32 %v4155, 4294901760
        %4343 = vmatpush.msra.mxu0 %v4342
        %v4344 = vand.u32 %v4151, 4294901760
        %4345 = vmatpush.msra.mxu0 %v4344
        %v4346 = vand.u32 %v4147, 4294901760
        %4347 = vmatpush.msra.mxu0 %v4346
        %v4348 = vand.u32 %v4143, 4294901760
        %4349 = vmatpush.msra.mxu0 %v4348
        %v4350 = vand.u32 %v4168, 4294901760
        %4351 = vmatmul.f32.gmra.mxu0 %v4350
        %v4352 = vpop.f32.mrf.mxu0
        %v4353 = vadd.f32 %v4328, %v4352
        %4354 = vdwg.mxu0
        %4355 = vmatpush.msra.mxu0 0.0
        %4356 = vmatpush.msra.mxu0 0.0
        %4357 = vmatpush.msra.mxu0 0.0
        %4358 = vmatpush.msra.mxu0 0.0
        %4359 = vmatpush.msra.mxu0 0.0
        %4360 = vmatpush.msra.mxu0 0.0
        %4361 = vmatpush.msra.mxu0 0.0
        %4362 = vmatpush.msra.mxu0 0.0
        %4363 = vmatpush.msra.mxu0 0.0
        %4364 = vmatpush.msra.mxu0 0.0
        %4365 = vmatpush.msra.mxu0 0.0
        %4366 = vmatpush.msra.mxu0 0.0
        %v4367 = vand.u32 %v4156, 4294901760
        %4368 = vmatpush.msra.mxu0 %v4367
        %v4369 = vand.u32 %v4152, 4294901760
        %4370 = vmatpush.msra.mxu0 %v4369
        %v4371 = vand.u32 %v4148, 4294901760
        %4372 = vmatpush.msra.mxu0 %v4371
        %v4373 = vand.u32 %v4144, 4294901760
        %4374 = vmatpush.msra.mxu0 %v4373
        %v4375 = vand.u32 %v4168, 4294901760
        %v4376 = vsub.f32 %v4168, %v4375
        %v4377 = vand.u32 %v4376, 4294901760
        %v4378 = vsub.f32 %v4376, %v4377
        %v4379 = vand.u32 %v4378, 4294901760
        %4380 = vmatmul.f32.gmra.mxu0 %v4379
        %v4381 = vpop.f32.mrf.mxu0
        %v4382 = vadd.f32 %v4164, %v4381
        %4383 = vdwg.mxu0
        %4384 = vmatpush.msra.mxu0 0.0
        %4385 = vmatpush.msra.mxu0 0.0
        %4386 = vmatpush.msra.mxu0 0.0
        %4387 = vmatpush.msra.mxu0 0.0
        %4388 = vmatpush.msra.mxu0 0.0
        %4389 = vmatpush.msra.mxu0 0.0
        %4390 = vmatpush.msra.mxu0 0.0
        %4391 = vmatpush.msra.mxu0 0.0
        %4392 = vmatpush.msra.mxu0 0.0
        %4393 = vmatpush.msra.mxu0 0.0
        %4394 = vmatpush.msra.mxu0 0.0
        %4395 = vmatpush.msra.mxu0 0.0
        %v4396 = vand.u32 %v4156, 4294901760
        %v4397 = vsub.f32 %v4156, %v4396
        %v4398 = vand.u32 %v4397, 4294901760
        %v4399 = vsub.f32 %v4397, %v4398
        %v4400 = vand.u32 %v4399, 4294901760
        %4401 = vmatpush.msra.mxu0 %v4400
        %v4402 = vand.u32 %v4152, 4294901760
        %v4403 = vsub.f32 %v4152, %v4402
        %v4404 = vand.u32 %v4403, 4294901760
        %v4405 = vsub.f32 %v4403, %v4404
        %v4406 = vand.u32 %v4405, 4294901760
        %4407 = vmatpush.msra.mxu0 %v4406
        %v4408 = vand.u32 %v4148, 4294901760
        %v4409 = vsub.f32 %v4148, %v4408
        %v4410 = vand.u32 %v4409, 4294901760
        %v4411 = vsub.f32 %v4409, %v4410
        %v4412 = vand.u32 %v4411, 4294901760
        %4413 = vmatpush.msra.mxu0 %v4412
        %v4414 = vand.u32 %v4144, 4294901760
        %v4415 = vsub.f32 %v4144, %v4414
        %v4416 = vand.u32 %v4415, 4294901760
        %v4417 = vsub.f32 %v4415, %v4416
        %v4418 = vand.u32 %v4417, 4294901760
        %4419 = vmatpush.msra.mxu0 %v4418
        %v4420 = vand.u32 %v4168, 4294901760
        %4421 = vmatmul.f32.gmra.mxu0 %v4420
        %v4422 = vpop.f32.mrf.mxu0
        %v4423 = vadd.f32 %v4382, %v4422
        %4424 = vdwg.mxu0
        %4425 = vmatpush.msra.mxu0 0.0
        %4426 = vmatpush.msra.mxu0 0.0
        %4427 = vmatpush.msra.mxu0 0.0
        %4428 = vmatpush.msra.mxu0 0.0
        %4429 = vmatpush.msra.mxu0 0.0
        %4430 = vmatpush.msra.mxu0 0.0
        %4431 = vmatpush.msra.mxu0 0.0
        %4432 = vmatpush.msra.mxu0 0.0
        %4433 = vmatpush.msra.mxu0 0.0
        %4434 = vmatpush.msra.mxu0 0.0
        %4435 = vmatpush.msra.mxu0 0.0
        %4436 = vmatpush.msra.mxu0 0.0
        %v4437 = vand.u32 %v4156, 4294901760
        %v4438 = vsub.f32 %v4156, %v4437
        %4439 = vmatpush.msra.mxu0 %v4438
        %v4440 = vand.u32 %v4152, 4294901760
        %v4441 = vsub.f32 %v4152, %v4440
        %4442 = vmatpush.msra.mxu0 %v4441
        %v4443 = vand.u32 %v4148, 4294901760
        %v4444 = vsub.f32 %v4148, %v4443
        %4445 = vmatpush.msra.mxu0 %v4444
        %v4446 = vand.u32 %v4144, 4294901760
        %v4447 = vsub.f32 %v4144, %v4446
        %4448 = vmatpush.msra.mxu0 %v4447
        %v4449 = vand.u32 %v4168, 4294901760
        %v4450 = vsub.f32 %v4168, %v4449
        %4451 = vmatmul.f32.gmra.mxu0 %v4450
        %v4452 = vpop.f32.mrf.mxu0
        %v4453 = vadd.f32 %v4423, %v4452
        %4454 = vdwg.mxu0
        %4455 = vmatpush.msra.mxu0 0.0
        %4456 = vmatpush.msra.mxu0 0.0
        %4457 = vmatpush.msra.mxu0 0.0
        %4458 = vmatpush.msra.mxu0 0.0
        %4459 = vmatpush.msra.mxu0 0.0
        %4460 = vmatpush.msra.mxu0 0.0
        %4461 = vmatpush.msra.mxu0 0.0
        %4462 = vmatpush.msra.mxu0 0.0
        %4463 = vmatpush.msra.mxu0 0.0
        %4464 = vmatpush.msra.mxu0 0.0
        %4465 = vmatpush.msra.mxu0 0.0
        %4466 = vmatpush.msra.mxu0 0.0
        %v4467 = vand.u32 %v4156, 4294901760
        %4468 = vmatpush.msra.mxu0 %v4467
        %v4469 = vand.u32 %v4152, 4294901760
        %4470 = vmatpush.msra.mxu0 %v4469
        %v4471 = vand.u32 %v4148, 4294901760
        %4472 = vmatpush.msra.mxu0 %v4471
        %v4473 = vand.u32 %v4144, 4294901760
        %4474 = vmatpush.msra.mxu0 %v4473
        %v4475 = vand.u32 %v4168, 4294901760
        %v4476 = vsub.f32 %v4168, %v4475
        %v4477 = vand.u32 %v4476, 4294901760
        %4478 = vmatmul.f32.gmra.mxu0 %v4477
        %v4479 = vpop.f32.mrf.mxu0
        %v4480 = vadd.f32 %v4453, %v4479
        %4481 = vdwg.mxu0
        %4482 = vmatpush.msra.mxu0 0.0
        %4483 = vmatpush.msra.mxu0 0.0
        %4484 = vmatpush.msra.mxu0 0.0
        %4485 = vmatpush.msra.mxu0 0.0
        %4486 = vmatpush.msra.mxu0 0.0
        %4487 = vmatpush.msra.mxu0 0.0
        %4488 = vmatpush.msra.mxu0 0.0
        %4489 = vmatpush.msra.mxu0 0.0
        %4490 = vmatpush.msra.mxu0 0.0
        %4491 = vmatpush.msra.mxu0 0.0
        %4492 = vmatpush.msra.mxu0 0.0
        %4493 = vmatpush.msra.mxu0 0.0
        %v4494 = vand.u32 %v4156, 4294901760
        %v4495 = vsub.f32 %v4156, %v4494
        %v4496 = vand.u32 %v4495, 4294901760
        %4497 = vmatpush.msra.mxu0 %v4496
        %v4498 = vand.u32 %v4152, 4294901760
        %v4499 = vsub.f32 %v4152, %v4498
        %v4500 = vand.u32 %v4499, 4294901760
        %4501 = vmatpush.msra.mxu0 %v4500
        %v4502 = vand.u32 %v4148, 4294901760
        %v4503 = vsub.f32 %v4148, %v4502
        %v4504 = vand.u32 %v4503, 4294901760
        %4505 = vmatpush.msra.mxu0 %v4504
        %v4506 = vand.u32 %v4144, 4294901760
        %v4507 = vsub.f32 %v4144, %v4506
        %v4508 = vand.u32 %v4507, 4294901760
        %4509 = vmatpush.msra.mxu0 %v4508
        %v4510 = vand.u32 %v4168, 4294901760
        %4511 = vmatmul.f32.gmra.mxu0 %v4510
        %v4512 = vpop.f32.mrf.mxu0
        %v4513 = vadd.f32 %v4480, %v4512
        %4514 = vdwg.mxu0
        %4515 = vmatpush.msra.mxu0 0.0
        %4516 = vmatpush.msra.mxu0 0.0
        %4517 = vmatpush.msra.mxu0 0.0
        %4518 = vmatpush.msra.mxu0 0.0
        %4519 = vmatpush.msra.mxu0 0.0
        %4520 = vmatpush.msra.mxu0 0.0
        %4521 = vmatpush.msra.mxu0 0.0
        %4522 = vmatpush.msra.mxu0 0.0
        %4523 = vmatpush.msra.mxu0 0.0
        %4524 = vmatpush.msra.mxu0 0.0
        %4525 = vmatpush.msra.mxu0 0.0
        %4526 = vmatpush.msra.mxu0 0.0
        %v4527 = vand.u32 %v4156, 4294901760
        %4528 = vmatpush.msra.mxu0 %v4527
        %v4529 = vand.u32 %v4152, 4294901760
        %4530 = vmatpush.msra.mxu0 %v4529
        %v4531 = vand.u32 %v4148, 4294901760
        %4532 = vmatpush.msra.mxu0 %v4531
        %v4533 = vand.u32 %v4144, 4294901760
        %4534 = vmatpush.msra.mxu0 %v4533
        %v4535 = vand.u32 %v4168, 4294901760
        %4536 = vmatmul.f32.gmra.mxu0 %v4535
        %v4537 = vpop.f32.mrf.mxu0
        %v4538 = vadd.f32 %v4513, %v4537
        %4539 = vdwg.mxu0
        %4540 = vmatpush.msra.mxu0 0.0
        %4541 = vmatpush.msra.mxu0 0.0
        %4542 = vmatpush.msra.mxu0 0.0
        %4543 = vmatpush.msra.mxu0 0.0
        %4544 = vmatpush.msra.mxu0 0.0
        %4545 = vmatpush.msra.mxu0 0.0
        %4546 = vmatpush.msra.mxu0 0.0
        %4547 = vmatpush.msra.mxu0 0.0
        %4548 = vmatpush.msra.mxu0 0.0
        %4549 = vmatpush.msra.mxu0 0.0
        %4550 = vmatpush.msra.mxu0 0.0
        %4551 = vmatpush.msra.mxu0 0.0
        %v4552 = vand.u32 %v4157, 4294901760
        %4553 = vmatpush.msra.mxu0 %v4552
        %v4554 = vand.u32 %v4153, 4294901760
        %4555 = vmatpush.msra.mxu0 %v4554
        %v4556 = vand.u32 %v4149, 4294901760
        %4557 = vmatpush.msra.mxu0 %v4556
        %v4558 = vand.u32 %v4145, 4294901760
        %4559 = vmatpush.msra.mxu0 %v4558
        %v4560 = vand.u32 %v4168, 4294901760
        %v4561 = vsub.f32 %v4168, %v4560
        %v4562 = vand.u32 %v4561, 4294901760
        %v4563 = vsub.f32 %v4561, %v4562
        %v4564 = vand.u32 %v4563, 4294901760
        %4565 = vmatmul.f32.gmra.mxu0 %v4564
        %v4566 = vpop.f32.mrf.mxu0
        %v4567 = vadd.f32 %v4164, %v4566
        %4568 = vdwg.mxu0
        %4569 = vmatpush.msra.mxu0 0.0
        %4570 = vmatpush.msra.mxu0 0.0
        %4571 = vmatpush.msra.mxu0 0.0
        %4572 = vmatpush.msra.mxu0 0.0
        %4573 = vmatpush.msra.mxu0 0.0
        %4574 = vmatpush.msra.mxu0 0.0
        %4575 = vmatpush.msra.mxu0 0.0
        %4576 = vmatpush.msra.mxu0 0.0
        %4577 = vmatpush.msra.mxu0 0.0
        %4578 = vmatpush.msra.mxu0 0.0
        %4579 = vmatpush.msra.mxu0 0.0
        %4580 = vmatpush.msra.mxu0 0.0
        %v4581 = vand.u32 %v4157, 4294901760
        %v4582 = vsub.f32 %v4157, %v4581
        %v4583 = vand.u32 %v4582, 4294901760
        %v4584 = vsub.f32 %v4582, %v4583
        %v4585 = vand.u32 %v4584, 4294901760
        %4586 = vmatpush.msra.mxu0 %v4585
        %v4587 = vand.u32 %v4153, 4294901760
        %v4588 = vsub.f32 %v4153, %v4587
        %v4589 = vand.u32 %v4588, 4294901760
        %v4590 = vsub.f32 %v4588, %v4589
        %v4591 = vand.u32 %v4590, 4294901760
        %4592 = vmatpush.msra.mxu0 %v4591
        %v4593 = vand.u32 %v4149, 4294901760
        %v4594 = vsub.f32 %v4149, %v4593
        %v4595 = vand.u32 %v4594, 4294901760
        %v4596 = vsub.f32 %v4594, %v4595
        %v4597 = vand.u32 %v4596, 4294901760
        %4598 = vmatpush.msra.mxu0 %v4597
        %v4599 = vand.u32 %v4145, 4294901760
        %v4600 = vsub.f32 %v4145, %v4599
        %v4601 = vand.u32 %v4600, 4294901760
        %v4602 = vsub.f32 %v4600, %v4601
        %v4603 = vand.u32 %v4602, 4294901760
        %4604 = vmatpush.msra.mxu0 %v4603
        %v4605 = vand.u32 %v4168, 4294901760
        %4606 = vmatmul.f32.gmra.mxu0 %v4605
        %v4607 = vpop.f32.mrf.mxu0
        %v4608 = vadd.f32 %v4567, %v4607
        %4609 = vdwg.mxu0
        %4610 = vmatpush.msra.mxu0 0.0
        %4611 = vmatpush.msra.mxu0 0.0
        %4612 = vmatpush.msra.mxu0 0.0
        %4613 = vmatpush.msra.mxu0 0.0
        %4614 = vmatpush.msra.mxu0 0.0
        %4615 = vmatpush.msra.mxu0 0.0
        %4616 = vmatpush.msra.mxu0 0.0
        %4617 = vmatpush.msra.mxu0 0.0
        %4618 = vmatpush.msra.mxu0 0.0
        %4619 = vmatpush.msra.mxu0 0.0
        %4620 = vmatpush.msra.mxu0 0.0
        %4621 = vmatpush.msra.mxu0 0.0
        %v4622 = vand.u32 %v4157, 4294901760
        %v4623 = vsub.f32 %v4157, %v4622
        %4624 = vmatpush.msra.mxu0 %v4623
        %v4625 = vand.u32 %v4153, 4294901760
        %v4626 = vsub.f32 %v4153, %v4625
        %4627 = vmatpush.msra.mxu0 %v4626
        %v4628 = vand.u32 %v4149, 4294901760
        %v4629 = vsub.f32 %v4149, %v4628
        %4630 = vmatpush.msra.mxu0 %v4629
        %v4631 = vand.u32 %v4145, 4294901760
        %v4632 = vsub.f32 %v4145, %v4631
        %4633 = vmatpush.msra.mxu0 %v4632
        %v4634 = vand.u32 %v4168, 4294901760
        %v4635 = vsub.f32 %v4168, %v4634
        %4636 = vmatmul.f32.gmra.mxu0 %v4635
        %v4637 = vpop.f32.mrf.mxu0
        %v4638 = vadd.f32 %v4608, %v4637
        %4639 = vdwg.mxu0
        %4640 = vmatpush.msra.mxu0 0.0
        %4641 = vmatpush.msra.mxu0 0.0
        %4642 = vmatpush.msra.mxu0 0.0
        %4643 = vmatpush.msra.mxu0 0.0
        %4644 = vmatpush.msra.mxu0 0.0
        %4645 = vmatpush.msra.mxu0 0.0
        %4646 = vmatpush.msra.mxu0 0.0
        %4647 = vmatpush.msra.mxu0 0.0
        %4648 = vmatpush.msra.mxu0 0.0
        %4649 = vmatpush.msra.mxu0 0.0
        %4650 = vmatpush.msra.mxu0 0.0
        %4651 = vmatpush.msra.mxu0 0.0
        %v4652 = vand.u32 %v4157, 4294901760
        %4653 = vmatpush.msra.mxu0 %v4652
        %v4654 = vand.u32 %v4153, 4294901760
        %4655 = vmatpush.msra.mxu0 %v4654
        %v4656 = vand.u32 %v4149, 4294901760
        %4657 = vmatpush.msra.mxu0 %v4656
        %v4658 = vand.u32 %v4145, 4294901760
        %4659 = vmatpush.msra.mxu0 %v4658
        %v4660 = vand.u32 %v4168, 4294901760
        %v4661 = vsub.f32 %v4168, %v4660
        %v4662 = vand.u32 %v4661, 4294901760
        %4663 = vmatmul.f32.gmra.mxu0 %v4662
        %v4664 = vpop.f32.mrf.mxu0
        %v4665 = vadd.f32 %v4638, %v4664
        %4666 = vdwg.mxu0
        %4667 = vmatpush.msra.mxu0 0.0
        %4668 = vmatpush.msra.mxu0 0.0
        %4669 = vmatpush.msra.mxu0 0.0
        %4670 = vmatpush.msra.mxu0 0.0
        %4671 = vmatpush.msra.mxu0 0.0
        %4672 = vmatpush.msra.mxu0 0.0
        %4673 = vmatpush.msra.mxu0 0.0
        %4674 = vmatpush.msra.mxu0 0.0
        %4675 = vmatpush.msra.mxu0 0.0
        %4676 = vmatpush.msra.mxu0 0.0
        %4677 = vmatpush.msra.mxu0 0.0
        %4678 = vmatpush.msra.mxu0 0.0
        %v4679 = vand.u32 %v4157, 4294901760
        %v4680 = vsub.f32 %v4157, %v4679
        %v4681 = vand.u32 %v4680, 4294901760
        %4682 = vmatpush.msra.mxu0 %v4681
        %v4683 = vand.u32 %v4153, 4294901760
        %v4684 = vsub.f32 %v4153, %v4683
        %v4685 = vand.u32 %v4684, 4294901760
        %4686 = vmatpush.msra.mxu0 %v4685
        %v4687 = vand.u32 %v4149, 4294901760
        %v4688 = vsub.f32 %v4149, %v4687
        %v4689 = vand.u32 %v4688, 4294901760
        %4690 = vmatpush.msra.mxu0 %v4689
        %v4691 = vand.u32 %v4145, 4294901760
        %v4692 = vsub.f32 %v4145, %v4691
        %v4693 = vand.u32 %v4692, 4294901760
        %4694 = vmatpush.msra.mxu0 %v4693
        %v4695 = vand.u32 %v4168, 4294901760
        %4696 = vmatmul.f32.gmra.mxu0 %v4695
        %v4697 = vpop.f32.mrf.mxu0
        %v4698 = vadd.f32 %v4665, %v4697
        %4699 = vdwg.mxu0
        %4700 = vmatpush.msra.mxu0 0.0
        %4701 = vmatpush.msra.mxu0 0.0
        %4702 = vmatpush.msra.mxu0 0.0
        %4703 = vmatpush.msra.mxu0 0.0
        %4704 = vmatpush.msra.mxu0 0.0
        %4705 = vmatpush.msra.mxu0 0.0
        %4706 = vmatpush.msra.mxu0 0.0
        %4707 = vmatpush.msra.mxu0 0.0
        %4708 = vmatpush.msra.mxu0 0.0
        %4709 = vmatpush.msra.mxu0 0.0
        %4710 = vmatpush.msra.mxu0 0.0
        %4711 = vmatpush.msra.mxu0 0.0
        %v4712 = vand.u32 %v4157, 4294901760
        %4713 = vmatpush.msra.mxu0 %v4712
        %v4714 = vand.u32 %v4153, 4294901760
        %4715 = vmatpush.msra.mxu0 %v4714
        %v4716 = vand.u32 %v4149, 4294901760
        %4717 = vmatpush.msra.mxu0 %v4716
        %v4718 = vand.u32 %v4145, 4294901760
        %4719 = vmatpush.msra.mxu0 %v4718
        %v4720 = vand.u32 %v4168, 4294901760
        %4721 = vmatmul.f32.gmra.mxu0 %v4720
        %v4722 = vpop.f32.mrf.mxu0
        %v4723 = vadd.f32 %v4698, %v4722
        %4724 = vdwg.mxu0
        %4725 = vmatpush.msra.mxu0 0.0
        %4726 = vmatpush.msra.mxu0 0.0
        %4727 = vmatpush.msra.mxu0 0.0
        %4728 = vmatpush.msra.mxu0 0.0
        %4729 = vmatpush.msra.mxu0 0.0
        %4730 = vmatpush.msra.mxu0 0.0
        %4731 = vmatpush.msra.mxu0 0.0
        %4732 = vmatpush.msra.mxu0 0.0
        %4733 = vmatpush.msra.mxu0 0.0
        %4734 = vmatpush.msra.mxu0 0.0
        %4735 = vmatpush.msra.mxu0 0.0
        %4736 = vmatpush.msra.mxu0 0.0
        %v4737 = vand.u32 %v4158, 4294901760
        %4738 = vmatpush.msra.mxu0 %v4737
        %v4739 = vand.u32 %v4154, 4294901760
        %4740 = vmatpush.msra.mxu0 %v4739
        %v4741 = vand.u32 %v4150, 4294901760
        %4742 = vmatpush.msra.mxu0 %v4741
        %v4743 = vand.u32 %v4146, 4294901760
        %4744 = vmatpush.msra.mxu0 %v4743
        %v4745 = vand.u32 %v4168, 4294901760
        %v4746 = vsub.f32 %v4168, %v4745
        %v4747 = vand.u32 %v4746, 4294901760
        %v4748 = vsub.f32 %v4746, %v4747
        %v4749 = vand.u32 %v4748, 4294901760
        %4750 = vmatmul.f32.gmra.mxu0 %v4749
        %v4751 = vpop.f32.mrf.mxu0
        %v4752 = vadd.f32 %v4164, %v4751
        %4753 = vdwg.mxu0
        %4754 = vmatpush.msra.mxu0 0.0
        %4755 = vmatpush.msra.mxu0 0.0
        %4756 = vmatpush.msra.mxu0 0.0
        %4757 = vmatpush.msra.mxu0 0.0
        %4758 = vmatpush.msra.mxu0 0.0
        %4759 = vmatpush.msra.mxu0 0.0
        %4760 = vmatpush.msra.mxu0 0.0
        %4761 = vmatpush.msra.mxu0 0.0
        %4762 = vmatpush.msra.mxu0 0.0
        %4763 = vmatpush.msra.mxu0 0.0
        %4764 = vmatpush.msra.mxu0 0.0
        %4765 = vmatpush.msra.mxu0 0.0
        %v4766 = vand.u32 %v4158, 4294901760
        %v4767 = vsub.f32 %v4158, %v4766
        %v4768 = vand.u32 %v4767, 4294901760
        %v4769 = vsub.f32 %v4767, %v4768
        %v4770 = vand.u32 %v4769, 4294901760
        %4771 = vmatpush.msra.mxu0 %v4770
        %v4772 = vand.u32 %v4154, 4294901760
        %v4773 = vsub.f32 %v4154, %v4772
        %v4774 = vand.u32 %v4773, 4294901760
        %v4775 = vsub.f32 %v4773, %v4774
        %v4776 = vand.u32 %v4775, 4294901760
        %4777 = vmatpush.msra.mxu0 %v4776
        %v4778 = vand.u32 %v4150, 4294901760
        %v4779 = vsub.f32 %v4150, %v4778
        %v4780 = vand.u32 %v4779, 4294901760
        %v4781 = vsub.f32 %v4779, %v4780
        %v4782 = vand.u32 %v4781, 4294901760
        %4783 = vmatpush.msra.mxu0 %v4782
        %v4784 = vand.u32 %v4146, 4294901760
        %v4785 = vsub.f32 %v4146, %v4784
        %v4786 = vand.u32 %v4785, 4294901760
        %v4787 = vsub.f32 %v4785, %v4786
        %v4788 = vand.u32 %v4787, 4294901760
        %4789 = vmatpush.msra.mxu0 %v4788
        %v4790 = vand.u32 %v4168, 4294901760
        %4791 = vmatmul.f32.gmra.mxu0 %v4790
        %v4792 = vpop.f32.mrf.mxu0
        %v4793 = vadd.f32 %v4752, %v4792
        %4794 = vdwg.mxu0
        %4795 = vmatpush.msra.mxu0 0.0
        %4796 = vmatpush.msra.mxu0 0.0
        %4797 = vmatpush.msra.mxu0 0.0
        %4798 = vmatpush.msra.mxu0 0.0
        %4799 = vmatpush.msra.mxu0 0.0
        %4800 = vmatpush.msra.mxu0 0.0
        %4801 = vmatpush.msra.mxu0 0.0
        %4802 = vmatpush.msra.mxu0 0.0
        %4803 = vmatpush.msra.mxu0 0.0
        %4804 = vmatpush.msra.mxu0 0.0
        %4805 = vmatpush.msra.mxu0 0.0
        %4806 = vmatpush.msra.mxu0 0.0
        %v4807 = vand.u32 %v4158, 4294901760
        %v4808 = vsub.f32 %v4158, %v4807
        %4809 = vmatpush.msra.mxu0 %v4808
        %v4810 = vand.u32 %v4154, 4294901760
        %v4811 = vsub.f32 %v4154, %v4810
        %4812 = vmatpush.msra.mxu0 %v4811
        %v4813 = vand.u32 %v4150, 4294901760
        %v4814 = vsub.f32 %v4150, %v4813
        %4815 = vmatpush.msra.mxu0 %v4814
        %v4816 = vand.u32 %v4146, 4294901760
        %v4817 = vsub.f32 %v4146, %v4816
        %4818 = vmatpush.msra.mxu0 %v4817
        %v4819 = vand.u32 %v4168, 4294901760
        %v4820 = vsub.f32 %v4168, %v4819
        %4821 = vmatmul.f32.gmra.mxu0 %v4820
        %v4822 = vpop.f32.mrf.mxu0
        %v4823 = vadd.f32 %v4793, %v4822
        %4824 = vdwg.mxu0
        %4825 = vmatpush.msra.mxu0 0.0
        %4826 = vmatpush.msra.mxu0 0.0
        %4827 = vmatpush.msra.mxu0 0.0
        %4828 = vmatpush.msra.mxu0 0.0
        %4829 = vmatpush.msra.mxu0 0.0
        %4830 = vmatpush.msra.mxu0 0.0
        %4831 = vmatpush.msra.mxu0 0.0
        %4832 = vmatpush.msra.mxu0 0.0
        %4833 = vmatpush.msra.mxu0 0.0
        %4834 = vmatpush.msra.mxu0 0.0
        %4835 = vmatpush.msra.mxu0 0.0
        %4836 = vmatpush.msra.mxu0 0.0
        %v4837 = vand.u32 %v4158, 4294901760
        %4838 = vmatpush.msra.mxu0 %v4837
        %v4839 = vand.u32 %v4154, 4294901760
        %4840 = vmatpush.msra.mxu0 %v4839
        %v4841 = vand.u32 %v4150, 4294901760
        %4842 = vmatpush.msra.mxu0 %v4841
        %v4843 = vand.u32 %v4146, 4294901760
        %4844 = vmatpush.msra.mxu0 %v4843
        %v4845 = vand.u32 %v4168, 4294901760
        %v4846 = vsub.f32 %v4168, %v4845
        %v4847 = vand.u32 %v4846, 4294901760
        %4848 = vmatmul.f32.gmra.mxu0 %v4847
        %v4849 = vpop.f32.mrf.mxu0
        %v4850 = vadd.f32 %v4823, %v4849
        %4851 = vdwg.mxu0
        %4852 = vmatpush.msra.mxu0 0.0
        %4853 = vmatpush.msra.mxu0 0.0
        %4854 = vmatpush.msra.mxu0 0.0
        %4855 = vmatpush.msra.mxu0 0.0
        %4856 = vmatpush.msra.mxu0 0.0
        %4857 = vmatpush.msra.mxu0 0.0
        %4858 = vmatpush.msra.mxu0 0.0
        %4859 = vmatpush.msra.mxu0 0.0
        %4860 = vmatpush.msra.mxu0 0.0
        %4861 = vmatpush.msra.mxu0 0.0
        %4862 = vmatpush.msra.mxu0 0.0
        %4863 = vmatpush.msra.mxu0 0.0
        %v4864 = vand.u32 %v4158, 4294901760
        %v4865 = vsub.f32 %v4158, %v4864
        %v4866 = vand.u32 %v4865, 4294901760
        %4867 = vmatpush.msra.mxu0 %v4866
        %v4868 = vand.u32 %v4154, 4294901760
        %v4869 = vsub.f32 %v4154, %v4868
        %v4870 = vand.u32 %v4869, 4294901760
        %4871 = vmatpush.msra.mxu0 %v4870
        %v4872 = vand.u32 %v4150, 4294901760
        %v4873 = vsub.f32 %v4150, %v4872
        %v4874 = vand.u32 %v4873, 4294901760
        %4875 = vmatpush.msra.mxu0 %v4874
        %v4876 = vand.u32 %v4146, 4294901760
        %v4877 = vsub.f32 %v4146, %v4876
        %v4878 = vand.u32 %v4877, 4294901760
        %4879 = vmatpush.msra.mxu0 %v4878
        %v4880 = vand.u32 %v4168, 4294901760
        %4881 = vmatmul.f32.gmra.mxu0 %v4880
        %v4882 = vpop.f32.mrf.mxu0
        %v4883 = vadd.f32 %v4850, %v4882
        %4884 = vdwg.mxu0
        %4885 = vmatpush.msra.mxu0 0.0
        %4886 = vmatpush.msra.mxu0 0.0
        %4887 = vmatpush.msra.mxu0 0.0
        %4888 = vmatpush.msra.mxu0 0.0
        %4889 = vmatpush.msra.mxu0 0.0
        %4890 = vmatpush.msra.mxu0 0.0
        %4891 = vmatpush.msra.mxu0 0.0
        %4892 = vmatpush.msra.mxu0 0.0
        %4893 = vmatpush.msra.mxu0 0.0
        %4894 = vmatpush.msra.mxu0 0.0
        %4895 = vmatpush.msra.mxu0 0.0
        %4896 = vmatpush.msra.mxu0 0.0
        %v4897 = vand.u32 %v4158, 4294901760
        %4898 = vmatpush.msra.mxu0 %v4897
        %v4899 = vand.u32 %v4154, 4294901760
        %4900 = vmatpush.msra.mxu0 %v4899
        %v4901 = vand.u32 %v4150, 4294901760
        %4902 = vmatpush.msra.mxu0 %v4901
        %v4903 = vand.u32 %v4146, 4294901760
        %4904 = vmatpush.msra.mxu0 %v4903
        %v4905 = vand.u32 %v4168, 4294901760
        %4906 = vmatmul.f32.gmra.mxu0 %v4905
        %v4907 = vpop.f32.mrf.mxu0
        %v4908 = vadd.f32 %v4883, %v4907
        %4909 = vdwg.mxu0
        %v4910 = vadd.f32 %v3220, %v4353
        %v4911 = vadd.f32 %v3503, %v4538
        %v4912 = vadd.f32 %v3786, %v4723
        %v4913 = vadd.f32 %v4069, %v4908
        %v4914 = vmul.f32 %v4353, %v4353
        %v4915 = vmul.f32 %v4538, %v4538
        %v4916 = vmul.f32 %v4723, %v4723
        %v4917 = vmul.f32 %v4908, %v4908
        %vm4918 = vcmask 1042432
        %v4919 = vsel %vm4918, %v4914, 0.0
        %v4920 = vsel %vm4918, %v4915, 0.0
        %v4921 = vadd.f32 %v4919, %v4920
        %v4922 = vsel %vm4918, %v4916, 0.0
        %v4923 = vadd.f32 %v4921, %v4922
        %v4924 = vsel %vm4918, %v4917, 0.0
        %v4925 = vadd.f32 %v4923, %v4924
        %4926 = vadd.xlane.f32.xlu0 %v4925
        %v4927 = vpop.xlane.xlu0 %4926
        %v4928 = vrot.slane %v4927, 4
        %v4929 = vadd.f32 %v4927, %v4928
        %v4930 = vrot.slane %v4929, 2
        %v4931 = vadd.f32 %v4929, %v4930
        %v4932 = vrot.slane %v4931, 1
        %v4933 = vadd.f32 %v4931, %v4932
        %s4934 = vtos %v4933
        %v4935 = vstv %s4934
        %4936 = vst [vmem:[%s320] sm:$0x1] %v4935
        %v4937 = vld [vmem:[%s3 + $0x28] sm:$0x7]
        %4939 = vset.pattern.permute.xlu0 0
        %4940 = vperm.xlu0 %4939, %v4937
        %v4941 = vpop.permute.xlu0 %4940
        %v4943 = vsub.f32 %v4941, %v4910
        %v4944 = vsub.f32 %v4941, %v4911
        %v4945 = vsub.f32 %v4941, %v4912
        %v4946 = vsub.f32 %v4941, %v4913
        %v4947 = vmul.f32 %v4943, %v4943
        %v4948 = vmul.f32 %v4944, %v4944
        %v4949 = vmul.f32 %v4945, %v4945
        %v4950 = vmul.f32 %v4946, %v4946
        %v4951 = vsel %vm4918, %v4947, 0.0
        %v4952 = vrot.slane %v4951, 4
        %v4953 = vadd.f32 %v4951, %v4952
        %v4954 = vrot.slane %v4953, 2
        %v4955 = vadd.f32 %v4953, %v4954
        %v4956 = vrot.slane %v4955, 1
        %v4957 = vadd.f32 %v4955, %v4956
        %v4958 = vsel %vm4918, %v4948, 0.0
        %v4959 = vrot.slane %v4958, 4
        %v4960 = vadd.f32 %v4958, %v4959
        %v4961 = vrot.slane %v4960, 2
        %v4962 = vadd.f32 %v4960, %v4961
        %v4963 = vrot.slane %v4962, 1
        %v4964 = vadd.f32 %v4962, %v4963
        %v4965 = vsel %vm4918, %v4949, 0.0
        %v4966 = vrot.slane %v4965, 4
        %v4967 = vadd.f32 %v4965, %v4966
        %v4968 = vrot.slane %v4967, 2
        %v4969 = vadd.f32 %v4967, %v4968
        %v4970 = vrot.slane %v4969, 1
        %v4971 = vadd.f32 %v4969, %v4970
        %v4972 = vsel %vm4918, %v4950, 0.0
        %v4973 = vrot.slane %v4972, 4
        %v4974 = vadd.f32 %v4972, %v4973
        %v4975 = vrot.slane %v4974, 2
        %v4976 = vadd.f32 %v4974, %v4975
        %v4977 = vrot.slane %v4976, 1
        %v4978 = vadd.f32 %v4976, %v4977
        %v4979 = vadd.f32 %v4957, 1e-08
        %v4980 = vadd.f32 %v4964, 1e-08
        %v4981 = vadd.f32 %v4971, 1e-08
        %v4982 = vadd.f32 %v4978, 1e-08
        %v4983 = vrsqrt.pop %v4979
        %v4984 = vmul.f32 %v4983, %v4979
        %v4985 = vmul.f32 %v4984, %v4983
        %v4986 = vmul.f32 0.5, %v4985
        %v4987 = vsub.f32 1.5, %v4986
        %v4988 = vmul.f32 %v4983, %v4987
        %vm4989 = vweird.f32 %v4979
        %vm4990 = vweird.f32 %v4983
        %vm4991 = vmor %vm4989, %vm4990
        %v4992 = vsel %vm4991, %v4983, %v4988
        %v4993 = vrsqrt.pop %v4980
        %v4994 = vmul.f32 %v4993, %v4980
        %v4995 = vmul.f32 %v4994, %v4993
        %v4996 = vmul.f32 0.5, %v4995
        %v4997 = vsub.f32 1.5, %v4996
        %v4998 = vmul.f32 %v4993, %v4997
        %vm4999 = vweird.f32 %v4980
        %vm5000 = vweird.f32 %v4993
        %vm5001 = vmor %vm4999, %vm5000
        %v5002 = vsel %vm5001, %v4993, %v4998
        %v5003 = vrsqrt.pop %v4981
        %v5004 = vmul.f32 %v5003, %v4981
        %v5005 = vmul.f32 %v5004, %v5003
        %v5006 = vmul.f32 0.5, %v5005
        %v5007 = vsub.f32 1.5, %v5006
        %v5008 = vmul.f32 %v5003, %v5007
        %vm5009 = vweird.f32 %v4981
        %vm5010 = vweird.f32 %v5003
        %vm5011 = vmor %vm5009, %vm5010
        %v5012 = vsel %vm5011, %v5003, %v5008
        %v5013 = vrsqrt.pop %v4982
        %v5014 = vmul.f32 %v5013, %v4982
        %v5015 = vmul.f32 %v5014, %v5013
        %v5016 = vmul.f32 0.5, %v5015
        %v5017 = vsub.f32 1.5, %v5016
        %v5018 = vmul.f32 %v5013, %v5017
        %vm5019 = vweird.f32 %v4982
        %vm5020 = vweird.f32 %v5013
        %vm5021 = vmor %vm5019, %vm5020
        %v5022 = vsel %vm5021, %v5013, %v5018
        %v5023 = vmul.f32 %v4943, %v4992
        %v5024 = vmul.f32 %v4944, %v5002
        %v5025 = vmul.f32 %v4945, %v5012
        %v5026 = vmul.f32 %v4946, %v5022
        %v5027 = vld [vmem:[%s2 + $0x80] sm:$0xff]
        %v5028 = vld [vmem:[%s2 + $0x88] sm:$0xff]
        %v5029 = vld [vmem:[%s2 + $0x90] sm:$0xff]
        %v5030 = vld [vmem:[%s2 + $0x98] sm:$0xff]
        %vm5031 = vcmask 23552
        %v5033 = vsel %vm5031, %v5027, 0
        %v5036 = vsel %vm5031, %v5028, 0
        %v5039 = vsel %vm5031, %v5029, 0
        %v5042 = vsel %vm5031, %v5030, 0
        %v5045 = vsel %vm4918, %v5023, 0
        %v5048 = vsel %vm4918, %v5024, 0
        %v5051 = vsel %vm4918, %v5025, 0
        %v5054 = vsel %vm4918, %v5026, 0
        %5056 = vmatpush.msra.mxu0 0.0
        %5057 = vmatpush.msra.mxu0 0.0
        %5058 = vmatpush.msra.mxu0 0.0
        %5059 = vmatpush.msra.mxu0 0.0
        %5060 = vmatpush.msra.mxu0 0.0
        %5061 = vmatpush.msra.mxu0 0.0
        %5062 = vmatpush.msra.mxu0 0.0
        %5063 = vmatpush.msra.mxu0 0.0
        %5064 = vmatpush.msra.mxu0 0.0
        %5065 = vmatpush.msra.mxu0 0.0
        %5066 = vmatpush.msra.mxu0 0.0
        %5067 = vmatpush.msra.mxu0 0.0
        %5068 = vmatpush.msra.mxu0 0.0
        %5069 = vmatpush.msra.mxu0 0.0
        %5070 = vmatpush.msra.mxu0 0.0
        %v5071 = vand.u32 %v5045, 4294901760
        %5072 = vmatpush.msra.mxu0 %v5071
        %v5073 = vand.u32 %v5033, 4294901760
        %v5074 = vsub.f32 %v5033, %v5073
        %v5075 = vand.u32 %v5074, 4294901760
        %v5076 = vsub.f32 %v5074, %v5075
        %v5077 = vand.u32 %v5076, 4294901760
        %5078 = vmatmul.f32.gmra.mxu0 %v5077
        %v5079 = vpop.f32.mrf.mxu0
        %v5080 = vadd.f32 0.0, %v5079
        %v5081 = vand.u32 %v5036, 4294901760
        %v5082 = vsub.f32 %v5036, %v5081
        %v5083 = vand.u32 %v5082, 4294901760
        %v5084 = vsub.f32 %v5082, %v5083
        %v5085 = vand.u32 %v5084, 4294901760
        %5086 = vmatmul.f32.gmra.mxu0 %v5085
        %v5087 = vpop.f32.mrf.mxu0
        %v5088 = vadd.f32 0.0, %v5087
        %v5089 = vand.u32 %v5039, 4294901760
        %v5090 = vsub.f32 %v5039, %v5089
        %v5091 = vand.u32 %v5090, 4294901760
        %v5092 = vsub.f32 %v5090, %v5091
        %v5093 = vand.u32 %v5092, 4294901760
        %5094 = vmatmul.f32.gmra.mxu0 %v5093
        %v5095 = vpop.f32.mrf.mxu0
        %v5096 = vadd.f32 0.0, %v5095
        %v5097 = vand.u32 %v5042, 4294901760
        %v5098 = vsub.f32 %v5042, %v5097
        %v5099 = vand.u32 %v5098, 4294901760
        %v5100 = vsub.f32 %v5098, %v5099
        %v5101 = vand.u32 %v5100, 4294901760
        %5102 = vmatmul.f32.gmra.mxu0 %v5101
        %v5103 = vpop.f32.mrf.mxu0
        %v5104 = vadd.f32 0.0, %v5103
        %5105 = vdwg.mxu0
        %5106 = vmatpush.msra.mxu0 0.0
        %5107 = vmatpush.msra.mxu0 0.0
        %5108 = vmatpush.msra.mxu0 0.0
        %5109 = vmatpush.msra.mxu0 0.0
        %5110 = vmatpush.msra.mxu0 0.0
        %5111 = vmatpush.msra.mxu0 0.0
        %5112 = vmatpush.msra.mxu0 0.0
        %5113 = vmatpush.msra.mxu0 0.0
        %5114 = vmatpush.msra.mxu0 0.0
        %5115 = vmatpush.msra.mxu0 0.0
        %5116 = vmatpush.msra.mxu0 0.0
        %5117 = vmatpush.msra.mxu0 0.0
        %5118 = vmatpush.msra.mxu0 0.0
        %5119 = vmatpush.msra.mxu0 0.0
        %5120 = vmatpush.msra.mxu0 0.0
        %v5121 = vand.u32 %v5045, 4294901760
        %v5122 = vsub.f32 %v5045, %v5121
        %v5123 = vand.u32 %v5122, 4294901760
        %v5124 = vsub.f32 %v5122, %v5123
        %v5125 = vand.u32 %v5124, 4294901760
        %5126 = vmatpush.msra.mxu0 %v5125
        %v5127 = vand.u32 %v5033, 4294901760
        %5128 = vmatmul.f32.gmra.mxu0 %v5127
        %v5129 = vpop.f32.mrf.mxu0
        %v5130 = vadd.f32 %v5080, %v5129
        %v5131 = vand.u32 %v5036, 4294901760
        %5132 = vmatmul.f32.gmra.mxu0 %v5131
        %v5133 = vpop.f32.mrf.mxu0
        %v5134 = vadd.f32 %v5088, %v5133
        %v5135 = vand.u32 %v5039, 4294901760
        %5136 = vmatmul.f32.gmra.mxu0 %v5135
        %v5137 = vpop.f32.mrf.mxu0
        %v5138 = vadd.f32 %v5096, %v5137
        %v5139 = vand.u32 %v5042, 4294901760
        %5140 = vmatmul.f32.gmra.mxu0 %v5139
        %v5141 = vpop.f32.mrf.mxu0
        %v5142 = vadd.f32 %v5104, %v5141
        %5143 = vdwg.mxu0
        %5144 = vmatpush.msra.mxu0 0.0
        %5145 = vmatpush.msra.mxu0 0.0
        %5146 = vmatpush.msra.mxu0 0.0
        %5147 = vmatpush.msra.mxu0 0.0
        %5148 = vmatpush.msra.mxu0 0.0
        %5149 = vmatpush.msra.mxu0 0.0
        %5150 = vmatpush.msra.mxu0 0.0
        %5151 = vmatpush.msra.mxu0 0.0
        %5152 = vmatpush.msra.mxu0 0.0
        %5153 = vmatpush.msra.mxu0 0.0
        %5154 = vmatpush.msra.mxu0 0.0
        %5155 = vmatpush.msra.mxu0 0.0
        %5156 = vmatpush.msra.mxu0 0.0
        %5157 = vmatpush.msra.mxu0 0.0
        %5158 = vmatpush.msra.mxu0 0.0
        %v5159 = vand.u32 %v5045, 4294901760
        %v5160 = vsub.f32 %v5045, %v5159
        %5161 = vmatpush.msra.mxu0 %v5160
        %v5162 = vand.u32 %v5033, 4294901760
        %v5163 = vsub.f32 %v5033, %v5162
        %5164 = vmatmul.f32.gmra.mxu0 %v5163
        %v5165 = vpop.f32.mrf.mxu0
        %v5166 = vadd.f32 %v5130, %v5165
        %v5167 = vand.u32 %v5036, 4294901760
        %v5168 = vsub.f32 %v5036, %v5167
        %5169 = vmatmul.f32.gmra.mxu0 %v5168
        %v5170 = vpop.f32.mrf.mxu0
        %v5171 = vadd.f32 %v5134, %v5170
        %v5172 = vand.u32 %v5039, 4294901760
        %v5173 = vsub.f32 %v5039, %v5172
        %5174 = vmatmul.f32.gmra.mxu0 %v5173
        %v5175 = vpop.f32.mrf.mxu0
        %v5176 = vadd.f32 %v5138, %v5175
        %v5177 = vand.u32 %v5042, 4294901760
        %v5178 = vsub.f32 %v5042, %v5177
        %5179 = vmatmul.f32.gmra.mxu0 %v5178
        %v5180 = vpop.f32.mrf.mxu0
        %v5181 = vadd.f32 %v5142, %v5180
        %5182 = vdwg.mxu0
        %5183 = vmatpush.msra.mxu0 0.0
        %5184 = vmatpush.msra.mxu0 0.0
        %5185 = vmatpush.msra.mxu0 0.0
        %5186 = vmatpush.msra.mxu0 0.0
        %5187 = vmatpush.msra.mxu0 0.0
        %5188 = vmatpush.msra.mxu0 0.0
        %5189 = vmatpush.msra.mxu0 0.0
        %5190 = vmatpush.msra.mxu0 0.0
        %5191 = vmatpush.msra.mxu0 0.0
        %5192 = vmatpush.msra.mxu0 0.0
        %5193 = vmatpush.msra.mxu0 0.0
        %5194 = vmatpush.msra.mxu0 0.0
        %5195 = vmatpush.msra.mxu0 0.0
        %5196 = vmatpush.msra.mxu0 0.0
        %5197 = vmatpush.msra.mxu0 0.0
        %v5198 = vand.u32 %v5045, 4294901760
        %5199 = vmatpush.msra.mxu0 %v5198
        %v5200 = vand.u32 %v5033, 4294901760
        %v5201 = vsub.f32 %v5033, %v5200
        %v5202 = vand.u32 %v5201, 4294901760
        %5203 = vmatmul.f32.gmra.mxu0 %v5202
        %v5204 = vpop.f32.mrf.mxu0
        %v5205 = vadd.f32 %v5166, %v5204
        %v5206 = vand.u32 %v5036, 4294901760
        %v5207 = vsub.f32 %v5036, %v5206
        %v5208 = vand.u32 %v5207, 4294901760
        %5209 = vmatmul.f32.gmra.mxu0 %v5208
        %v5210 = vpop.f32.mrf.mxu0
        %v5211 = vadd.f32 %v5171, %v5210
        %v5212 = vand.u32 %v5039, 4294901760
        %v5213 = vsub.f32 %v5039, %v5212
        %v5214 = vand.u32 %v5213, 4294901760
        %5215 = vmatmul.f32.gmra.mxu0 %v5214
        %v5216 = vpop.f32.mrf.mxu0
        %v5217 = vadd.f32 %v5176, %v5216
        %v5218 = vand.u32 %v5042, 4294901760
        %v5219 = vsub.f32 %v5042, %v5218
        %v5220 = vand.u32 %v5219, 4294901760
        %5221 = vmatmul.f32.gmra.mxu0 %v5220
        %v5222 = vpop.f32.mrf.mxu0
        %v5223 = vadd.f32 %v5181, %v5222
        %5224 = vdwg.mxu0
        %5225 = vmatpush.msra.mxu0 0.0
        %5226 = vmatpush.msra.mxu0 0.0
        %5227 = vmatpush.msra.mxu0 0.0
        %5228 = vmatpush.msra.mxu0 0.0
        %5229 = vmatpush.msra.mxu0 0.0
        %5230 = vmatpush.msra.mxu0 0.0
        %5231 = vmatpush.msra.mxu0 0.0
        %5232 = vmatpush.msra.mxu0 0.0
        %5233 = vmatpush.msra.mxu0 0.0
        %5234 = vmatpush.msra.mxu0 0.0
        %5235 = vmatpush.msra.mxu0 0.0
        %5236 = vmatpush.msra.mxu0 0.0
        %5237 = vmatpush.msra.mxu0 0.0
        %5238 = vmatpush.msra.mxu0 0.0
        %5239 = vmatpush.msra.mxu0 0.0
        %v5240 = vand.u32 %v5045, 4294901760
        %v5241 = vsub.f32 %v5045, %v5240
        %v5242 = vand.u32 %v5241, 4294901760
        %5243 = vmatpush.msra.mxu0 %v5242
        %v5244 = vand.u32 %v5033, 4294901760
        %5245 = vmatmul.f32.gmra.mxu0 %v5244
        %v5246 = vpop.f32.mrf.mxu0
        %v5247 = vadd.f32 %v5205, %v5246
        %v5248 = vand.u32 %v5036, 4294901760
        %5249 = vmatmul.f32.gmra.mxu0 %v5248
        %v5250 = vpop.f32.mrf.mxu0
        %v5251 = vadd.f32 %v5211, %v5250
        %v5252 = vand.u32 %v5039, 4294901760
        %5253 = vmatmul.f32.gmra.mxu0 %v5252
        %v5254 = vpop.f32.mrf.mxu0
        %v5255 = vadd.f32 %v5217, %v5254
        %v5256 = vand.u32 %v5042, 4294901760
        %5257 = vmatmul.f32.gmra.mxu0 %v5256
        %v5258 = vpop.f32.mrf.mxu0
        %v5259 = vadd.f32 %v5223, %v5258
        %5260 = vdwg.mxu0
        %5261 = vmatpush.msra.mxu0 0.0
        %5262 = vmatpush.msra.mxu0 0.0
        %5263 = vmatpush.msra.mxu0 0.0
        %5264 = vmatpush.msra.mxu0 0.0
        %5265 = vmatpush.msra.mxu0 0.0
        %5266 = vmatpush.msra.mxu0 0.0
        %5267 = vmatpush.msra.mxu0 0.0
        %5268 = vmatpush.msra.mxu0 0.0
        %5269 = vmatpush.msra.mxu0 0.0
        %5270 = vmatpush.msra.mxu0 0.0
        %5271 = vmatpush.msra.mxu0 0.0
        %5272 = vmatpush.msra.mxu0 0.0
        %5273 = vmatpush.msra.mxu0 0.0
        %5274 = vmatpush.msra.mxu0 0.0
        %5275 = vmatpush.msra.mxu0 0.0
        %v5276 = vand.u32 %v5045, 4294901760
        %5277 = vmatpush.msra.mxu0 %v5276
        %v5278 = vand.u32 %v5033, 4294901760
        %5279 = vmatmul.f32.gmra.mxu0 %v5278
        %v5280 = vpop.f32.mrf.mxu0
        %v5281 = vadd.f32 %v5247, %v5280
        %v5282 = vand.u32 %v5036, 4294901760
        %5283 = vmatmul.f32.gmra.mxu0 %v5282
        %v5284 = vpop.f32.mrf.mxu0
        %v5285 = vadd.f32 %v5251, %v5284
        %v5286 = vand.u32 %v5039, 4294901760
        %5287 = vmatmul.f32.gmra.mxu0 %v5286
        %v5288 = vpop.f32.mrf.mxu0
        %v5289 = vadd.f32 %v5255, %v5288
        %v5290 = vand.u32 %v5042, 4294901760
        %5291 = vmatmul.f32.gmra.mxu0 %v5290
        %v5292 = vpop.f32.mrf.mxu0
        %v5293 = vadd.f32 %v5259, %v5292
        %5294 = vdwg.mxu0
        %5295 = vmatpush.msra.mxu0 0.0
        %5296 = vmatpush.msra.mxu0 0.0
        %5297 = vmatpush.msra.mxu0 0.0
        %5298 = vmatpush.msra.mxu0 0.0
        %5299 = vmatpush.msra.mxu0 0.0
        %5300 = vmatpush.msra.mxu0 0.0
        %5301 = vmatpush.msra.mxu0 0.0
        %5302 = vmatpush.msra.mxu0 0.0
        %5303 = vmatpush.msra.mxu0 0.0
        %5304 = vmatpush.msra.mxu0 0.0
        %5305 = vmatpush.msra.mxu0 0.0
        %5306 = vmatpush.msra.mxu0 0.0
        %5307 = vmatpush.msra.mxu0 0.0
        %5308 = vmatpush.msra.mxu0 0.0
        %5309 = vmatpush.msra.mxu0 0.0
        %v5310 = vand.u32 %v5048, 4294901760
        %5311 = vmatpush.msra.mxu0 %v5310
        %v5312 = vand.u32 %v5033, 4294901760
        %v5313 = vsub.f32 %v5033, %v5312
        %v5314 = vand.u32 %v5313, 4294901760
        %v5315 = vsub.f32 %v5313, %v5314
        %v5316 = vand.u32 %v5315, 4294901760
        %5317 = vmatmul.f32.gmra.mxu0 %v5316
        %v5318 = vpop.f32.mrf.mxu0
        %v5319 = vadd.f32 0.0, %v5318
        %v5320 = vand.u32 %v5036, 4294901760
        %v5321 = vsub.f32 %v5036, %v5320
        %v5322 = vand.u32 %v5321, 4294901760
        %v5323 = vsub.f32 %v5321, %v5322
        %v5324 = vand.u32 %v5323, 4294901760
        %5325 = vmatmul.f32.gmra.mxu0 %v5324
        %v5326 = vpop.f32.mrf.mxu0
        %v5327 = vadd.f32 0.0, %v5326
        %v5328 = vand.u32 %v5039, 4294901760
        %v5329 = vsub.f32 %v5039, %v5328
        %v5330 = vand.u32 %v5329, 4294901760
        %v5331 = vsub.f32 %v5329, %v5330
        %v5332 = vand.u32 %v5331, 4294901760
        %5333 = vmatmul.f32.gmra.mxu0 %v5332
        %v5334 = vpop.f32.mrf.mxu0
        %v5335 = vadd.f32 0.0, %v5334
        %v5336 = vand.u32 %v5042, 4294901760
        %v5337 = vsub.f32 %v5042, %v5336
        %v5338 = vand.u32 %v5337, 4294901760
        %v5339 = vsub.f32 %v5337, %v5338
        %v5340 = vand.u32 %v5339, 4294901760
        %5341 = vmatmul.f32.gmra.mxu0 %v5340
        %v5342 = vpop.f32.mrf.mxu0
        %v5343 = vadd.f32 0.0, %v5342
        %5344 = vdwg.mxu0
        %5345 = vmatpush.msra.mxu0 0.0
        %5346 = vmatpush.msra.mxu0 0.0
        %5347 = vmatpush.msra.mxu0 0.0
        %5348 = vmatpush.msra.mxu0 0.0
        %5349 = vmatpush.msra.mxu0 0.0
        %5350 = vmatpush.msra.mxu0 0.0
        %5351 = vmatpush.msra.mxu0 0.0
        %5352 = vmatpush.msra.mxu0 0.0
        %5353 = vmatpush.msra.mxu0 0.0
        %5354 = vmatpush.msra.mxu0 0.0
        %5355 = vmatpush.msra.mxu0 0.0
        %5356 = vmatpush.msra.mxu0 0.0
        %5357 = vmatpush.msra.mxu0 0.0
        %5358 = vmatpush.msra.mxu0 0.0
        %5359 = vmatpush.msra.mxu0 0.0
        %v5360 = vand.u32 %v5048, 4294901760
        %v5361 = vsub.f32 %v5048, %v5360
        %v5362 = vand.u32 %v5361, 4294901760
        %v5363 = vsub.f32 %v5361, %v5362
        %v5364 = vand.u32 %v5363, 4294901760
        %5365 = vmatpush.msra.mxu0 %v5364
        %v5366 = vand.u32 %v5033, 4294901760
        %5367 = vmatmul.f32.gmra.mxu0 %v5366
        %v5368 = vpop.f32.mrf.mxu0
        %v5369 = vadd.f32 %v5319, %v5368
        %v5370 = vand.u32 %v5036, 4294901760
        %5371 = vmatmul.f32.gmra.mxu0 %v5370
        %v5372 = vpop.f32.mrf.mxu0
        %v5373 = vadd.f32 %v5327, %v5372
        %v5374 = vand.u32 %v5039, 4294901760
        %5375 = vmatmul.f32.gmra.mxu0 %v5374
        %v5376 = vpop.f32.mrf.mxu0
        %v5377 = vadd.f32 %v5335, %v5376
        %v5378 = vand.u32 %v5042, 4294901760
        %5379 = vmatmul.f32.gmra.mxu0 %v5378
        %v5380 = vpop.f32.mrf.mxu0
        %v5381 = vadd.f32 %v5343, %v5380
        %5382 = vdwg.mxu0
        %5383 = vmatpush.msra.mxu0 0.0
        %5384 = vmatpush.msra.mxu0 0.0
        %5385 = vmatpush.msra.mxu0 0.0
        %5386 = vmatpush.msra.mxu0 0.0
        %5387 = vmatpush.msra.mxu0 0.0
        %5388 = vmatpush.msra.mxu0 0.0
        %5389 = vmatpush.msra.mxu0 0.0
        %5390 = vmatpush.msra.mxu0 0.0
        %5391 = vmatpush.msra.mxu0 0.0
        %5392 = vmatpush.msra.mxu0 0.0
        %5393 = vmatpush.msra.mxu0 0.0
        %5394 = vmatpush.msra.mxu0 0.0
        %5395 = vmatpush.msra.mxu0 0.0
        %5396 = vmatpush.msra.mxu0 0.0
        %5397 = vmatpush.msra.mxu0 0.0
        %v5398 = vand.u32 %v5048, 4294901760
        %v5399 = vsub.f32 %v5048, %v5398
        %5400 = vmatpush.msra.mxu0 %v5399
        %v5401 = vand.u32 %v5033, 4294901760
        %v5402 = vsub.f32 %v5033, %v5401
        %5403 = vmatmul.f32.gmra.mxu0 %v5402
        %v5404 = vpop.f32.mrf.mxu0
        %v5405 = vadd.f32 %v5369, %v5404
        %v5406 = vand.u32 %v5036, 4294901760
        %v5407 = vsub.f32 %v5036, %v5406
        %5408 = vmatmul.f32.gmra.mxu0 %v5407
        %v5409 = vpop.f32.mrf.mxu0
        %v5410 = vadd.f32 %v5373, %v5409
        %v5411 = vand.u32 %v5039, 4294901760
        %v5412 = vsub.f32 %v5039, %v5411
        %5413 = vmatmul.f32.gmra.mxu0 %v5412
        %v5414 = vpop.f32.mrf.mxu0
        %v5415 = vadd.f32 %v5377, %v5414
        %v5416 = vand.u32 %v5042, 4294901760
        %v5417 = vsub.f32 %v5042, %v5416
        %5418 = vmatmul.f32.gmra.mxu0 %v5417
        %v5419 = vpop.f32.mrf.mxu0
        %v5420 = vadd.f32 %v5381, %v5419
        %5421 = vdwg.mxu0
        %5422 = vmatpush.msra.mxu0 0.0
        %5423 = vmatpush.msra.mxu0 0.0
        %5424 = vmatpush.msra.mxu0 0.0
        %5425 = vmatpush.msra.mxu0 0.0
        %5426 = vmatpush.msra.mxu0 0.0
        %5427 = vmatpush.msra.mxu0 0.0
        %5428 = vmatpush.msra.mxu0 0.0
        %5429 = vmatpush.msra.mxu0 0.0
        %5430 = vmatpush.msra.mxu0 0.0
        %5431 = vmatpush.msra.mxu0 0.0
        %5432 = vmatpush.msra.mxu0 0.0
        %5433 = vmatpush.msra.mxu0 0.0
        %5434 = vmatpush.msra.mxu0 0.0
        %5435 = vmatpush.msra.mxu0 0.0
        %5436 = vmatpush.msra.mxu0 0.0
        %v5437 = vand.u32 %v5048, 4294901760
        %5438 = vmatpush.msra.mxu0 %v5437
        %v5439 = vand.u32 %v5033, 4294901760
        %v5440 = vsub.f32 %v5033, %v5439
        %v5441 = vand.u32 %v5440, 4294901760
        %5442 = vmatmul.f32.gmra.mxu0 %v5441
        %v5443 = vpop.f32.mrf.mxu0
        %v5444 = vadd.f32 %v5405, %v5443
        %v5445 = vand.u32 %v5036, 4294901760
        %v5446 = vsub.f32 %v5036, %v5445
        %v5447 = vand.u32 %v5446, 4294901760
        %5448 = vmatmul.f32.gmra.mxu0 %v5447
        %v5449 = vpop.f32.mrf.mxu0
        %v5450 = vadd.f32 %v5410, %v5449
        %v5451 = vand.u32 %v5039, 4294901760
        %v5452 = vsub.f32 %v5039, %v5451
        %v5453 = vand.u32 %v5452, 4294901760
        %5454 = vmatmul.f32.gmra.mxu0 %v5453
        %v5455 = vpop.f32.mrf.mxu0
        %v5456 = vadd.f32 %v5415, %v5455
        %v5457 = vand.u32 %v5042, 4294901760
        %v5458 = vsub.f32 %v5042, %v5457
        %v5459 = vand.u32 %v5458, 4294901760
        %5460 = vmatmul.f32.gmra.mxu0 %v5459
        %v5461 = vpop.f32.mrf.mxu0
        %v5462 = vadd.f32 %v5420, %v5461
        %5463 = vdwg.mxu0
        %5464 = vmatpush.msra.mxu0 0.0
        %5465 = vmatpush.msra.mxu0 0.0
        %5466 = vmatpush.msra.mxu0 0.0
        %5467 = vmatpush.msra.mxu0 0.0
        %5468 = vmatpush.msra.mxu0 0.0
        %5469 = vmatpush.msra.mxu0 0.0
        %5470 = vmatpush.msra.mxu0 0.0
        %5471 = vmatpush.msra.mxu0 0.0
        %5472 = vmatpush.msra.mxu0 0.0
        %5473 = vmatpush.msra.mxu0 0.0
        %5474 = vmatpush.msra.mxu0 0.0
        %5475 = vmatpush.msra.mxu0 0.0
        %5476 = vmatpush.msra.mxu0 0.0
        %5477 = vmatpush.msra.mxu0 0.0
        %5478 = vmatpush.msra.mxu0 0.0
        %v5479 = vand.u32 %v5048, 4294901760
        %v5480 = vsub.f32 %v5048, %v5479
        %v5481 = vand.u32 %v5480, 4294901760
        %5482 = vmatpush.msra.mxu0 %v5481
        %v5483 = vand.u32 %v5033, 4294901760
        %5484 = vmatmul.f32.gmra.mxu0 %v5483
        %v5485 = vpop.f32.mrf.mxu0
        %v5486 = vadd.f32 %v5444, %v5485
        %v5487 = vand.u32 %v5036, 4294901760
        %5488 = vmatmul.f32.gmra.mxu0 %v5487
        %v5489 = vpop.f32.mrf.mxu0
        %v5490 = vadd.f32 %v5450, %v5489
        %v5491 = vand.u32 %v5039, 4294901760
        %5492 = vmatmul.f32.gmra.mxu0 %v5491
        %v5493 = vpop.f32.mrf.mxu0
        %v5494 = vadd.f32 %v5456, %v5493
        %v5495 = vand.u32 %v5042, 4294901760
        %5496 = vmatmul.f32.gmra.mxu0 %v5495
        %v5497 = vpop.f32.mrf.mxu0
        %v5498 = vadd.f32 %v5462, %v5497
        %5499 = vdwg.mxu0
        %5500 = vmatpush.msra.mxu0 0.0
        %5501 = vmatpush.msra.mxu0 0.0
        %5502 = vmatpush.msra.mxu0 0.0
        %5503 = vmatpush.msra.mxu0 0.0
        %5504 = vmatpush.msra.mxu0 0.0
        %5505 = vmatpush.msra.mxu0 0.0
        %5506 = vmatpush.msra.mxu0 0.0
        %5507 = vmatpush.msra.mxu0 0.0
        %5508 = vmatpush.msra.mxu0 0.0
        %5509 = vmatpush.msra.mxu0 0.0
        %5510 = vmatpush.msra.mxu0 0.0
        %5511 = vmatpush.msra.mxu0 0.0
        %5512 = vmatpush.msra.mxu0 0.0
        %5513 = vmatpush.msra.mxu0 0.0
        %5514 = vmatpush.msra.mxu0 0.0
        %v5515 = vand.u32 %v5048, 4294901760
        %5516 = vmatpush.msra.mxu0 %v5515
        %v5517 = vand.u32 %v5033, 4294901760
        %5518 = vmatmul.f32.gmra.mxu0 %v5517
        %v5519 = vpop.f32.mrf.mxu0
        %v5520 = vadd.f32 %v5486, %v5519
        %v5521 = vand.u32 %v5036, 4294901760
        %5522 = vmatmul.f32.gmra.mxu0 %v5521
        %v5523 = vpop.f32.mrf.mxu0
        %v5524 = vadd.f32 %v5490, %v5523
        %v5525 = vand.u32 %v5039, 4294901760
        %5526 = vmatmul.f32.gmra.mxu0 %v5525
        %v5527 = vpop.f32.mrf.mxu0
        %v5528 = vadd.f32 %v5494, %v5527
        %v5529 = vand.u32 %v5042, 4294901760
        %5530 = vmatmul.f32.gmra.mxu0 %v5529
        %v5531 = vpop.f32.mrf.mxu0
        %v5532 = vadd.f32 %v5498, %v5531
        %5533 = vdwg.mxu0
        %5534 = vmatpush.msra.mxu0 0.0
        %5535 = vmatpush.msra.mxu0 0.0
        %5536 = vmatpush.msra.mxu0 0.0
        %5537 = vmatpush.msra.mxu0 0.0
        %5538 = vmatpush.msra.mxu0 0.0
        %5539 = vmatpush.msra.mxu0 0.0
        %5540 = vmatpush.msra.mxu0 0.0
        %5541 = vmatpush.msra.mxu0 0.0
        %5542 = vmatpush.msra.mxu0 0.0
        %5543 = vmatpush.msra.mxu0 0.0
        %5544 = vmatpush.msra.mxu0 0.0
        %5545 = vmatpush.msra.mxu0 0.0
        %5546 = vmatpush.msra.mxu0 0.0
        %5547 = vmatpush.msra.mxu0 0.0
        %5548 = vmatpush.msra.mxu0 0.0
        %v5549 = vand.u32 %v5051, 4294901760
        %5550 = vmatpush.msra.mxu0 %v5549
        %v5551 = vand.u32 %v5033, 4294901760
        %v5552 = vsub.f32 %v5033, %v5551
        %v5553 = vand.u32 %v5552, 4294901760
        %v5554 = vsub.f32 %v5552, %v5553
        %v5555 = vand.u32 %v5554, 4294901760
        %5556 = vmatmul.f32.gmra.mxu0 %v5555
        %v5557 = vpop.f32.mrf.mxu0
        %v5558 = vadd.f32 0.0, %v5557
        %v5559 = vand.u32 %v5036, 4294901760
        %v5560 = vsub.f32 %v5036, %v5559
        %v5561 = vand.u32 %v5560, 4294901760
        %v5562 = vsub.f32 %v5560, %v5561
        %v5563 = vand.u32 %v5562, 4294901760
        %5564 = vmatmul.f32.gmra.mxu0 %v5563
        %v5565 = vpop.f32.mrf.mxu0
        %v5566 = vadd.f32 0.0, %v5565
        %v5567 = vand.u32 %v5039, 4294901760
        %v5568 = vsub.f32 %v5039, %v5567
        %v5569 = vand.u32 %v5568, 4294901760
        %v5570 = vsub.f32 %v5568, %v5569
        %v5571 = vand.u32 %v5570, 4294901760
        %5572 = vmatmul.f32.gmra.mxu0 %v5571
        %v5573 = vpop.f32.mrf.mxu0
        %v5574 = vadd.f32 0.0, %v5573
        %v5575 = vand.u32 %v5042, 4294901760
        %v5576 = vsub.f32 %v5042, %v5575
        %v5577 = vand.u32 %v5576, 4294901760
        %v5578 = vsub.f32 %v5576, %v5577
        %v5579 = vand.u32 %v5578, 4294901760
        %5580 = vmatmul.f32.gmra.mxu0 %v5579
        %v5581 = vpop.f32.mrf.mxu0
        %v5582 = vadd.f32 0.0, %v5581
        %5583 = vdwg.mxu0
        %5584 = vmatpush.msra.mxu0 0.0
        %5585 = vmatpush.msra.mxu0 0.0
        %5586 = vmatpush.msra.mxu0 0.0
        %5587 = vmatpush.msra.mxu0 0.0
        %5588 = vmatpush.msra.mxu0 0.0
        %5589 = vmatpush.msra.mxu0 0.0
        %5590 = vmatpush.msra.mxu0 0.0
        %5591 = vmatpush.msra.mxu0 0.0
        %5592 = vmatpush.msra.mxu0 0.0
        %5593 = vmatpush.msra.mxu0 0.0
        %5594 = vmatpush.msra.mxu0 0.0
        %5595 = vmatpush.msra.mxu0 0.0
        %5596 = vmatpush.msra.mxu0 0.0
        %5597 = vmatpush.msra.mxu0 0.0
        %5598 = vmatpush.msra.mxu0 0.0
        %v5599 = vand.u32 %v5051, 4294901760
        %v5600 = vsub.f32 %v5051, %v5599
        %v5601 = vand.u32 %v5600, 4294901760
        %v5602 = vsub.f32 %v5600, %v5601
        %v5603 = vand.u32 %v5602, 4294901760
        %5604 = vmatpush.msra.mxu0 %v5603
        %v5605 = vand.u32 %v5033, 4294901760
        %5606 = vmatmul.f32.gmra.mxu0 %v5605
        %v5607 = vpop.f32.mrf.mxu0
        %v5608 = vadd.f32 %v5558, %v5607
        %v5609 = vand.u32 %v5036, 4294901760
        %5610 = vmatmul.f32.gmra.mxu0 %v5609
        %v5611 = vpop.f32.mrf.mxu0
        %v5612 = vadd.f32 %v5566, %v5611
        %v5613 = vand.u32 %v5039, 4294901760
        %5614 = vmatmul.f32.gmra.mxu0 %v5613
        %v5615 = vpop.f32.mrf.mxu0
        %v5616 = vadd.f32 %v5574, %v5615
        %v5617 = vand.u32 %v5042, 4294901760
        %5618 = vmatmul.f32.gmra.mxu0 %v5617
        %v5619 = vpop.f32.mrf.mxu0
        %v5620 = vadd.f32 %v5582, %v5619
        %5621 = vdwg.mxu0
        %5622 = vmatpush.msra.mxu0 0.0
        %5623 = vmatpush.msra.mxu0 0.0
        %5624 = vmatpush.msra.mxu0 0.0
        %5625 = vmatpush.msra.mxu0 0.0
        %5626 = vmatpush.msra.mxu0 0.0
        %5627 = vmatpush.msra.mxu0 0.0
        %5628 = vmatpush.msra.mxu0 0.0
        %5629 = vmatpush.msra.mxu0 0.0
        %5630 = vmatpush.msra.mxu0 0.0
        %5631 = vmatpush.msra.mxu0 0.0
        %5632 = vmatpush.msra.mxu0 0.0
        %5633 = vmatpush.msra.mxu0 0.0
        %5634 = vmatpush.msra.mxu0 0.0
        %5635 = vmatpush.msra.mxu0 0.0
        %5636 = vmatpush.msra.mxu0 0.0
        %v5637 = vand.u32 %v5051, 4294901760
        %v5638 = vsub.f32 %v5051, %v5637
        %5639 = vmatpush.msra.mxu0 %v5638
        %v5640 = vand.u32 %v5033, 4294901760
        %v5641 = vsub.f32 %v5033, %v5640
        %5642 = vmatmul.f32.gmra.mxu0 %v5641
        %v5643 = vpop.f32.mrf.mxu0
        %v5644 = vadd.f32 %v5608, %v5643
        %v5645 = vand.u32 %v5036, 4294901760
        %v5646 = vsub.f32 %v5036, %v5645
        %5647 = vmatmul.f32.gmra.mxu0 %v5646
        %v5648 = vpop.f32.mrf.mxu0
        %v5649 = vadd.f32 %v5612, %v5648
        %v5650 = vand.u32 %v5039, 4294901760
        %v5651 = vsub.f32 %v5039, %v5650
        %5652 = vmatmul.f32.gmra.mxu0 %v5651
        %v5653 = vpop.f32.mrf.mxu0
        %v5654 = vadd.f32 %v5616, %v5653
        %v5655 = vand.u32 %v5042, 4294901760
        %v5656 = vsub.f32 %v5042, %v5655
        %5657 = vmatmul.f32.gmra.mxu0 %v5656
        %v5658 = vpop.f32.mrf.mxu0
        %v5659 = vadd.f32 %v5620, %v5658
        %5660 = vdwg.mxu0
        %5661 = vmatpush.msra.mxu0 0.0
        %5662 = vmatpush.msra.mxu0 0.0
        %5663 = vmatpush.msra.mxu0 0.0
        %5664 = vmatpush.msra.mxu0 0.0
        %5665 = vmatpush.msra.mxu0 0.0
        %5666 = vmatpush.msra.mxu0 0.0
        %5667 = vmatpush.msra.mxu0 0.0
        %5668 = vmatpush.msra.mxu0 0.0
        %5669 = vmatpush.msra.mxu0 0.0
        %5670 = vmatpush.msra.mxu0 0.0
        %5671 = vmatpush.msra.mxu0 0.0
        %5672 = vmatpush.msra.mxu0 0.0
        %5673 = vmatpush.msra.mxu0 0.0
        %5674 = vmatpush.msra.mxu0 0.0
        %5675 = vmatpush.msra.mxu0 0.0
        %v5676 = vand.u32 %v5051, 4294901760
        %5677 = vmatpush.msra.mxu0 %v5676
        %v5678 = vand.u32 %v5033, 4294901760
        %v5679 = vsub.f32 %v5033, %v5678
        %v5680 = vand.u32 %v5679, 4294901760
        %5681 = vmatmul.f32.gmra.mxu0 %v5680
        %v5682 = vpop.f32.mrf.mxu0
        %v5683 = vadd.f32 %v5644, %v5682
        %v5684 = vand.u32 %v5036, 4294901760
        %v5685 = vsub.f32 %v5036, %v5684
        %v5686 = vand.u32 %v5685, 4294901760
        %5687 = vmatmul.f32.gmra.mxu0 %v5686
        %v5688 = vpop.f32.mrf.mxu0
        %v5689 = vadd.f32 %v5649, %v5688
        %v5690 = vand.u32 %v5039, 4294901760
        %v5691 = vsub.f32 %v5039, %v5690
        %v5692 = vand.u32 %v5691, 4294901760
        %5693 = vmatmul.f32.gmra.mxu0 %v5692
        %v5694 = vpop.f32.mrf.mxu0
        %v5695 = vadd.f32 %v5654, %v5694
        %v5696 = vand.u32 %v5042, 4294901760
        %v5697 = vsub.f32 %v5042, %v5696
        %v5698 = vand.u32 %v5697, 4294901760
        %5699 = vmatmul.f32.gmra.mxu0 %v5698
        %v5700 = vpop.f32.mrf.mxu0
        %v5701 = vadd.f32 %v5659, %v5700
        %5702 = vdwg.mxu0
        %5703 = vmatpush.msra.mxu0 0.0
        %5704 = vmatpush.msra.mxu0 0.0
        %5705 = vmatpush.msra.mxu0 0.0
        %5706 = vmatpush.msra.mxu0 0.0
        %5707 = vmatpush.msra.mxu0 0.0
        %5708 = vmatpush.msra.mxu0 0.0
        %5709 = vmatpush.msra.mxu0 0.0
        %5710 = vmatpush.msra.mxu0 0.0
        %5711 = vmatpush.msra.mxu0 0.0
        %5712 = vmatpush.msra.mxu0 0.0
        %5713 = vmatpush.msra.mxu0 0.0
        %5714 = vmatpush.msra.mxu0 0.0
        %5715 = vmatpush.msra.mxu0 0.0
        %5716 = vmatpush.msra.mxu0 0.0
        %5717 = vmatpush.msra.mxu0 0.0
        %v5718 = vand.u32 %v5051, 4294901760
        %v5719 = vsub.f32 %v5051, %v5718
        %v5720 = vand.u32 %v5719, 4294901760
        %5721 = vmatpush.msra.mxu0 %v5720
        %v5722 = vand.u32 %v5033, 4294901760
        %5723 = vmatmul.f32.gmra.mxu0 %v5722
        %v5724 = vpop.f32.mrf.mxu0
        %v5725 = vadd.f32 %v5683, %v5724
        %v5726 = vand.u32 %v5036, 4294901760
        %5727 = vmatmul.f32.gmra.mxu0 %v5726
        %v5728 = vpop.f32.mrf.mxu0
        %v5729 = vadd.f32 %v5689, %v5728
        %v5730 = vand.u32 %v5039, 4294901760
        %5731 = vmatmul.f32.gmra.mxu0 %v5730
        %v5732 = vpop.f32.mrf.mxu0
        %v5733 = vadd.f32 %v5695, %v5732
        %v5734 = vand.u32 %v5042, 4294901760
        %5735 = vmatmul.f32.gmra.mxu0 %v5734
        %v5736 = vpop.f32.mrf.mxu0
        %v5737 = vadd.f32 %v5701, %v5736
        %5738 = vdwg.mxu0
        %5739 = vmatpush.msra.mxu0 0.0
        %5740 = vmatpush.msra.mxu0 0.0
        %5741 = vmatpush.msra.mxu0 0.0
        %5742 = vmatpush.msra.mxu0 0.0
        %5743 = vmatpush.msra.mxu0 0.0
        %5744 = vmatpush.msra.mxu0 0.0
        %5745 = vmatpush.msra.mxu0 0.0
        %5746 = vmatpush.msra.mxu0 0.0
        %5747 = vmatpush.msra.mxu0 0.0
        %5748 = vmatpush.msra.mxu0 0.0
        %5749 = vmatpush.msra.mxu0 0.0
        %5750 = vmatpush.msra.mxu0 0.0
        %5751 = vmatpush.msra.mxu0 0.0
        %5752 = vmatpush.msra.mxu0 0.0
        %5753 = vmatpush.msra.mxu0 0.0
        %v5754 = vand.u32 %v5051, 4294901760
        %5755 = vmatpush.msra.mxu0 %v5754
        %v5756 = vand.u32 %v5033, 4294901760
        %5757 = vmatmul.f32.gmra.mxu0 %v5756
        %v5758 = vpop.f32.mrf.mxu0
        %v5759 = vadd.f32 %v5725, %v5758
        %v5760 = vand.u32 %v5036, 4294901760
        %5761 = vmatmul.f32.gmra.mxu0 %v5760
        %v5762 = vpop.f32.mrf.mxu0
        %v5763 = vadd.f32 %v5729, %v5762
        %v5764 = vand.u32 %v5039, 4294901760
        %5765 = vmatmul.f32.gmra.mxu0 %v5764
        %v5766 = vpop.f32.mrf.mxu0
        %v5767 = vadd.f32 %v5733, %v5766
        %v5768 = vand.u32 %v5042, 4294901760
        %5769 = vmatmul.f32.gmra.mxu0 %v5768
        %v5770 = vpop.f32.mrf.mxu0
        %v5771 = vadd.f32 %v5737, %v5770
        %5772 = vdwg.mxu0
        %5773 = vmatpush.msra.mxu0 0.0
        %5774 = vmatpush.msra.mxu0 0.0
        %5775 = vmatpush.msra.mxu0 0.0
        %5776 = vmatpush.msra.mxu0 0.0
        %5777 = vmatpush.msra.mxu0 0.0
        %5778 = vmatpush.msra.mxu0 0.0
        %5779 = vmatpush.msra.mxu0 0.0
        %5780 = vmatpush.msra.mxu0 0.0
        %5781 = vmatpush.msra.mxu0 0.0
        %5782 = vmatpush.msra.mxu0 0.0
        %5783 = vmatpush.msra.mxu0 0.0
        %5784 = vmatpush.msra.mxu0 0.0
        %5785 = vmatpush.msra.mxu0 0.0
        %5786 = vmatpush.msra.mxu0 0.0
        %5787 = vmatpush.msra.mxu0 0.0
        %v5788 = vand.u32 %v5054, 4294901760
        %5789 = vmatpush.msra.mxu0 %v5788
        %v5790 = vand.u32 %v5033, 4294901760
        %v5791 = vsub.f32 %v5033, %v5790
        %v5792 = vand.u32 %v5791, 4294901760
        %v5793 = vsub.f32 %v5791, %v5792
        %v5794 = vand.u32 %v5793, 4294901760
        %5795 = vmatmul.f32.gmra.mxu0 %v5794
        %v5796 = vpop.f32.mrf.mxu0
        %v5797 = vadd.f32 0.0, %v5796
        %v5798 = vand.u32 %v5036, 4294901760
        %v5799 = vsub.f32 %v5036, %v5798
        %v5800 = vand.u32 %v5799, 4294901760
        %v5801 = vsub.f32 %v5799, %v5800
        %v5802 = vand.u32 %v5801, 4294901760
        %5803 = vmatmul.f32.gmra.mxu0 %v5802
        %v5804 = vpop.f32.mrf.mxu0
        %v5805 = vadd.f32 0.0, %v5804
        %v5806 = vand.u32 %v5039, 4294901760
        %v5807 = vsub.f32 %v5039, %v5806
        %v5808 = vand.u32 %v5807, 4294901760
        %v5809 = vsub.f32 %v5807, %v5808
        %v5810 = vand.u32 %v5809, 4294901760
        %5811 = vmatmul.f32.gmra.mxu0 %v5810
        %v5812 = vpop.f32.mrf.mxu0
        %v5813 = vadd.f32 0.0, %v5812
        %v5814 = vand.u32 %v5042, 4294901760
        %v5815 = vsub.f32 %v5042, %v5814
        %v5816 = vand.u32 %v5815, 4294901760
        %v5817 = vsub.f32 %v5815, %v5816
        %v5818 = vand.u32 %v5817, 4294901760
        %5819 = vmatmul.f32.gmra.mxu0 %v5818
        %v5820 = vpop.f32.mrf.mxu0
        %v5821 = vadd.f32 0.0, %v5820
        %5822 = vdwg.mxu0
        %5823 = vmatpush.msra.mxu0 0.0
        %5824 = vmatpush.msra.mxu0 0.0
        %5825 = vmatpush.msra.mxu0 0.0
        %5826 = vmatpush.msra.mxu0 0.0
        %5827 = vmatpush.msra.mxu0 0.0
        %5828 = vmatpush.msra.mxu0 0.0
        %5829 = vmatpush.msra.mxu0 0.0
        %5830 = vmatpush.msra.mxu0 0.0
        %5831 = vmatpush.msra.mxu0 0.0
        %5832 = vmatpush.msra.mxu0 0.0
        %5833 = vmatpush.msra.mxu0 0.0
        %5834 = vmatpush.msra.mxu0 0.0
        %5835 = vmatpush.msra.mxu0 0.0
        %5836 = vmatpush.msra.mxu0 0.0
        %5837 = vmatpush.msra.mxu0 0.0
        %v5838 = vand.u32 %v5054, 4294901760
        %v5839 = vsub.f32 %v5054, %v5838
        %v5840 = vand.u32 %v5839, 4294901760
        %v5841 = vsub.f32 %v5839, %v5840
        %v5842 = vand.u32 %v5841, 4294901760
        %5843 = vmatpush.msra.mxu0 %v5842
        %v5844 = vand.u32 %v5033, 4294901760
        %5845 = vmatmul.f32.gmra.mxu0 %v5844
        %v5846 = vpop.f32.mrf.mxu0
        %v5847 = vadd.f32 %v5797, %v5846
        %v5848 = vand.u32 %v5036, 4294901760
        %5849 = vmatmul.f32.gmra.mxu0 %v5848
        %v5850 = vpop.f32.mrf.mxu0
        %v5851 = vadd.f32 %v5805, %v5850
        %v5852 = vand.u32 %v5039, 4294901760
        %5853 = vmatmul.f32.gmra.mxu0 %v5852
        %v5854 = vpop.f32.mrf.mxu0
        %v5855 = vadd.f32 %v5813, %v5854
        %v5856 = vand.u32 %v5042, 4294901760
        %5857 = vmatmul.f32.gmra.mxu0 %v5856
        %v5858 = vpop.f32.mrf.mxu0
        %v5859 = vadd.f32 %v5821, %v5858
        %5860 = vdwg.mxu0
        %5861 = vmatpush.msra.mxu0 0.0
        %5862 = vmatpush.msra.mxu0 0.0
        %5863 = vmatpush.msra.mxu0 0.0
        %5864 = vmatpush.msra.mxu0 0.0
        %5865 = vmatpush.msra.mxu0 0.0
        %5866 = vmatpush.msra.mxu0 0.0
        %5867 = vmatpush.msra.mxu0 0.0
        %5868 = vmatpush.msra.mxu0 0.0
        %5869 = vmatpush.msra.mxu0 0.0
        %5870 = vmatpush.msra.mxu0 0.0
        %5871 = vmatpush.msra.mxu0 0.0
        %5872 = vmatpush.msra.mxu0 0.0
        %5873 = vmatpush.msra.mxu0 0.0
        %5874 = vmatpush.msra.mxu0 0.0
        %5875 = vmatpush.msra.mxu0 0.0
        %v5876 = vand.u32 %v5054, 4294901760
        %v5877 = vsub.f32 %v5054, %v5876
        %5878 = vmatpush.msra.mxu0 %v5877
        %v5879 = vand.u32 %v5033, 4294901760
        %v5880 = vsub.f32 %v5033, %v5879
        %5881 = vmatmul.f32.gmra.mxu0 %v5880
        %v5882 = vpop.f32.mrf.mxu0
        %v5883 = vadd.f32 %v5847, %v5882
        %v5884 = vand.u32 %v5036, 4294901760
        %v5885 = vsub.f32 %v5036, %v5884
        %5886 = vmatmul.f32.gmra.mxu0 %v5885
        %v5887 = vpop.f32.mrf.mxu0
        %v5888 = vadd.f32 %v5851, %v5887
        %v5889 = vand.u32 %v5039, 4294901760
        %v5890 = vsub.f32 %v5039, %v5889
        %5891 = vmatmul.f32.gmra.mxu0 %v5890
        %v5892 = vpop.f32.mrf.mxu0
        %v5893 = vadd.f32 %v5855, %v5892
        %v5894 = vand.u32 %v5042, 4294901760
        %v5895 = vsub.f32 %v5042, %v5894
        %5896 = vmatmul.f32.gmra.mxu0 %v5895
        %v5897 = vpop.f32.mrf.mxu0
        %v5898 = vadd.f32 %v5859, %v5897
        %5899 = vdwg.mxu0
        %5900 = vmatpush.msra.mxu0 0.0
        %5901 = vmatpush.msra.mxu0 0.0
        %5902 = vmatpush.msra.mxu0 0.0
        %5903 = vmatpush.msra.mxu0 0.0
        %5904 = vmatpush.msra.mxu0 0.0
        %5905 = vmatpush.msra.mxu0 0.0
        %5906 = vmatpush.msra.mxu0 0.0
        %5907 = vmatpush.msra.mxu0 0.0
        %5908 = vmatpush.msra.mxu0 0.0
        %5909 = vmatpush.msra.mxu0 0.0
        %5910 = vmatpush.msra.mxu0 0.0
        %5911 = vmatpush.msra.mxu0 0.0
        %5912 = vmatpush.msra.mxu0 0.0
        %5913 = vmatpush.msra.mxu0 0.0
        %5914 = vmatpush.msra.mxu0 0.0
        %v5915 = vand.u32 %v5054, 4294901760
        %5916 = vmatpush.msra.mxu0 %v5915
        %v5917 = vand.u32 %v5033, 4294901760
        %v5918 = vsub.f32 %v5033, %v5917
        %v5919 = vand.u32 %v5918, 4294901760
        %5920 = vmatmul.f32.gmra.mxu0 %v5919
        %v5921 = vpop.f32.mrf.mxu0
        %v5922 = vadd.f32 %v5883, %v5921
        %v5923 = vand.u32 %v5036, 4294901760
        %v5924 = vsub.f32 %v5036, %v5923
        %v5925 = vand.u32 %v5924, 4294901760
        %5926 = vmatmul.f32.gmra.mxu0 %v5925
        %v5927 = vpop.f32.mrf.mxu0
        %v5928 = vadd.f32 %v5888, %v5927
        %v5929 = vand.u32 %v5039, 4294901760
        %v5930 = vsub.f32 %v5039, %v5929
        %v5931 = vand.u32 %v5930, 4294901760
        %5932 = vmatmul.f32.gmra.mxu0 %v5931
        %v5933 = vpop.f32.mrf.mxu0
        %v5934 = vadd.f32 %v5893, %v5933
        %v5935 = vand.u32 %v5042, 4294901760
        %v5936 = vsub.f32 %v5042, %v5935
        %v5937 = vand.u32 %v5936, 4294901760
        %5938 = vmatmul.f32.gmra.mxu0 %v5937
        %v5939 = vpop.f32.mrf.mxu0
        %v5940 = vadd.f32 %v5898, %v5939
        %5941 = vdwg.mxu0
        %5942 = vmatpush.msra.mxu0 0.0
        %5943 = vmatpush.msra.mxu0 0.0
        %5944 = vmatpush.msra.mxu0 0.0
        %5945 = vmatpush.msra.mxu0 0.0
        %5946 = vmatpush.msra.mxu0 0.0
        %5947 = vmatpush.msra.mxu0 0.0
        %5948 = vmatpush.msra.mxu0 0.0
        %5949 = vmatpush.msra.mxu0 0.0
        %5950 = vmatpush.msra.mxu0 0.0
        %5951 = vmatpush.msra.mxu0 0.0
        %5952 = vmatpush.msra.mxu0 0.0
        %5953 = vmatpush.msra.mxu0 0.0
        %5954 = vmatpush.msra.mxu0 0.0
        %5955 = vmatpush.msra.mxu0 0.0
        %5956 = vmatpush.msra.mxu0 0.0
        %v5957 = vand.u32 %v5054, 4294901760
        %v5958 = vsub.f32 %v5054, %v5957
        %v5959 = vand.u32 %v5958, 4294901760
        %5960 = vmatpush.msra.mxu0 %v5959
        %v5961 = vand.u32 %v5033, 4294901760
        %5962 = vmatmul.f32.gmra.mxu0 %v5961
        %v5963 = vpop.f32.mrf.mxu0
        %v5964 = vadd.f32 %v5922, %v5963
        %v5965 = vand.u32 %v5036, 4294901760
        %5966 = vmatmul.f32.gmra.mxu0 %v5965
        %v5967 = vpop.f32.mrf.mxu0
        %v5968 = vadd.f32 %v5928, %v5967
        %v5969 = vand.u32 %v5039, 4294901760
        %5970 = vmatmul.f32.gmra.mxu0 %v5969
        %v5971 = vpop.f32.mrf.mxu0
        %v5972 = vadd.f32 %v5934, %v5971
        %v5973 = vand.u32 %v5042, 4294901760
        %5974 = vmatmul.f32.gmra.mxu0 %v5973
        %v5975 = vpop.f32.mrf.mxu0
        %v5976 = vadd.f32 %v5940, %v5975
        %5977 = vdwg.mxu0
        %5978 = vmatpush.msra.mxu0 0.0
        %5979 = vmatpush.msra.mxu0 0.0
        %5980 = vmatpush.msra.mxu0 0.0
        %5981 = vmatpush.msra.mxu0 0.0
        %5982 = vmatpush.msra.mxu0 0.0
        %5983 = vmatpush.msra.mxu0 0.0
        %5984 = vmatpush.msra.mxu0 0.0
        %5985 = vmatpush.msra.mxu0 0.0
        %5986 = vmatpush.msra.mxu0 0.0
        %5987 = vmatpush.msra.mxu0 0.0
        %5988 = vmatpush.msra.mxu0 0.0
        %5989 = vmatpush.msra.mxu0 0.0
        %5990 = vmatpush.msra.mxu0 0.0
        %5991 = vmatpush.msra.mxu0 0.0
        %5992 = vmatpush.msra.mxu0 0.0
        %v5993 = vand.u32 %v5054, 4294901760
        %5994 = vmatpush.msra.mxu0 %v5993
        %v5995 = vand.u32 %v5033, 4294901760
        %5996 = vmatmul.f32.gmra.mxu0 %v5995
        %v5997 = vpop.f32.mrf.mxu0
        %v5998 = vadd.f32 %v5964, %v5997
        %v5999 = vand.u32 %v5036, 4294901760
        %6000 = vmatmul.f32.gmra.mxu0 %v5999
        %v6001 = vpop.f32.mrf.mxu0
        %v6002 = vadd.f32 %v5968, %v6001
        %v6003 = vand.u32 %v5039, 4294901760
        %6004 = vmatmul.f32.gmra.mxu0 %v6003
        %v6005 = vpop.f32.mrf.mxu0
        %v6006 = vadd.f32 %v5972, %v6005
        %v6007 = vand.u32 %v5042, 4294901760
        %6008 = vmatmul.f32.gmra.mxu0 %v6007
        %v6009 = vpop.f32.mrf.mxu0
        %v6010 = vadd.f32 %v5976, %v6009
        %6011 = vdwg.mxu0
        %v6012 = vadd.f32 %v836, %v5281
        %v6013 = vadd.f32 %v1283, %v5520
        %v6014 = vadd.f32 %v1730, %v5759
        %v6015 = vadd.f32 %v2177, %v5998
        %v6016 = vadd.f32 %v840, %v5285
        %v6017 = vadd.f32 %v1287, %v5524
        %v6018 = vadd.f32 %v1734, %v5763
        %v6019 = vadd.f32 %v2181, %v6002
        %v6020 = vadd.f32 %v844, %v5289
        %v6021 = vadd.f32 %v1291, %v5528
        %v6022 = vadd.f32 %v1738, %v5767
        %v6023 = vadd.f32 %v2185, %v6006
        %v6024 = vadd.f32 %v848, %v5293
        %v6025 = vadd.f32 %v1295, %v5532
        %v6026 = vadd.f32 %v1742, %v5771
        %v6027 = vadd.f32 %v2189, %v6010
        %v6028 = vld [vmem:[%s3 + $0x30] sm:$0xff]
        %v6029 = vld [vmem:[%s3 + $0x38] sm:$0xff]
        %v6030 = vld [vmem:[%s3 + $0x40] sm:$0xff]
        %v6031 = vld [vmem:[%s3 + $0x48] sm:$0xff]
        %6033 = vset.pattern.permute.xlu0 0
        %6034 = vperm.xlu0 %6033, %v6028
        %v6035 = vpop.permute.xlu0 %6034
        %6038 = vset.pattern.permute.xlu0 0
        %6039 = vperm.xlu0 %6038, %v6029
        %v6040 = vpop.permute.xlu0 %6039
        %6043 = vset.pattern.permute.xlu0 0
        %6044 = vperm.xlu0 %6043, %v6030
        %v6045 = vpop.permute.xlu0 %6044
        %6048 = vset.pattern.permute.xlu0 0
        %6049 = vperm.xlu0 %6048, %v6031
        %v6050 = vpop.permute.xlu0 %6049
        %v6052 = vadd.f32 %v6012, %v6035
        %v6053 = vadd.f32 %v6013, %v6035
        %v6054 = vadd.f32 %v6014, %v6035
        %v6055 = vadd.f32 %v6015, %v6035
        %v6056 = vadd.f32 %v6016, %v6040
        %v6057 = vadd.f32 %v6017, %v6040
        %v6058 = vadd.f32 %v6018, %v6040
        %v6059 = vadd.f32 %v6019, %v6040
        %v6060 = vadd.f32 %v6020, %v6045
        %v6061 = vadd.f32 %v6021, %v6045
        %v6062 = vadd.f32 %v6022, %v6045
        %v6063 = vadd.f32 %v6023, %v6045
        %v6064 = vadd.f32 %v6024, %v6050
        %v6065 = vadd.f32 %v6025, %v6050
        %v6066 = vadd.f32 %v6026, %v6050
        %v6067 = vadd.f32 %v6027, %v6050
        %v6068 = vmax.f32 %v6052, 0.0
        %v6069 = vmax.f32 %v6053, 0.0
        %v6070 = vmax.f32 %v6054, 0.0
        %v6071 = vmax.f32 %v6055, 0.0
        %v6072 = vmax.f32 %v6056, 0.0
        %v6073 = vmax.f32 %v6057, 0.0
        %v6074 = vmax.f32 %v6058, 0.0
        %v6075 = vmax.f32 %v6059, 0.0
        %v6076 = vmax.f32 %v6060, 0.0
        %v6077 = vmax.f32 %v6061, 0.0
        %v6078 = vmax.f32 %v6062, 0.0
        %v6079 = vmax.f32 %v6063, 0.0
        %v6080 = vmax.f32 %v6064, 0.0
        %v6081 = vmax.f32 %v6065, 0.0
        %v6082 = vmax.f32 %v6066, 0.0
        %v6083 = vmax.f32 %v6067, 0.0
        %v6084 = vld [vmem:[%s2 + $0xa0] sm:$0x7]
        %v6085 = vld [vmem:[%s3 + $0x50] sm:$0x7]
        %6087 = vset.pattern.permute.xlu0 0
        %6088 = vperm.xlu0 %6087, %v6085
        %v6089 = vpop.permute.xlu0 %6088
        %v6092 = vsel %vm4166, %v6084, 0
        %6094 = vmatpush.msra.mxu0 0.0
        %6095 = vmatpush.msra.mxu0 0.0
        %6096 = vmatpush.msra.mxu0 0.0
        %6097 = vmatpush.msra.mxu0 0.0
        %6098 = vmatpush.msra.mxu0 0.0
        %6099 = vmatpush.msra.mxu0 0.0
        %6100 = vmatpush.msra.mxu0 0.0
        %6101 = vmatpush.msra.mxu0 0.0
        %6102 = vmatpush.msra.mxu0 0.0
        %6103 = vmatpush.msra.mxu0 0.0
        %6104 = vmatpush.msra.mxu0 0.0
        %6105 = vmatpush.msra.mxu0 0.0
        %v6106 = vand.u32 %v6080, 4294901760
        %6107 = vmatpush.msra.mxu0 %v6106
        %v6108 = vand.u32 %v6076, 4294901760
        %6109 = vmatpush.msra.mxu0 %v6108
        %v6110 = vand.u32 %v6072, 4294901760
        %6111 = vmatpush.msra.mxu0 %v6110
        %v6112 = vand.u32 %v6068, 4294901760
        %6113 = vmatpush.msra.mxu0 %v6112
        %v6114 = vand.u32 %v6092, 4294901760
        %v6115 = vsub.f32 %v6092, %v6114
        %v6116 = vand.u32 %v6115, 4294901760
        %v6117 = vsub.f32 %v6115, %v6116
        %v6118 = vand.u32 %v6117, 4294901760
        %6119 = vmatmul.f32.gmra.mxu0 %v6118
        %v6120 = vpop.f32.mrf.mxu0
        %v6121 = vadd.f32 %v6089, %v6120
        %6122 = vdwg.mxu0
        %6123 = vmatpush.msra.mxu0 0.0
        %6124 = vmatpush.msra.mxu0 0.0
        %6125 = vmatpush.msra.mxu0 0.0
        %6126 = vmatpush.msra.mxu0 0.0
        %6127 = vmatpush.msra.mxu0 0.0
        %6128 = vmatpush.msra.mxu0 0.0
        %6129 = vmatpush.msra.mxu0 0.0
        %6130 = vmatpush.msra.mxu0 0.0
        %6131 = vmatpush.msra.mxu0 0.0
        %6132 = vmatpush.msra.mxu0 0.0
        %6133 = vmatpush.msra.mxu0 0.0
        %6134 = vmatpush.msra.mxu0 0.0
        %v6135 = vand.u32 %v6080, 4294901760
        %v6136 = vsub.f32 %v6080, %v6135
        %v6137 = vand.u32 %v6136, 4294901760
        %v6138 = vsub.f32 %v6136, %v6137
        %v6139 = vand.u32 %v6138, 4294901760
        %6140 = vmatpush.msra.mxu0 %v6139
        %v6141 = vand.u32 %v6076, 4294901760
        %v6142 = vsub.f32 %v6076, %v6141
        %v6143 = vand.u32 %v6142, 4294901760
        %v6144 = vsub.f32 %v6142, %v6143
        %v6145 = vand.u32 %v6144, 4294901760
        %6146 = vmatpush.msra.mxu0 %v6145
        %v6147 = vand.u32 %v6072, 4294901760
        %v6148 = vsub.f32 %v6072, %v6147
        %v6149 = vand.u32 %v6148, 4294901760
        %v6150 = vsub.f32 %v6148, %v6149
        %v6151 = vand.u32 %v6150, 4294901760
        %6152 = vmatpush.msra.mxu0 %v6151
        %v6153 = vand.u32 %v6068, 4294901760
        %v6154 = vsub.f32 %v6068, %v6153
        %v6155 = vand.u32 %v6154, 4294901760
        %v6156 = vsub.f32 %v6154, %v6155
        %v6157 = vand.u32 %v6156, 4294901760
        %6158 = vmatpush.msra.mxu0 %v6157
        %v6159 = vand.u32 %v6092, 4294901760
        %6160 = vmatmul.f32.gmra.mxu0 %v6159
        %v6161 = vpop.f32.mrf.mxu0
        %v6162 = vadd.f32 %v6121, %v6161
        %6163 = vdwg.mxu0
        %6164 = vmatpush.msra.mxu0 0.0
        %6165 = vmatpush.msra.mxu0 0.0
        %6166 = vmatpush.msra.mxu0 0.0
        %6167 = vmatpush.msra.mxu0 0.0
        %6168 = vmatpush.msra.mxu0 0.0
        %6169 = vmatpush.msra.mxu0 0.0
        %6170 = vmatpush.msra.mxu0 0.0
        %6171 = vmatpush.msra.mxu0 0.0
        %6172 = vmatpush.msra.mxu0 0.0
        %6173 = vmatpush.msra.mxu0 0.0
        %6174 = vmatpush.msra.mxu0 0.0
        %6175 = vmatpush.msra.mxu0 0.0
        %v6176 = vand.u32 %v6080, 4294901760
        %v6177 = vsub.f32 %v6080, %v6176
        %6178 = vmatpush.msra.mxu0 %v6177
        %v6179 = vand.u32 %v6076, 4294901760
        %v6180 = vsub.f32 %v6076, %v6179
        %6181 = vmatpush.msra.mxu0 %v6180
        %v6182 = vand.u32 %v6072, 4294901760
        %v6183 = vsub.f32 %v6072, %v6182
        %6184 = vmatpush.msra.mxu0 %v6183
        %v6185 = vand.u32 %v6068, 4294901760
        %v6186 = vsub.f32 %v6068, %v6185
        %6187 = vmatpush.msra.mxu0 %v6186
        %v6188 = vand.u32 %v6092, 4294901760
        %v6189 = vsub.f32 %v6092, %v6188
        %6190 = vmatmul.f32.gmra.mxu0 %v6189
        %v6191 = vpop.f32.mrf.mxu0
        %v6192 = vadd.f32 %v6162, %v6191
        %6193 = vdwg.mxu0
        %6194 = vmatpush.msra.mxu0 0.0
        %6195 = vmatpush.msra.mxu0 0.0
        %6196 = vmatpush.msra.mxu0 0.0
        %6197 = vmatpush.msra.mxu0 0.0
        %6198 = vmatpush.msra.mxu0 0.0
        %6199 = vmatpush.msra.mxu0 0.0
        %6200 = vmatpush.msra.mxu0 0.0
        %6201 = vmatpush.msra.mxu0 0.0
        %6202 = vmatpush.msra.mxu0 0.0
        %6203 = vmatpush.msra.mxu0 0.0
        %6204 = vmatpush.msra.mxu0 0.0
        %6205 = vmatpush.msra.mxu0 0.0
        %v6206 = vand.u32 %v6080, 4294901760
        %6207 = vmatpush.msra.mxu0 %v6206
        %v6208 = vand.u32 %v6076, 4294901760
        %6209 = vmatpush.msra.mxu0 %v6208
        %v6210 = vand.u32 %v6072, 4294901760
        %6211 = vmatpush.msra.mxu0 %v6210
        %v6212 = vand.u32 %v6068, 4294901760
        %6213 = vmatpush.msra.mxu0 %v6212
        %v6214 = vand.u32 %v6092, 4294901760
        %v6215 = vsub.f32 %v6092, %v6214
        %v6216 = vand.u32 %v6215, 4294901760
        %6217 = vmatmul.f32.gmra.mxu0 %v6216
        %v6218 = vpop.f32.mrf.mxu0
        %v6219 = vadd.f32 %v6192, %v6218
        %6220 = vdwg.mxu0
        %6221 = vmatpush.msra.mxu0 0.0
        %6222 = vmatpush.msra.mxu0 0.0
        %6223 = vmatpush.msra.mxu0 0.0
        %6224 = vmatpush.msra.mxu0 0.0
        %6225 = vmatpush.msra.mxu0 0.0
        %6226 = vmatpush.msra.mxu0 0.0
        %6227 = vmatpush.msra.mxu0 0.0
        %6228 = vmatpush.msra.mxu0 0.0
        %6229 = vmatpush.msra.mxu0 0.0
        %6230 = vmatpush.msra.mxu0 0.0
        %6231 = vmatpush.msra.mxu0 0.0
        %6232 = vmatpush.msra.mxu0 0.0
        %v6233 = vand.u32 %v6080, 4294901760
        %v6234 = vsub.f32 %v6080, %v6233
        %v6235 = vand.u32 %v6234, 4294901760
        %6236 = vmatpush.msra.mxu0 %v6235
        %v6237 = vand.u32 %v6076, 4294901760
        %v6238 = vsub.f32 %v6076, %v6237
        %v6239 = vand.u32 %v6238, 4294901760
        %6240 = vmatpush.msra.mxu0 %v6239
        %v6241 = vand.u32 %v6072, 4294901760
        %v6242 = vsub.f32 %v6072, %v6241
        %v6243 = vand.u32 %v6242, 4294901760
        %6244 = vmatpush.msra.mxu0 %v6243
        %v6245 = vand.u32 %v6068, 4294901760
        %v6246 = vsub.f32 %v6068, %v6245
        %v6247 = vand.u32 %v6246, 4294901760
        %6248 = vmatpush.msra.mxu0 %v6247
        %v6249 = vand.u32 %v6092, 4294901760
        %6250 = vmatmul.f32.gmra.mxu0 %v6249
        %v6251 = vpop.f32.mrf.mxu0
        %v6252 = vadd.f32 %v6219, %v6251
        %6253 = vdwg.mxu0
        %6254 = vmatpush.msra.mxu0 0.0
        %6255 = vmatpush.msra.mxu0 0.0
        %6256 = vmatpush.msra.mxu0 0.0
        %6257 = vmatpush.msra.mxu0 0.0
        %6258 = vmatpush.msra.mxu0 0.0
        %6259 = vmatpush.msra.mxu0 0.0
        %6260 = vmatpush.msra.mxu0 0.0
        %6261 = vmatpush.msra.mxu0 0.0
        %6262 = vmatpush.msra.mxu0 0.0
        %6263 = vmatpush.msra.mxu0 0.0
        %6264 = vmatpush.msra.mxu0 0.0
        %6265 = vmatpush.msra.mxu0 0.0
        %v6266 = vand.u32 %v6080, 4294901760
        %6267 = vmatpush.msra.mxu0 %v6266
        %v6268 = vand.u32 %v6076, 4294901760
        %6269 = vmatpush.msra.mxu0 %v6268
        %v6270 = vand.u32 %v6072, 4294901760
        %6271 = vmatpush.msra.mxu0 %v6270
        %v6272 = vand.u32 %v6068, 4294901760
        %6273 = vmatpush.msra.mxu0 %v6272
        %v6274 = vand.u32 %v6092, 4294901760
        %6275 = vmatmul.f32.gmra.mxu0 %v6274
        %v6276 = vpop.f32.mrf.mxu0
        %v6277 = vadd.f32 %v6252, %v6276
        %6278 = vdwg.mxu0
        %6279 = vmatpush.msra.mxu0 0.0
        %6280 = vmatpush.msra.mxu0 0.0
        %6281 = vmatpush.msra.mxu0 0.0
        %6282 = vmatpush.msra.mxu0 0.0
        %6283 = vmatpush.msra.mxu0 0.0
        %6284 = vmatpush.msra.mxu0 0.0
        %6285 = vmatpush.msra.mxu0 0.0
        %6286 = vmatpush.msra.mxu0 0.0
        %6287 = vmatpush.msra.mxu0 0.0
        %6288 = vmatpush.msra.mxu0 0.0
        %6289 = vmatpush.msra.mxu0 0.0
        %6290 = vmatpush.msra.mxu0 0.0
        %v6291 = vand.u32 %v6081, 4294901760
        %6292 = vmatpush.msra.mxu0 %v6291
        %v6293 = vand.u32 %v6077, 4294901760
        %6294 = vmatpush.msra.mxu0 %v6293
        %v6295 = vand.u32 %v6073, 4294901760
        %6296 = vmatpush.msra.mxu0 %v6295
        %v6297 = vand.u32 %v6069, 4294901760
        %6298 = vmatpush.msra.mxu0 %v6297
        %v6299 = vand.u32 %v6092, 4294901760
        %v6300 = vsub.f32 %v6092, %v6299
        %v6301 = vand.u32 %v6300, 4294901760
        %v6302 = vsub.f32 %v6300, %v6301
        %v6303 = vand.u32 %v6302, 4294901760
        %6304 = vmatmul.f32.gmra.mxu0 %v6303
        %v6305 = vpop.f32.mrf.mxu0
        %v6306 = vadd.f32 %v6089, %v6305
        %6307 = vdwg.mxu0
        %6308 = vmatpush.msra.mxu0 0.0
        %6309 = vmatpush.msra.mxu0 0.0
        %6310 = vmatpush.msra.mxu0 0.0
        %6311 = vmatpush.msra.mxu0 0.0
        %6312 = vmatpush.msra.mxu0 0.0
        %6313 = vmatpush.msra.mxu0 0.0
        %6314 = vmatpush.msra.mxu0 0.0
        %6315 = vmatpush.msra.mxu0 0.0
        %6316 = vmatpush.msra.mxu0 0.0
        %6317 = vmatpush.msra.mxu0 0.0
        %6318 = vmatpush.msra.mxu0 0.0
        %6319 = vmatpush.msra.mxu0 0.0
        %v6320 = vand.u32 %v6081, 4294901760
        %v6321 = vsub.f32 %v6081, %v6320
        %v6322 = vand.u32 %v6321, 4294901760
        %v6323 = vsub.f32 %v6321, %v6322
        %v6324 = vand.u32 %v6323, 4294901760
        %6325 = vmatpush.msra.mxu0 %v6324
        %v6326 = vand.u32 %v6077, 4294901760
        %v6327 = vsub.f32 %v6077, %v6326
        %v6328 = vand.u32 %v6327, 4294901760
        %v6329 = vsub.f32 %v6327, %v6328
        %v6330 = vand.u32 %v6329, 4294901760
        %6331 = vmatpush.msra.mxu0 %v6330
        %v6332 = vand.u32 %v6073, 4294901760
        %v6333 = vsub.f32 %v6073, %v6332
        %v6334 = vand.u32 %v6333, 4294901760
        %v6335 = vsub.f32 %v6333, %v6334
        %v6336 = vand.u32 %v6335, 4294901760
        %6337 = vmatpush.msra.mxu0 %v6336
        %v6338 = vand.u32 %v6069, 4294901760
        %v6339 = vsub.f32 %v6069, %v6338
        %v6340 = vand.u32 %v6339, 4294901760
        %v6341 = vsub.f32 %v6339, %v6340
        %v6342 = vand.u32 %v6341, 4294901760
        %6343 = vmatpush.msra.mxu0 %v6342
        %v6344 = vand.u32 %v6092, 4294901760
        %6345 = vmatmul.f32.gmra.mxu0 %v6344
        %v6346 = vpop.f32.mrf.mxu0
        %v6347 = vadd.f32 %v6306, %v6346
        %6348 = vdwg.mxu0
        %6349 = vmatpush.msra.mxu0 0.0
        %6350 = vmatpush.msra.mxu0 0.0
        %6351 = vmatpush.msra.mxu0 0.0
        %6352 = vmatpush.msra.mxu0 0.0
        %6353 = vmatpush.msra.mxu0 0.0
        %6354 = vmatpush.msra.mxu0 0.0
        %6355 = vmatpush.msra.mxu0 0.0
        %6356 = vmatpush.msra.mxu0 0.0
        %6357 = vmatpush.msra.mxu0 0.0
        %6358 = vmatpush.msra.mxu0 0.0
        %6359 = vmatpush.msra.mxu0 0.0
        %6360 = vmatpush.msra.mxu0 0.0
        %v6361 = vand.u32 %v6081, 4294901760
        %v6362 = vsub.f32 %v6081, %v6361
        %6363 = vmatpush.msra.mxu0 %v6362
        %v6364 = vand.u32 %v6077, 4294901760
        %v6365 = vsub.f32 %v6077, %v6364
        %6366 = vmatpush.msra.mxu0 %v6365
        %v6367 = vand.u32 %v6073, 4294901760
        %v6368 = vsub.f32 %v6073, %v6367
        %6369 = vmatpush.msra.mxu0 %v6368
        %v6370 = vand.u32 %v6069, 4294901760
        %v6371 = vsub.f32 %v6069, %v6370
        %6372 = vmatpush.msra.mxu0 %v6371
        %v6373 = vand.u32 %v6092, 4294901760
        %v6374 = vsub.f32 %v6092, %v6373
        %6375 = vmatmul.f32.gmra.mxu0 %v6374
        %v6376 = vpop.f32.mrf.mxu0
        %v6377 = vadd.f32 %v6347, %v6376
        %6378 = vdwg.mxu0
        %6379 = vmatpush.msra.mxu0 0.0
        %6380 = vmatpush.msra.mxu0 0.0
        %6381 = vmatpush.msra.mxu0 0.0
        %6382 = vmatpush.msra.mxu0 0.0
        %6383 = vmatpush.msra.mxu0 0.0
        %6384 = vmatpush.msra.mxu0 0.0
        %6385 = vmatpush.msra.mxu0 0.0
        %6386 = vmatpush.msra.mxu0 0.0
        %6387 = vmatpush.msra.mxu0 0.0
        %6388 = vmatpush.msra.mxu0 0.0
        %6389 = vmatpush.msra.mxu0 0.0
        %6390 = vmatpush.msra.mxu0 0.0
        %v6391 = vand.u32 %v6081, 4294901760
        %6392 = vmatpush.msra.mxu0 %v6391
        %v6393 = vand.u32 %v6077, 4294901760
        %6394 = vmatpush.msra.mxu0 %v6393
        %v6395 = vand.u32 %v6073, 4294901760
        %6396 = vmatpush.msra.mxu0 %v6395
        %v6397 = vand.u32 %v6069, 4294901760
        %6398 = vmatpush.msra.mxu0 %v6397
        %v6399 = vand.u32 %v6092, 4294901760
        %v6400 = vsub.f32 %v6092, %v6399
        %v6401 = vand.u32 %v6400, 4294901760
        %6402 = vmatmul.f32.gmra.mxu0 %v6401
        %v6403 = vpop.f32.mrf.mxu0
        %v6404 = vadd.f32 %v6377, %v6403
        %6405 = vdwg.mxu0
        %6406 = vmatpush.msra.mxu0 0.0
        %6407 = vmatpush.msra.mxu0 0.0
        %6408 = vmatpush.msra.mxu0 0.0
        %6409 = vmatpush.msra.mxu0 0.0
        %6410 = vmatpush.msra.mxu0 0.0
        %6411 = vmatpush.msra.mxu0 0.0
        %6412 = vmatpush.msra.mxu0 0.0
        %6413 = vmatpush.msra.mxu0 0.0
        %6414 = vmatpush.msra.mxu0 0.0
        %6415 = vmatpush.msra.mxu0 0.0
        %6416 = vmatpush.msra.mxu0 0.0
        %6417 = vmatpush.msra.mxu0 0.0
        %v6418 = vand.u32 %v6081, 4294901760
        %v6419 = vsub.f32 %v6081, %v6418
        %v6420 = vand.u32 %v6419, 4294901760
        %6421 = vmatpush.msra.mxu0 %v6420
        %v6422 = vand.u32 %v6077, 4294901760
        %v6423 = vsub.f32 %v6077, %v6422
        %v6424 = vand.u32 %v6423, 4294901760
        %6425 = vmatpush.msra.mxu0 %v6424
        %v6426 = vand.u32 %v6073, 4294901760
        %v6427 = vsub.f32 %v6073, %v6426
        %v6428 = vand.u32 %v6427, 4294901760
        %6429 = vmatpush.msra.mxu0 %v6428
        %v6430 = vand.u32 %v6069, 4294901760
        %v6431 = vsub.f32 %v6069, %v6430
        %v6432 = vand.u32 %v6431, 4294901760
        %6433 = vmatpush.msra.mxu0 %v6432
        %v6434 = vand.u32 %v6092, 4294901760
        %6435 = vmatmul.f32.gmra.mxu0 %v6434
        %v6436 = vpop.f32.mrf.mxu0
        %v6437 = vadd.f32 %v6404, %v6436
        %6438 = vdwg.mxu0
        %6439 = vmatpush.msra.mxu0 0.0
        %6440 = vmatpush.msra.mxu0 0.0
        %6441 = vmatpush.msra.mxu0 0.0
        %6442 = vmatpush.msra.mxu0 0.0
        %6443 = vmatpush.msra.mxu0 0.0
        %6444 = vmatpush.msra.mxu0 0.0
        %6445 = vmatpush.msra.mxu0 0.0
        %6446 = vmatpush.msra.mxu0 0.0
        %6447 = vmatpush.msra.mxu0 0.0
        %6448 = vmatpush.msra.mxu0 0.0
        %6449 = vmatpush.msra.mxu0 0.0
        %6450 = vmatpush.msra.mxu0 0.0
        %v6451 = vand.u32 %v6081, 4294901760
        %6452 = vmatpush.msra.mxu0 %v6451
        %v6453 = vand.u32 %v6077, 4294901760
        %6454 = vmatpush.msra.mxu0 %v6453
        %v6455 = vand.u32 %v6073, 4294901760
        %6456 = vmatpush.msra.mxu0 %v6455
        %v6457 = vand.u32 %v6069, 4294901760
        %6458 = vmatpush.msra.mxu0 %v6457
        %v6459 = vand.u32 %v6092, 4294901760
        %6460 = vmatmul.f32.gmra.mxu0 %v6459
        %v6461 = vpop.f32.mrf.mxu0
        %v6462 = vadd.f32 %v6437, %v6461
        %6463 = vdwg.mxu0
        %6464 = vmatpush.msra.mxu0 0.0
        %6465 = vmatpush.msra.mxu0 0.0
        %6466 = vmatpush.msra.mxu0 0.0
        %6467 = vmatpush.msra.mxu0 0.0
        %6468 = vmatpush.msra.mxu0 0.0
        %6469 = vmatpush.msra.mxu0 0.0
        %6470 = vmatpush.msra.mxu0 0.0
        %6471 = vmatpush.msra.mxu0 0.0
        %6472 = vmatpush.msra.mxu0 0.0
        %6473 = vmatpush.msra.mxu0 0.0
        %6474 = vmatpush.msra.mxu0 0.0
        %6475 = vmatpush.msra.mxu0 0.0
        %v6476 = vand.u32 %v6082, 4294901760
        %6477 = vmatpush.msra.mxu0 %v6476
        %v6478 = vand.u32 %v6078, 4294901760
        %6479 = vmatpush.msra.mxu0 %v6478
        %v6480 = vand.u32 %v6074, 4294901760
        %6481 = vmatpush.msra.mxu0 %v6480
        %v6482 = vand.u32 %v6070, 4294901760
        %6483 = vmatpush.msra.mxu0 %v6482
        %v6484 = vand.u32 %v6092, 4294901760
        %v6485 = vsub.f32 %v6092, %v6484
        %v6486 = vand.u32 %v6485, 4294901760
        %v6487 = vsub.f32 %v6485, %v6486
        %v6488 = vand.u32 %v6487, 4294901760
        %6489 = vmatmul.f32.gmra.mxu0 %v6488
        %v6490 = vpop.f32.mrf.mxu0
        %v6491 = vadd.f32 %v6089, %v6490
        %6492 = vdwg.mxu0
        %6493 = vmatpush.msra.mxu0 0.0
        %6494 = vmatpush.msra.mxu0 0.0
        %6495 = vmatpush.msra.mxu0 0.0
        %6496 = vmatpush.msra.mxu0 0.0
        %6497 = vmatpush.msra.mxu0 0.0
        %6498 = vmatpush.msra.mxu0 0.0
        %6499 = vmatpush.msra.mxu0 0.0
        %6500 = vmatpush.msra.mxu0 0.0
        %6501 = vmatpush.msra.mxu0 0.0
        %6502 = vmatpush.msra.mxu0 0.0
        %6503 = vmatpush.msra.mxu0 0.0
        %6504 = vmatpush.msra.mxu0 0.0
        %v6505 = vand.u32 %v6082, 4294901760
        %v6506 = vsub.f32 %v6082, %v6505
        %v6507 = vand.u32 %v6506, 4294901760
        %v6508 = vsub.f32 %v6506, %v6507
        %v6509 = vand.u32 %v6508, 4294901760
        %6510 = vmatpush.msra.mxu0 %v6509
        %v6511 = vand.u32 %v6078, 4294901760
        %v6512 = vsub.f32 %v6078, %v6511
        %v6513 = vand.u32 %v6512, 4294901760
        %v6514 = vsub.f32 %v6512, %v6513
        %v6515 = vand.u32 %v6514, 4294901760
        %6516 = vmatpush.msra.mxu0 %v6515
        %v6517 = vand.u32 %v6074, 4294901760
        %v6518 = vsub.f32 %v6074, %v6517
        %v6519 = vand.u32 %v6518, 4294901760
        %v6520 = vsub.f32 %v6518, %v6519
        %v6521 = vand.u32 %v6520, 4294901760
        %6522 = vmatpush.msra.mxu0 %v6521
        %v6523 = vand.u32 %v6070, 4294901760
        %v6524 = vsub.f32 %v6070, %v6523
        %v6525 = vand.u32 %v6524, 4294901760
        %v6526 = vsub.f32 %v6524, %v6525
        %v6527 = vand.u32 %v6526, 4294901760
        %6528 = vmatpush.msra.mxu0 %v6527
        %v6529 = vand.u32 %v6092, 4294901760
        %6530 = vmatmul.f32.gmra.mxu0 %v6529
        %v6531 = vpop.f32.mrf.mxu0
        %v6532 = vadd.f32 %v6491, %v6531
        %6533 = vdwg.mxu0
        %6534 = vmatpush.msra.mxu0 0.0
        %6535 = vmatpush.msra.mxu0 0.0
        %6536 = vmatpush.msra.mxu0 0.0
        %6537 = vmatpush.msra.mxu0 0.0
        %6538 = vmatpush.msra.mxu0 0.0
        %6539 = vmatpush.msra.mxu0 0.0
        %6540 = vmatpush.msra.mxu0 0.0
        %6541 = vmatpush.msra.mxu0 0.0
        %6542 = vmatpush.msra.mxu0 0.0
        %6543 = vmatpush.msra.mxu0 0.0
        %6544 = vmatpush.msra.mxu0 0.0
        %6545 = vmatpush.msra.mxu0 0.0
        %v6546 = vand.u32 %v6082, 4294901760
        %v6547 = vsub.f32 %v6082, %v6546
        %6548 = vmatpush.msra.mxu0 %v6547
        %v6549 = vand.u32 %v6078, 4294901760
        %v6550 = vsub.f32 %v6078, %v6549
        %6551 = vmatpush.msra.mxu0 %v6550
        %v6552 = vand.u32 %v6074, 4294901760
        %v6553 = vsub.f32 %v6074, %v6552
        %6554 = vmatpush.msra.mxu0 %v6553
        %v6555 = vand.u32 %v6070, 4294901760
        %v6556 = vsub.f32 %v6070, %v6555
        %6557 = vmatpush.msra.mxu0 %v6556
        %v6558 = vand.u32 %v6092, 4294901760
        %v6559 = vsub.f32 %v6092, %v6558
        %6560 = vmatmul.f32.gmra.mxu0 %v6559
        %v6561 = vpop.f32.mrf.mxu0
        %v6562 = vadd.f32 %v6532, %v6561
        %6563 = vdwg.mxu0
        %6564 = vmatpush.msra.mxu0 0.0
        %6565 = vmatpush.msra.mxu0 0.0
        %6566 = vmatpush.msra.mxu0 0.0
        %6567 = vmatpush.msra.mxu0 0.0
        %6568 = vmatpush.msra.mxu0 0.0
        %6569 = vmatpush.msra.mxu0 0.0
        %6570 = vmatpush.msra.mxu0 0.0
        %6571 = vmatpush.msra.mxu0 0.0
        %6572 = vmatpush.msra.mxu0 0.0
        %6573 = vmatpush.msra.mxu0 0.0
        %6574 = vmatpush.msra.mxu0 0.0
        %6575 = vmatpush.msra.mxu0 0.0
        %v6576 = vand.u32 %v6082, 4294901760
        %6577 = vmatpush.msra.mxu0 %v6576
        %v6578 = vand.u32 %v6078, 4294901760
        %6579 = vmatpush.msra.mxu0 %v6578
        %v6580 = vand.u32 %v6074, 4294901760
        %6581 = vmatpush.msra.mxu0 %v6580
        %v6582 = vand.u32 %v6070, 4294901760
        %6583 = vmatpush.msra.mxu0 %v6582
        %v6584 = vand.u32 %v6092, 4294901760
        %v6585 = vsub.f32 %v6092, %v6584
        %v6586 = vand.u32 %v6585, 4294901760
        %6587 = vmatmul.f32.gmra.mxu0 %v6586
        %v6588 = vpop.f32.mrf.mxu0
        %v6589 = vadd.f32 %v6562, %v6588
        %6590 = vdwg.mxu0
        %6591 = vmatpush.msra.mxu0 0.0
        %6592 = vmatpush.msra.mxu0 0.0
        %6593 = vmatpush.msra.mxu0 0.0
        %6594 = vmatpush.msra.mxu0 0.0
        %6595 = vmatpush.msra.mxu0 0.0
        %6596 = vmatpush.msra.mxu0 0.0
        %6597 = vmatpush.msra.mxu0 0.0
        %6598 = vmatpush.msra.mxu0 0.0
        %6599 = vmatpush.msra.mxu0 0.0
        %6600 = vmatpush.msra.mxu0 0.0
        %6601 = vmatpush.msra.mxu0 0.0
        %6602 = vmatpush.msra.mxu0 0.0
        %v6603 = vand.u32 %v6082, 4294901760
        %v6604 = vsub.f32 %v6082, %v6603
        %v6605 = vand.u32 %v6604, 4294901760
        %6606 = vmatpush.msra.mxu0 %v6605
        %v6607 = vand.u32 %v6078, 4294901760
        %v6608 = vsub.f32 %v6078, %v6607
        %v6609 = vand.u32 %v6608, 4294901760
        %6610 = vmatpush.msra.mxu0 %v6609
        %v6611 = vand.u32 %v6074, 4294901760
        %v6612 = vsub.f32 %v6074, %v6611
        %v6613 = vand.u32 %v6612, 4294901760
        %6614 = vmatpush.msra.mxu0 %v6613
        %v6615 = vand.u32 %v6070, 4294901760
        %v6616 = vsub.f32 %v6070, %v6615
        %v6617 = vand.u32 %v6616, 4294901760
        %6618 = vmatpush.msra.mxu0 %v6617
        %v6619 = vand.u32 %v6092, 4294901760
        %6620 = vmatmul.f32.gmra.mxu0 %v6619
        %v6621 = vpop.f32.mrf.mxu0
        %v6622 = vadd.f32 %v6589, %v6621
        %6623 = vdwg.mxu0
        %6624 = vmatpush.msra.mxu0 0.0
        %6625 = vmatpush.msra.mxu0 0.0
        %6626 = vmatpush.msra.mxu0 0.0
        %6627 = vmatpush.msra.mxu0 0.0
        %6628 = vmatpush.msra.mxu0 0.0
        %6629 = vmatpush.msra.mxu0 0.0
        %6630 = vmatpush.msra.mxu0 0.0
        %6631 = vmatpush.msra.mxu0 0.0
        %6632 = vmatpush.msra.mxu0 0.0
        %6633 = vmatpush.msra.mxu0 0.0
        %6634 = vmatpush.msra.mxu0 0.0
        %6635 = vmatpush.msra.mxu0 0.0
        %v6636 = vand.u32 %v6082, 4294901760
        %6637 = vmatpush.msra.mxu0 %v6636
        %v6638 = vand.u32 %v6078, 4294901760
        %6639 = vmatpush.msra.mxu0 %v6638
        %v6640 = vand.u32 %v6074, 4294901760
        %6641 = vmatpush.msra.mxu0 %v6640
        %v6642 = vand.u32 %v6070, 4294901760
        %6643 = vmatpush.msra.mxu0 %v6642
        %v6644 = vand.u32 %v6092, 4294901760
        %6645 = vmatmul.f32.gmra.mxu0 %v6644
        %v6646 = vpop.f32.mrf.mxu0
        %v6647 = vadd.f32 %v6622, %v6646
        %6648 = vdwg.mxu0
        %6649 = vmatpush.msra.mxu0 0.0
        %6650 = vmatpush.msra.mxu0 0.0
        %6651 = vmatpush.msra.mxu0 0.0
        %6652 = vmatpush.msra.mxu0 0.0
        %6653 = vmatpush.msra.mxu0 0.0
        %6654 = vmatpush.msra.mxu0 0.0
        %6655 = vmatpush.msra.mxu0 0.0
        %6656 = vmatpush.msra.mxu0 0.0
        %6657 = vmatpush.msra.mxu0 0.0
        %6658 = vmatpush.msra.mxu0 0.0
        %6659 = vmatpush.msra.mxu0 0.0
        %6660 = vmatpush.msra.mxu0 0.0
        %v6661 = vand.u32 %v6083, 4294901760
        %6662 = vmatpush.msra.mxu0 %v6661
        %v6663 = vand.u32 %v6079, 4294901760
        %6664 = vmatpush.msra.mxu0 %v6663
        %v6665 = vand.u32 %v6075, 4294901760
        %6666 = vmatpush.msra.mxu0 %v6665
        %v6667 = vand.u32 %v6071, 4294901760
        %6668 = vmatpush.msra.mxu0 %v6667
        %v6669 = vand.u32 %v6092, 4294901760
        %v6670 = vsub.f32 %v6092, %v6669
        %v6671 = vand.u32 %v6670, 4294901760
        %v6672 = vsub.f32 %v6670, %v6671
        %v6673 = vand.u32 %v6672, 4294901760
        %6674 = vmatmul.f32.gmra.mxu0 %v6673
        %v6675 = vpop.f32.mrf.mxu0
        %v6676 = vadd.f32 %v6089, %v6675
        %6677 = vdwg.mxu0
        %6678 = vmatpush.msra.mxu0 0.0
        %6679 = vmatpush.msra.mxu0 0.0
        %6680 = vmatpush.msra.mxu0 0.0
        %6681 = vmatpush.msra.mxu0 0.0
        %6682 = vmatpush.msra.mxu0 0.0
        %6683 = vmatpush.msra.mxu0 0.0
        %6684 = vmatpush.msra.mxu0 0.0
        %6685 = vmatpush.msra.mxu0 0.0
        %6686 = vmatpush.msra.mxu0 0.0
        %6687 = vmatpush.msra.mxu0 0.0
        %6688 = vmatpush.msra.mxu0 0.0
        %6689 = vmatpush.msra.mxu0 0.0
        %v6690 = vand.u32 %v6083, 4294901760
        %v6691 = vsub.f32 %v6083, %v6690
        %v6692 = vand.u32 %v6691, 4294901760
        %v6693 = vsub.f32 %v6691, %v6692
        %v6694 = vand.u32 %v6693, 4294901760
        %6695 = vmatpush.msra.mxu0 %v6694
        %v6696 = vand.u32 %v6079, 4294901760
        %v6697 = vsub.f32 %v6079, %v6696
        %v6698 = vand.u32 %v6697, 4294901760
        %v6699 = vsub.f32 %v6697, %v6698
        %v6700 = vand.u32 %v6699, 4294901760
        %6701 = vmatpush.msra.mxu0 %v6700
        %v6702 = vand.u32 %v6075, 4294901760
        %v6703 = vsub.f32 %v6075, %v6702
        %v6704 = vand.u32 %v6703, 4294901760
        %v6705 = vsub.f32 %v6703, %v6704
        %v6706 = vand.u32 %v6705, 4294901760
        %6707 = vmatpush.msra.mxu0 %v6706
        %v6708 = vand.u32 %v6071, 4294901760
        %v6709 = vsub.f32 %v6071, %v6708
        %v6710 = vand.u32 %v6709, 4294901760
        %v6711 = vsub.f32 %v6709, %v6710
        %v6712 = vand.u32 %v6711, 4294901760
        %6713 = vmatpush.msra.mxu0 %v6712
        %v6714 = vand.u32 %v6092, 4294901760
        %6715 = vmatmul.f32.gmra.mxu0 %v6714
        %v6716 = vpop.f32.mrf.mxu0
        %v6717 = vadd.f32 %v6676, %v6716
        %6718 = vdwg.mxu0
        %6719 = vmatpush.msra.mxu0 0.0
        %6720 = vmatpush.msra.mxu0 0.0
        %6721 = vmatpush.msra.mxu0 0.0
        %6722 = vmatpush.msra.mxu0 0.0
        %6723 = vmatpush.msra.mxu0 0.0
        %6724 = vmatpush.msra.mxu0 0.0
        %6725 = vmatpush.msra.mxu0 0.0
        %6726 = vmatpush.msra.mxu0 0.0
        %6727 = vmatpush.msra.mxu0 0.0
        %6728 = vmatpush.msra.mxu0 0.0
        %6729 = vmatpush.msra.mxu0 0.0
        %6730 = vmatpush.msra.mxu0 0.0
        %v6731 = vand.u32 %v6083, 4294901760
        %v6732 = vsub.f32 %v6083, %v6731
        %6733 = vmatpush.msra.mxu0 %v6732
        %v6734 = vand.u32 %v6079, 4294901760
        %v6735 = vsub.f32 %v6079, %v6734
        %6736 = vmatpush.msra.mxu0 %v6735
        %v6737 = vand.u32 %v6075, 4294901760
        %v6738 = vsub.f32 %v6075, %v6737
        %6739 = vmatpush.msra.mxu0 %v6738
        %v6740 = vand.u32 %v6071, 4294901760
        %v6741 = vsub.f32 %v6071, %v6740
        %6742 = vmatpush.msra.mxu0 %v6741
        %v6743 = vand.u32 %v6092, 4294901760
        %v6744 = vsub.f32 %v6092, %v6743
        %6745 = vmatmul.f32.gmra.mxu0 %v6744
        %v6746 = vpop.f32.mrf.mxu0
        %v6747 = vadd.f32 %v6717, %v6746
        %6748 = vdwg.mxu0
        %6749 = vmatpush.msra.mxu0 0.0
        %6750 = vmatpush.msra.mxu0 0.0
        %6751 = vmatpush.msra.mxu0 0.0
        %6752 = vmatpush.msra.mxu0 0.0
        %6753 = vmatpush.msra.mxu0 0.0
        %6754 = vmatpush.msra.mxu0 0.0
        %6755 = vmatpush.msra.mxu0 0.0
        %6756 = vmatpush.msra.mxu0 0.0
        %6757 = vmatpush.msra.mxu0 0.0
        %6758 = vmatpush.msra.mxu0 0.0
        %6759 = vmatpush.msra.mxu0 0.0
        %6760 = vmatpush.msra.mxu0 0.0
        %v6761 = vand.u32 %v6083, 4294901760
        %6762 = vmatpush.msra.mxu0 %v6761
        %v6763 = vand.u32 %v6079, 4294901760
        %6764 = vmatpush.msra.mxu0 %v6763
        %v6765 = vand.u32 %v6075, 4294901760
        %6766 = vmatpush.msra.mxu0 %v6765
        %v6767 = vand.u32 %v6071, 4294901760
        %6768 = vmatpush.msra.mxu0 %v6767
        %v6769 = vand.u32 %v6092, 4294901760
        %v6770 = vsub.f32 %v6092, %v6769
        %v6771 = vand.u32 %v6770, 4294901760
        %6772 = vmatmul.f32.gmra.mxu0 %v6771
        %v6773 = vpop.f32.mrf.mxu0
        %v6774 = vadd.f32 %v6747, %v6773
        %6775 = vdwg.mxu0
        %6776 = vmatpush.msra.mxu0 0.0
        %6777 = vmatpush.msra.mxu0 0.0
        %6778 = vmatpush.msra.mxu0 0.0
        %6779 = vmatpush.msra.mxu0 0.0
        %6780 = vmatpush.msra.mxu0 0.0
        %6781 = vmatpush.msra.mxu0 0.0
        %6782 = vmatpush.msra.mxu0 0.0
        %6783 = vmatpush.msra.mxu0 0.0
        %6784 = vmatpush.msra.mxu0 0.0
        %6785 = vmatpush.msra.mxu0 0.0
        %6786 = vmatpush.msra.mxu0 0.0
        %6787 = vmatpush.msra.mxu0 0.0
        %v6788 = vand.u32 %v6083, 4294901760
        %v6789 = vsub.f32 %v6083, %v6788
        %v6790 = vand.u32 %v6789, 4294901760
        %6791 = vmatpush.msra.mxu0 %v6790
        %v6792 = vand.u32 %v6079, 4294901760
        %v6793 = vsub.f32 %v6079, %v6792
        %v6794 = vand.u32 %v6793, 4294901760
        %6795 = vmatpush.msra.mxu0 %v6794
        %v6796 = vand.u32 %v6075, 4294901760
        %v6797 = vsub.f32 %v6075, %v6796
        %v6798 = vand.u32 %v6797, 4294901760
        %6799 = vmatpush.msra.mxu0 %v6798
        %v6800 = vand.u32 %v6071, 4294901760
        %v6801 = vsub.f32 %v6071, %v6800
        %v6802 = vand.u32 %v6801, 4294901760
        %6803 = vmatpush.msra.mxu0 %v6802
        %v6804 = vand.u32 %v6092, 4294901760
        %6805 = vmatmul.f32.gmra.mxu0 %v6804
        %v6806 = vpop.f32.mrf.mxu0
        %v6807 = vadd.f32 %v6774, %v6806
        %6808 = vdwg.mxu0
        %6809 = vmatpush.msra.mxu0 0.0
        %6810 = vmatpush.msra.mxu0 0.0
        %6811 = vmatpush.msra.mxu0 0.0
        %6812 = vmatpush.msra.mxu0 0.0
        %6813 = vmatpush.msra.mxu0 0.0
        %6814 = vmatpush.msra.mxu0 0.0
        %6815 = vmatpush.msra.mxu0 0.0
        %6816 = vmatpush.msra.mxu0 0.0
        %6817 = vmatpush.msra.mxu0 0.0
        %6818 = vmatpush.msra.mxu0 0.0
        %6819 = vmatpush.msra.mxu0 0.0
        %6820 = vmatpush.msra.mxu0 0.0
        %v6821 = vand.u32 %v6083, 4294901760
        %6822 = vmatpush.msra.mxu0 %v6821
        %v6823 = vand.u32 %v6079, 4294901760
        %6824 = vmatpush.msra.mxu0 %v6823
        %v6825 = vand.u32 %v6075, 4294901760
        %6826 = vmatpush.msra.mxu0 %v6825
        %v6827 = vand.u32 %v6071, 4294901760
        %6828 = vmatpush.msra.mxu0 %v6827
        %v6829 = vand.u32 %v6092, 4294901760
        %6830 = vmatmul.f32.gmra.mxu0 %v6829
        %v6831 = vpop.f32.mrf.mxu0
        %v6832 = vadd.f32 %v6807, %v6831
        %6833 = vdwg.mxu0
        %v6834 = vxor.u32 %v6277, 2147483648
        %v6835 = vxor.u32 %v6462, 2147483648
        %v6836 = vxor.u32 %v6647, 2147483648
        %v6837 = vxor.u32 %v6832, 2147483648
        %v6838 = vmul.f32 %v6834, 1.442695
        %v6839 = vpow.pop %v6838
        %v6840 = vmul.f32 %v6835, 1.442695
        %v6841 = vpow.pop %v6840
        %v6842 = vmul.f32 %v6836, 1.442695
        %v6843 = vpow.pop %v6842
        %v6844 = vmul.f32 %v6837, 1.442695
        %v6845 = vpow.pop %v6844
        %v6846 = vadd.f32 %v6839, 1.0
        %v6847 = vadd.f32 %v6841, 1.0
        %v6848 = vadd.f32 %v6843, 1.0
        %v6849 = vadd.f32 %v6845, 1.0
        %v6850 = vrcp.pop %v6846
        %v6851 = vmul.f32 %v6846, %v6850
        %v6852 = vsub.f32 1.0, %v6851
        %v6853 = vmul.f32 %v6850, %v6852
        %v6854 = vadd.f32 %v6850, %v6853
        %vm6855 = vweird.f32 %v6846
        %vm6856 = vweird.f32 %v6850
        %vm6857 = vmor %vm6855, %vm6856
        %v6858 = vsel %vm6857, %v6850, %v6854
        %v6859 = vand.u32 2147483647, %v6846
        %vm6860 = vcmp.eq.f32.partialorder %v6859, 8.507059e+37
        %v6861 = vand.u32 %v6846, 2147483648
        %v6862 = vor.u32 1.1754944e-38, %v6861
        %v6863 = vsel %vm6860, %v6862, %v6858
        %v6864 = vmul.f32 1.0, %v6863
        %v6865 = vrcp.pop %v6847
        %v6866 = vmul.f32 %v6847, %v6865
        %v6867 = vsub.f32 1.0, %v6866
        %v6868 = vmul.f32 %v6865, %v6867
        %v6869 = vadd.f32 %v6865, %v6868
        %vm6870 = vweird.f32 %v6847
        %vm6871 = vweird.f32 %v6865
        %vm6872 = vmor %vm6870, %vm6871
        %v6873 = vsel %vm6872, %v6865, %v6869
        %v6874 = vand.u32 2147483647, %v6847
        %vm6875 = vcmp.eq.f32.partialorder %v6874, 8.507059e+37
        %v6876 = vand.u32 %v6847, 2147483648
        %v6877 = vor.u32 1.1754944e-38, %v6876
        %v6878 = vsel %vm6875, %v6877, %v6873
        %v6879 = vmul.f32 1.0, %v6878
        %v6880 = vrcp.pop %v6848
        %v6881 = vmul.f32 %v6848, %v6880
        %v6882 = vsub.f32 1.0, %v6881
        %v6883 = vmul.f32 %v6880, %v6882
        %v6884 = vadd.f32 %v6880, %v6883
        %vm6885 = vweird.f32 %v6848
        %vm6886 = vweird.f32 %v6880
        %vm6887 = vmor %vm6885, %vm6886
        %v6888 = vsel %vm6887, %v6880, %v6884
        %v6889 = vand.u32 2147483647, %v6848
        %vm6890 = vcmp.eq.f32.partialorder %v6889, 8.507059e+37
        %v6891 = vand.u32 %v6848, 2147483648
        %v6892 = vor.u32 1.1754944e-38, %v6891
        %v6893 = vsel %vm6890, %v6892, %v6888
        %v6894 = vmul.f32 1.0, %v6893
        %v6895 = vrcp.pop %v6849
        %v6896 = vmul.f32 %v6849, %v6895
        %v6897 = vsub.f32 1.0, %v6896
        %v6898 = vmul.f32 %v6895, %v6897
        %v6899 = vadd.f32 %v6895, %v6898
        %vm6900 = vweird.f32 %v6849
        %vm6901 = vweird.f32 %v6895
        %vm6902 = vmor %vm6900, %vm6901
        %v6903 = vsel %vm6902, %v6895, %v6899
        %v6904 = vand.u32 2147483647, %v6849
        %vm6905 = vcmp.eq.f32.partialorder %v6904, 8.507059e+37
        %v6906 = vand.u32 %v6849, 2147483648
        %v6907 = vor.u32 1.1754944e-38, %v6906
        %v6908 = vsel %vm6905, %v6907, %v6903
        %v6909 = vmul.f32 1.0, %v6908
        %v6910 = vld [vmem:[%s2 + $0xa8] sm:$0xff]
        %v6911 = vld [vmem:[%s2 + $0xb0] sm:$0xff]
        %v6912 = vld [vmem:[%s2 + $0xb8] sm:$0xff]
        %v6913 = vld [vmem:[%s2 + $0xc0] sm:$0xff]
        %v6914 = vld [vmem:[%s3 + $0x58] sm:$0xff]
        %v6915 = vld [vmem:[%s3 + $0x60] sm:$0xff]
        %v6916 = vld [vmem:[%s3 + $0x68] sm:$0xff]
        %v6917 = vld [vmem:[%s3 + $0x70] sm:$0xff]
        %6919 = vset.pattern.permute.xlu0 0
        %6920 = vperm.xlu0 %6919, %v6914
        %v6921 = vpop.permute.xlu0 %6920
        %6924 = vset.pattern.permute.xlu0 0
        %6925 = vperm.xlu0 %6924, %v6915
        %v6926 = vpop.permute.xlu0 %6925
        %6929 = vset.pattern.permute.xlu0 0
        %6930 = vperm.xlu0 %6929, %v6916
        %v6931 = vpop.permute.xlu0 %6930
        %6934 = vset.pattern.permute.xlu0 0
        %6935 = vperm.xlu0 %6934, %v6917
        %v6936 = vpop.permute.xlu0 %6935
        %v6939 = vsel %vm5031, %v6910, 0
        %v6942 = vsel %vm5031, %v6911, 0
        %v6945 = vsel %vm5031, %v6912, 0
        %v6948 = vsel %vm5031, %v6913, 0
        %v6951 = vsel %vm4918, %v4910, 0
        %v6954 = vsel %vm4918, %v4911, 0
        %v6957 = vsel %vm4918, %v4912, 0
        %v6960 = vsel %vm4918, %v4913, 0
        %6962 = vmatpush.msra.mxu0 0.0
        %6963 = vmatpush.msra.mxu0 0.0
        %6964 = vmatpush.msra.mxu0 0.0
        %6965 = vmatpush.msra.mxu0 0.0
        %6966 = vmatpush.msra.mxu0 0.0
        %6967 = vmatpush.msra.mxu0 0.0
        %6968 = vmatpush.msra.mxu0 0.0
        %6969 = vmatpush.msra.mxu0 0.0
        %6970 = vmatpush.msra.mxu0 0.0
        %6971 = vmatpush.msra.mxu0 0.0
        %6972 = vmatpush.msra.mxu0 0.0
        %6973 = vmatpush.msra.mxu0 0.0
        %6974 = vmatpush.msra.mxu0 0.0
        %6975 = vmatpush.msra.mxu0 0.0
        %6976 = vmatpush.msra.mxu0 0.0
        %v6977 = vand.u32 %v6951, 4294901760
        %6978 = vmatpush.msra.mxu0 %v6977
        %v6979 = vand.u32 %v6939, 4294901760
        %v6980 = vsub.f32 %v6939, %v6979
        %v6981 = vand.u32 %v6980, 4294901760
        %v6982 = vsub.f32 %v6980, %v6981
        %v6983 = vand.u32 %v6982, 4294901760
        %6984 = vmatmul.f32.gmra.mxu0 %v6983
        %v6985 = vpop.f32.mrf.mxu0
        %v6986 = vadd.f32 %v6921, %v6985
        %v6987 = vand.u32 %v6942, 4294901760
        %v6988 = vsub.f32 %v6942, %v6987
        %v6989 = vand.u32 %v6988, 4294901760
        %v6990 = vsub.f32 %v6988, %v6989
        %v6991 = vand.u32 %v6990, 4294901760
        %6992 = vmatmul.f32.gmra.mxu0 %v6991
        %v6993 = vpop.f32.mrf.mxu0
        %v6994 = vadd.f32 %v6926, %v6993
        %v6995 = vand.u32 %v6945, 4294901760
        %v6996 = vsub.f32 %v6945, %v6995
        %v6997 = vand.u32 %v6996, 4294901760
        %v6998 = vsub.f32 %v6996, %v6997
        %v6999 = vand.u32 %v6998, 4294901760
        %7000 = vmatmul.f32.gmra.mxu0 %v6999
        %v7001 = vpop.f32.mrf.mxu0
        %v7002 = vadd.f32 %v6931, %v7001
        %v7003 = vand.u32 %v6948, 4294901760
        %v7004 = vsub.f32 %v6948, %v7003
        %v7005 = vand.u32 %v7004, 4294901760
        %v7006 = vsub.f32 %v7004, %v7005
        %v7007 = vand.u32 %v7006, 4294901760
        %7008 = vmatmul.f32.gmra.mxu0 %v7007
        %v7009 = vpop.f32.mrf.mxu0
        %v7010 = vadd.f32 %v6936, %v7009
        %7011 = vdwg.mxu0
        %7012 = vmatpush.msra.mxu0 0.0
        %7013 = vmatpush.msra.mxu0 0.0
        %7014 = vmatpush.msra.mxu0 0.0
        %7015 = vmatpush.msra.mxu0 0.0
        %7016 = vmatpush.msra.mxu0 0.0
        %7017 = vmatpush.msra.mxu0 0.0
        %7018 = vmatpush.msra.mxu0 0.0
        %7019 = vmatpush.msra.mxu0 0.0
        %7020 = vmatpush.msra.mxu0 0.0
        %7021 = vmatpush.msra.mxu0 0.0
        %7022 = vmatpush.msra.mxu0 0.0
        %7023 = vmatpush.msra.mxu0 0.0
        %7024 = vmatpush.msra.mxu0 0.0
        %7025 = vmatpush.msra.mxu0 0.0
        %7026 = vmatpush.msra.mxu0 0.0
        %v7027 = vand.u32 %v6951, 4294901760
        %v7028 = vsub.f32 %v6951, %v7027
        %v7029 = vand.u32 %v7028, 4294901760
        %v7030 = vsub.f32 %v7028, %v7029
        %v7031 = vand.u32 %v7030, 4294901760
        %7032 = vmatpush.msra.mxu0 %v7031
        %v7033 = vand.u32 %v6939, 4294901760
        %7034 = vmatmul.f32.gmra.mxu0 %v7033
        %v7035 = vpop.f32.mrf.mxu0
        %v7036 = vadd.f32 %v6986, %v7035
        %v7037 = vand.u32 %v6942, 4294901760
        %7038 = vmatmul.f32.gmra.mxu0 %v7037
        %v7039 = vpop.f32.mrf.mxu0
        %v7040 = vadd.f32 %v6994, %v7039
        %v7041 = vand.u32 %v6945, 4294901760
        %7042 = vmatmul.f32.gmra.mxu0 %v7041
        %v7043 = vpop.f32.mrf.mxu0
        %v7044 = vadd.f32 %v7002, %v7043
        %v7045 = vand.u32 %v6948, 4294901760
        %7046 = vmatmul.f32.gmra.mxu0 %v7045
        %v7047 = vpop.f32.mrf.mxu0
        %v7048 = vadd.f32 %v7010, %v7047
        %7049 = vdwg.mxu0
        %7050 = vmatpush.msra.mxu0 0.0
        %7051 = vmatpush.msra.mxu0 0.0
        %7052 = vmatpush.msra.mxu0 0.0
        %7053 = vmatpush.msra.mxu0 0.0
        %7054 = vmatpush.msra.mxu0 0.0
        %7055 = vmatpush.msra.mxu0 0.0
        %7056 = vmatpush.msra.mxu0 0.0
        %7057 = vmatpush.msra.mxu0 0.0
        %7058 = vmatpush.msra.mxu0 0.0
        %7059 = vmatpush.msra.mxu0 0.0
        %7060 = vmatpush.msra.mxu0 0.0
        %7061 = vmatpush.msra.mxu0 0.0
        %7062 = vmatpush.msra.mxu0 0.0
        %7063 = vmatpush.msra.mxu0 0.0
        %7064 = vmatpush.msra.mxu0 0.0
        %v7065 = vand.u32 %v6951, 4294901760
        %v7066 = vsub.f32 %v6951, %v7065
        %7067 = vmatpush.msra.mxu0 %v7066
        %v7068 = vand.u32 %v6939, 4294901760
        %v7069 = vsub.f32 %v6939, %v7068
        %7070 = vmatmul.f32.gmra.mxu0 %v7069
        %v7071 = vpop.f32.mrf.mxu0
        %v7072 = vadd.f32 %v7036, %v7071
        %v7073 = vand.u32 %v6942, 4294901760
        %v7074 = vsub.f32 %v6942, %v7073
        %7075 = vmatmul.f32.gmra.mxu0 %v7074
        %v7076 = vpop.f32.mrf.mxu0
        %v7077 = vadd.f32 %v7040, %v7076
        %v7078 = vand.u32 %v6945, 4294901760
        %v7079 = vsub.f32 %v6945, %v7078
        %7080 = vmatmul.f32.gmra.mxu0 %v7079
        %v7081 = vpop.f32.mrf.mxu0
        %v7082 = vadd.f32 %v7044, %v7081
        %v7083 = vand.u32 %v6948, 4294901760
        %v7084 = vsub.f32 %v6948, %v7083
        %7085 = vmatmul.f32.gmra.mxu0 %v7084
        %v7086 = vpop.f32.mrf.mxu0
        %v7087 = vadd.f32 %v7048, %v7086
        %7088 = vdwg.mxu0
        %7089 = vmatpush.msra.mxu0 0.0
        %7090 = vmatpush.msra.mxu0 0.0
        %7091 = vmatpush.msra.mxu0 0.0
        %7092 = vmatpush.msra.mxu0 0.0
        %7093 = vmatpush.msra.mxu0 0.0
        %7094 = vmatpush.msra.mxu0 0.0
        %7095 = vmatpush.msra.mxu0 0.0
        %7096 = vmatpush.msra.mxu0 0.0
        %7097 = vmatpush.msra.mxu0 0.0
        %7098 = vmatpush.msra.mxu0 0.0
        %7099 = vmatpush.msra.mxu0 0.0
        %7100 = vmatpush.msra.mxu0 0.0
        %7101 = vmatpush.msra.mxu0 0.0
        %7102 = vmatpush.msra.mxu0 0.0
        %7103 = vmatpush.msra.mxu0 0.0
        %v7104 = vand.u32 %v6951, 4294901760
        %7105 = vmatpush.msra.mxu0 %v7104
        %v7106 = vand.u32 %v6939, 4294901760
        %v7107 = vsub.f32 %v6939, %v7106
        %v7108 = vand.u32 %v7107, 4294901760
        %7109 = vmatmul.f32.gmra.mxu0 %v7108
        %v7110 = vpop.f32.mrf.mxu0
        %v7111 = vadd.f32 %v7072, %v7110
        %v7112 = vand.u32 %v6942, 4294901760
        %v7113 = vsub.f32 %v6942, %v7112
        %v7114 = vand.u32 %v7113, 4294901760
        %7115 = vmatmul.f32.gmra.mxu0 %v7114
        %v7116 = vpop.f32.mrf.mxu0
        %v7117 = vadd.f32 %v7077, %v7116
        %v7118 = vand.u32 %v6945, 4294901760
        %v7119 = vsub.f32 %v6945, %v7118
        %v7120 = vand.u32 %v7119, 4294901760
        %7121 = vmatmul.f32.gmra.mxu0 %v7120
        %v7122 = vpop.f32.mrf.mxu0
        %v7123 = vadd.f32 %v7082, %v7122
        %v7124 = vand.u32 %v6948, 4294901760
        %v7125 = vsub.f32 %v6948, %v7124
        %v7126 = vand.u32 %v7125, 4294901760
        %7127 = vmatmul.f32.gmra.mxu0 %v7126
        %v7128 = vpop.f32.mrf.mxu0
        %v7129 = vadd.f32 %v7087, %v7128
        %7130 = vdwg.mxu0
        %7131 = vmatpush.msra.mxu0 0.0
        %7132 = vmatpush.msra.mxu0 0.0
        %7133 = vmatpush.msra.mxu0 0.0
        %7134 = vmatpush.msra.mxu0 0.0
        %7135 = vmatpush.msra.mxu0 0.0
        %7136 = vmatpush.msra.mxu0 0.0
        %7137 = vmatpush.msra.mxu0 0.0
        %7138 = vmatpush.msra.mxu0 0.0
        %7139 = vmatpush.msra.mxu0 0.0
        %7140 = vmatpush.msra.mxu0 0.0
        %7141 = vmatpush.msra.mxu0 0.0
        %7142 = vmatpush.msra.mxu0 0.0
        %7143 = vmatpush.msra.mxu0 0.0
        %7144 = vmatpush.msra.mxu0 0.0
        %7145 = vmatpush.msra.mxu0 0.0
        %v7146 = vand.u32 %v6951, 4294901760
        %v7147 = vsub.f32 %v6951, %v7146
        %v7148 = vand.u32 %v7147, 4294901760
        %7149 = vmatpush.msra.mxu0 %v7148
        %v7150 = vand.u32 %v6939, 4294901760
        %7151 = vmatmul.f32.gmra.mxu0 %v7150
        %v7152 = vpop.f32.mrf.mxu0
        %v7153 = vadd.f32 %v7111, %v7152
        %v7154 = vand.u32 %v6942, 4294901760
        %7155 = vmatmul.f32.gmra.mxu0 %v7154
        %v7156 = vpop.f32.mrf.mxu0
        %v7157 = vadd.f32 %v7117, %v7156
        %v7158 = vand.u32 %v6945, 4294901760
        %7159 = vmatmul.f32.gmra.mxu0 %v7158
        %v7160 = vpop.f32.mrf.mxu0
        %v7161 = vadd.f32 %v7123, %v7160
        %v7162 = vand.u32 %v6948, 4294901760
        %7163 = vmatmul.f32.gmra.mxu0 %v7162
        %v7164 = vpop.f32.mrf.mxu0
        %v7165 = vadd.f32 %v7129, %v7164
        %7166 = vdwg.mxu0
        %7167 = vmatpush.msra.mxu0 0.0
        %7168 = vmatpush.msra.mxu0 0.0
        %7169 = vmatpush.msra.mxu0 0.0
        %7170 = vmatpush.msra.mxu0 0.0
        %7171 = vmatpush.msra.mxu0 0.0
        %7172 = vmatpush.msra.mxu0 0.0
        %7173 = vmatpush.msra.mxu0 0.0
        %7174 = vmatpush.msra.mxu0 0.0
        %7175 = vmatpush.msra.mxu0 0.0
        %7176 = vmatpush.msra.mxu0 0.0
        %7177 = vmatpush.msra.mxu0 0.0
        %7178 = vmatpush.msra.mxu0 0.0
        %7179 = vmatpush.msra.mxu0 0.0
        %7180 = vmatpush.msra.mxu0 0.0
        %7181 = vmatpush.msra.mxu0 0.0
        %v7182 = vand.u32 %v6951, 4294901760
        %7183 = vmatpush.msra.mxu0 %v7182
        %v7184 = vand.u32 %v6939, 4294901760
        %7185 = vmatmul.f32.gmra.mxu0 %v7184
        %v7186 = vpop.f32.mrf.mxu0
        %v7187 = vadd.f32 %v7153, %v7186
        %v7188 = vand.u32 %v6942, 4294901760
        %7189 = vmatmul.f32.gmra.mxu0 %v7188
        %v7190 = vpop.f32.mrf.mxu0
        %v7191 = vadd.f32 %v7157, %v7190
        %v7192 = vand.u32 %v6945, 4294901760
        %7193 = vmatmul.f32.gmra.mxu0 %v7192
        %v7194 = vpop.f32.mrf.mxu0
        %v7195 = vadd.f32 %v7161, %v7194
        %v7196 = vand.u32 %v6948, 4294901760
        %7197 = vmatmul.f32.gmra.mxu0 %v7196
        %v7198 = vpop.f32.mrf.mxu0
        %v7199 = vadd.f32 %v7165, %v7198
        %7200 = vdwg.mxu0
        %7201 = vmatpush.msra.mxu0 0.0
        %7202 = vmatpush.msra.mxu0 0.0
        %7203 = vmatpush.msra.mxu0 0.0
        %7204 = vmatpush.msra.mxu0 0.0
        %7205 = vmatpush.msra.mxu0 0.0
        %7206 = vmatpush.msra.mxu0 0.0
        %7207 = vmatpush.msra.mxu0 0.0
        %7208 = vmatpush.msra.mxu0 0.0
        %7209 = vmatpush.msra.mxu0 0.0
        %7210 = vmatpush.msra.mxu0 0.0
        %7211 = vmatpush.msra.mxu0 0.0
        %7212 = vmatpush.msra.mxu0 0.0
        %7213 = vmatpush.msra.mxu0 0.0
        %7214 = vmatpush.msra.mxu0 0.0
        %7215 = vmatpush.msra.mxu0 0.0
        %v7216 = vand.u32 %v6954, 4294901760
        %7217 = vmatpush.msra.mxu0 %v7216
        %v7218 = vand.u32 %v6939, 4294901760
        %v7219 = vsub.f32 %v6939, %v7218
        %v7220 = vand.u32 %v7219, 4294901760
        %v7221 = vsub.f32 %v7219, %v7220
        %v7222 = vand.u32 %v7221, 4294901760
        %7223 = vmatmul.f32.gmra.mxu0 %v7222
        %v7224 = vpop.f32.mrf.mxu0
        %v7225 = vadd.f32 %v6921, %v7224
        %v7226 = vand.u32 %v6942, 4294901760
        %v7227 = vsub.f32 %v6942, %v7226
        %v7228 = vand.u32 %v7227, 4294901760
        %v7229 = vsub.f32 %v7227, %v7228
        %v7230 = vand.u32 %v7229, 4294901760
        %7231 = vmatmul.f32.gmra.mxu0 %v7230
        %v7232 = vpop.f32.mrf.mxu0
        %v7233 = vadd.f32 %v6926, %v7232
        %v7234 = vand.u32 %v6945, 4294901760
        %v7235 = vsub.f32 %v6945, %v7234
        %v7236 = vand.u32 %v7235, 4294901760
        %v7237 = vsub.f32 %v7235, %v7236
        %v7238 = vand.u32 %v7237, 4294901760
        %7239 = vmatmul.f32.gmra.mxu0 %v7238
        %v7240 = vpop.f32.mrf.mxu0
        %v7241 = vadd.f32 %v6931, %v7240
        %v7242 = vand.u32 %v6948, 4294901760
        %v7243 = vsub.f32 %v6948, %v7242
        %v7244 = vand.u32 %v7243, 4294901760
        %v7245 = vsub.f32 %v7243, %v7244
        %v7246 = vand.u32 %v7245, 4294901760
        %7247 = vmatmul.f32.gmra.mxu0 %v7246
        %v7248 = vpop.f32.mrf.mxu0
        %v7249 = vadd.f32 %v6936, %v7248
        %7250 = vdwg.mxu0
        %7251 = vmatpush.msra.mxu0 0.0
        %7252 = vmatpush.msra.mxu0 0.0
        %7253 = vmatpush.msra.mxu0 0.0
        %7254 = vmatpush.msra.mxu0 0.0
        %7255 = vmatpush.msra.mxu0 0.0
        %7256 = vmatpush.msra.mxu0 0.0
        %7257 = vmatpush.msra.mxu0 0.0
        %7258 = vmatpush.msra.mxu0 0.0
        %7259 = vmatpush.msra.mxu0 0.0
        %7260 = vmatpush.msra.mxu0 0.0
        %7261 = vmatpush.msra.mxu0 0.0
        %7262 = vmatpush.msra.mxu0 0.0
        %7263 = vmatpush.msra.mxu0 0.0
        %7264 = vmatpush.msra.mxu0 0.0
        %7265 = vmatpush.msra.mxu0 0.0
        %v7266 = vand.u32 %v6954, 4294901760
        %v7267 = vsub.f32 %v6954, %v7266
        %v7268 = vand.u32 %v7267, 4294901760
        %v7269 = vsub.f32 %v7267, %v7268
        %v7270 = vand.u32 %v7269, 4294901760
        %7271 = vmatpush.msra.mxu0 %v7270
        %v7272 = vand.u32 %v6939, 4294901760
        %7273 = vmatmul.f32.gmra.mxu0 %v7272
        %v7274 = vpop.f32.mrf.mxu0
        %v7275 = vadd.f32 %v7225, %v7274
        %v7276 = vand.u32 %v6942, 4294901760
        %7277 = vmatmul.f32.gmra.mxu0 %v7276
        %v7278 = vpop.f32.mrf.mxu0
        %v7279 = vadd.f32 %v7233, %v7278
        %v7280 = vand.u32 %v6945, 4294901760
        %7281 = vmatmul.f32.gmra.mxu0 %v7280
        %v7282 = vpop.f32.mrf.mxu0
        %v7283 = vadd.f32 %v7241, %v7282
        %v7284 = vand.u32 %v6948, 4294901760
        %7285 = vmatmul.f32.gmra.mxu0 %v7284
        %v7286 = vpop.f32.mrf.mxu0
        %v7287 = vadd.f32 %v7249, %v7286
        %7288 = vdwg.mxu0
        %7289 = vmatpush.msra.mxu0 0.0
        %7290 = vmatpush.msra.mxu0 0.0
        %7291 = vmatpush.msra.mxu0 0.0
        %7292 = vmatpush.msra.mxu0 0.0
        %7293 = vmatpush.msra.mxu0 0.0
        %7294 = vmatpush.msra.mxu0 0.0
        %7295 = vmatpush.msra.mxu0 0.0
        %7296 = vmatpush.msra.mxu0 0.0
        %7297 = vmatpush.msra.mxu0 0.0
        %7298 = vmatpush.msra.mxu0 0.0
        %7299 = vmatpush.msra.mxu0 0.0
        %7300 = vmatpush.msra.mxu0 0.0
        %7301 = vmatpush.msra.mxu0 0.0
        %7302 = vmatpush.msra.mxu0 0.0
        %7303 = vmatpush.msra.mxu0 0.0
        %v7304 = vand.u32 %v6954, 4294901760
        %v7305 = vsub.f32 %v6954, %v7304
        %7306 = vmatpush.msra.mxu0 %v7305
        %v7307 = vand.u32 %v6939, 4294901760
        %v7308 = vsub.f32 %v6939, %v7307
        %7309 = vmatmul.f32.gmra.mxu0 %v7308
        %v7310 = vpop.f32.mrf.mxu0
        %v7311 = vadd.f32 %v7275, %v7310
        %v7312 = vand.u32 %v6942, 4294901760
        %v7313 = vsub.f32 %v6942, %v7312
        %7314 = vmatmul.f32.gmra.mxu0 %v7313
        %v7315 = vpop.f32.mrf.mxu0
        %v7316 = vadd.f32 %v7279, %v7315
        %v7317 = vand.u32 %v6945, 4294901760
        %v7318 = vsub.f32 %v6945, %v7317
        %7319 = vmatmul.f32.gmra.mxu0 %v7318
        %v7320 = vpop.f32.mrf.mxu0
        %v7321 = vadd.f32 %v7283, %v7320
        %v7322 = vand.u32 %v6948, 4294901760
        %v7323 = vsub.f32 %v6948, %v7322
        %7324 = vmatmul.f32.gmra.mxu0 %v7323
        %v7325 = vpop.f32.mrf.mxu0
        %v7326 = vadd.f32 %v7287, %v7325
        %7327 = vdwg.mxu0
        %7328 = vmatpush.msra.mxu0 0.0
        %7329 = vmatpush.msra.mxu0 0.0
        %7330 = vmatpush.msra.mxu0 0.0
        %7331 = vmatpush.msra.mxu0 0.0
        %7332 = vmatpush.msra.mxu0 0.0
        %7333 = vmatpush.msra.mxu0 0.0
        %7334 = vmatpush.msra.mxu0 0.0
        %7335 = vmatpush.msra.mxu0 0.0
        %7336 = vmatpush.msra.mxu0 0.0
        %7337 = vmatpush.msra.mxu0 0.0
        %7338 = vmatpush.msra.mxu0 0.0
        %7339 = vmatpush.msra.mxu0 0.0
        %7340 = vmatpush.msra.mxu0 0.0
        %7341 = vmatpush.msra.mxu0 0.0
        %7342 = vmatpush.msra.mxu0 0.0
        %v7343 = vand.u32 %v6954, 4294901760
        %7344 = vmatpush.msra.mxu0 %v7343
        %v7345 = vand.u32 %v6939, 4294901760
        %v7346 = vsub.f32 %v6939, %v7345
        %v7347 = vand.u32 %v7346, 4294901760
        %7348 = vmatmul.f32.gmra.mxu0 %v7347
        %v7349 = vpop.f32.mrf.mxu0
        %v7350 = vadd.f32 %v7311, %v7349
        %v7351 = vand.u32 %v6942, 4294901760
        %v7352 = vsub.f32 %v6942, %v7351
        %v7353 = vand.u32 %v7352, 4294901760
        %7354 = vmatmul.f32.gmra.mxu0 %v7353
        %v7355 = vpop.f32.mrf.mxu0
        %v7356 = vadd.f32 %v7316, %v7355
        %v7357 = vand.u32 %v6945, 4294901760
        %v7358 = vsub.f32 %v6945, %v7357
        %v7359 = vand.u32 %v7358, 4294901760
        %7360 = vmatmul.f32.gmra.mxu0 %v7359
        %v7361 = vpop.f32.mrf.mxu0
        %v7362 = vadd.f32 %v7321, %v7361
        %v7363 = vand.u32 %v6948, 4294901760
        %v7364 = vsub.f32 %v6948, %v7363
        %v7365 = vand.u32 %v7364, 4294901760
        %7366 = vmatmul.f32.gmra.mxu0 %v7365
        %v7367 = vpop.f32.mrf.mxu0
        %v7368 = vadd.f32 %v7326, %v7367
        %7369 = vdwg.mxu0
        %7370 = vmatpush.msra.mxu0 0.0
        %7371 = vmatpush.msra.mxu0 0.0
        %7372 = vmatpush.msra.mxu0 0.0
        %7373 = vmatpush.msra.mxu0 0.0
        %7374 = vmatpush.msra.mxu0 0.0
        %7375 = vmatpush.msra.mxu0 0.0
        %7376 = vmatpush.msra.mxu0 0.0
        %7377 = vmatpush.msra.mxu0 0.0
        %7378 = vmatpush.msra.mxu0 0.0
        %7379 = vmatpush.msra.mxu0 0.0
        %7380 = vmatpush.msra.mxu0 0.0
        %7381 = vmatpush.msra.mxu0 0.0
        %7382 = vmatpush.msra.mxu0 0.0
        %7383 = vmatpush.msra.mxu0 0.0
        %7384 = vmatpush.msra.mxu0 0.0
        %v7385 = vand.u32 %v6954, 4294901760
        %v7386 = vsub.f32 %v6954, %v7385
        %v7387 = vand.u32 %v7386, 4294901760
        %7388 = vmatpush.msra.mxu0 %v7387
        %v7389 = vand.u32 %v6939, 4294901760
        %7390 = vmatmul.f32.gmra.mxu0 %v7389
        %v7391 = vpop.f32.mrf.mxu0
        %v7392 = vadd.f32 %v7350, %v7391
        %v7393 = vand.u32 %v6942, 4294901760
        %7394 = vmatmul.f32.gmra.mxu0 %v7393
        %v7395 = vpop.f32.mrf.mxu0
        %v7396 = vadd.f32 %v7356, %v7395
        %v7397 = vand.u32 %v6945, 4294901760
        %7398 = vmatmul.f32.gmra.mxu0 %v7397
        %v7399 = vpop.f32.mrf.mxu0
        %v7400 = vadd.f32 %v7362, %v7399
        %v7401 = vand.u32 %v6948, 4294901760
        %7402 = vmatmul.f32.gmra.mxu0 %v7401
        %v7403 = vpop.f32.mrf.mxu0
        %v7404 = vadd.f32 %v7368, %v7403
        %7405 = vdwg.mxu0
        %7406 = vmatpush.msra.mxu0 0.0
        %7407 = vmatpush.msra.mxu0 0.0
        %7408 = vmatpush.msra.mxu0 0.0
        %7409 = vmatpush.msra.mxu0 0.0
        %7410 = vmatpush.msra.mxu0 0.0
        %7411 = vmatpush.msra.mxu0 0.0
        %7412 = vmatpush.msra.mxu0 0.0
        %7413 = vmatpush.msra.mxu0 0.0
        %7414 = vmatpush.msra.mxu0 0.0
        %7415 = vmatpush.msra.mxu0 0.0
        %7416 = vmatpush.msra.mxu0 0.0
        %7417 = vmatpush.msra.mxu0 0.0
        %7418 = vmatpush.msra.mxu0 0.0
        %7419 = vmatpush.msra.mxu0 0.0
        %7420 = vmatpush.msra.mxu0 0.0
        %v7421 = vand.u32 %v6954, 4294901760
        %7422 = vmatpush.msra.mxu0 %v7421
        %v7423 = vand.u32 %v6939, 4294901760
        %7424 = vmatmul.f32.gmra.mxu0 %v7423
        %v7425 = vpop.f32.mrf.mxu0
        %v7426 = vadd.f32 %v7392, %v7425
        %v7427 = vand.u32 %v6942, 4294901760
        %7428 = vmatmul.f32.gmra.mxu0 %v7427
        %v7429 = vpop.f32.mrf.mxu0
        %v7430 = vadd.f32 %v7396, %v7429
        %v7431 = vand.u32 %v6945, 4294901760
        %7432 = vmatmul.f32.gmra.mxu0 %v7431
        %v7433 = vpop.f32.mrf.mxu0
        %v7434 = vadd.f32 %v7400, %v7433
        %v7435 = vand.u32 %v6948, 4294901760
        %7436 = vmatmul.f32.gmra.mxu0 %v7435
        %v7437 = vpop.f32.mrf.mxu0
        %v7438 = vadd.f32 %v7404, %v7437
        %7439 = vdwg.mxu0
        %7440 = vmatpush.msra.mxu0 0.0
        %7441 = vmatpush.msra.mxu0 0.0
        %7442 = vmatpush.msra.mxu0 0.0
        %7443 = vmatpush.msra.mxu0 0.0
        %7444 = vmatpush.msra.mxu0 0.0
        %7445 = vmatpush.msra.mxu0 0.0
        %7446 = vmatpush.msra.mxu0 0.0
        %7447 = vmatpush.msra.mxu0 0.0
        %7448 = vmatpush.msra.mxu0 0.0
        %7449 = vmatpush.msra.mxu0 0.0
        %7450 = vmatpush.msra.mxu0 0.0
        %7451 = vmatpush.msra.mxu0 0.0
        %7452 = vmatpush.msra.mxu0 0.0
        %7453 = vmatpush.msra.mxu0 0.0
        %7454 = vmatpush.msra.mxu0 0.0
        %v7455 = vand.u32 %v6957, 4294901760
        %7456 = vmatpush.msra.mxu0 %v7455
        %v7457 = vand.u32 %v6939, 4294901760
        %v7458 = vsub.f32 %v6939, %v7457
        %v7459 = vand.u32 %v7458, 4294901760
        %v7460 = vsub.f32 %v7458, %v7459
        %v7461 = vand.u32 %v7460, 4294901760
        %7462 = vmatmul.f32.gmra.mxu0 %v7461
        %v7463 = vpop.f32.mrf.mxu0
        %v7464 = vadd.f32 %v6921, %v7463
        %v7465 = vand.u32 %v6942, 4294901760
        %v7466 = vsub.f32 %v6942, %v7465
        %v7467 = vand.u32 %v7466, 4294901760
        %v7468 = vsub.f32 %v7466, %v7467
        %v7469 = vand.u32 %v7468, 4294901760
        %7470 = vmatmul.f32.gmra.mxu0 %v7469
        %v7471 = vpop.f32.mrf.mxu0
        %v7472 = vadd.f32 %v6926, %v7471
        %v7473 = vand.u32 %v6945, 4294901760
        %v7474 = vsub.f32 %v6945, %v7473
        %v7475 = vand.u32 %v7474, 4294901760
        %v7476 = vsub.f32 %v7474, %v7475
        %v7477 = vand.u32 %v7476, 4294901760
        %7478 = vmatmul.f32.gmra.mxu0 %v7477
        %v7479 = vpop.f32.mrf.mxu0
        %v7480 = vadd.f32 %v6931, %v7479
        %v7481 = vand.u32 %v6948, 4294901760
        %v7482 = vsub.f32 %v6948, %v7481
        %v7483 = vand.u32 %v7482, 4294901760
        %v7484 = vsub.f32 %v7482, %v7483
        %v7485 = vand.u32 %v7484, 4294901760
        %7486 = vmatmul.f32.gmra.mxu0 %v7485
        %v7487 = vpop.f32.mrf.mxu0
        %v7488 = vadd.f32 %v6936, %v7487
        %7489 = vdwg.mxu0
        %7490 = vmatpush.msra.mxu0 0.0
        %7491 = vmatpush.msra.mxu0 0.0
        %7492 = vmatpush.msra.mxu0 0.0
        %7493 = vmatpush.msra.mxu0 0.0
        %7494 = vmatpush.msra.mxu0 0.0
        %7495 = vmatpush.msra.mxu0 0.0
        %7496 = vmatpush.msra.mxu0 0.0
        %7497 = vmatpush.msra.mxu0 0.0
        %7498 = vmatpush.msra.mxu0 0.0
        %7499 = vmatpush.msra.mxu0 0.0
        %7500 = vmatpush.msra.mxu0 0.0
        %7501 = vmatpush.msra.mxu0 0.0
        %7502 = vmatpush.msra.mxu0 0.0
        %7503 = vmatpush.msra.mxu0 0.0
        %7504 = vmatpush.msra.mxu0 0.0
        %v7505 = vand.u32 %v6957, 4294901760
        %v7506 = vsub.f32 %v6957, %v7505
        %v7507 = vand.u32 %v7506, 4294901760
        %v7508 = vsub.f32 %v7506, %v7507
        %v7509 = vand.u32 %v7508, 4294901760
        %7510 = vmatpush.msra.mxu0 %v7509
        %v7511 = vand.u32 %v6939, 4294901760
        %7512 = vmatmul.f32.gmra.mxu0 %v7511
        %v7513 = vpop.f32.mrf.mxu0
        %v7514 = vadd.f32 %v7464, %v7513
        %v7515 = vand.u32 %v6942, 4294901760
        %7516 = vmatmul.f32.gmra.mxu0 %v7515
        %v7517 = vpop.f32.mrf.mxu0
        %v7518 = vadd.f32 %v7472, %v7517
        %v7519 = vand.u32 %v6945, 4294901760
        %7520 = vmatmul.f32.gmra.mxu0 %v7519
        %v7521 = vpop.f32.mrf.mxu0
        %v7522 = vadd.f32 %v7480, %v7521
        %v7523 = vand.u32 %v6948, 4294901760
        %7524 = vmatmul.f32.gmra.mxu0 %v7523
        %v7525 = vpop.f32.mrf.mxu0
        %v7526 = vadd.f32 %v7488, %v7525
        %7527 = vdwg.mxu0
        %7528 = vmatpush.msra.mxu0 0.0
        %7529 = vmatpush.msra.mxu0 0.0
        %7530 = vmatpush.msra.mxu0 0.0
        %7531 = vmatpush.msra.mxu0 0.0
        %7532 = vmatpush.msra.mxu0 0.0
        %7533 = vmatpush.msra.mxu0 0.0
        %7534 = vmatpush.msra.mxu0 0.0
        %7535 = vmatpush.msra.mxu0 0.0
        %7536 = vmatpush.msra.mxu0 0.0
        %7537 = vmatpush.msra.mxu0 0.0
        %7538 = vmatpush.msra.mxu0 0.0
        %7539 = vmatpush.msra.mxu0 0.0
        %7540 = vmatpush.msra.mxu0 0.0
        %7541 = vmatpush.msra.mxu0 0.0
        %7542 = vmatpush.msra.mxu0 0.0
        %v7543 = vand.u32 %v6957, 4294901760
        %v7544 = vsub.f32 %v6957, %v7543
        %7545 = vmatpush.msra.mxu0 %v7544
        %v7546 = vand.u32 %v6939, 4294901760
        %v7547 = vsub.f32 %v6939, %v7546
        %7548 = vmatmul.f32.gmra.mxu0 %v7547
        %v7549 = vpop.f32.mrf.mxu0
        %v7550 = vadd.f32 %v7514, %v7549
        %v7551 = vand.u32 %v6942, 4294901760
        %v7552 = vsub.f32 %v6942, %v7551
        %7553 = vmatmul.f32.gmra.mxu0 %v7552
        %v7554 = vpop.f32.mrf.mxu0
        %v7555 = vadd.f32 %v7518, %v7554
        %v7556 = vand.u32 %v6945, 4294901760
        %v7557 = vsub.f32 %v6945, %v7556
        %7558 = vmatmul.f32.gmra.mxu0 %v7557
        %v7559 = vpop.f32.mrf.mxu0
        %v7560 = vadd.f32 %v7522, %v7559
        %v7561 = vand.u32 %v6948, 4294901760
        %v7562 = vsub.f32 %v6948, %v7561
        %7563 = vmatmul.f32.gmra.mxu0 %v7562
        %v7564 = vpop.f32.mrf.mxu0
        %v7565 = vadd.f32 %v7526, %v7564
        %7566 = vdwg.mxu0
        %7567 = vmatpush.msra.mxu0 0.0
        %7568 = vmatpush.msra.mxu0 0.0
        %7569 = vmatpush.msra.mxu0 0.0
        %7570 = vmatpush.msra.mxu0 0.0
        %7571 = vmatpush.msra.mxu0 0.0
        %7572 = vmatpush.msra.mxu0 0.0
        %7573 = vmatpush.msra.mxu0 0.0
        %7574 = vmatpush.msra.mxu0 0.0
        %7575 = vmatpush.msra.mxu0 0.0
        %7576 = vmatpush.msra.mxu0 0.0
        %7577 = vmatpush.msra.mxu0 0.0
        %7578 = vmatpush.msra.mxu0 0.0
        %7579 = vmatpush.msra.mxu0 0.0
        %7580 = vmatpush.msra.mxu0 0.0
        %7581 = vmatpush.msra.mxu0 0.0
        %v7582 = vand.u32 %v6957, 4294901760
        %7583 = vmatpush.msra.mxu0 %v7582
        %v7584 = vand.u32 %v6939, 4294901760
        %v7585 = vsub.f32 %v6939, %v7584
        %v7586 = vand.u32 %v7585, 4294901760
        %7587 = vmatmul.f32.gmra.mxu0 %v7586
        %v7588 = vpop.f32.mrf.mxu0
        %v7589 = vadd.f32 %v7550, %v7588
        %v7590 = vand.u32 %v6942, 4294901760
        %v7591 = vsub.f32 %v6942, %v7590
        %v7592 = vand.u32 %v7591, 4294901760
        %7593 = vmatmul.f32.gmra.mxu0 %v7592
        %v7594 = vpop.f32.mrf.mxu0
        %v7595 = vadd.f32 %v7555, %v7594
        %v7596 = vand.u32 %v6945, 4294901760
        %v7597 = vsub.f32 %v6945, %v7596
        %v7598 = vand.u32 %v7597, 4294901760
        %7599 = vmatmul.f32.gmra.mxu0 %v7598
        %v7600 = vpop.f32.mrf.mxu0
        %v7601 = vadd.f32 %v7560, %v7600
        %v7602 = vand.u32 %v6948, 4294901760
        %v7603 = vsub.f32 %v6948, %v7602
        %v7604 = vand.u32 %v7603, 4294901760
        %7605 = vmatmul.f32.gmra.mxu0 %v7604
        %v7606 = vpop.f32.mrf.mxu0
        %v7607 = vadd.f32 %v7565, %v7606
        %7608 = vdwg.mxu0
        %7609 = vmatpush.msra.mxu0 0.0
        %7610 = vmatpush.msra.mxu0 0.0
        %7611 = vmatpush.msra.mxu0 0.0
        %7612 = vmatpush.msra.mxu0 0.0
        %7613 = vmatpush.msra.mxu0 0.0
        %7614 = vmatpush.msra.mxu0 0.0
        %7615 = vmatpush.msra.mxu0 0.0
        %7616 = vmatpush.msra.mxu0 0.0
        %7617 = vmatpush.msra.mxu0 0.0
        %7618 = vmatpush.msra.mxu0 0.0
        %7619 = vmatpush.msra.mxu0 0.0
        %7620 = vmatpush.msra.mxu0 0.0
        %7621 = vmatpush.msra.mxu0 0.0
        %7622 = vmatpush.msra.mxu0 0.0
        %7623 = vmatpush.msra.mxu0 0.0
        %v7624 = vand.u32 %v6957, 4294901760
        %v7625 = vsub.f32 %v6957, %v7624
        %v7626 = vand.u32 %v7625, 4294901760
        %7627 = vmatpush.msra.mxu0 %v7626
        %v7628 = vand.u32 %v6939, 4294901760
        %7629 = vmatmul.f32.gmra.mxu0 %v7628
        %v7630 = vpop.f32.mrf.mxu0
        %v7631 = vadd.f32 %v7589, %v7630
        %v7632 = vand.u32 %v6942, 4294901760
        %7633 = vmatmul.f32.gmra.mxu0 %v7632
        %v7634 = vpop.f32.mrf.mxu0
        %v7635 = vadd.f32 %v7595, %v7634
        %v7636 = vand.u32 %v6945, 4294901760
        %7637 = vmatmul.f32.gmra.mxu0 %v7636
        %v7638 = vpop.f32.mrf.mxu0
        %v7639 = vadd.f32 %v7601, %v7638
        %v7640 = vand.u32 %v6948, 4294901760
        %7641 = vmatmul.f32.gmra.mxu0 %v7640
        %v7642 = vpop.f32.mrf.mxu0
        %v7643 = vadd.f32 %v7607, %v7642
        %7644 = vdwg.mxu0
        %7645 = vmatpush.msra.mxu0 0.0
        %7646 = vmatpush.msra.mxu0 0.0
        %7647 = vmatpush.msra.mxu0 0.0
        %7648 = vmatpush.msra.mxu0 0.0
        %7649 = vmatpush.msra.mxu0 0.0
        %7650 = vmatpush.msra.mxu0 0.0
        %7651 = vmatpush.msra.mxu0 0.0
        %7652 = vmatpush.msra.mxu0 0.0
        %7653 = vmatpush.msra.mxu0 0.0
        %7654 = vmatpush.msra.mxu0 0.0
        %7655 = vmatpush.msra.mxu0 0.0
        %7656 = vmatpush.msra.mxu0 0.0
        %7657 = vmatpush.msra.mxu0 0.0
        %7658 = vmatpush.msra.mxu0 0.0
        %7659 = vmatpush.msra.mxu0 0.0
        %v7660 = vand.u32 %v6957, 4294901760
        %7661 = vmatpush.msra.mxu0 %v7660
        %v7662 = vand.u32 %v6939, 4294901760
        %7663 = vmatmul.f32.gmra.mxu0 %v7662
        %v7664 = vpop.f32.mrf.mxu0
        %v7665 = vadd.f32 %v7631, %v7664
        %v7666 = vand.u32 %v6942, 4294901760
        %7667 = vmatmul.f32.gmra.mxu0 %v7666
        %v7668 = vpop.f32.mrf.mxu0
        %v7669 = vadd.f32 %v7635, %v7668
        %v7670 = vand.u32 %v6945, 4294901760
        %7671 = vmatmul.f32.gmra.mxu0 %v7670
        %v7672 = vpop.f32.mrf.mxu0
        %v7673 = vadd.f32 %v7639, %v7672
        %v7674 = vand.u32 %v6948, 4294901760
        %7675 = vmatmul.f32.gmra.mxu0 %v7674
        %v7676 = vpop.f32.mrf.mxu0
        %v7677 = vadd.f32 %v7643, %v7676
        %7678 = vdwg.mxu0
        %7679 = vmatpush.msra.mxu0 0.0
        %7680 = vmatpush.msra.mxu0 0.0
        %7681 = vmatpush.msra.mxu0 0.0
        %7682 = vmatpush.msra.mxu0 0.0
        %7683 = vmatpush.msra.mxu0 0.0
        %7684 = vmatpush.msra.mxu0 0.0
        %7685 = vmatpush.msra.mxu0 0.0
        %7686 = vmatpush.msra.mxu0 0.0
        %7687 = vmatpush.msra.mxu0 0.0
        %7688 = vmatpush.msra.mxu0 0.0
        %7689 = vmatpush.msra.mxu0 0.0
        %7690 = vmatpush.msra.mxu0 0.0
        %7691 = vmatpush.msra.mxu0 0.0
        %7692 = vmatpush.msra.mxu0 0.0
        %7693 = vmatpush.msra.mxu0 0.0
        %v7694 = vand.u32 %v6960, 4294901760
        %7695 = vmatpush.msra.mxu0 %v7694
        %v7696 = vand.u32 %v6939, 4294901760
        %v7697 = vsub.f32 %v6939, %v7696
        %v7698 = vand.u32 %v7697, 4294901760
        %v7699 = vsub.f32 %v7697, %v7698
        %v7700 = vand.u32 %v7699, 4294901760
        %7701 = vmatmul.f32.gmra.mxu0 %v7700
        %v7702 = vpop.f32.mrf.mxu0
        %v7703 = vadd.f32 %v6921, %v7702
        %v7704 = vand.u32 %v6942, 4294901760
        %v7705 = vsub.f32 %v6942, %v7704
        %v7706 = vand.u32 %v7705, 4294901760
        %v7707 = vsub.f32 %v7705, %v7706
        %v7708 = vand.u32 %v7707, 4294901760
        %7709 = vmatmul.f32.gmra.mxu0 %v7708
        %v7710 = vpop.f32.mrf.mxu0
        %v7711 = vadd.f32 %v6926, %v7710
        %v7712 = vand.u32 %v6945, 4294901760
        %v7713 = vsub.f32 %v6945, %v7712
        %v7714 = vand.u32 %v7713, 4294901760
        %v7715 = vsub.f32 %v7713, %v7714
        %v7716 = vand.u32 %v7715, 4294901760
        %7717 = vmatmul.f32.gmra.mxu0 %v7716
        %v7718 = vpop.f32.mrf.mxu0
        %v7719 = vadd.f32 %v6931, %v7718
        %v7720 = vand.u32 %v6948, 4294901760
        %v7721 = vsub.f32 %v6948, %v7720
        %v7722 = vand.u32 %v7721, 4294901760
        %v7723 = vsub.f32 %v7721, %v7722
        %v7724 = vand.u32 %v7723, 4294901760
        %7725 = vmatmul.f32.gmra.mxu0 %v7724
        %v7726 = vpop.f32.mrf.mxu0
        %v7727 = vadd.f32 %v6936, %v7726
        %7728 = vdwg.mxu0
        %7729 = vmatpush.msra.mxu0 0.0
        %7730 = vmatpush.msra.mxu0 0.0
        %7731 = vmatpush.msra.mxu0 0.0
        %7732 = vmatpush.msra.mxu0 0.0
        %7733 = vmatpush.msra.mxu0 0.0
        %7734 = vmatpush.msra.mxu0 0.0
        %7735 = vmatpush.msra.mxu0 0.0
        %7736 = vmatpush.msra.mxu0 0.0
        %7737 = vmatpush.msra.mxu0 0.0
        %7738 = vmatpush.msra.mxu0 0.0
        %7739 = vmatpush.msra.mxu0 0.0
        %7740 = vmatpush.msra.mxu0 0.0
        %7741 = vmatpush.msra.mxu0 0.0
        %7742 = vmatpush.msra.mxu0 0.0
        %7743 = vmatpush.msra.mxu0 0.0
        %v7744 = vand.u32 %v6960, 4294901760
        %v7745 = vsub.f32 %v6960, %v7744
        %v7746 = vand.u32 %v7745, 4294901760
        %v7747 = vsub.f32 %v7745, %v7746
        %v7748 = vand.u32 %v7747, 4294901760
        %7749 = vmatpush.msra.mxu0 %v7748
        %v7750 = vand.u32 %v6939, 4294901760
        %7751 = vmatmul.f32.gmra.mxu0 %v7750
        %v7752 = vpop.f32.mrf.mxu0
        %v7753 = vadd.f32 %v7703, %v7752
        %v7754 = vand.u32 %v6942, 4294901760
        %7755 = vmatmul.f32.gmra.mxu0 %v7754
        %v7756 = vpop.f32.mrf.mxu0
        %v7757 = vadd.f32 %v7711, %v7756
        %v7758 = vand.u32 %v6945, 4294901760
        %7759 = vmatmul.f32.gmra.mxu0 %v7758
        %v7760 = vpop.f32.mrf.mxu0
        %v7761 = vadd.f32 %v7719, %v7760
        %v7762 = vand.u32 %v6948, 4294901760
        %7763 = vmatmul.f32.gmra.mxu0 %v7762
        %v7764 = vpop.f32.mrf.mxu0
        %v7765 = vadd.f32 %v7727, %v7764
        %7766 = vdwg.mxu0
        %7767 = vmatpush.msra.mxu0 0.0
        %7768 = vmatpush.msra.mxu0 0.0
        %7769 = vmatpush.msra.mxu0 0.0
        %7770 = vmatpush.msra.mxu0 0.0
        %7771 = vmatpush.msra.mxu0 0.0
        %7772 = vmatpush.msra.mxu0 0.0
        %7773 = vmatpush.msra.mxu0 0.0
        %7774 = vmatpush.msra.mxu0 0.0
        %7775 = vmatpush.msra.mxu0 0.0
        %7776 = vmatpush.msra.mxu0 0.0
        %7777 = vmatpush.msra.mxu0 0.0
        %7778 = vmatpush.msra.mxu0 0.0
        %7779 = vmatpush.msra.mxu0 0.0
        %7780 = vmatpush.msra.mxu0 0.0
        %7781 = vmatpush.msra.mxu0 0.0
        %v7782 = vand.u32 %v6960, 4294901760
        %v7783 = vsub.f32 %v6960, %v7782
        %7784 = vmatpush.msra.mxu0 %v7783
        %v7785 = vand.u32 %v6939, 4294901760
        %v7786 = vsub.f32 %v6939, %v7785
        %7787 = vmatmul.f32.gmra.mxu0 %v7786
        %v7788 = vpop.f32.mrf.mxu0
        %v7789 = vadd.f32 %v7753, %v7788
        %v7790 = vand.u32 %v6942, 4294901760
        %v7791 = vsub.f32 %v6942, %v7790
        %7792 = vmatmul.f32.gmra.mxu0 %v7791
        %v7793 = vpop.f32.mrf.mxu0
        %v7794 = vadd.f32 %v7757, %v7793
        %v7795 = vand.u32 %v6945, 4294901760
        %v7796 = vsub.f32 %v6945, %v7795
        %7797 = vmatmul.f32.gmra.mxu0 %v7796
        %v7798 = vpop.f32.mrf.mxu0
        %v7799 = vadd.f32 %v7761, %v7798
        %v7800 = vand.u32 %v6948, 4294901760
        %v7801 = vsub.f32 %v6948, %v7800
        %7802 = vmatmul.f32.gmra.mxu0 %v7801
        %v7803 = vpop.f32.mrf.mxu0
        %v7804 = vadd.f32 %v7765, %v7803
        %7805 = vdwg.mxu0
        %7806 = vmatpush.msra.mxu0 0.0
        %7807 = vmatpush.msra.mxu0 0.0
        %7808 = vmatpush.msra.mxu0 0.0
        %7809 = vmatpush.msra.mxu0 0.0
        %7810 = vmatpush.msra.mxu0 0.0
        %7811 = vmatpush.msra.mxu0 0.0
        %7812 = vmatpush.msra.mxu0 0.0
        %7813 = vmatpush.msra.mxu0 0.0
        %7814 = vmatpush.msra.mxu0 0.0
        %7815 = vmatpush.msra.mxu0 0.0
        %7816 = vmatpush.msra.mxu0 0.0
        %7817 = vmatpush.msra.mxu0 0.0
        %7818 = vmatpush.msra.mxu0 0.0
        %7819 = vmatpush.msra.mxu0 0.0
        %7820 = vmatpush.msra.mxu0 0.0
        %v7821 = vand.u32 %v6960, 4294901760
        %7822 = vmatpush.msra.mxu0 %v7821
        %v7823 = vand.u32 %v6939, 4294901760
        %v7824 = vsub.f32 %v6939, %v7823
        %v7825 = vand.u32 %v7824, 4294901760
        %7826 = vmatmul.f32.gmra.mxu0 %v7825
        %v7827 = vpop.f32.mrf.mxu0
        %v7828 = vadd.f32 %v7789, %v7827
        %v7829 = vand.u32 %v6942, 4294901760
        %v7830 = vsub.f32 %v6942, %v7829
        %v7831 = vand.u32 %v7830, 4294901760
        %7832 = vmatmul.f32.gmra.mxu0 %v7831
        %v7833 = vpop.f32.mrf.mxu0
        %v7834 = vadd.f32 %v7794, %v7833
        %v7835 = vand.u32 %v6945, 4294901760
        %v7836 = vsub.f32 %v6945, %v7835
        %v7837 = vand.u32 %v7836, 4294901760
        %7838 = vmatmul.f32.gmra.mxu0 %v7837
        %v7839 = vpop.f32.mrf.mxu0
        %v7840 = vadd.f32 %v7799, %v7839
        %v7841 = vand.u32 %v6948, 4294901760
        %v7842 = vsub.f32 %v6948, %v7841
        %v7843 = vand.u32 %v7842, 4294901760
        %7844 = vmatmul.f32.gmra.mxu0 %v7843
        %v7845 = vpop.f32.mrf.mxu0
        %v7846 = vadd.f32 %v7804, %v7845
        %7847 = vdwg.mxu0
        %7848 = vmatpush.msra.mxu0 0.0
        %7849 = vmatpush.msra.mxu0 0.0
        %7850 = vmatpush.msra.mxu0 0.0
        %7851 = vmatpush.msra.mxu0 0.0
        %7852 = vmatpush.msra.mxu0 0.0
        %7853 = vmatpush.msra.mxu0 0.0
        %7854 = vmatpush.msra.mxu0 0.0
        %7855 = vmatpush.msra.mxu0 0.0
        %7856 = vmatpush.msra.mxu0 0.0
        %7857 = vmatpush.msra.mxu0 0.0
        %7858 = vmatpush.msra.mxu0 0.0
        %7859 = vmatpush.msra.mxu0 0.0
        %7860 = vmatpush.msra.mxu0 0.0
        %7861 = vmatpush.msra.mxu0 0.0
        %7862 = vmatpush.msra.mxu0 0.0
        %v7863 = vand.u32 %v6960, 4294901760
        %v7864 = vsub.f32 %v6960, %v7863
        %v7865 = vand.u32 %v7864, 4294901760
        %7866 = vmatpush.msra.mxu0 %v7865
        %v7867 = vand.u32 %v6939, 4294901760
        %7868 = vmatmul.f32.gmra.mxu0 %v7867
        %v7869 = vpop.f32.mrf.mxu0
        %v7870 = vadd.f32 %v7828, %v7869
        %v7871 = vand.u32 %v6942, 4294901760
        %7872 = vmatmul.f32.gmra.mxu0 %v7871
        %v7873 = vpop.f32.mrf.mxu0
        %v7874 = vadd.f32 %v7834, %v7873
        %v7875 = vand.u32 %v6945, 4294901760
        %7876 = vmatmul.f32.gmra.mxu0 %v7875
        %v7877 = vpop.f32.mrf.mxu0
        %v7878 = vadd.f32 %v7840, %v7877
        %v7879 = vand.u32 %v6948, 4294901760
        %7880 = vmatmul.f32.gmra.mxu0 %v7879
        %v7881 = vpop.f32.mrf.mxu0
        %v7882 = vadd.f32 %v7846, %v7881
        %7883 = vdwg.mxu0
        %7884 = vmatpush.msra.mxu0 0.0
        %7885 = vmatpush.msra.mxu0 0.0
        %7886 = vmatpush.msra.mxu0 0.0
        %7887 = vmatpush.msra.mxu0 0.0
        %7888 = vmatpush.msra.mxu0 0.0
        %7889 = vmatpush.msra.mxu0 0.0
        %7890 = vmatpush.msra.mxu0 0.0
        %7891 = vmatpush.msra.mxu0 0.0
        %7892 = vmatpush.msra.mxu0 0.0
        %7893 = vmatpush.msra.mxu0 0.0
        %7894 = vmatpush.msra.mxu0 0.0
        %7895 = vmatpush.msra.mxu0 0.0
        %7896 = vmatpush.msra.mxu0 0.0
        %7897 = vmatpush.msra.mxu0 0.0
        %7898 = vmatpush.msra.mxu0 0.0
        %v7899 = vand.u32 %v6960, 4294901760
        %7900 = vmatpush.msra.mxu0 %v7899
        %v7901 = vand.u32 %v6939, 4294901760
        %7902 = vmatmul.f32.gmra.mxu0 %v7901
        %v7903 = vpop.f32.mrf.mxu0
        %v7904 = vadd.f32 %v7870, %v7903
        %v7905 = vand.u32 %v6942, 4294901760
        %7906 = vmatmul.f32.gmra.mxu0 %v7905
        %v7907 = vpop.f32.mrf.mxu0
        %v7908 = vadd.f32 %v7874, %v7907
        %v7909 = vand.u32 %v6945, 4294901760
        %7910 = vmatmul.f32.gmra.mxu0 %v7909
        %v7911 = vpop.f32.mrf.mxu0
        %v7912 = vadd.f32 %v7878, %v7911
        %v7913 = vand.u32 %v6948, 4294901760
        %7914 = vmatmul.f32.gmra.mxu0 %v7913
        %v7915 = vpop.f32.mrf.mxu0
        %v7916 = vadd.f32 %v7882, %v7915
        %7917 = vdwg.mxu0
        %v7918 = vmax.f32 %v7187, 0.0
        %v7919 = vmax.f32 %v7426, 0.0
        %v7920 = vmax.f32 %v7665, 0.0
        %v7921 = vmax.f32 %v7904, 0.0
        %v7922 = vmax.f32 %v7191, 0.0
        %v7923 = vmax.f32 %v7430, 0.0
        %v7924 = vmax.f32 %v7669, 0.0
        %v7925 = vmax.f32 %v7908, 0.0
        %v7926 = vmax.f32 %v7195, 0.0
        %v7927 = vmax.f32 %v7434, 0.0
        %v7928 = vmax.f32 %v7673, 0.0
        %v7929 = vmax.f32 %v7912, 0.0
        %v7930 = vmax.f32 %v7199, 0.0
        %v7931 = vmax.f32 %v7438, 0.0
        %v7932 = vmax.f32 %v7677, 0.0
        %v7933 = vmax.f32 %v7916, 0.0
        %v7934 = vld [vmem:[%s2 + $0xc8] sm:$0x7]
        %v7935 = vld [vmem:[%s3 + $0x78] sm:$0x7]
        %7937 = vset.pattern.permute.xlu0 0
        %7938 = vperm.xlu0 %7937, %v7935
        %v7939 = vpop.permute.xlu0 %7938
        %v7942 = vsel %vm4166, %v7934, 0
        %7944 = vmatpush.msra.mxu0 0.0
        %7945 = vmatpush.msra.mxu0 0.0
        %7946 = vmatpush.msra.mxu0 0.0
        %7947 = vmatpush.msra.mxu0 0.0
        %7948 = vmatpush.msra.mxu0 0.0
        %7949 = vmatpush.msra.mxu0 0.0
        %7950 = vmatpush.msra.mxu0 0.0
        %7951 = vmatpush.msra.mxu0 0.0
        %7952 = vmatpush.msra.mxu0 0.0
        %7953 = vmatpush.msra.mxu0 0.0
        %7954 = vmatpush.msra.mxu0 0.0
        %7955 = vmatpush.msra.mxu0 0.0
        %v7956 = vand.u32 %v7930, 4294901760
        %7957 = vmatpush.msra.mxu0 %v7956
        %v7958 = vand.u32 %v7926, 4294901760
        %7959 = vmatpush.msra.mxu0 %v7958
        %v7960 = vand.u32 %v7922, 4294901760
        %7961 = vmatpush.msra.mxu0 %v7960
        %v7962 = vand.u32 %v7918, 4294901760
        %7963 = vmatpush.msra.mxu0 %v7962
        %v7964 = vand.u32 %v7942, 4294901760
        %v7965 = vsub.f32 %v7942, %v7964
        %v7966 = vand.u32 %v7965, 4294901760
        %v7967 = vsub.f32 %v7965, %v7966
        %v7968 = vand.u32 %v7967, 4294901760
        %7969 = vmatmul.f32.gmra.mxu0 %v7968
        %v7970 = vpop.f32.mrf.mxu0
        %v7971 = vadd.f32 %v7939, %v7970
        %7972 = vdwg.mxu0
        %7973 = vmatpush.msra.mxu0 0.0
        %7974 = vmatpush.msra.mxu0 0.0
        %7975 = vmatpush.msra.mxu0 0.0
        %7976 = vmatpush.msra.mxu0 0.0
        %7977 = vmatpush.msra.mxu0 0.0
        %7978 = vmatpush.msra.mxu0 0.0
        %7979 = vmatpush.msra.mxu0 0.0
        %7980 = vmatpush.msra.mxu0 0.0
        %7981 = vmatpush.msra.mxu0 0.0
        %7982 = vmatpush.msra.mxu0 0.0
        %7983 = vmatpush.msra.mxu0 0.0
        %7984 = vmatpush.msra.mxu0 0.0
        %v7985 = vand.u32 %v7930, 4294901760
        %v7986 = vsub.f32 %v7930, %v7985
        %v7987 = vand.u32 %v7986, 4294901760
        %v7988 = vsub.f32 %v7986, %v7987
        %v7989 = vand.u32 %v7988, 4294901760
        %7990 = vmatpush.msra.mxu0 %v7989
        %v7991 = vand.u32 %v7926, 4294901760
        %v7992 = vsub.f32 %v7926, %v7991
        %v7993 = vand.u32 %v7992, 4294901760
        %v7994 = vsub.f32 %v7992, %v7993
        %v7995 = vand.u32 %v7994, 4294901760
        %7996 = vmatpush.msra.mxu0 %v7995
        %v7997 = vand.u32 %v7922, 4294901760
        %v7998 = vsub.f32 %v7922, %v7997
        %v7999 = vand.u32 %v7998, 4294901760
        %v8000 = vsub.f32 %v7998, %v7999
        %v8001 = vand.u32 %v8000, 4294901760
        %8002 = vmatpush.msra.mxu0 %v8001
        %v8003 = vand.u32 %v7918, 4294901760
        %v8004 = vsub.f32 %v7918, %v8003
        %v8005 = vand.u32 %v8004, 4294901760
        %v8006 = vsub.f32 %v8004, %v8005
        %v8007 = vand.u32 %v8006, 4294901760
        %8008 = vmatpush.msra.mxu0 %v8007
        %v8009 = vand.u32 %v7942, 4294901760
        %8010 = vmatmul.f32.gmra.mxu0 %v8009
        %v8011 = vpop.f32.mrf.mxu0
        %v8012 = vadd.f32 %v7971, %v8011
        %8013 = vdwg.mxu0
        %8014 = vmatpush.msra.mxu0 0.0
        %8015 = vmatpush.msra.mxu0 0.0
        %8016 = vmatpush.msra.mxu0 0.0
        %8017 = vmatpush.msra.mxu0 0.0
        %8018 = vmatpush.msra.mxu0 0.0
        %8019 = vmatpush.msra.mxu0 0.0
        %8020 = vmatpush.msra.mxu0 0.0
        %8021 = vmatpush.msra.mxu0 0.0
        %8022 = vmatpush.msra.mxu0 0.0
        %8023 = vmatpush.msra.mxu0 0.0
        %8024 = vmatpush.msra.mxu0 0.0
        %8025 = vmatpush.msra.mxu0 0.0
        %v8026 = vand.u32 %v7930, 4294901760
        %v8027 = vsub.f32 %v7930, %v8026
        %8028 = vmatpush.msra.mxu0 %v8027
        %v8029 = vand.u32 %v7926, 4294901760
        %v8030 = vsub.f32 %v7926, %v8029
        %8031 = vmatpush.msra.mxu0 %v8030
        %v8032 = vand.u32 %v7922, 4294901760
        %v8033 = vsub.f32 %v7922, %v8032
        %8034 = vmatpush.msra.mxu0 %v8033
        %v8035 = vand.u32 %v7918, 4294901760
        %v8036 = vsub.f32 %v7918, %v8035
        %8037 = vmatpush.msra.mxu0 %v8036
        %v8038 = vand.u32 %v7942, 4294901760
        %v8039 = vsub.f32 %v7942, %v8038
        %8040 = vmatmul.f32.gmra.mxu0 %v8039
        %v8041 = vpop.f32.mrf.mxu0
        %v8042 = vadd.f32 %v8012, %v8041
        %8043 = vdwg.mxu0
        %8044 = vmatpush.msra.mxu0 0.0
        %8045 = vmatpush.msra.mxu0 0.0
        %8046 = vmatpush.msra.mxu0 0.0
        %8047 = vmatpush.msra.mxu0 0.0
        %8048 = vmatpush.msra.mxu0 0.0
        %8049 = vmatpush.msra.mxu0 0.0
        %8050 = vmatpush.msra.mxu0 0.0
        %8051 = vmatpush.msra.mxu0 0.0
        %8052 = vmatpush.msra.mxu0 0.0
        %8053 = vmatpush.msra.mxu0 0.0
        %8054 = vmatpush.msra.mxu0 0.0
        %8055 = vmatpush.msra.mxu0 0.0
        %v8056 = vand.u32 %v7930, 4294901760
        %8057 = vmatpush.msra.mxu0 %v8056
        %v8058 = vand.u32 %v7926, 4294901760
        %8059 = vmatpush.msra.mxu0 %v8058
        %v8060 = vand.u32 %v7922, 4294901760
        %8061 = vmatpush.msra.mxu0 %v8060
        %v8062 = vand.u32 %v7918, 4294901760
        %8063 = vmatpush.msra.mxu0 %v8062
        %v8064 = vand.u32 %v7942, 4294901760
        %v8065 = vsub.f32 %v7942, %v8064
        %v8066 = vand.u32 %v8065, 4294901760
        %8067 = vmatmul.f32.gmra.mxu0 %v8066
        %v8068 = vpop.f32.mrf.mxu0
        %v8069 = vadd.f32 %v8042, %v8068
        %8070 = vdwg.mxu0
        %8071 = vmatpush.msra.mxu0 0.0
        %8072 = vmatpush.msra.mxu0 0.0
        %8073 = vmatpush.msra.mxu0 0.0
        %8074 = vmatpush.msra.mxu0 0.0
        %8075 = vmatpush.msra.mxu0 0.0
        %8076 = vmatpush.msra.mxu0 0.0
        %8077 = vmatpush.msra.mxu0 0.0
        %8078 = vmatpush.msra.mxu0 0.0
        %8079 = vmatpush.msra.mxu0 0.0
        %8080 = vmatpush.msra.mxu0 0.0
        %8081 = vmatpush.msra.mxu0 0.0
        %8082 = vmatpush.msra.mxu0 0.0
        %v8083 = vand.u32 %v7930, 4294901760
        %v8084 = vsub.f32 %v7930, %v8083
        %v8085 = vand.u32 %v8084, 4294901760
        %8086 = vmatpush.msra.mxu0 %v8085
        %v8087 = vand.u32 %v7926, 4294901760
        %v8088 = vsub.f32 %v7926, %v8087
        %v8089 = vand.u32 %v8088, 4294901760
        %8090 = vmatpush.msra.mxu0 %v8089
        %v8091 = vand.u32 %v7922, 4294901760
        %v8092 = vsub.f32 %v7922, %v8091
        %v8093 = vand.u32 %v8092, 4294901760
        %8094 = vmatpush.msra.mxu0 %v8093
        %v8095 = vand.u32 %v7918, 4294901760
        %v8096 = vsub.f32 %v7918, %v8095
        %v8097 = vand.u32 %v8096, 4294901760
        %8098 = vmatpush.msra.mxu0 %v8097
        %v8099 = vand.u32 %v7942, 4294901760
        %8100 = vmatmul.f32.gmra.mxu0 %v8099
        %v8101 = vpop.f32.mrf.mxu0
        %v8102 = vadd.f32 %v8069, %v8101
        %8103 = vdwg.mxu0
        %8104 = vmatpush.msra.mxu0 0.0
        %8105 = vmatpush.msra.mxu0 0.0
        %8106 = vmatpush.msra.mxu0 0.0
        %8107 = vmatpush.msra.mxu0 0.0
        %8108 = vmatpush.msra.mxu0 0.0
        %8109 = vmatpush.msra.mxu0 0.0
        %8110 = vmatpush.msra.mxu0 0.0
        %8111 = vmatpush.msra.mxu0 0.0
        %8112 = vmatpush.msra.mxu0 0.0
        %8113 = vmatpush.msra.mxu0 0.0
        %8114 = vmatpush.msra.mxu0 0.0
        %8115 = vmatpush.msra.mxu0 0.0
        %v8116 = vand.u32 %v7930, 4294901760
        %8117 = vmatpush.msra.mxu0 %v8116
        %v8118 = vand.u32 %v7926, 4294901760
        %8119 = vmatpush.msra.mxu0 %v8118
        %v8120 = vand.u32 %v7922, 4294901760
        %8121 = vmatpush.msra.mxu0 %v8120
        %v8122 = vand.u32 %v7918, 4294901760
        %8123 = vmatpush.msra.mxu0 %v8122
        %v8124 = vand.u32 %v7942, 4294901760
        %8125 = vmatmul.f32.gmra.mxu0 %v8124
        %v8126 = vpop.f32.mrf.mxu0
        %v8127 = vadd.f32 %v8102, %v8126
        %8128 = vdwg.mxu0
        %8129 = vmatpush.msra.mxu0 0.0
        %8130 = vmatpush.msra.mxu0 0.0
        %8131 = vmatpush.msra.mxu0 0.0
        %8132 = vmatpush.msra.mxu0 0.0
        %8133 = vmatpush.msra.mxu0 0.0
        %8134 = vmatpush.msra.mxu0 0.0
        %8135 = vmatpush.msra.mxu0 0.0
        %8136 = vmatpush.msra.mxu0 0.0
        %8137 = vmatpush.msra.mxu0 0.0
        %8138 = vmatpush.msra.mxu0 0.0
        %8139 = vmatpush.msra.mxu0 0.0
        %8140 = vmatpush.msra.mxu0 0.0
        %v8141 = vand.u32 %v7931, 4294901760
        %8142 = vmatpush.msra.mxu0 %v8141
        %v8143 = vand.u32 %v7927, 4294901760
        %8144 = vmatpush.msra.mxu0 %v8143
        %v8145 = vand.u32 %v7923, 4294901760
        %8146 = vmatpush.msra.mxu0 %v8145
        %v8147 = vand.u32 %v7919, 4294901760
        %8148 = vmatpush.msra.mxu0 %v8147
        %v8149 = vand.u32 %v7942, 4294901760
        %v8150 = vsub.f32 %v7942, %v8149
        %v8151 = vand.u32 %v8150, 4294901760
        %v8152 = vsub.f32 %v8150, %v8151
        %v8153 = vand.u32 %v8152, 4294901760
        %8154 = vmatmul.f32.gmra.mxu0 %v8153
        %v8155 = vpop.f32.mrf.mxu0
        %v8156 = vadd.f32 %v7939, %v8155
        %8157 = vdwg.mxu0
        %8158 = vmatpush.msra.mxu0 0.0
        %8159 = vmatpush.msra.mxu0 0.0
        %8160 = vmatpush.msra.mxu0 0.0
        %8161 = vmatpush.msra.mxu0 0.0
        %8162 = vmatpush.msra.mxu0 0.0
        %8163 = vmatpush.msra.mxu0 0.0
        %8164 = vmatpush.msra.mxu0 0.0
        %8165 = vmatpush.msra.mxu0 0.0
        %8166 = vmatpush.msra.mxu0 0.0
        %8167 = vmatpush.msra.mxu0 0.0
        %8168 = vmatpush.msra.mxu0 0.0
        %8169 = vmatpush.msra.mxu0 0.0
        %v8170 = vand.u32 %v7931, 4294901760
        %v8171 = vsub.f32 %v7931, %v8170
        %v8172 = vand.u32 %v8171, 4294901760
        %v8173 = vsub.f32 %v8171, %v8172
        %v8174 = vand.u32 %v8173, 4294901760
        %8175 = vmatpush.msra.mxu0 %v8174
        %v8176 = vand.u32 %v7927, 4294901760
        %v8177 = vsub.f32 %v7927, %v8176
        %v8178 = vand.u32 %v8177, 4294901760
        %v8179 = vsub.f32 %v8177, %v8178
        %v8180 = vand.u32 %v8179, 4294901760
        %8181 = vmatpush.msra.mxu0 %v8180
        %v8182 = vand.u32 %v7923, 4294901760
        %v8183 = vsub.f32 %v7923, %v8182
        %v8184 = vand.u32 %v8183, 4294901760
        %v8185 = vsub.f32 %v8183, %v8184
        %v8186 = vand.u32 %v8185, 4294901760
        %8187 = vmatpush.msra.mxu0 %v8186
        %v8188 = vand.u32 %v7919, 4294901760
        %v8189 = vsub.f32 %v7919, %v8188
        %v8190 = vand.u32 %v8189, 4294901760
        %v8191 = vsub.f32 %v8189, %v8190
        %v8192 = vand.u32 %v8191, 4294901760
        %8193 = vmatpush.msra.mxu0 %v8192
        %v8194 = vand.u32 %v7942, 4294901760
        %8195 = vmatmul.f32.gmra.mxu0 %v8194
        %v8196 = vpop.f32.mrf.mxu0
        %v8197 = vadd.f32 %v8156, %v8196
        %8198 = vdwg.mxu0
        %8199 = vmatpush.msra.mxu0 0.0
        %8200 = vmatpush.msra.mxu0 0.0
        %8201 = vmatpush.msra.mxu0 0.0
        %8202 = vmatpush.msra.mxu0 0.0
        %8203 = vmatpush.msra.mxu0 0.0
        %8204 = vmatpush.msra.mxu0 0.0
        %8205 = vmatpush.msra.mxu0 0.0
        %8206 = vmatpush.msra.mxu0 0.0
        %8207 = vmatpush.msra.mxu0 0.0
        %8208 = vmatpush.msra.mxu0 0.0
        %8209 = vmatpush.msra.mxu0 0.0
        %8210 = vmatpush.msra.mxu0 0.0
        %v8211 = vand.u32 %v7931, 4294901760
        %v8212 = vsub.f32 %v7931, %v8211
        %8213 = vmatpush.msra.mxu0 %v8212
        %v8214 = vand.u32 %v7927, 4294901760
        %v8215 = vsub.f32 %v7927, %v8214
        %8216 = vmatpush.msra.mxu0 %v8215
        %v8217 = vand.u32 %v7923, 4294901760
        %v8218 = vsub.f32 %v7923, %v8217
        %8219 = vmatpush.msra.mxu0 %v8218
        %v8220 = vand.u32 %v7919, 4294901760
        %v8221 = vsub.f32 %v7919, %v8220
        %8222 = vmatpush.msra.mxu0 %v8221
        %v8223 = vand.u32 %v7942, 4294901760
        %v8224 = vsub.f32 %v7942, %v8223
        %8225 = vmatmul.f32.gmra.mxu0 %v8224
        %v8226 = vpop.f32.mrf.mxu0
        %v8227 = vadd.f32 %v8197, %v8226
        %8228 = vdwg.mxu0
        %8229 = vmatpush.msra.mxu0 0.0
        %8230 = vmatpush.msra.mxu0 0.0
        %8231 = vmatpush.msra.mxu0 0.0
        %8232 = vmatpush.msra.mxu0 0.0
        %8233 = vmatpush.msra.mxu0 0.0
        %8234 = vmatpush.msra.mxu0 0.0
        %8235 = vmatpush.msra.mxu0 0.0
        %8236 = vmatpush.msra.mxu0 0.0
        %8237 = vmatpush.msra.mxu0 0.0
        %8238 = vmatpush.msra.mxu0 0.0
        %8239 = vmatpush.msra.mxu0 0.0
        %8240 = vmatpush.msra.mxu0 0.0
        %v8241 = vand.u32 %v7931, 4294901760
        %8242 = vmatpush.msra.mxu0 %v8241
        %v8243 = vand.u32 %v7927, 4294901760
        %8244 = vmatpush.msra.mxu0 %v8243
        %v8245 = vand.u32 %v7923, 4294901760
        %8246 = vmatpush.msra.mxu0 %v8245
        %v8247 = vand.u32 %v7919, 4294901760
        %8248 = vmatpush.msra.mxu0 %v8247
        %v8249 = vand.u32 %v7942, 4294901760
        %v8250 = vsub.f32 %v7942, %v8249
        %v8251 = vand.u32 %v8250, 4294901760
        %8252 = vmatmul.f32.gmra.mxu0 %v8251
        %v8253 = vpop.f32.mrf.mxu0
        %v8254 = vadd.f32 %v8227, %v8253
        %8255 = vdwg.mxu0
        %8256 = vmatpush.msra.mxu0 0.0
        %8257 = vmatpush.msra.mxu0 0.0
        %8258 = vmatpush.msra.mxu0 0.0
        %8259 = vmatpush.msra.mxu0 0.0
        %8260 = vmatpush.msra.mxu0 0.0
        %8261 = vmatpush.msra.mxu0 0.0
        %8262 = vmatpush.msra.mxu0 0.0
        %8263 = vmatpush.msra.mxu0 0.0
        %8264 = vmatpush.msra.mxu0 0.0
        %8265 = vmatpush.msra.mxu0 0.0
        %8266 = vmatpush.msra.mxu0 0.0
        %8267 = vmatpush.msra.mxu0 0.0
        %v8268 = vand.u32 %v7931, 4294901760
        %v8269 = vsub.f32 %v7931, %v8268
        %v8270 = vand.u32 %v8269, 4294901760
        %8271 = vmatpush.msra.mxu0 %v8270
        %v8272 = vand.u32 %v7927, 4294901760
        %v8273 = vsub.f32 %v7927, %v8272
        %v8274 = vand.u32 %v8273, 4294901760
        %8275 = vmatpush.msra.mxu0 %v8274
        %v8276 = vand.u32 %v7923, 4294901760
        %v8277 = vsub.f32 %v7923, %v8276
        %v8278 = vand.u32 %v8277, 4294901760
        %8279 = vmatpush.msra.mxu0 %v8278
        %v8280 = vand.u32 %v7919, 4294901760
        %v8281 = vsub.f32 %v7919, %v8280
        %v8282 = vand.u32 %v8281, 4294901760
        %8283 = vmatpush.msra.mxu0 %v8282
        %v8284 = vand.u32 %v7942, 4294901760
        %8285 = vmatmul.f32.gmra.mxu0 %v8284
        %v8286 = vpop.f32.mrf.mxu0
        %v8287 = vadd.f32 %v8254, %v8286
        %8288 = vdwg.mxu0
        %8289 = vmatpush.msra.mxu0 0.0
        %8290 = vmatpush.msra.mxu0 0.0
        %8291 = vmatpush.msra.mxu0 0.0
        %8292 = vmatpush.msra.mxu0 0.0
        %8293 = vmatpush.msra.mxu0 0.0
        %8294 = vmatpush.msra.mxu0 0.0
        %8295 = vmatpush.msra.mxu0 0.0
        %8296 = vmatpush.msra.mxu0 0.0
        %8297 = vmatpush.msra.mxu0 0.0
        %8298 = vmatpush.msra.mxu0 0.0
        %8299 = vmatpush.msra.mxu0 0.0
        %8300 = vmatpush.msra.mxu0 0.0
        %v8301 = vand.u32 %v7931, 4294901760
        %8302 = vmatpush.msra.mxu0 %v8301
        %v8303 = vand.u32 %v7927, 4294901760
        %8304 = vmatpush.msra.mxu0 %v8303
        %v8305 = vand.u32 %v7923, 4294901760
        %8306 = vmatpush.msra.mxu0 %v8305
        %v8307 = vand.u32 %v7919, 4294901760
        %8308 = vmatpush.msra.mxu0 %v8307
        %v8309 = vand.u32 %v7942, 4294901760
        %8310 = vmatmul.f32.gmra.mxu0 %v8309
        %v8311 = vpop.f32.mrf.mxu0
        %v8312 = vadd.f32 %v8287, %v8311
        %8313 = vdwg.mxu0
        %8314 = vmatpush.msra.mxu0 0.0
        %8315 = vmatpush.msra.mxu0 0.0
        %8316 = vmatpush.msra.mxu0 0.0
        %8317 = vmatpush.msra.mxu0 0.0
        %8318 = vmatpush.msra.mxu0 0.0
        %8319 = vmatpush.msra.mxu0 0.0
        %8320 = vmatpush.msra.mxu0 0.0
        %8321 = vmatpush.msra.mxu0 0.0
        %8322 = vmatpush.msra.mxu0 0.0
        %8323 = vmatpush.msra.mxu0 0.0
        %8324 = vmatpush.msra.mxu0 0.0
        %8325 = vmatpush.msra.mxu0 0.0
        %v8326 = vand.u32 %v7932, 4294901760
        %8327 = vmatpush.msra.mxu0 %v8326
        %v8328 = vand.u32 %v7928, 4294901760
        %8329 = vmatpush.msra.mxu0 %v8328
        %v8330 = vand.u32 %v7924, 4294901760
        %8331 = vmatpush.msra.mxu0 %v8330
        %v8332 = vand.u32 %v7920, 4294901760
        %8333 = vmatpush.msra.mxu0 %v8332
        %v8334 = vand.u32 %v7942, 4294901760
        %v8335 = vsub.f32 %v7942, %v8334
        %v8336 = vand.u32 %v8335, 4294901760
        %v8337 = vsub.f32 %v8335, %v8336
        %v8338 = vand.u32 %v8337, 4294901760
        %8339 = vmatmul.f32.gmra.mxu0 %v8338
        %v8340 = vpop.f32.mrf.mxu0
        %v8341 = vadd.f32 %v7939, %v8340
        %8342 = vdwg.mxu0
        %8343 = vmatpush.msra.mxu0 0.0
        %8344 = vmatpush.msra.mxu0 0.0
        %8345 = vmatpush.msra.mxu0 0.0
        %8346 = vmatpush.msra.mxu0 0.0
        %8347 = vmatpush.msra.mxu0 0.0
        %8348 = vmatpush.msra.mxu0 0.0
        %8349 = vmatpush.msra.mxu0 0.0
        %8350 = vmatpush.msra.mxu0 0.0
        %8351 = vmatpush.msra.mxu0 0.0
        %8352 = vmatpush.msra.mxu0 0.0
        %8353 = vmatpush.msra.mxu0 0.0
        %8354 = vmatpush.msra.mxu0 0.0
        %v8355 = vand.u32 %v7932, 4294901760
        %v8356 = vsub.f32 %v7932, %v8355
        %v8357 = vand.u32 %v8356, 4294901760
        %v8358 = vsub.f32 %v8356, %v8357
        %v8359 = vand.u32 %v8358, 4294901760
        %8360 = vmatpush.msra.mxu0 %v8359
        %v8361 = vand.u32 %v7928, 4294901760
        %v8362 = vsub.f32 %v7928, %v8361
        %v8363 = vand.u32 %v8362, 4294901760
        %v8364 = vsub.f32 %v8362, %v8363
        %v8365 = vand.u32 %v8364, 4294901760
        %8366 = vmatpush.msra.mxu0 %v8365
        %v8367 = vand.u32 %v7924, 4294901760
        %v8368 = vsub.f32 %v7924, %v8367
        %v8369 = vand.u32 %v8368, 4294901760
        %v8370 = vsub.f32 %v8368, %v8369
        %v8371 = vand.u32 %v8370, 4294901760
        %8372 = vmatpush.msra.mxu0 %v8371
        %v8373 = vand.u32 %v7920, 4294901760
        %v8374 = vsub.f32 %v7920, %v8373
        %v8375 = vand.u32 %v8374, 4294901760
        %v8376 = vsub.f32 %v8374, %v8375
        %v8377 = vand.u32 %v8376, 4294901760
        %8378 = vmatpush.msra.mxu0 %v8377
        %v8379 = vand.u32 %v7942, 4294901760
        %8380 = vmatmul.f32.gmra.mxu0 %v8379
        %v8381 = vpop.f32.mrf.mxu0
        %v8382 = vadd.f32 %v8341, %v8381
        %8383 = vdwg.mxu0
        %8384 = vmatpush.msra.mxu0 0.0
        %8385 = vmatpush.msra.mxu0 0.0
        %8386 = vmatpush.msra.mxu0 0.0
        %8387 = vmatpush.msra.mxu0 0.0
        %8388 = vmatpush.msra.mxu0 0.0
        %8389 = vmatpush.msra.mxu0 0.0
        %8390 = vmatpush.msra.mxu0 0.0
        %8391 = vmatpush.msra.mxu0 0.0
        %8392 = vmatpush.msra.mxu0 0.0
        %8393 = vmatpush.msra.mxu0 0.0
        %8394 = vmatpush.msra.mxu0 0.0
        %8395 = vmatpush.msra.mxu0 0.0
        %v8396 = vand.u32 %v7932, 4294901760
        %v8397 = vsub.f32 %v7932, %v8396
        %8398 = vmatpush.msra.mxu0 %v8397
        %v8399 = vand.u32 %v7928, 4294901760
        %v8400 = vsub.f32 %v7928, %v8399
        %8401 = vmatpush.msra.mxu0 %v8400
        %v8402 = vand.u32 %v7924, 4294901760
        %v8403 = vsub.f32 %v7924, %v8402
        %8404 = vmatpush.msra.mxu0 %v8403
        %v8405 = vand.u32 %v7920, 4294901760
        %v8406 = vsub.f32 %v7920, %v8405
        %8407 = vmatpush.msra.mxu0 %v8406
        %v8408 = vand.u32 %v7942, 4294901760
        %v8409 = vsub.f32 %v7942, %v8408
        %8410 = vmatmul.f32.gmra.mxu0 %v8409
        %v8411 = vpop.f32.mrf.mxu0
        %v8412 = vadd.f32 %v8382, %v8411
        %8413 = vdwg.mxu0
        %8414 = vmatpush.msra.mxu0 0.0
        %8415 = vmatpush.msra.mxu0 0.0
        %8416 = vmatpush.msra.mxu0 0.0
        %8417 = vmatpush.msra.mxu0 0.0
        %8418 = vmatpush.msra.mxu0 0.0
        %8419 = vmatpush.msra.mxu0 0.0
        %8420 = vmatpush.msra.mxu0 0.0
        %8421 = vmatpush.msra.mxu0 0.0
        %8422 = vmatpush.msra.mxu0 0.0
        %8423 = vmatpush.msra.mxu0 0.0
        %8424 = vmatpush.msra.mxu0 0.0
        %8425 = vmatpush.msra.mxu0 0.0
        %v8426 = vand.u32 %v7932, 4294901760
        %8427 = vmatpush.msra.mxu0 %v8426
        %v8428 = vand.u32 %v7928, 4294901760
        %8429 = vmatpush.msra.mxu0 %v8428
        %v8430 = vand.u32 %v7924, 4294901760
        %8431 = vmatpush.msra.mxu0 %v8430
        %v8432 = vand.u32 %v7920, 4294901760
        %8433 = vmatpush.msra.mxu0 %v8432
        %v8434 = vand.u32 %v7942, 4294901760
        %v8435 = vsub.f32 %v7942, %v8434
        %v8436 = vand.u32 %v8435, 4294901760
        %8437 = vmatmul.f32.gmra.mxu0 %v8436
        %v8438 = vpop.f32.mrf.mxu0
        %v8439 = vadd.f32 %v8412, %v8438
        %8440 = vdwg.mxu0
        %8441 = vmatpush.msra.mxu0 0.0
        %8442 = vmatpush.msra.mxu0 0.0
        %8443 = vmatpush.msra.mxu0 0.0
        %8444 = vmatpush.msra.mxu0 0.0
        %8445 = vmatpush.msra.mxu0 0.0
        %8446 = vmatpush.msra.mxu0 0.0
        %8447 = vmatpush.msra.mxu0 0.0
        %8448 = vmatpush.msra.mxu0 0.0
        %8449 = vmatpush.msra.mxu0 0.0
        %8450 = vmatpush.msra.mxu0 0.0
        %8451 = vmatpush.msra.mxu0 0.0
        %8452 = vmatpush.msra.mxu0 0.0
        %v8453 = vand.u32 %v7932, 4294901760
        %v8454 = vsub.f32 %v7932, %v8453
        %v8455 = vand.u32 %v8454, 4294901760
        %8456 = vmatpush.msra.mxu0 %v8455
        %v8457 = vand.u32 %v7928, 4294901760
        %v8458 = vsub.f32 %v7928, %v8457
        %v8459 = vand.u32 %v8458, 4294901760
        %8460 = vmatpush.msra.mxu0 %v8459
        %v8461 = vand.u32 %v7924, 4294901760
        %v8462 = vsub.f32 %v7924, %v8461
        %v8463 = vand.u32 %v8462, 4294901760
        %8464 = vmatpush.msra.mxu0 %v8463
        %v8465 = vand.u32 %v7920, 4294901760
        %v8466 = vsub.f32 %v7920, %v8465
        %v8467 = vand.u32 %v8466, 4294901760
        %8468 = vmatpush.msra.mxu0 %v8467
        %v8469 = vand.u32 %v7942, 4294901760
        %8470 = vmatmul.f32.gmra.mxu0 %v8469
        %v8471 = vpop.f32.mrf.mxu0
        %v8472 = vadd.f32 %v8439, %v8471
        %8473 = vdwg.mxu0
        %8474 = vmatpush.msra.mxu0 0.0
        %8475 = vmatpush.msra.mxu0 0.0
        %8476 = vmatpush.msra.mxu0 0.0
        %8477 = vmatpush.msra.mxu0 0.0
        %8478 = vmatpush.msra.mxu0 0.0
        %8479 = vmatpush.msra.mxu0 0.0
        %8480 = vmatpush.msra.mxu0 0.0
        %8481 = vmatpush.msra.mxu0 0.0
        %8482 = vmatpush.msra.mxu0 0.0
        %8483 = vmatpush.msra.mxu0 0.0
        %8484 = vmatpush.msra.mxu0 0.0
        %8485 = vmatpush.msra.mxu0 0.0
        %v8486 = vand.u32 %v7932, 4294901760
        %8487 = vmatpush.msra.mxu0 %v8486
        %v8488 = vand.u32 %v7928, 4294901760
        %8489 = vmatpush.msra.mxu0 %v8488
        %v8490 = vand.u32 %v7924, 4294901760
        %8491 = vmatpush.msra.mxu0 %v8490
        %v8492 = vand.u32 %v7920, 4294901760
        %8493 = vmatpush.msra.mxu0 %v8492
        %v8494 = vand.u32 %v7942, 4294901760
        %8495 = vmatmul.f32.gmra.mxu0 %v8494
        %v8496 = vpop.f32.mrf.mxu0
        %v8497 = vadd.f32 %v8472, %v8496
        %8498 = vdwg.mxu0
        %8499 = vmatpush.msra.mxu0 0.0
        %8500 = vmatpush.msra.mxu0 0.0
        %8501 = vmatpush.msra.mxu0 0.0
        %8502 = vmatpush.msra.mxu0 0.0
        %8503 = vmatpush.msra.mxu0 0.0
        %8504 = vmatpush.msra.mxu0 0.0
        %8505 = vmatpush.msra.mxu0 0.0
        %8506 = vmatpush.msra.mxu0 0.0
        %8507 = vmatpush.msra.mxu0 0.0
        %8508 = vmatpush.msra.mxu0 0.0
        %8509 = vmatpush.msra.mxu0 0.0
        %8510 = vmatpush.msra.mxu0 0.0
        %v8511 = vand.u32 %v7933, 4294901760
        %8512 = vmatpush.msra.mxu0 %v8511
        %v8513 = vand.u32 %v7929, 4294901760
        %8514 = vmatpush.msra.mxu0 %v8513
        %v8515 = vand.u32 %v7925, 4294901760
        %8516 = vmatpush.msra.mxu0 %v8515
        %v8517 = vand.u32 %v7921, 4294901760
        %8518 = vmatpush.msra.mxu0 %v8517
        %v8519 = vand.u32 %v7942, 4294901760
        %v8520 = vsub.f32 %v7942, %v8519
        %v8521 = vand.u32 %v8520, 4294901760
        %v8522 = vsub.f32 %v8520, %v8521
        %v8523 = vand.u32 %v8522, 4294901760
        %8524 = vmatmul.f32.gmra.mxu0 %v8523
        %v8525 = vpop.f32.mrf.mxu0
        %v8526 = vadd.f32 %v7939, %v8525
        %8527 = vdwg.mxu0
        %8528 = vmatpush.msra.mxu0 0.0
        %8529 = vmatpush.msra.mxu0 0.0
        %8530 = vmatpush.msra.mxu0 0.0
        %8531 = vmatpush.msra.mxu0 0.0
        %8532 = vmatpush.msra.mxu0 0.0
        %8533 = vmatpush.msra.mxu0 0.0
        %8534 = vmatpush.msra.mxu0 0.0
        %8535 = vmatpush.msra.mxu0 0.0
        %8536 = vmatpush.msra.mxu0 0.0
        %8537 = vmatpush.msra.mxu0 0.0
        %8538 = vmatpush.msra.mxu0 0.0
        %8539 = vmatpush.msra.mxu0 0.0
        %v8540 = vand.u32 %v7933, 4294901760
        %v8541 = vsub.f32 %v7933, %v8540
        %v8542 = vand.u32 %v8541, 4294901760
        %v8543 = vsub.f32 %v8541, %v8542
        %v8544 = vand.u32 %v8543, 4294901760
        %8545 = vmatpush.msra.mxu0 %v8544
        %v8546 = vand.u32 %v7929, 4294901760
        %v8547 = vsub.f32 %v7929, %v8546
        %v8548 = vand.u32 %v8547, 4294901760
        %v8549 = vsub.f32 %v8547, %v8548
        %v8550 = vand.u32 %v8549, 4294901760
        %8551 = vmatpush.msra.mxu0 %v8550
        %v8552 = vand.u32 %v7925, 4294901760
        %v8553 = vsub.f32 %v7925, %v8552
        %v8554 = vand.u32 %v8553, 4294901760
        %v8555 = vsub.f32 %v8553, %v8554
        %v8556 = vand.u32 %v8555, 4294901760
        %8557 = vmatpush.msra.mxu0 %v8556
        %v8558 = vand.u32 %v7921, 4294901760
        %v8559 = vsub.f32 %v7921, %v8558
        %v8560 = vand.u32 %v8559, 4294901760
        %v8561 = vsub.f32 %v8559, %v8560
        %v8562 = vand.u32 %v8561, 4294901760
        %8563 = vmatpush.msra.mxu0 %v8562
        %v8564 = vand.u32 %v7942, 4294901760
        %8565 = vmatmul.f32.gmra.mxu0 %v8564
        %v8566 = vpop.f32.mrf.mxu0
        %v8567 = vadd.f32 %v8526, %v8566
        %8568 = vdwg.mxu0
        %8569 = vmatpush.msra.mxu0 0.0
        %8570 = vmatpush.msra.mxu0 0.0
        %8571 = vmatpush.msra.mxu0 0.0
        %8572 = vmatpush.msra.mxu0 0.0
        %8573 = vmatpush.msra.mxu0 0.0
        %8574 = vmatpush.msra.mxu0 0.0
        %8575 = vmatpush.msra.mxu0 0.0
        %8576 = vmatpush.msra.mxu0 0.0
        %8577 = vmatpush.msra.mxu0 0.0
        %8578 = vmatpush.msra.mxu0 0.0
        %8579 = vmatpush.msra.mxu0 0.0
        %8580 = vmatpush.msra.mxu0 0.0
        %v8581 = vand.u32 %v7933, 4294901760
        %v8582 = vsub.f32 %v7933, %v8581
        %8583 = vmatpush.msra.mxu0 %v8582
        %v8584 = vand.u32 %v7929, 4294901760
        %v8585 = vsub.f32 %v7929, %v8584
        %8586 = vmatpush.msra.mxu0 %v8585
        %v8587 = vand.u32 %v7925, 4294901760
        %v8588 = vsub.f32 %v7925, %v8587
        %8589 = vmatpush.msra.mxu0 %v8588
        %v8590 = vand.u32 %v7921, 4294901760
        %v8591 = vsub.f32 %v7921, %v8590
        %8592 = vmatpush.msra.mxu0 %v8591
        %v8593 = vand.u32 %v7942, 4294901760
        %v8594 = vsub.f32 %v7942, %v8593
        %8595 = vmatmul.f32.gmra.mxu0 %v8594
        %v8596 = vpop.f32.mrf.mxu0
        %v8597 = vadd.f32 %v8567, %v8596
        %8598 = vdwg.mxu0
        %8599 = vmatpush.msra.mxu0 0.0
        %8600 = vmatpush.msra.mxu0 0.0
        %8601 = vmatpush.msra.mxu0 0.0
        %8602 = vmatpush.msra.mxu0 0.0
        %8603 = vmatpush.msra.mxu0 0.0
        %8604 = vmatpush.msra.mxu0 0.0
        %8605 = vmatpush.msra.mxu0 0.0
        %8606 = vmatpush.msra.mxu0 0.0
        %8607 = vmatpush.msra.mxu0 0.0
        %8608 = vmatpush.msra.mxu0 0.0
        %8609 = vmatpush.msra.mxu0 0.0
        %8610 = vmatpush.msra.mxu0 0.0
        %v8611 = vand.u32 %v7933, 4294901760
        %8612 = vmatpush.msra.mxu0 %v8611
        %v8613 = vand.u32 %v7929, 4294901760
        %8614 = vmatpush.msra.mxu0 %v8613
        %v8615 = vand.u32 %v7925, 4294901760
        %8616 = vmatpush.msra.mxu0 %v8615
        %v8617 = vand.u32 %v7921, 4294901760
        %8618 = vmatpush.msra.mxu0 %v8617
        %v8619 = vand.u32 %v7942, 4294901760
        %v8620 = vsub.f32 %v7942, %v8619
        %v8621 = vand.u32 %v8620, 4294901760
        %8622 = vmatmul.f32.gmra.mxu0 %v8621
        %v8623 = vpop.f32.mrf.mxu0
        %v8624 = vadd.f32 %v8597, %v8623
        %8625 = vdwg.mxu0
        %8626 = vmatpush.msra.mxu0 0.0
        %8627 = vmatpush.msra.mxu0 0.0
        %8628 = vmatpush.msra.mxu0 0.0
        %8629 = vmatpush.msra.mxu0 0.0
        %8630 = vmatpush.msra.mxu0 0.0
        %8631 = vmatpush.msra.mxu0 0.0
        %8632 = vmatpush.msra.mxu0 0.0
        %8633 = vmatpush.msra.mxu0 0.0
        %8634 = vmatpush.msra.mxu0 0.0
        %8635 = vmatpush.msra.mxu0 0.0
        %8636 = vmatpush.msra.mxu0 0.0
        %8637 = vmatpush.msra.mxu0 0.0
        %v8638 = vand.u32 %v7933, 4294901760
        %v8639 = vsub.f32 %v7933, %v8638
        %v8640 = vand.u32 %v8639, 4294901760
        %8641 = vmatpush.msra.mxu0 %v8640
        %v8642 = vand.u32 %v7929, 4294901760
        %v8643 = vsub.f32 %v7929, %v8642
        %v8644 = vand.u32 %v8643, 4294901760
        %8645 = vmatpush.msra.mxu0 %v8644
        %v8646 = vand.u32 %v7925, 4294901760
        %v8647 = vsub.f32 %v7925, %v8646
        %v8648 = vand.u32 %v8647, 4294901760
        %8649 = vmatpush.msra.mxu0 %v8648
        %v8650 = vand.u32 %v7921, 4294901760
        %v8651 = vsub.f32 %v7921, %v8650
        %v8652 = vand.u32 %v8651, 4294901760
        %8653 = vmatpush.msra.mxu0 %v8652
        %v8654 = vand.u32 %v7942, 4294901760
        %8655 = vmatmul.f32.gmra.mxu0 %v8654
        %v8656 = vpop.f32.mrf.mxu0
        %v8657 = vadd.f32 %v8624, %v8656
        %8658 = vdwg.mxu0
        %8659 = vmatpush.msra.mxu0 0.0
        %8660 = vmatpush.msra.mxu0 0.0
        %8661 = vmatpush.msra.mxu0 0.0
        %8662 = vmatpush.msra.mxu0 0.0
        %8663 = vmatpush.msra.mxu0 0.0
        %8664 = vmatpush.msra.mxu0 0.0
        %8665 = vmatpush.msra.mxu0 0.0
        %8666 = vmatpush.msra.mxu0 0.0
        %8667 = vmatpush.msra.mxu0 0.0
        %8668 = vmatpush.msra.mxu0 0.0
        %8669 = vmatpush.msra.mxu0 0.0
        %8670 = vmatpush.msra.mxu0 0.0
        %v8671 = vand.u32 %v7933, 4294901760
        %8672 = vmatpush.msra.mxu0 %v8671
        %v8673 = vand.u32 %v7929, 4294901760
        %8674 = vmatpush.msra.mxu0 %v8673
        %v8675 = vand.u32 %v7925, 4294901760
        %8676 = vmatpush.msra.mxu0 %v8675
        %v8677 = vand.u32 %v7921, 4294901760
        %8678 = vmatpush.msra.mxu0 %v8677
        %v8679 = vand.u32 %v7942, 4294901760
        %8680 = vmatmul.f32.gmra.mxu0 %v8679
        %v8681 = vpop.f32.mrf.mxu0
        %v8682 = vadd.f32 %v8657, %v8681
        %8683 = vdwg.mxu0
        %v8684 = vtanh.pop %v8127
        %v8685 = vtanh.pop %v8312
        %v8686 = vtanh.pop %v8497
        %v8687 = vtanh.pop %v8682
        %v8688 = vmul.f32 %v8684, 0.01
        %v8689 = vmul.f32 %v8685, 0.01
        %v8690 = vmul.f32 %v8686, 0.01
        %v8691 = vmul.f32 %v8687, 0.01
        %v8692 = vadd.f32 %v4910, %v8688
        %v8693 = vadd.f32 %v4911, %v8689
        %v8694 = vadd.f32 %v4912, %v8690
        %v8695 = vadd.f32 %v4913, %v8691
        %v8700 = vrot.slane %v8693, 4
        %v8701 = vrot.slane %v8695, 4
        %v8702 = vsel %vm2209, %v8692, %v8700
        %v8703 = vsel %vm2209, %v8694, %v8701
        %8706 = vst [vmem:[%s307] sm:$0x77] %v8702
        %8707 = vst [vmem:[%s307 + $0x8] sm:$0x77] %v8703
        %v8712 = vrot.slane %v6879, 4
        %v8713 = vrot.slane %v6909, 4
        %v8714 = vsel %vm2209, %v6864, %v8712
        %v8715 = vsel %vm2209, %v6894, %v8713
        %8718 = vst [vmem:[%s314] sm:$0x77] %v8714
        %8719 = vst [vmem:[%s314 + $0x8] sm:$0x77] %v8715
        %s8720 = sand.u32 %s126, 1
        %s8721 = scalar_lea.sflag [#allocation4], %s8720
        %s8722 = sand.u32 %s126, 1
        %s8723 = smul.addr %s8722, 16
        %s8724 = scalar_lea.vmem [#allocation3], %s8723
        %s8725 = sand.u32 %s24, 1
        %s8726 = scalar_lea.sflag [#allocation6], %s8725
        %s8727 = sand.u32 %s152, 1
        %s8728 = smul.addr %s8727, 16
        %s8729 = scalar_lea.vmem [#allocation5], %s8728
        %s8730 = sand.u32 %s24, 1
        %s8731 = scalar_lea.sflag [#allocation6], %s8730
        %s8732 = sand.u32 %s178, 1
        %s8733 = scalar_lea.vmem [#allocation7], %s8732
        // Predicated region
        $region60: #{tpu_custom_call.1} parent=54 // pred_check
          %p8734 = pneg %p136
        $region61: #{tpu_custom_call.1} parent=54 // pred_check_branch
          %8736 = sbr.rel (%p8734) target = $region63
        $region62: #{tpu_custom_call.1} parent=54 // pred_region
          %s8737 = smul.u32 4, %s24
          %8739 = vsyncadd %s8721, 0
          %s8740 = smul.addr %s8737, 4
          %s8741 = scalar_lea.hbm %s4, %s8740
          %s8743 = sshll.u32 %s8724, 4
          %s8744 = int_to_ptr.vmem [resolvable:$true] %s8743
          %s8745 = sshll.u32 %s8741, 4
          %s8746 = int_to_ptr.hbm [resolvable:$true] %s8745
          %8748 = dma.vmem_to_hbm [thread:$0]  %s8744, 256, %s8746, %s8721
        $region63: #{tpu_custom_call.1} parent=54 // pred_fallthru
          _
        // Predicated region
        $region64: #{tpu_custom_call.1} parent=54 // pred_check
          %p8749 = pneg %p162
        $region65: #{tpu_custom_call.1} parent=54 // pred_check_branch
          %8751 = sbr.rel (%p8749) target = $region67
        $region66: #{tpu_custom_call.1} parent=54 // pred_region
          %s8752 = smul.u32 4, %s24
          %8754 = vsyncadd %s8726, 0
          %s8755 = smul.addr %s8752, 4
          %s8756 = scalar_lea.hbm %s5, %s8755
          %s8758 = sshll.u32 %s8729, 4
          %s8759 = int_to_ptr.vmem [resolvable:$true] %s8758
          %s8760 = sshll.u32 %s8756, 4
          %s8761 = int_to_ptr.hbm [resolvable:$true] %s8760
          %8763 = dma.vmem_to_hbm [thread:$0]  %s8759, 256, %s8761, %s8726
        $region67: #{tpu_custom_call.1} parent=54 // pred_fallthru
          _
        // Predicated region
        $region68: #{tpu_custom_call.1} parent=54 // pred_check
          %p8764 = pneg %p188
        $region69: #{tpu_custom_call.1} parent=54 // pred_check_branch
          %8766 = sbr.rel (%p8764) target = $region71
        $region70: #{tpu_custom_call.1} parent=54 // pred_region
          %8768 = vsyncadd %s8731, 0
          %s8769 = scalar_lea.hbm %s6, %s24
          %s8771 = sshll.u32 %s8733, 4
          %s8772 = int_to_ptr.vmem [resolvable:$true] %s8771
          %s8773 = sshll.u32 %s8769, 4
          %s8774 = int_to_ptr.hbm [resolvable:$true] %s8773
          %8776 = dma.vmem_to_hbm [thread:$0]  %s8772, 16, %s8774, %s8731
        $region71: #{tpu_custom_call.1} parent=54 // pred_fallthru
          _
      $region55: #{tpu_custom_call.1} parent=5 // pred_fallthru
        _
      %p8777 = scmp.le.s32.totalorder 2, %s19
      // Predicated region
      $region72: #{tpu_custom_call.1} parent=5 // pred_check
        %p8778 = pneg %p8777
      $region73: #{tpu_custom_call.1} parent=5 // pred_check_branch
        %8780 = sbr.rel (%p8778) target = $region75
      $region74: #{tpu_custom_call.1} parent=5 // pred_region
        %s8781 = ssub.s32 %s19, 2
        // Predicated region
        $region76: #{tpu_custom_call.1} parent=74 // pred_check
          %p8782 = pneg %p142
        $region77: #{tpu_custom_call.1} parent=74 // pred_check_branch
          %8784 = sbr.rel (%p8782) target = $region79
        $region78: #{tpu_custom_call.1} parent=74 // pred_region
          %s8785 = sand.u32 %s127, 1
          %s8786 = scalar_lea.sflag [#allocation4], %s8785
          %s8787 = sand.u32 %s127, 1
          %s8788 = smul.addr %s8787, 16
          %s8789 = scalar_lea.vmem [#allocation3], %s8788
          %8791 = dma.done %s8786, 256
        $region79: #{tpu_custom_call.1} parent=74 // pred_fallthru
          _
        // Predicated region
        $region80: #{tpu_custom_call.1} parent=74 // pred_check
          %p8792 = pneg %p168
        $region81: #{tpu_custom_call.1} parent=74 // pred_check_branch
          %8794 = sbr.rel (%p8792) target = $region83
        $region82: #{tpu_custom_call.1} parent=74 // pred_region
          %s8795 = sand.u32 %s25, 1
          %s8796 = scalar_lea.sflag [#allocation6], %s8795
          %s8797 = sand.u32 %s153, 1
          %s8798 = smul.addr %s8797, 16
          %s8799 = scalar_lea.vmem [#allocation5], %s8798
          %8801 = dma.done %s8796, 256
        $region83: #{tpu_custom_call.1} parent=74 // pred_fallthru
          _
        // Predicated region
        $region84: #{tpu_custom_call.1} parent=74 // pred_check
          %p8802 = pneg %p194
        $region85: #{tpu_custom_call.1} parent=74 // pred_check_branch
          %8804 = sbr.rel (%p8802) target = $region87
        $region86: #{tpu_custom_call.1} parent=74 // pred_region
          %s8805 = sand.u32 %s25, 1
          %s8806 = scalar_lea.sflag [#allocation6], %s8805
          %s8807 = sand.u32 %s179, 1
          %s8808 = scalar_lea.vmem [#allocation7], %s8807
          %8810 = dma.done %s8806, 16
        $region87: #{tpu_custom_call.1} parent=74 // pred_fallthru
          _
      $region75: #{tpu_custom_call.1} parent=5 // pred_fallthru
        _
    $region6: #{tpu_custom_call.1} parent=1 // loop_footer
      %s23 = sadd.s32 1, %s19
    $region7: #{tpu_custom_call.1} parent=1 // loop_footer_branch
      %18 = sbr.rel target = $region3
    $region8: #{tpu_custom_call.1} parent=1 // loop_exit
      _
    %8811 = vsyncpa [#allocation4], 1
    %s8812 = scalar_lea.sflag [#allocation4], 1
    %8813 = vsyncpa %s8812, 1
    %8814 = vsyncpa [#allocation6], 1
    %s8815 = scalar_lea.sflag [#allocation6], 1
    %8816 = vsyncpa %s8815, 1

</llo_original>
